<compile_context>
chip_gen: v5e
topology: v5e:2x2
jax: 0.10.0
libtpu: 0.0.40
codegen_flags: <defaults>
</compile_context>

<pallas_src>
import jax
import jax.numpy as jnp
from jax.experimental import pallas as pl
from jax.experimental.pallas import tpu as pltpu


# ---------------------------------------------------------------------------
# Packed-bias layout (one VMEM input, every slot 128-lane aligned)
# ---------------------------------------------------------------------------

_BIAS_ORDER = ("b_lstm", "gb1", "gb2", "gb3", "gb4", "cb", "pb1", "pb2", "pb3")


def _round_up(x, m):
    return (x + m - 1) // m * m


def _bias_layout(H, S):
    widths = {"b_lstm": 8 * H, "gb1": 256, "gb2": 1024, "gb3": 512,
              "gb4": S, "cb": S, "pb1": 128, "pb2": 64, "pb3": 2}
    offsets = {}
    off = 0
    for name in _BIAS_ORDER:
        offsets[name] = off
        off += _round_up(widths[name], 128)
    return widths, offsets, off


# ---------------------------------------------------------------------------
# Fused kernel + Pallas wrapper
# ---------------------------------------------------------------------------

def _fused_forward(x_seq, a_kron, p, *, N, b, H, S, C):
    f32 = jnp.float32
    bwidths, boffs, _ = _bias_layout(H, S)

    def kernel(x_ref, a_ref, w_ih_ref, w_hh_ref, gw1_ref, gw2_hbm, gw3_hbm,
               gw4_ref, cw_ref, pw1_ref, pw2_ref, pw3_ref, biases_ref,
               out_ref, gw2_vm, gw3_vm, dma_sem):
        # Kick off the two big graph-weight DMAs so they overlap the serial LSTM recurrence.
        cp2 = pltpu.make_async_copy(gw2_hbm, gw2_vm, dma_sem.at[0])
        cp3 = pltpu.make_async_copy(gw3_hbm, gw3_vm, dma_sem.at[1])
        cp2.start()
        cp3.start()

        def bias(name):
            o = boffs[name]
            return biases_ref[:, o:o + bwidths[name]]

        # bn0: BatchNorm1d(affine=False), eval-mode default running stats (mean=0, var=1).
        # TODO(synk): trained running_mean/var (or training-mode batch stats) not reproduced.
        x = x_ref[...] * (1.0 / (1.0 + 1e-5) ** 0.5)                       # (N*b, C)

        # ----------------- bidirectional LSTM (fwd + bwd fused, fully unrolled) -----------------
        w_hh = w_hh_ref[...]                                               # (2H, 8H)
        gx = jnp.dot(x, w_ih_ref[...], preferred_element_type=f32) + bias("b_lstm")  # (N*b, 8H)
        # Gate-axis (8H) column layout: [i_f i_b | f_f f_b | g_f g_b | o_f o_b], blocks of H.
        col = jax.lax.broadcasted_iota(jnp.int32, (1, 8 * H), 1)
        fwd_cols = (col % (2 * H)) < H
        # Precompute the direction-blended input gates (off the recurrence critical path).
        gx_t = [gx[t * b:(t + 1) * b, :] for t in range(N)]
        gx_sel = [jnp.where(fwd_cols, gx_t[t], gx_t[N - 1 - t]) for t in range(N)]

        h = jnp.zeros((b, 2 * H), f32)
        c = jnp.zeros((b, 2 * H), f32)
        hs = []
        for t in range(N):                                                 # static unroll, N=16
            gates = gx_sel[t] + jnp.dot(h, w_hh, preferred_element_type=f32)   # (b, 8H)
            ig = jax.nn.sigmoid(gates[:, 0 * H:2 * H])
            fg = jax.nn.sigmoid(gates[:, 2 * H:4 * H])
            gg = jnp.tanh(gates[:, 4 * H:6 * H])
            og = jax.nn.sigmoid(gates[:, 6 * H:8 * H])
            c = fg * c + ig * gg
            h = og * jnp.tanh(c)
            hs.append(h)
        # Output time t = [h_fwd(t) | h_bwd(t)]; h_bwd(t) was produced at loop step N-1-t.
        lane = jax.lax.broadcasted_iota(jnp.int32, (b, 2 * H), 1)
        left = lane < H
        yl = jnp.concatenate(
            [jnp.where(left, hs[t], hs[N - 1 - t]) for t in range(N)], axis=0)  # (N*b, 2H)

        # ----------------- conv1 branch (1x1 conv, lane-dense rows) -----------------
        yc = jnp.dot(x, cw_ref[...], preferred_element_type=f32) + bias("cb")   # (N*b, S)

        # ----------------- graph branch (batch folded into rows) -----------------
        a_full = a_ref[...]                                                # (N*b, N*b)

        def gconv(feat, w_ref, bias_row, d):
            agg = jnp.dot(a_full, feat, preferred_element_type=f32)        # MeanAggregator bmm
            out = (jnp.dot(feat, w_ref[:d, :], preferred_element_type=f32)
                   + jnp.dot(agg, w_ref[d:, :], preferred_element_type=f32)
                   + bias_row)
            return jnp.maximum(out, 0.0)

        yg = gconv(x, gw1_ref, bias("gb1"), C)                             # (N*b, 256)
        cp2.wait()                                                         # gw2 now in VMEM
        yg = gconv(yg, gw2_vm, bias("gb2"), 256)                           # (N*b, 1024)
        cp3.wait()                                                         # gw3 now in VMEM
        yg = gconv(yg, gw3_vm, bias("gb3"), 1024)                          # (N*b, 512)
        yg = gconv(yg, gw4_ref, bias("gb4"), 512)                          # (N*b, S)

        # ----------------- prediction head (pw1 row-split; dropout = identity) -----------------
        h1 = jnp.maximum(
            jnp.dot(yl, pw1_ref[:2 * H, :], preferred_element_type=f32)
            + jnp.dot(yg, pw1_ref[2 * H:2 * H + S, :], preferred_element_type=f32)
            + jnp.dot(yc, pw1_ref[2 * H + S:, :], preferred_element_type=f32)
            + bias("pb1"), 0.0)
        h2 = jnp.maximum(
            jnp.dot(h1, pw2_ref[...], preferred_element_type=f32) + bias("pb2"), 0.0)
        out_ref[...] = jnp.dot(h2, pw3_ref[...], preferred_element_type=f32) + bias("pb3")

    vm = pl.BlockSpec(memory_space=pltpu.MemorySpace.VMEM)
    hbm = pl.BlockSpec(memory_space=pl.ANY)
    return pl.pallas_call(
        kernel,
        out_shape=jax.ShapeDtypeStruct((N * b, 2), jnp.float32),
        in_specs=[vm, vm, vm, vm, vm, hbm, hbm, vm, vm, vm, vm, vm, vm],
        out_specs=vm,
        scratch_shapes=[
            pltpu.VMEM(p["gw2"].shape, jnp.float32),     # staging for overlapped gw2 DMA
            pltpu.VMEM(p["gw3"].shape, jnp.float32),     # staging for overlapped gw3 DMA
            pltpu.SemaphoreType.DMA((2,)),
        ],
        compiler_params=pltpu.CompilerParams(vmem_limit_bytes=32 * 1024 * 1024),
    )(x_seq, a_kron,
      p["w_ih"], p["w_hh"], p["gw1"], p["gw2"], p["gw3"], p["gw4"],
      p["cw"], p["pw1"], p["pw2"], p["pw3"], p["biases"])


@jax.jit
def adaptive_deformation_forward(params, x, A):
    """x: (b, C, N) float32;  A: (N, N) float32 (shared across the batch).  -> (b, 2, N)."""
    b, C, N = x.shape
    H = params["w_hh"].shape[0] // 2
    S = params["cw"].shape[1]
    # Time-major rows (row = t*b + batch); bn scaling is applied inside the kernel.
    x_seq = jnp.transpose(x, (2, 0, 1)).reshape(N * b, C)
    # Batch-folded adjacency so the aggregation of all batch items is one matmul.
    a_kron = jnp.kron(A, jnp.eye(b, dtype=A.dtype))
    out_rows = _fused_forward(x_seq, a_kron, params, N=N, b=b, H=H, S=S, C=C)
    return jnp.transpose(out_rows.reshape(N, b, 2), (1, 2, 0))             # (b, 2, N)


# ---------------------------------------------------------------------------
# Parameter init (PyTorch layouts) + repacking into the fused-kernel layouts
# ---------------------------------------------------------------------------

def _uniform(key, shape, bound):
    return jax.random.uniform(key, shape, jnp.float32, -bound, bound)


def _xavier_uniform(key, shape):
    bound = (6.0 / (shape[0] + shape[1])) ** 0.5
    return jax.random.uniform(key, shape, jnp.float32, -bound, bound)


def init_torch_params(key, input_dim, state_dim):
    """Parameters in PyTorch shapes/layouts (as a real state_dict would provide)."""
    keys = iter(jax.random.split(key, 32))
    H = state_dim
    k_lstm = 1.0 / (H ** 0.5)
    p = {}
    for tag in ("f", "b"):                                  # fwd / bwd LSTM directions
        p[f"lstm_w_ih_{tag}"] = _uniform(next(keys), (4 * H, input_dim), k_lstm)
        p[f"lstm_w_hh_{tag}"] = _uniform(next(keys), (4 * H, H), k_lstm)
        p[f"lstm_b_ih_{tag}"] = _uniform(next(keys), (4 * H,), k_lstm)
        p[f"lstm_b_hh_{tag}"] = _uniform(next(keys), (4 * H,), k_lstm)
    k_c1 = 1.0 / (input_dim ** 0.5)
    p["conv1_w"] = _uniform(next(keys), (state_dim, input_dim), k_c1)    # (S, C)
    p["conv1_b"] = _uniform(next(keys), (state_dim,), k_c1)
    gdims = [(input_dim, 256), (256, 1024), (1024, 512), (512, state_dim)]
    for idx, (di, do) in enumerate(gdims, start=1):
        p[f"gconv{idx}_w"] = _xavier_uniform(next(keys), (2 * di, do))
        p[f"gconv{idx}_b"] = jnp.zeros((do,), jnp.float32)
    pdims = [(4 * state_dim, 128), (128, 64), (64, 2)]
    for idx, (di, do) in enumerate(pdims, start=1):
        k = 1.0 / (di ** 0.5)
        p[f"pred{idx}_w"] = _uniform(next(keys), (do, di), k)
        p[f"pred{idx}_b"] = _uniform(next(keys), (do,), k)
    return p


def prepare_params(tp, state_dim):
    """Repack PyTorch-layout parameters into the fused-kernel layouts."""
    H = state_dim
    S = state_dim

    def interleave(m_f, m_b):
        # Interleave the 4H gate axes of both directions (PyTorch gate order i,f,g,o)
        # into columns [i_f i_b | f_f f_b | g_f g_b | o_f o_b], each block H wide.
        parts = []
        for g in range(4):
            parts.append(m_f[..., g * H:(g + 1) * H])
            parts.append(m_b[..., g * H:(g + 1) * H])
        return jnp.concatenate(parts, axis=-1)

    p = {}
    p["w_ih"] = interleave(tp["lstm_w_ih_f"].T, tp["lstm_w_ih_b"].T)          # (C, 8H)
    zeros_h = jnp.zeros((H, 4 * H), jnp.float32)
    p["w_hh"] = jnp.concatenate(                                               # (2H, 8H)
        [interleave(tp["lstm_w_hh_f"].T, zeros_h),        # rows 0:H   <- h_fwd
         interleave(zeros_h, tp["lstm_w_hh_b"].T)],       # rows H:2H  <- h_bwd
        axis=0)

    for i in range(1, 5):
        p[f"gw{i}"] = tp[f"gconv{i}_w"]                       # (2d, out), used as-is
    p["cw"] = tp["conv1_w"].T                                 # (C, S)
    for i in range(1, 4):
        p[f"pw{i}"] = tp[f"pred{i}_w"].T                      # (Cin, Cout)

    # Pack all small bias vectors into one (1, total) VMEM input with 128-aligned slots.
    bias_f = (tp["lstm_b_ih_f"] + tp["lstm_b_hh_f"])[None, :]
    bias_b = (tp["lstm_b_ih_b"] + tp["lstm_b_hh_b"])[None, :]
    b_vals = {
        "b_lstm": interleave(bias_f, bias_b),                 # (1, 8H)
        "gb1": tp["gconv1_b"][None, :],
        "gb2": tp["gconv2_b"][None, :],
        "gb3": tp["gconv3_b"][None, :],
        "gb4": tp["gconv4_b"][None, :],
        "cb": tp["conv1_b"][None, :],
        "pb1": tp["pred1_b"][None, :],
        "pb2": tp["pred2_b"][None, :],
        "pb3": tp["pred3_b"][None, :],
    }
    widths, offsets, total = _bias_layout(H, S)
    packed = jnp.zeros((1, total), jnp.float32)
    for name in _BIAS_ORDER:
        packed = packed.at[:, offsets[name]:offsets[name] + widths[name]].set(b_vals[name])
    p["biases"] = packed
    return p


# ---------------------------------------------------------------------------
# Demo
# ---------------------------------------------------------------------------

if __name__ == "__main__":
    input_dim = 4      # channels C
    state_dim = 32     # S (= LSTM hidden H)
    batch = 2
    seq_len = 16       # N == n (graph nodes)

    key = jax.random.PRNGKey(0)
    k_params, k_x, k_a = jax.random.split(key, 3)

    torch_params = init_torch_params(k_params, input_dim, state_dim)
    params = prepare_params(torch_params, state_dim)

    x = jax.random.normal(k_x, (batch, input_dim, seq_len), jnp.float32)
    A_raw = jax.random.uniform(k_a, (seq_len, seq_len), jnp.float32)
    A = A_raw / jnp.sum(A_raw, axis=-1, keepdims=True)        # row-normalized adjacency

    out = adaptive_deformation_forward(params, x, A)
    jax.block_until_ready(out)
    assert out.shape == (batch, 2, seq_len), out.shape
    assert out.dtype == jnp.float32
    assert bool(jnp.all(jnp.isfinite(out)))
    print("KERNEL_OK")
</pallas_src>

<mosaic_0001>
module attributes {stable_mosaic.version = 11 : i64} {
  func.func @kernel(%arg0: memref<32x4xf32, #tpu.memory_space<vmem>>, %arg1: memref<32x32xf32, #tpu.memory_space<vmem>>, %arg2: memref<4x256xf32, #tpu.memory_space<vmem>>, %arg3: memref<64x256xf32, #tpu.memory_space<vmem>>, %arg4: memref<8x256xf32, #tpu.memory_space<vmem>>, %arg5: memref<512x1024xf32, #tpu.memory_space<any>>, %arg6: memref<2048x512xf32, #tpu.memory_space<any>>, %arg7: memref<1024x32xf32, #tpu.memory_space<vmem>>, %arg8: memref<4x32xf32, #tpu.memory_space<vmem>>, %arg9: memref<128x128xf32, #tpu.memory_space<vmem>>, %arg10: memref<128x64xf32, #tpu.memory_space<vmem>>, %arg11: memref<64x2xf32, #tpu.memory_space<vmem>>, %arg12: memref<1x2688xf32, #tpu.memory_space<vmem>>, %arg13: memref<32x2xf32, #tpu.memory_space<vmem>>, %arg14: memref<512x1024xf32, #tpu.memory_space<vmem>>, %arg15: memref<2048x512xf32, #tpu.memory_space<vmem>>, %arg16: memref<2x!tpu.dma_semaphore, #tpu.memory_space<semaphore_mem>>) attributes {dimension_semantics = [], scalar_prefetch = 0 : i64, scratch_operands = 3 : i64, tpu.core_type = #tpu.core_type<tc>} {
    %c0_i32 = arith.constant 0 : i32
    %0 = tpu.memref_slice %arg16[%c0_i32] : memref<2x!tpu.dma_semaphore, #tpu.memory_space<semaphore_mem>> -> memref<1x!tpu.dma_semaphore, #tpu.memory_space<semaphore_mem>>
    %1 = tpu.memref_squeeze %0 : memref<1x!tpu.dma_semaphore, #tpu.memory_space<semaphore_mem>> -> memref<!tpu.dma_semaphore, #tpu.memory_space<semaphore_mem>>
    tpu.enqueue_dma source(%arg5 : memref<512x1024xf32, #tpu.memory_space<any>>) target(%arg14 : memref<512x1024xf32, #tpu.memory_space<vmem>>) target_semaphore(%1 : memref<!tpu.dma_semaphore, #tpu.memory_space<semaphore_mem>>)
    %c1_i32 = arith.constant 1 : i32
    %2 = tpu.memref_slice %arg16[%c1_i32] : memref<2x!tpu.dma_semaphore, #tpu.memory_space<semaphore_mem>> -> memref<1x!tpu.dma_semaphore, #tpu.memory_space<semaphore_mem>>
    %3 = tpu.memref_squeeze %2 : memref<1x!tpu.dma_semaphore, #tpu.memory_space<semaphore_mem>> -> memref<!tpu.dma_semaphore, #tpu.memory_space<semaphore_mem>>
    tpu.enqueue_dma source(%arg6 : memref<2048x512xf32, #tpu.memory_space<any>>) target(%arg15 : memref<2048x512xf32, #tpu.memory_space<vmem>>) target_semaphore(%3 : memref<!tpu.dma_semaphore, #tpu.memory_space<semaphore_mem>>)
    %c0 = arith.constant 0 : index
    %c0_0 = arith.constant 0 : index
    %4 = vector.load %arg0[%c0, %c0_0] : memref<32x4xf32, #tpu.memory_space<vmem>>, vector<32x4xf32>
    %cst = arith.constant 0.999994993 : f32
    %5 = vector.broadcast %cst : f32 to vector<32x4xf32>
    %6 = arith.mulf %4, %5 : vector<32x4xf32>
    %c0_1 = arith.constant 0 : index
    %c0_2 = arith.constant 0 : index
    %7 = vector.load %arg3[%c0_1, %c0_2] : memref<64x256xf32, #tpu.memory_space<vmem>>, vector<64x256xf32>
    %c0_3 = arith.constant 0 : index
    %c0_4 = arith.constant 0 : index
    %8 = vector.load %arg2[%c0_3, %c0_4] : memref<4x256xf32, #tpu.memory_space<vmem>>, vector<4x256xf32>
    %cst_5 = arith.constant dense<0.000000e+00> : vector<32x256xf32>
    %9 = tpu.matmul %6, %8, %cst_5 {dimension_numbers = #tpu.dot_dimension_numbers<[1], [0], [0], [1], [0, 0, 1, 1], [], []>} : vector<32x4xf32>, vector<4x256xf32>, vector<32x256xf32> -> vector<32x256xf32>
    %c0_6 = arith.constant 0 : index
    %c0_7 = arith.constant 0 : index
    %10 = vector.load %arg12[%c0_6, %c0_7] : memref<1x2688xf32, #tpu.memory_space<vmem>>, vector<1x256xf32>
    %11 = vector.broadcast %10 : vector<1x256xf32> to vector<32x256xf32>
    %12 = arith.addf %9, %11 : vector<32x256xf32>
    %13 = tpu.iota {dimensions = array<i32: 1>} : vector<1x256xi32>
    %c64_i32 = arith.constant 64 : i32
    %c0_i32_8 = arith.constant 0 : i32
    %14 = arith.cmpi eq, %c64_i32, %c0_i32_8 : i32
    %c1_i32_9 = arith.constant 1 : i32
    %15 = arith.select %14, %c1_i32_9, %c64_i32 : i32
    %16 = vector.broadcast %15 : i32 to vector<1x256xi32>
    %17 = arith.remsi %13, %16 : vector<1x256xi32>
    %c0_i32_10 = arith.constant 0 : i32
    %18 = vector.broadcast %c0_i32_10 : i32 to vector<1x256xi32>
    %19 = arith.cmpi ne, %17, %18 : vector<1x256xi32>
    %c0_i32_11 = arith.constant 0 : i32
    %20 = vector.broadcast %c0_i32_11 : i32 to vector<1x256xi32>
    %21 = arith.cmpi slt, %17, %20 : vector<1x256xi32>
    %c0_i32_12 = arith.constant 0 : i32
    %22 = arith.cmpi slt, %15, %c0_i32_12 : i32
    %23 = vector.broadcast %22 : i1 to vector<1x256xi1>
    %24 = vector.broadcast %23 : vector<1x256xi1> to vector<1x256xi1>
    %25 = arith.xori %21, %24 : vector<1x256xi1>
    %26 = arith.andi %25, %19 : vector<1x256xi1>
    %27 = vector.broadcast %15 : i32 to vector<1x256xi32>
    %28 = arith.addi %17, %27 : vector<1x256xi32>
    %29 = arith.select %26, %28, %17 : vector<1x256xi1>, vector<1x256xi32>
    %c32_i32 = arith.constant 32 : i32
    %30 = vector.broadcast %c32_i32 : i32 to vector<1x256xi32>
    %31 = arith.cmpi slt, %29, %30 : vector<1x256xi32>
    %32 = vector.extract_strided_slice %12 {offsets = [0, 0], sizes = [2, 256], strides = [1, 1]} : vector<32x256xf32> to vector<2x256xf32>
    %33 = vector.extract_strided_slice %12 {offsets = [2, 0], sizes = [2, 256], strides = [1, 1]} : vector<32x256xf32> to vector<2x256xf32>
    %34 = vector.extract_strided_slice %12 {offsets = [4, 0], sizes = [2, 256], strides = [1, 1]} : vector<32x256xf32> to vector<2x256xf32>
    %35 = vector.extract_strided_slice %12 {offsets = [6, 0], sizes = [2, 256], strides = [1, 1]} : vector<32x256xf32> to vector<2x256xf32>
    %36 = vector.extract_strided_slice %12 {offsets = [8, 0], sizes = [2, 256], strides = [1, 1]} : vector<32x256xf32> to vector<2x256xf32>
    %37 = vector.extract_strided_slice %12 {offsets = [10, 0], sizes = [2, 256], strides = [1, 1]} : vector<32x256xf32> to vector<2x256xf32>
    %38 = vector.extract_strided_slice %12 {offsets = [12, 0], sizes = [2, 256], strides = [1, 1]} : vector<32x256xf32> to vector<2x256xf32>
    %39 = vector.extract_strided_slice %12 {offsets = [14, 0], sizes = [2, 256], strides = [1, 1]} : vector<32x256xf32> to vector<2x256xf32>
    %40 = vector.extract_strided_slice %12 {offsets = [16, 0], sizes = [2, 256], strides = [1, 1]} : vector<32x256xf32> to vector<2x256xf32>
    %41 = vector.extract_strided_slice %12 {offsets = [18, 0], sizes = [2, 256], strides = [1, 1]} : vector<32x256xf32> to vector<2x256xf32>
    %42 = vector.extract_strided_slice %12 {offsets = [20, 0], sizes = [2, 256], strides = [1, 1]} : vector<32x256xf32> to vector<2x256xf32>
    %43 = vector.extract_strided_slice %12 {offsets = [22, 0], sizes = [2, 256], strides = [1, 1]} : vector<32x256xf32> to vector<2x256xf32>
    %44 = vector.extract_strided_slice %12 {offsets = [24, 0], sizes = [2, 256], strides = [1, 1]} : vector<32x256xf32> to vector<2x256xf32>
    %45 = vector.extract_strided_slice %12 {offsets = [26, 0], sizes = [2, 256], strides = [1, 1]} : vector<32x256xf32> to vector<2x256xf32>
    %46 = vector.extract_strided_slice %12 {offsets = [28, 0], sizes = [2, 256], strides = [1, 1]} : vector<32x256xf32> to vector<2x256xf32>
    %47 = vector.extract_strided_slice %12 {offsets = [30, 0], sizes = [2, 256], strides = [1, 1]} : vector<32x256xf32> to vector<2x256xf32>
    %48 = vector.shape_cast %31 : vector<1x256xi1> to vector<1x256xi1>
    %49 = vector.broadcast %48 : vector<1x256xi1> to vector<2x256xi1>
    %50 = arith.select %49, %32, %47 : vector<2x256xi1>, vector<2x256xf32>
    %51 = vector.shape_cast %31 : vector<1x256xi1> to vector<1x256xi1>
    %52 = vector.broadcast %51 : vector<1x256xi1> to vector<2x256xi1>
    %53 = arith.select %52, %33, %46 : vector<2x256xi1>, vector<2x256xf32>
    %54 = vector.shape_cast %31 : vector<1x256xi1> to vector<1x256xi1>
    %55 = vector.broadcast %54 : vector<1x256xi1> to vector<2x256xi1>
    %56 = arith.select %55, %34, %45 : vector<2x256xi1>, vector<2x256xf32>
    %57 = vector.shape_cast %31 : vector<1x256xi1> to vector<1x256xi1>
    %58 = vector.broadcast %57 : vector<1x256xi1> to vector<2x256xi1>
    %59 = arith.select %58, %35, %44 : vector<2x256xi1>, vector<2x256xf32>
    %60 = vector.shape_cast %31 : vector<1x256xi1> to vector<1x256xi1>
    %61 = vector.broadcast %60 : vector<1x256xi1> to vector<2x256xi1>
    %62 = arith.select %61, %36, %43 : vector<2x256xi1>, vector<2x256xf32>
    %63 = vector.shape_cast %31 : vector<1x256xi1> to vector<1x256xi1>
    %64 = vector.broadcast %63 : vector<1x256xi1> to vector<2x256xi1>
    %65 = arith.select %64, %37, %42 : vector<2x256xi1>, vector<2x256xf32>
    %66 = vector.shape_cast %31 : vector<1x256xi1> to vector<1x256xi1>
    %67 = vector.broadcast %66 : vector<1x256xi1> to vector<2x256xi1>
    %68 = arith.select %67, %38, %41 : vector<2x256xi1>, vector<2x256xf32>
    %69 = vector.shape_cast %31 : vector<1x256xi1> to vector<1x256xi1>
    %70 = vector.broadcast %69 : vector<1x256xi1> to vector<2x256xi1>
    %71 = arith.select %70, %39, %40 : vector<2x256xi1>, vector<2x256xf32>
    %72 = vector.shape_cast %31 : vector<1x256xi1> to vector<1x256xi1>
    %73 = vector.broadcast %72 : vector<1x256xi1> to vector<2x256xi1>
    %74 = arith.select %73, %40, %39 : vector<2x256xi1>, vector<2x256xf32>
    %75 = vector.shape_cast %31 : vector<1x256xi1> to vector<1x256xi1>
    %76 = vector.broadcast %75 : vector<1x256xi1> to vector<2x256xi1>
    %77 = arith.select %76, %41, %38 : vector<2x256xi1>, vector<2x256xf32>
    %78 = vector.shape_cast %31 : vector<1x256xi1> to vector<1x256xi1>
    %79 = vector.broadcast %78 : vector<1x256xi1> to vector<2x256xi1>
    %80 = arith.select %79, %42, %37 : vector<2x256xi1>, vector<2x256xf32>
    %81 = vector.shape_cast %31 : vector<1x256xi1> to vector<1x256xi1>
    %82 = vector.broadcast %81 : vector<1x256xi1> to vector<2x256xi1>
    %83 = arith.select %82, %43, %36 : vector<2x256xi1>, vector<2x256xf32>
    %84 = vector.shape_cast %31 : vector<1x256xi1> to vector<1x256xi1>
    %85 = vector.broadcast %84 : vector<1x256xi1> to vector<2x256xi1>
    %86 = arith.select %85, %44, %35 : vector<2x256xi1>, vector<2x256xf32>
    %87 = vector.shape_cast %31 : vector<1x256xi1> to vector<1x256xi1>
    %88 = vector.broadcast %87 : vector<1x256xi1> to vector<2x256xi1>
    %89 = arith.select %88, %45, %34 : vector<2x256xi1>, vector<2x256xf32>
    %90 = vector.shape_cast %31 : vector<1x256xi1> to vector<1x256xi1>
    %91 = vector.broadcast %90 : vector<1x256xi1> to vector<2x256xi1>
    %92 = arith.select %91, %46, %33 : vector<2x256xi1>, vector<2x256xf32>
    %93 = vector.shape_cast %31 : vector<1x256xi1> to vector<1x256xi1>
    %94 = vector.broadcast %93 : vector<1x256xi1> to vector<2x256xi1>
    %95 = arith.select %94, %47, %32 : vector<2x256xi1>, vector<2x256xf32>
    %cst_13 = arith.constant 0.000000e+00 : f32
    %96 = vector.broadcast %cst_13 : f32 to vector<2x64xf32>
    %cst_14 = arith.constant 0.000000e+00 : f32
    %97 = vector.broadcast %cst_14 : f32 to vector<2x64xf32>
    %cst_15 = arith.constant dense<0.000000e+00> : vector<2x256xf32>
    %98 = tpu.matmul %96, %7, %cst_15 {dimension_numbers = #tpu.dot_dimension_numbers<[1], [0], [0], [1], [0, 0, 1, 1], [], []>} : vector<2x64xf32>, vector<64x256xf32>, vector<2x256xf32> -> vector<2x256xf32>
    %99 = arith.addf %50, %98 : vector<2x256xf32>
    %100 = vector.extract_strided_slice %99 {offsets = [0, 0], sizes = [2, 64], strides = [1, 1]} : vector<2x256xf32> to vector<2x64xf32>
    %101 = arith.negf %100 : vector<2x64xf32>
    %102 = math.exp %101 : vector<2x64xf32>
    %cst_16 = arith.constant 1.000000e+00 : f32
    %103 = vector.broadcast %cst_16 : f32 to vector<2x64xf32>
    %104 = arith.addf %103, %102 : vector<2x64xf32>
    %105 = arith.divf %103, %104 : vector<2x64xf32>
    %106 = vector.extract_strided_slice %99 {offsets = [0, 64], sizes = [2, 64], strides = [1, 1]} : vector<2x256xf32> to vector<2x64xf32>
    %107 = arith.negf %106 : vector<2x64xf32>
    %108 = math.exp %107 : vector<2x64xf32>
    %cst_17 = arith.constant 1.000000e+00 : f32
    %109 = vector.broadcast %cst_17 : f32 to vector<2x64xf32>
    %110 = arith.addf %109, %108 : vector<2x64xf32>
    %111 = arith.divf %109, %110 : vector<2x64xf32>
    %112 = vector.extract_strided_slice %99 {offsets = [0, 128], sizes = [2, 64], strides = [1, 1]} : vector<2x256xf32> to vector<2x64xf32>
    %113 = math.tanh %112 : vector<2x64xf32>
    %114 = vector.extract_strided_slice %99 {offsets = [0, 192], sizes = [2, 64], strides = [1, 1]} : vector<2x256xf32> to vector<2x64xf32>
    %115 = arith.negf %114 : vector<2x64xf32>
    %116 = math.exp %115 : vector<2x64xf32>
    %cst_18 = arith.constant 1.000000e+00 : f32
    %117 = vector.broadcast %cst_18 : f32 to vector<2x64xf32>
    %118 = arith.addf %117, %116 : vector<2x64xf32>
    %119 = arith.divf %117, %118 : vector<2x64xf32>
    %120 = arith.mulf %111, %97 : vector<2x64xf32>
    %121 = arith.mulf %105, %113 : vector<2x64xf32>
    %122 = arith.addf %120, %121 : vector<2x64xf32>
    %123 = math.tanh %122 : vector<2x64xf32>
    %124 = arith.mulf %119, %123 : vector<2x64xf32>
    %cst_19 = arith.constant dense<0.000000e+00> : vector<2x256xf32>
    %125 = tpu.matmul %124, %7, %cst_19 {dimension_numbers = #tpu.dot_dimension_numbers<[1], [0], [0], [1], [0, 0, 1, 1], [], []>} : vector<2x64xf32>, vector<64x256xf32>, vector<2x256xf32> -> vector<2x256xf32>
    %126 = arith.addf %53, %125 : vector<2x256xf32>
    %127 = vector.extract_strided_slice %126 {offsets = [0, 0], sizes = [2, 64], strides = [1, 1]} : vector<2x256xf32> to vector<2x64xf32>
    %128 = arith.negf %127 : vector<2x64xf32>
    %129 = math.exp %128 : vector<2x64xf32>
    %cst_20 = arith.constant 1.000000e+00 : f32
    %130 = vector.broadcast %cst_20 : f32 to vector<2x64xf32>
    %131 = arith.addf %130, %129 : vector<2x64xf32>
    %132 = arith.divf %130, %131 : vector<2x64xf32>
    %133 = vector.extract_strided_slice %126 {offsets = [0, 64], sizes = [2, 64], strides = [1, 1]} : vector<2x256xf32> to vector<2x64xf32>
    %134 = arith.negf %133 : vector<2x64xf32>
    %135 = math.exp %134 : vector<2x64xf32>
    %cst_21 = arith.constant 1.000000e+00 : f32
    %136 = vector.broadcast %cst_21 : f32 to vector<2x64xf32>
    %137 = arith.addf %136, %135 : vector<2x64xf32>
    %138 = arith.divf %136, %137 : vector<2x64xf32>
    %139 = vector.extract_strided_slice %126 {offsets = [0, 128], sizes = [2, 64], strides = [1, 1]} : vector<2x256xf32> to vector<2x64xf32>
    %140 = math.tanh %139 : vector<2x64xf32>
    %141 = vector.extract_strided_slice %126 {offsets = [0, 192], sizes = [2, 64], strides = [1, 1]} : vector<2x256xf32> to vector<2x64xf32>
    %142 = arith.negf %141 : vector<2x64xf32>
    %143 = math.exp %142 : vector<2x64xf32>
    %cst_22 = arith.constant 1.000000e+00 : f32
    %144 = vector.broadcast %cst_22 : f32 to vector<2x64xf32>
    %145 = arith.addf %144, %143 : vector<2x64xf32>
    %146 = arith.divf %144, %145 : vector<2x64xf32>
    %147 = arith.mulf %138, %122 : vector<2x64xf32>
    %148 = arith.mulf %132, %140 : vector<2x64xf32>
    %149 = arith.addf %147, %148 : vector<2x64xf32>
    %150 = math.tanh %149 : vector<2x64xf32>
    %151 = arith.mulf %146, %150 : vector<2x64xf32>
    %cst_23 = arith.constant dense<0.000000e+00> : vector<2x256xf32>
    %152 = tpu.matmul %151, %7, %cst_23 {dimension_numbers = #tpu.dot_dimension_numbers<[1], [0], [0], [1], [0, 0, 1, 1], [], []>} : vector<2x64xf32>, vector<64x256xf32>, vector<2x256xf32> -> vector<2x256xf32>
    %153 = arith.addf %56, %152 : vector<2x256xf32>
    %154 = vector.extract_strided_slice %153 {offsets = [0, 0], sizes = [2, 64], strides = [1, 1]} : vector<2x256xf32> to vector<2x64xf32>
    %155 = arith.negf %154 : vector<2x64xf32>
    %156 = math.exp %155 : vector<2x64xf32>
    %cst_24 = arith.constant 1.000000e+00 : f32
    %157 = vector.broadcast %cst_24 : f32 to vector<2x64xf32>
    %158 = arith.addf %157, %156 : vector<2x64xf32>
    %159 = arith.divf %157, %158 : vector<2x64xf32>
    %160 = vector.extract_strided_slice %153 {offsets = [0, 64], sizes = [2, 64], strides = [1, 1]} : vector<2x256xf32> to vector<2x64xf32>
    %161 = arith.negf %160 : vector<2x64xf32>
    %162 = math.exp %161 : vector<2x64xf32>
    %cst_25 = arith.constant 1.000000e+00 : f32
    %163 = vector.broadcast %cst_25 : f32 to vector<2x64xf32>
    %164 = arith.addf %163, %162 : vector<2x64xf32>
    %165 = arith.divf %163, %164 : vector<2x64xf32>
    %166 = vector.extract_strided_slice %153 {offsets = [0, 128], sizes = [2, 64], strides = [1, 1]} : vector<2x256xf32> to vector<2x64xf32>
    %167 = math.tanh %166 : vector<2x64xf32>
    %168 = vector.extract_strided_slice %153 {offsets = [0, 192], sizes = [2, 64], strides = [1, 1]} : vector<2x256xf32> to vector<2x64xf32>
    %169 = arith.negf %168 : vector<2x64xf32>
    %170 = math.exp %169 : vector<2x64xf32>
    %cst_26 = arith.constant 1.000000e+00 : f32
    %171 = vector.broadcast %cst_26 : f32 to vector<2x64xf32>
    %172 = arith.addf %171, %170 : vector<2x64xf32>
    %173 = arith.divf %171, %172 : vector<2x64xf32>
    %174 = arith.mulf %165, %149 : vector<2x64xf32>
    %175 = arith.mulf %159, %167 : vector<2x64xf32>
    %176 = arith.addf %174, %175 : vector<2x64xf32>
    %177 = math.tanh %176 : vector<2x64xf32>
    %178 = arith.mulf %173, %177 : vector<2x64xf32>
    %cst_27 = arith.constant dense<0.000000e+00> : vector<2x256xf32>
    %179 = tpu.matmul %178, %7, %cst_27 {dimension_numbers = #tpu.dot_dimension_numbers<[1], [0], [0], [1], [0, 0, 1, 1], [], []>} : vector<2x64xf32>, vector<64x256xf32>, vector<2x256xf32> -> vector<2x256xf32>
    %180 = arith.addf %59, %179 : vector<2x256xf32>
    %181 = vector.extract_strided_slice %180 {offsets = [0, 0], sizes = [2, 64], strides = [1, 1]} : vector<2x256xf32> to vector<2x64xf32>
    %182 = arith.negf %181 : vector<2x64xf32>
    %183 = math.exp %182 : vector<2x64xf32>
    %cst_28 = arith.constant 1.000000e+00 : f32
    %184 = vector.broadcast %cst_28 : f32 to vector<2x64xf32>
    %185 = arith.addf %184, %183 : vector<2x64xf32>
    %186 = arith.divf %184, %185 : vector<2x64xf32>
    %187 = vector.extract_strided_slice %180 {offsets = [0, 64], sizes = [2, 64], strides = [1, 1]} : vector<2x256xf32> to vector<2x64xf32>
    %188 = arith.negf %187 : vector<2x64xf32>
    %189 = math.exp %188 : vector<2x64xf32>
    %cst_29 = arith.constant 1.000000e+00 : f32
    %190 = vector.broadcast %cst_29 : f32 to vector<2x64xf32>
    %191 = arith.addf %190, %189 : vector<2x64xf32>
    %192 = arith.divf %190, %191 : vector<2x64xf32>
    %193 = vector.extract_strided_slice %180 {offsets = [0, 128], sizes = [2, 64], strides = [1, 1]} : vector<2x256xf32> to vector<2x64xf32>
    %194 = math.tanh %193 : vector<2x64xf32>
    %195 = vector.extract_strided_slice %180 {offsets = [0, 192], sizes = [2, 64], strides = [1, 1]} : vector<2x256xf32> to vector<2x64xf32>
    %196 = arith.negf %195 : vector<2x64xf32>
    %197 = math.exp %196 : vector<2x64xf32>
    %cst_30 = arith.constant 1.000000e+00 : f32
    %198 = vector.broadcast %cst_30 : f32 to vector<2x64xf32>
    %199 = arith.addf %198, %197 : vector<2x64xf32>
    %200 = arith.divf %198, %199 : vector<2x64xf32>
    %201 = arith.mulf %192, %176 : vector<2x64xf32>
    %202 = arith.mulf %186, %194 : vector<2x64xf32>
    %203 = arith.addf %201, %202 : vector<2x64xf32>
    %204 = math.tanh %203 : vector<2x64xf32>
    %205 = arith.mulf %200, %204 : vector<2x64xf32>
    %cst_31 = arith.constant dense<0.000000e+00> : vector<2x256xf32>
    %206 = tpu.matmul %205, %7, %cst_31 {dimension_numbers = #tpu.dot_dimension_numbers<[1], [0], [0], [1], [0, 0, 1, 1], [], []>} : vector<2x64xf32>, vector<64x256xf32>, vector<2x256xf32> -> vector<2x256xf32>
    %207 = arith.addf %62, %206 : vector<2x256xf32>
    %208 = vector.extract_strided_slice %207 {offsets = [0, 0], sizes = [2, 64], strides = [1, 1]} : vector<2x256xf32> to vector<2x64xf32>
    %209 = arith.negf %208 : vector<2x64xf32>
    %210 = math.exp %209 : vector<2x64xf32>
    %cst_32 = arith.constant 1.000000e+00 : f32
    %211 = vector.broadcast %cst_32 : f32 to vector<2x64xf32>
    %212 = arith.addf %211, %210 : vector<2x64xf32>
    %213 = arith.divf %211, %212 : vector<2x64xf32>
    %214 = vector.extract_strided_slice %207 {offsets = [0, 64], sizes = [2, 64], strides = [1, 1]} : vector<2x256xf32> to vector<2x64xf32>
    %215 = arith.negf %214 : vector<2x64xf32>
    %216 = math.exp %215 : vector<2x64xf32>
    %cst_33 = arith.constant 1.000000e+00 : f32
    %217 = vector.broadcast %cst_33 : f32 to vector<2x64xf32>
    %218 = arith.addf %217, %216 : vector<2x64xf32>
    %219 = arith.divf %217, %218 : vector<2x64xf32>
    %220 = vector.extract_strided_slice %207 {offsets = [0, 128], sizes = [2, 64], strides = [1, 1]} : vector<2x256xf32> to vector<2x64xf32>
    %221 = math.tanh %220 : vector<2x64xf32>
    %222 = vector.extract_strided_slice %207 {offsets = [0, 192], sizes = [2, 64], strides = [1, 1]} : vector<2x256xf32> to vector<2x64xf32>
    %223 = arith.negf %222 : vector<2x64xf32>
    %224 = math.exp %223 : vector<2x64xf32>
    %cst_34 = arith.constant 1.000000e+00 : f32
    %225 = vector.broadcast %cst_34 : f32 to vector<2x64xf32>
    %226 = arith.addf %225, %224 : vector<2x64xf32>
    %227 = arith.divf %225, %226 : vector<2x64xf32>
    %228 = arith.mulf %219, %203 : vector<2x64xf32>
    %229 = arith.mulf %213, %221 : vector<2x64xf32>
    %230 = arith.addf %228, %229 : vector<2x64xf32>
    %231 = math.tanh %230 : vector<2x64xf32>
    %232 = arith.mulf %227, %231 : vector<2x64xf32>
    %cst_35 = arith.constant dense<0.000000e+00> : vector<2x256xf32>
    %233 = tpu.matmul %232, %7, %cst_35 {dimension_numbers = #tpu.dot_dimension_numbers<[1], [0], [0], [1], [0, 0, 1, 1], [], []>} : vector<2x64xf32>, vector<64x256xf32>, vector<2x256xf32> -> vector<2x256xf32>
    %234 = arith.addf %65, %233 : vector<2x256xf32>
    %235 = vector.extract_strided_slice %234 {offsets = [0, 0], sizes = [2, 64], strides = [1, 1]} : vector<2x256xf32> to vector<2x64xf32>
    %236 = arith.negf %235 : vector<2x64xf32>
    %237 = math.exp %236 : vector<2x64xf32>
    %cst_36 = arith.constant 1.000000e+00 : f32
    %238 = vector.broadcast %cst_36 : f32 to vector<2x64xf32>
    %239 = arith.addf %238, %237 : vector<2x64xf32>
    %240 = arith.divf %238, %239 : vector<2x64xf32>
    %241 = vector.extract_strided_slice %234 {offsets = [0, 64], sizes = [2, 64], strides = [1, 1]} : vector<2x256xf32> to vector<2x64xf32>
    %242 = arith.negf %241 : vector<2x64xf32>
    %243 = math.exp %242 : vector<2x64xf32>
    %cst_37 = arith.constant 1.000000e+00 : f32
    %244 = vector.broadcast %cst_37 : f32 to vector<2x64xf32>
    %245 = arith.addf %244, %243 : vector<2x64xf32>
    %246 = arith.divf %244, %245 : vector<2x64xf32>
    %247 = vector.extract_strided_slice %234 {offsets = [0, 128], sizes = [2, 64], strides = [1, 1]} : vector<2x256xf32> to vector<2x64xf32>
    %248 = math.tanh %247 : vector<2x64xf32>
    %249 = vector.extract_strided_slice %234 {offsets = [0, 192], sizes = [2, 64], strides = [1, 1]} : vector<2x256xf32> to vector<2x64xf32>
    %250 = arith.negf %249 : vector<2x64xf32>
    %251 = math.exp %250 : vector<2x64xf32>
    %cst_38 = arith.constant 1.000000e+00 : f32
    %252 = vector.broadcast %cst_38 : f32 to vector<2x64xf32>
    %253 = arith.addf %252, %251 : vector<2x64xf32>
    %254 = arith.divf %252, %253 : vector<2x64xf32>
    %255 = arith.mulf %246, %230 : vector<2x64xf32>
    %256 = arith.mulf %240, %248 : vector<2x64xf32>
    %257 = arith.addf %255, %256 : vector<2x64xf32>
    %258 = math.tanh %257 : vector<2x64xf32>
    %259 = arith.mulf %254, %258 : vector<2x64xf32>
    %cst_39 = arith.constant dense<0.000000e+00> : vector<2x256xf32>
    %260 = tpu.matmul %259, %7, %cst_39 {dimension_numbers = #tpu.dot_dimension_numbers<[1], [0], [0], [1], [0, 0, 1, 1], [], []>} : vector<2x64xf32>, vector<64x256xf32>, vector<2x256xf32> -> vector<2x256xf32>
    %261 = arith.addf %68, %260 : vector<2x256xf32>
    %262 = vector.extract_strided_slice %261 {offsets = [0, 0], sizes = [2, 64], strides = [1, 1]} : vector<2x256xf32> to vector<2x64xf32>
    %263 = arith.negf %262 : vector<2x64xf32>
    %264 = math.exp %263 : vector<2x64xf32>
    %cst_40 = arith.constant 1.000000e+00 : f32
    %265 = vector.broadcast %cst_40 : f32 to vector<2x64xf32>
    %266 = arith.addf %265, %264 : vector<2x64xf32>
    %267 = arith.divf %265, %266 : vector<2x64xf32>
    %268 = vector.extract_strided_slice %261 {offsets = [0, 64], sizes = [2, 64], strides = [1, 1]} : vector<2x256xf32> to vector<2x64xf32>
    %269 = arith.negf %268 : vector<2x64xf32>
    %270 = math.exp %269 : vector<2x64xf32>
    %cst_41 = arith.constant 1.000000e+00 : f32
    %271 = vector.broadcast %cst_41 : f32 to vector<2x64xf32>
    %272 = arith.addf %271, %270 : vector<2x64xf32>
    %273 = arith.divf %271, %272 : vector<2x64xf32>
    %274 = vector.extract_strided_slice %261 {offsets = [0, 128], sizes = [2, 64], strides = [1, 1]} : vector<2x256xf32> to vector<2x64xf32>
    %275 = math.tanh %274 : vector<2x64xf32>
    %276 = vector.extract_strided_slice %261 {offsets = [0, 192], sizes = [2, 64], strides = [1, 1]} : vector<2x256xf32> to vector<2x64xf32>
    %277 = arith.negf %276 : vector<2x64xf32>
    %278 = math.exp %277 : vector<2x64xf32>
    %cst_42 = arith.constant 1.000000e+00 : f32
    %279 = vector.broadcast %cst_42 : f32 to vector<2x64xf32>
    %280 = arith.addf %279, %278 : vector<2x64xf32>
    %281 = arith.divf %279, %280 : vector<2x64xf32>
    %282 = arith.mulf %273, %257 : vector<2x64xf32>
    %283 = arith.mulf %267, %275 : vector<2x64xf32>
    %284 = arith.addf %282, %283 : vector<2x64xf32>
    %285 = math.tanh %284 : vector<2x64xf32>
    %286 = arith.mulf %281, %285 : vector<2x64xf32>
    %cst_43 = arith.constant dense<0.000000e+00> : vector<2x256xf32>
    %287 = tpu.matmul %286, %7, %cst_43 {dimension_numbers = #tpu.dot_dimension_numbers<[1], [0], [0], [1], [0, 0, 1, 1], [], []>} : vector<2x64xf32>, vector<64x256xf32>, vector<2x256xf32> -> vector<2x256xf32>
    %288 = arith.addf %71, %287 : vector<2x256xf32>
    %289 = vector.extract_strided_slice %288 {offsets = [0, 0], sizes = [2, 64], strides = [1, 1]} : vector<2x256xf32> to vector<2x64xf32>
    %290 = arith.negf %289 : vector<2x64xf32>
    %291 = math.exp %290 : vector<2x64xf32>
    %cst_44 = arith.constant 1.000000e+00 : f32
    %292 = vector.broadcast %cst_44 : f32 to vector<2x64xf32>
    %293 = arith.addf %292, %291 : vector<2x64xf32>
    %294 = arith.divf %292, %293 : vector<2x64xf32>
    %295 = vector.extract_strided_slice %288 {offsets = [0, 64], sizes = [2, 64], strides = [1, 1]} : vector<2x256xf32> to vector<2x64xf32>
    %296 = arith.negf %295 : vector<2x64xf32>
    %297 = math.exp %296 : vector<2x64xf32>
    %cst_45 = arith.constant 1.000000e+00 : f32
    %298 = vector.broadcast %cst_45 : f32 to vector<2x64xf32>
    %299 = arith.addf %298, %297 : vector<2x64xf32>
    %300 = arith.divf %298, %299 : vector<2x64xf32>
    %301 = vector.extract_strided_slice %288 {offsets = [0, 128], sizes = [2, 64], strides = [1, 1]} : vector<2x256xf32> to vector<2x64xf32>
    %302 = math.tanh %301 : vector<2x64xf32>
    %303 = vector.extract_strided_slice %288 {offsets = [0, 192], sizes = [2, 64], strides = [1, 1]} : vector<2x256xf32> to vector<2x64xf32>
    %304 = arith.negf %303 : vector<2x64xf32>
    %305 = math.exp %304 : vector<2x64xf32>
    %cst_46 = arith.constant 1.000000e+00 : f32
    %306 = vector.broadcast %cst_46 : f32 to vector<2x64xf32>
    %307 = arith.addf %306, %305 : vector<2x64xf32>
    %308 = arith.divf %306, %307 : vector<2x64xf32>
    %309 = arith.mulf %300, %284 : vector<2x64xf32>
    %310 = arith.mulf %294, %302 : vector<2x64xf32>
    %311 = arith.addf %309, %310 : vector<2x64xf32>
    %312 = math.tanh %311 : vector<2x64xf32>
    %313 = arith.mulf %308, %312 : vector<2x64xf32>
    %cst_47 = arith.constant dense<0.000000e+00> : vector<2x256xf32>
    %314 = tpu.matmul %313, %7, %cst_47 {dimension_numbers = #tpu.dot_dimension_numbers<[1], [0], [0], [1], [0, 0, 1, 1], [], []>} : vector<2x64xf32>, vector<64x256xf32>, vector<2x256xf32> -> vector<2x256xf32>
    %315 = arith.addf %74, %314 : vector<2x256xf32>
    %316 = vector.extract_strided_slice %315 {offsets = [0, 0], sizes = [2, 64], strides = [1, 1]} : vector<2x256xf32> to vector<2x64xf32>
    %317 = arith.negf %316 : vector<2x64xf32>
    %318 = math.exp %317 : vector<2x64xf32>
    %cst_48 = arith.constant 1.000000e+00 : f32
    %319 = vector.broadcast %cst_48 : f32 to vector<2x64xf32>
    %320 = arith.addf %319, %318 : vector<2x64xf32>
    %321 = arith.divf %319, %320 : vector<2x64xf32>
    %322 = vector.extract_strided_slice %315 {offsets = [0, 64], sizes = [2, 64], strides = [1, 1]} : vector<2x256xf32> to vector<2x64xf32>
    %323 = arith.negf %322 : vector<2x64xf32>
    %324 = math.exp %323 : vector<2x64xf32>
    %cst_49 = arith.constant 1.000000e+00 : f32
    %325 = vector.broadcast %cst_49 : f32 to vector<2x64xf32>
    %326 = arith.addf %325, %324 : vector<2x64xf32>
    %327 = arith.divf %325, %326 : vector<2x64xf32>
    %328 = vector.extract_strided_slice %315 {offsets = [0, 128], sizes = [2, 64], strides = [1, 1]} : vector<2x256xf32> to vector<2x64xf32>
    %329 = math.tanh %328 : vector<2x64xf32>
    %330 = vector.extract_strided_slice %315 {offsets = [0, 192], sizes = [2, 64], strides = [1, 1]} : vector<2x256xf32> to vector<2x64xf32>
    %331 = arith.negf %330 : vector<2x64xf32>
    %332 = math.exp %331 : vector<2x64xf32>
    %cst_50 = arith.constant 1.000000e+00 : f32
    %333 = vector.broadcast %cst_50 : f32 to vector<2x64xf32>
    %334 = arith.addf %333, %332 : vector<2x64xf32>
    %335 = arith.divf %333, %334 : vector<2x64xf32>
    %336 = arith.mulf %327, %311 : vector<2x64xf32>
    %337 = arith.mulf %321, %329 : vector<2x64xf32>
    %338 = arith.addf %336, %337 : vector<2x64xf32>
    %339 = math.tanh %338 : vector<2x64xf32>
    %340 = arith.mulf %335, %339 : vector<2x64xf32>
    %cst_51 = arith.constant dense<0.000000e+00> : vector<2x256xf32>
    %341 = tpu.matmul %340, %7, %cst_51 {dimension_numbers = #tpu.dot_dimension_numbers<[1], [0], [0], [1], [0, 0, 1, 1], [], []>} : vector<2x64xf32>, vector<64x256xf32>, vector<2x256xf32> -> vector<2x256xf32>
    %342 = arith.addf %77, %341 : vector<2x256xf32>
    %343 = vector.extract_strided_slice %342 {offsets = [0, 0], sizes = [2, 64], strides = [1, 1]} : vector<2x256xf32> to vector<2x64xf32>
    %344 = arith.negf %343 : vector<2x64xf32>
    %345 = math.exp %344 : vector<2x64xf32>
    %cst_52 = arith.constant 1.000000e+00 : f32
    %346 = vector.broadcast %cst_52 : f32 to vector<2x64xf32>
    %347 = arith.addf %346, %345 : vector<2x64xf32>
    %348 = arith.divf %346, %347 : vector<2x64xf32>
    %349 = vector.extract_strided_slice %342 {offsets = [0, 64], sizes = [2, 64], strides = [1, 1]} : vector<2x256xf32> to vector<2x64xf32>
    %350 = arith.negf %349 : vector<2x64xf32>
    %351 = math.exp %350 : vector<2x64xf32>
    %cst_53 = arith.constant 1.000000e+00 : f32
    %352 = vector.broadcast %cst_53 : f32 to vector<2x64xf32>
    %353 = arith.addf %352, %351 : vector<2x64xf32>
    %354 = arith.divf %352, %353 : vector<2x64xf32>
    %355 = vector.extract_strided_slice %342 {offsets = [0, 128], sizes = [2, 64], strides = [1, 1]} : vector<2x256xf32> to vector<2x64xf32>
    %356 = math.tanh %355 : vector<2x64xf32>
    %357 = vector.extract_strided_slice %342 {offsets = [0, 192], sizes = [2, 64], strides = [1, 1]} : vector<2x256xf32> to vector<2x64xf32>
    %358 = arith.negf %357 : vector<2x64xf32>
    %359 = math.exp %358 : vector<2x64xf32>
    %cst_54 = arith.constant 1.000000e+00 : f32
    %360 = vector.broadcast %cst_54 : f32 to vector<2x64xf32>
    %361 = arith.addf %360, %359 : vector<2x64xf32>
    %362 = arith.divf %360, %361 : vector<2x64xf32>
    %363 = arith.mulf %354, %338 : vector<2x64xf32>
    %364 = arith.mulf %348, %356 : vector<2x64xf32>
    %365 = arith.addf %363, %364 : vector<2x64xf32>
    %366 = math.tanh %365 : vector<2x64xf32>
    %367 = arith.mulf %362, %366 : vector<2x64xf32>
    %cst_55 = arith.constant dense<0.000000e+00> : vector<2x256xf32>
    %368 = tpu.matmul %367, %7, %cst_55 {dimension_numbers = #tpu.dot_dimension_numbers<[1], [0], [0], [1], [0, 0, 1, 1], [], []>} : vector<2x64xf32>, vector<64x256xf32>, vector<2x256xf32> -> vector<2x256xf32>
    %369 = arith.addf %80, %368 : vector<2x256xf32>
    %370 = vector.extract_strided_slice %369 {offsets = [0, 0], sizes = [2, 64], strides = [1, 1]} : vector<2x256xf32> to vector<2x64xf32>
    %371 = arith.negf %370 : vector<2x64xf32>
    %372 = math.exp %371 : vector<2x64xf32>
    %cst_56 = arith.constant 1.000000e+00 : f32
    %373 = vector.broadcast %cst_56 : f32 to vector<2x64xf32>
    %374 = arith.addf %373, %372 : vector<2x64xf32>
    %375 = arith.divf %373, %374 : vector<2x64xf32>
    %376 = vector.extract_strided_slice %369 {offsets = [0, 64], sizes = [2, 64], strides = [1, 1]} : vector<2x256xf32> to vector<2x64xf32>
    %377 = arith.negf %376 : vector<2x64xf32>
    %378 = math.exp %377 : vector<2x64xf32>
    %cst_57 = arith.constant 1.000000e+00 : f32
    %379 = vector.broadcast %cst_57 : f32 to vector<2x64xf32>
    %380 = arith.addf %379, %378 : vector<2x64xf32>
    %381 = arith.divf %379, %380 : vector<2x64xf32>
    %382 = vector.extract_strided_slice %369 {offsets = [0, 128], sizes = [2, 64], strides = [1, 1]} : vector<2x256xf32> to vector<2x64xf32>
    %383 = math.tanh %382 : vector<2x64xf32>
    %384 = vector.extract_strided_slice %369 {offsets = [0, 192], sizes = [2, 64], strides = [1, 1]} : vector<2x256xf32> to vector<2x64xf32>
    %385 = arith.negf %384 : vector<2x64xf32>
    %386 = math.exp %385 : vector<2x64xf32>
    %cst_58 = arith.constant 1.000000e+00 : f32
    %387 = vector.broadcast %cst_58 : f32 to vector<2x64xf32>
    %388 = arith.addf %387, %386 : vector<2x64xf32>
    %389 = arith.divf %387, %388 : vector<2x64xf32>
    %390 = arith.mulf %381, %365 : vector<2x64xf32>
    %391 = arith.mulf %375, %383 : vector<2x64xf32>
    %392 = arith.addf %390, %391 : vector<2x64xf32>
    %393 = math.tanh %392 : vector<2x64xf32>
    %394 = arith.mulf %389, %393 : vector<2x64xf32>
    %cst_59 = arith.constant dense<0.000000e+00> : vector<2x256xf32>
    %395 = tpu.matmul %394, %7, %cst_59 {dimension_numbers = #tpu.dot_dimension_numbers<[1], [0], [0], [1], [0, 0, 1, 1], [], []>} : vector<2x64xf32>, vector<64x256xf32>, vector<2x256xf32> -> vector<2x256xf32>
    %396 = arith.addf %83, %395 : vector<2x256xf32>
    %397 = vector.extract_strided_slice %396 {offsets = [0, 0], sizes = [2, 64], strides = [1, 1]} : vector<2x256xf32> to vector<2x64xf32>
    %398 = arith.negf %397 : vector<2x64xf32>
    %399 = math.exp %398 : vector<2x64xf32>
    %cst_60 = arith.constant 1.000000e+00 : f32
    %400 = vector.broadcast %cst_60 : f32 to vector<2x64xf32>
    %401 = arith.addf %400, %399 : vector<2x64xf32>
    %402 = arith.divf %400, %401 : vector<2x64xf32>
    %403 = vector.extract_strided_slice %396 {offsets = [0, 64], sizes = [2, 64], strides = [1, 1]} : vector<2x256xf32> to vector<2x64xf32>
    %404 = arith.negf %403 : vector<2x64xf32>
    %405 = math.exp %404 : vector<2x64xf32>
    %cst_61 = arith.constant 1.000000e+00 : f32
    %406 = vector.broadcast %cst_61 : f32 to vector<2x64xf32>
    %407 = arith.addf %406, %405 : vector<2x64xf32>
    %408 = arith.divf %406, %407 : vector<2x64xf32>
    %409 = vector.extract_strided_slice %396 {offsets = [0, 128], sizes = [2, 64], strides = [1, 1]} : vector<2x256xf32> to vector<2x64xf32>
    %410 = math.tanh %409 : vector<2x64xf32>
    %411 = vector.extract_strided_slice %396 {offsets = [0, 192], sizes = [2, 64], strides = [1, 1]} : vector<2x256xf32> to vector<2x64xf32>
    %412 = arith.negf %411 : vector<2x64xf32>
    %413 = math.exp %412 : vector<2x64xf32>
    %cst_62 = arith.constant 1.000000e+00 : f32
    %414 = vector.broadcast %cst_62 : f32 to vector<2x64xf32>
    %415 = arith.addf %414, %413 : vector<2x64xf32>
    %416 = arith.divf %414, %415 : vector<2x64xf32>
    %417 = arith.mulf %408, %392 : vector<2x64xf32>
    %418 = arith.mulf %402, %410 : vector<2x64xf32>
    %419 = arith.addf %417, %418 : vector<2x64xf32>
    %420 = math.tanh %419 : vector<2x64xf32>
    %421 = arith.mulf %416, %420 : vector<2x64xf32>
    %cst_63 = arith.constant dense<0.000000e+00> : vector<2x256xf32>
    %422 = tpu.matmul %421, %7, %cst_63 {dimension_numbers = #tpu.dot_dimension_numbers<[1], [0], [0], [1], [0, 0, 1, 1], [], []>} : vector<2x64xf32>, vector<64x256xf32>, vector<2x256xf32> -> vector<2x256xf32>
    %423 = arith.addf %86, %422 : vector<2x256xf32>
    %424 = vector.extract_strided_slice %423 {offsets = [0, 0], sizes = [2, 64], strides = [1, 1]} : vector<2x256xf32> to vector<2x64xf32>
    %425 = arith.negf %424 : vector<2x64xf32>
    %426 = math.exp %425 : vector<2x64xf32>
    %cst_64 = arith.constant 1.000000e+00 : f32
    %427 = vector.broadcast %cst_64 : f32 to vector<2x64xf32>
    %428 = arith.addf %427, %426 : vector<2x64xf32>
    %429 = arith.divf %427, %428 : vector<2x64xf32>
    %430 = vector.extract_strided_slice %423 {offsets = [0, 64], sizes = [2, 64], strides = [1, 1]} : vector<2x256xf32> to vector<2x64xf32>
    %431 = arith.negf %430 : vector<2x64xf32>
    %432 = math.exp %431 : vector<2x64xf32>
    %cst_65 = arith.constant 1.000000e+00 : f32
    %433 = vector.broadcast %cst_65 : f32 to vector<2x64xf32>
    %434 = arith.addf %433, %432 : vector<2x64xf32>
    %435 = arith.divf %433, %434 : vector<2x64xf32>
    %436 = vector.extract_strided_slice %423 {offsets = [0, 128], sizes = [2, 64], strides = [1, 1]} : vector<2x256xf32> to vector<2x64xf32>
    %437 = math.tanh %436 : vector<2x64xf32>
    %438 = vector.extract_strided_slice %423 {offsets = [0, 192], sizes = [2, 64], strides = [1, 1]} : vector<2x256xf32> to vector<2x64xf32>
    %439 = arith.negf %438 : vector<2x64xf32>
    %440 = math.exp %439 : vector<2x64xf32>
    %cst_66 = arith.constant 1.000000e+00 : f32
    %441 = vector.broadcast %cst_66 : f32 to vector<2x64xf32>
    %442 = arith.addf %441, %440 : vector<2x64xf32>
    %443 = arith.divf %441, %442 : vector<2x64xf32>
    %444 = arith.mulf %435, %419 : vector<2x64xf32>
    %445 = arith.mulf %429, %437 : vector<2x64xf32>
    %446 = arith.addf %444, %445 : vector<2x64xf32>
    %447 = math.tanh %446 : vector<2x64xf32>
    %448 = arith.mulf %443, %447 : vector<2x64xf32>
    %cst_67 = arith.constant dense<0.000000e+00> : vector<2x256xf32>
    %449 = tpu.matmul %448, %7, %cst_67 {dimension_numbers = #tpu.dot_dimension_numbers<[1], [0], [0], [1], [0, 0, 1, 1], [], []>} : vector<2x64xf32>, vector<64x256xf32>, vector<2x256xf32> -> vector<2x256xf32>
    %450 = arith.addf %89, %449 : vector<2x256xf32>
    %451 = vector.extract_strided_slice %450 {offsets = [0, 0], sizes = [2, 64], strides = [1, 1]} : vector<2x256xf32> to vector<2x64xf32>
    %452 = arith.negf %451 : vector<2x64xf32>
    %453 = math.exp %452 : vector<2x64xf32>
    %cst_68 = arith.constant 1.000000e+00 : f32
    %454 = vector.broadcast %cst_68 : f32 to vector<2x64xf32>
    %455 = arith.addf %454, %453 : vector<2x64xf32>
    %456 = arith.divf %454, %455 : vector<2x64xf32>
    %457 = vector.extract_strided_slice %450 {offsets = [0, 64], sizes = [2, 64], strides = [1, 1]} : vector<2x256xf32> to vector<2x64xf32>
    %458 = arith.negf %457 : vector<2x64xf32>
    %459 = math.exp %458 : vector<2x64xf32>
    %cst_69 = arith.constant 1.000000e+00 : f32
    %460 = vector.broadcast %cst_69 : f32 to vector<2x64xf32>
    %461 = arith.addf %460, %459 : vector<2x64xf32>
    %462 = arith.divf %460, %461 : vector<2x64xf32>
    %463 = vector.extract_strided_slice %450 {offsets = [0, 128], sizes = [2, 64], strides = [1, 1]} : vector<2x256xf32> to vector<2x64xf32>
    %464 = math.tanh %463 : vector<2x64xf32>
    %465 = vector.extract_strided_slice %450 {offsets = [0, 192], sizes = [2, 64], strides = [1, 1]} : vector<2x256xf32> to vector<2x64xf32>
    %466 = arith.negf %465 : vector<2x64xf32>
    %467 = math.exp %466 : vector<2x64xf32>
    %cst_70 = arith.constant 1.000000e+00 : f32
    %468 = vector.broadcast %cst_70 : f32 to vector<2x64xf32>
    %469 = arith.addf %468, %467 : vector<2x64xf32>
    %470 = arith.divf %468, %469 : vector<2x64xf32>
    %471 = arith.mulf %462, %446 : vector<2x64xf32>
    %472 = arith.mulf %456, %464 : vector<2x64xf32>
    %473 = arith.addf %471, %472 : vector<2x64xf32>
    %474 = math.tanh %473 : vector<2x64xf32>
    %475 = arith.mulf %470, %474 : vector<2x64xf32>
    %cst_71 = arith.constant dense<0.000000e+00> : vector<2x256xf32>
    %476 = tpu.matmul %475, %7, %cst_71 {dimension_numbers = #tpu.dot_dimension_numbers<[1], [0], [0], [1], [0, 0, 1, 1], [], []>} : vector<2x64xf32>, vector<64x256xf32>, vector<2x256xf32> -> vector<2x256xf32>
    %477 = arith.addf %92, %476 : vector<2x256xf32>
    %478 = vector.extract_strided_slice %477 {offsets = [0, 0], sizes = [2, 64], strides = [1, 1]} : vector<2x256xf32> to vector<2x64xf32>
    %479 = arith.negf %478 : vector<2x64xf32>
    %480 = math.exp %479 : vector<2x64xf32>
    %cst_72 = arith.constant 1.000000e+00 : f32
    %481 = vector.broadcast %cst_72 : f32 to vector<2x64xf32>
    %482 = arith.addf %481, %480 : vector<2x64xf32>
    %483 = arith.divf %481, %482 : vector<2x64xf32>
    %484 = vector.extract_strided_slice %477 {offsets = [0, 64], sizes = [2, 64], strides = [1, 1]} : vector<2x256xf32> to vector<2x64xf32>
    %485 = arith.negf %484 : vector<2x64xf32>
    %486 = math.exp %485 : vector<2x64xf32>
    %cst_73 = arith.constant 1.000000e+00 : f32
    %487 = vector.broadcast %cst_73 : f32 to vector<2x64xf32>
    %488 = arith.addf %487, %486 : vector<2x64xf32>
    %489 = arith.divf %487, %488 : vector<2x64xf32>
    %490 = vector.extract_strided_slice %477 {offsets = [0, 128], sizes = [2, 64], strides = [1, 1]} : vector<2x256xf32> to vector<2x64xf32>
    %491 = math.tanh %490 : vector<2x64xf32>
    %492 = vector.extract_strided_slice %477 {offsets = [0, 192], sizes = [2, 64], strides = [1, 1]} : vector<2x256xf32> to vector<2x64xf32>
    %493 = arith.negf %492 : vector<2x64xf32>
    %494 = math.exp %493 : vector<2x64xf32>
    %cst_74 = arith.constant 1.000000e+00 : f32
    %495 = vector.broadcast %cst_74 : f32 to vector<2x64xf32>
    %496 = arith.addf %495, %494 : vector<2x64xf32>
    %497 = arith.divf %495, %496 : vector<2x64xf32>
    %498 = arith.mulf %489, %473 : vector<2x64xf32>
    %499 = arith.mulf %483, %491 : vector<2x64xf32>
    %500 = arith.addf %498, %499 : vector<2x64xf32>
    %501 = math.tanh %500 : vector<2x64xf32>
    %502 = arith.mulf %497, %501 : vector<2x64xf32>
    %cst_75 = arith.constant dense<0.000000e+00> : vector<2x256xf32>
    %503 = tpu.matmul %502, %7, %cst_75 {dimension_numbers = #tpu.dot_dimension_numbers<[1], [0], [0], [1], [0, 0, 1, 1], [], []>} : vector<2x64xf32>, vector<64x256xf32>, vector<2x256xf32> -> vector<2x256xf32>
    %504 = arith.addf %95, %503 : vector<2x256xf32>
    %505 = vector.extract_strided_slice %504 {offsets = [0, 0], sizes = [2, 64], strides = [1, 1]} : vector<2x256xf32> to vector<2x64xf32>
    %506 = arith.negf %505 : vector<2x64xf32>
    %507 = math.exp %506 : vector<2x64xf32>
    %cst_76 = arith.constant 1.000000e+00 : f32
    %508 = vector.broadcast %cst_76 : f32 to vector<2x64xf32>
    %509 = arith.addf %508, %507 : vector<2x64xf32>
    %510 = arith.divf %508, %509 : vector<2x64xf32>
    %511 = vector.extract_strided_slice %504 {offsets = [0, 64], sizes = [2, 64], strides = [1, 1]} : vector<2x256xf32> to vector<2x64xf32>
    %512 = arith.negf %511 : vector<2x64xf32>
    %513 = math.exp %512 : vector<2x64xf32>
    %cst_77 = arith.constant 1.000000e+00 : f32
    %514 = vector.broadcast %cst_77 : f32 to vector<2x64xf32>
    %515 = arith.addf %514, %513 : vector<2x64xf32>
    %516 = arith.divf %514, %515 : vector<2x64xf32>
    %517 = vector.extract_strided_slice %504 {offsets = [0, 128], sizes = [2, 64], strides = [1, 1]} : vector<2x256xf32> to vector<2x64xf32>
    %518 = math.tanh %517 : vector<2x64xf32>
    %519 = vector.extract_strided_slice %504 {offsets = [0, 192], sizes = [2, 64], strides = [1, 1]} : vector<2x256xf32> to vector<2x64xf32>
    %520 = arith.negf %519 : vector<2x64xf32>
    %521 = math.exp %520 : vector<2x64xf32>
    %cst_78 = arith.constant 1.000000e+00 : f32
    %522 = vector.broadcast %cst_78 : f32 to vector<2x64xf32>
    %523 = arith.addf %522, %521 : vector<2x64xf32>
    %524 = arith.divf %522, %523 : vector<2x64xf32>
    %525 = arith.mulf %516, %500 : vector<2x64xf32>
    %526 = arith.mulf %510, %518 : vector<2x64xf32>
    %527 = arith.addf %525, %526 : vector<2x64xf32>
    %528 = math.tanh %527 : vector<2x64xf32>
    %529 = arith.mulf %524, %528 : vector<2x64xf32>
    %530 = tpu.iota {dimensions = array<i32: 1>} : vector<2x64xi32>
    %c32_i32_79 = arith.constant 32 : i32
    %531 = vector.broadcast %c32_i32_79 : i32 to vector<2x64xi32>
    %532 = arith.cmpi slt, %530, %531 : vector<2x64xi32>
    %533 = arith.select %532, %124, %529 : vector<2x64xi1>, vector<2x64xf32>
    %534 = arith.select %532, %151, %502 : vector<2x64xi1>, vector<2x64xf32>
    %535 = arith.select %532, %178, %475 : vector<2x64xi1>, vector<2x64xf32>
    %536 = arith.select %532, %205, %448 : vector<2x64xi1>, vector<2x64xf32>
    %537 = arith.select %532, %232, %421 : vector<2x64xi1>, vector<2x64xf32>
    %538 = arith.select %532, %259, %394 : vector<2x64xi1>, vector<2x64xf32>
    %539 = arith.select %532, %286, %367 : vector<2x64xi1>, vector<2x64xf32>
    %540 = arith.select %532, %313, %340 : vector<2x64xi1>, vector<2x64xf32>
    %541 = arith.select %532, %340, %313 : vector<2x64xi1>, vector<2x64xf32>
    %542 = arith.select %532, %367, %286 : vector<2x64xi1>, vector<2x64xf32>
    %543 = arith.select %532, %394, %259 : vector<2x64xi1>, vector<2x64xf32>
    %544 = arith.select %532, %421, %232 : vector<2x64xi1>, vector<2x64xf32>
    %545 = arith.select %532, %448, %205 : vector<2x64xi1>, vector<2x64xf32>
    %546 = arith.select %532, %475, %178 : vector<2x64xi1>, vector<2x64xf32>
    %547 = arith.select %532, %502, %151 : vector<2x64xi1>, vector<2x64xf32>
    %548 = arith.select %532, %529, %124 : vector<2x64xi1>, vector<2x64xf32>
    %549 = tpu.concatenate %533, %534, %535, %536, %537, %538, %539, %540, %541, %542, %543, %544, %545, %546, %547, %548 in 0 : vector<2x64xf32>, vector<2x64xf32>, vector<2x64xf32>, vector<2x64xf32>, vector<2x64xf32>, vector<2x64xf32>, vector<2x64xf32>, vector<2x64xf32>, vector<2x64xf32>, vector<2x64xf32>, vector<2x64xf32>, vector<2x64xf32>, vector<2x64xf32>, vector<2x64xf32>, vector<2x64xf32>, vector<2x64xf32> -> vector<32x64xf32>
    %c0_80 = arith.constant 0 : index
    %c0_81 = arith.constant 0 : index
    %550 = vector.load %arg8[%c0_80, %c0_81] : memref<4x32xf32, #tpu.memory_space<vmem>>, vector<4x32xf32>
    %cst_82 = arith.constant dense<0.000000e+00> : vector<32x32xf32>
    %551 = tpu.matmul %6, %550, %cst_82 {dimension_numbers = #tpu.dot_dimension_numbers<[1], [0], [0], [1], [0, 0, 1, 1], [], []>} : vector<32x4xf32>, vector<4x32xf32>, vector<32x32xf32> -> vector<32x32xf32>
    %c0_83 = arith.constant 0 : index
    %c2176 = arith.constant 2176 : index
    %552 = vector.load %arg12[%c0_83, %c2176] : memref<1x2688xf32, #tpu.memory_space<vmem>>, vector<1x32xf32>
    %553 = vector.broadcast %552 : vector<1x32xf32> to vector<32x32xf32>
    %554 = arith.addf %551, %553 : vector<32x32xf32>
    %c0_84 = arith.constant 0 : index
    %c0_85 = arith.constant 0 : index
    %555 = vector.load %arg1[%c0_84, %c0_85] : memref<32x32xf32, #tpu.memory_space<vmem>>, vector<32x32xf32>
    %c0_86 = arith.constant 0 : index
    %c256 = arith.constant 256 : index
    %556 = vector.load %arg12[%c0_86, %c256] : memref<1x2688xf32, #tpu.memory_space<vmem>>, vector<1x256xf32>
    %cst_87 = arith.constant dense<0.000000e+00> : vector<32x4xf32>
    %557 = tpu.matmul %555, %6, %cst_87 {dimension_numbers = #tpu.dot_dimension_numbers<[1], [0], [0], [1], [0, 0, 1, 1], [], []>} : vector<32x32xf32>, vector<32x4xf32>, vector<32x4xf32> -> vector<32x4xf32>
    %c0_88 = arith.constant 0 : index
    %c0_89 = arith.constant 0 : index
    %558 = vector.load %arg4[%c0_88, %c0_89] : memref<8x256xf32, #tpu.memory_space<vmem>>, vector<4x256xf32>
    %cst_90 = arith.constant dense<0.000000e+00> : vector<32x256xf32>
    %559 = tpu.matmul %6, %558, %cst_90 {dimension_numbers = #tpu.dot_dimension_numbers<[1], [0], [0], [1], [0, 0, 1, 1], [], []>} : vector<32x4xf32>, vector<4x256xf32>, vector<32x256xf32> -> vector<32x256xf32>
    %c4 = arith.constant 4 : index
    %c0_91 = arith.constant 0 : index
    %560 = vector.load %arg4[%c4, %c0_91] : memref<8x256xf32, #tpu.memory_space<vmem>>, vector<4x256xf32>
    %cst_92 = arith.constant dense<0.000000e+00> : vector<32x256xf32>
    %561 = tpu.matmul %557, %560, %cst_92 {dimension_numbers = #tpu.dot_dimension_numbers<[1], [0], [0], [1], [0, 0, 1, 1], [], []>} : vector<32x4xf32>, vector<4x256xf32>, vector<32x256xf32> -> vector<32x256xf32>
    %562 = arith.addf %559, %561 : vector<32x256xf32>
    %563 = vector.broadcast %556 : vector<1x256xf32> to vector<32x256xf32>
    %564 = arith.addf %562, %563 : vector<32x256xf32>
    %cst_93 = arith.constant 0.000000e+00 : f32
    %565 = vector.broadcast %cst_93 : f32 to vector<32x256xf32>
    %566 = arith.maximumf %564, %565 : vector<32x256xf32>
    %c0_i32_94 = arith.constant 0 : i32
    %567 = tpu.memref_slice %arg16[%c0_i32_94] : memref<2x!tpu.dma_semaphore, #tpu.memory_space<semaphore_mem>> -> memref<1x!tpu.dma_semaphore, #tpu.memory_space<semaphore_mem>>
    %568 = tpu.memref_squeeze %567 : memref<1x!tpu.dma_semaphore, #tpu.memory_space<semaphore_mem>> -> memref<!tpu.dma_semaphore, #tpu.memory_space<semaphore_mem>>
    tpu.wait_dma2 semaphore(%568 : memref<!tpu.dma_semaphore, #tpu.memory_space<semaphore_mem>>) src(%arg5 : memref<512x1024xf32, #tpu.memory_space<any>>) dst(%arg14 : memref<512x1024xf32, #tpu.memory_space<vmem>>)
    %c0_95 = arith.constant 0 : index
    %c512 = arith.constant 512 : index
    %569 = vector.load %arg12[%c0_95, %c512] : memref<1x2688xf32, #tpu.memory_space<vmem>>, vector<1x1024xf32>
    %cst_96 = arith.constant dense<0.000000e+00> : vector<32x256xf32>
    %570 = tpu.matmul %555, %566, %cst_96 {dimension_numbers = #tpu.dot_dimension_numbers<[1], [0], [0], [1], [0, 0, 1, 1], [], []>} : vector<32x32xf32>, vector<32x256xf32>, vector<32x256xf32> -> vector<32x256xf32>
    %c0_97 = arith.constant 0 : index
    %c0_98 = arith.constant 0 : index
    %571 = vector.load %arg14[%c0_97, %c0_98] : memref<512x1024xf32, #tpu.memory_space<vmem>>, vector<256x1024xf32>
    %cst_99 = arith.constant dense<0.000000e+00> : vector<32x1024xf32>
    %572 = tpu.matmul %566, %571, %cst_99 {dimension_numbers = #tpu.dot_dimension_numbers<[1], [0], [0], [1], [0, 0, 1, 1], [], []>} : vector<32x256xf32>, vector<256x1024xf32>, vector<32x1024xf32> -> vector<32x1024xf32>
    %c256_100 = arith.constant 256 : index
    %c0_101 = arith.constant 0 : index
    %573 = vector.load %arg14[%c256_100, %c0_101] : memref<512x1024xf32, #tpu.memory_space<vmem>>, vector<256x1024xf32>
    %cst_102 = arith.constant dense<0.000000e+00> : vector<32x1024xf32>
    %574 = tpu.matmul %570, %573, %cst_102 {dimension_numbers = #tpu.dot_dimension_numbers<[1], [0], [0], [1], [0, 0, 1, 1], [], []>} : vector<32x256xf32>, vector<256x1024xf32>, vector<32x1024xf32> -> vector<32x1024xf32>
    %575 = arith.addf %572, %574 : vector<32x1024xf32>
    %576 = vector.broadcast %569 : vector<1x1024xf32> to vector<32x1024xf32>
    %577 = arith.addf %575, %576 : vector<32x1024xf32>
    %cst_103 = arith.constant 0.000000e+00 : f32
    %578 = vector.broadcast %cst_103 : f32 to vector<32x1024xf32>
    %579 = arith.maximumf %577, %578 : vector<32x1024xf32>
    %c1_i32_104 = arith.constant 1 : i32
    %580 = tpu.memref_slice %arg16[%c1_i32_104] : memref<2x!tpu.dma_semaphore, #tpu.memory_space<semaphore_mem>> -> memref<1x!tpu.dma_semaphore, #tpu.memory_space<semaphore_mem>>
    %581 = tpu.memref_squeeze %580 : memref<1x!tpu.dma_semaphore, #tpu.memory_space<semaphore_mem>> -> memref<!tpu.dma_semaphore, #tpu.memory_space<semaphore_mem>>
    tpu.wait_dma2 semaphore(%581 : memref<!tpu.dma_semaphore, #tpu.memory_space<semaphore_mem>>) src(%arg6 : memref<2048x512xf32, #tpu.memory_space<any>>) dst(%arg15 : memref<2048x512xf32, #tpu.memory_space<vmem>>)
    %c0_105 = arith.constant 0 : index
    %c1536 = arith.constant 1536 : index
    %582 = vector.load %arg12[%c0_105, %c1536] : memref<1x2688xf32, #tpu.memory_space<vmem>>, vector<1x512xf32>
    %cst_106 = arith.constant dense<0.000000e+00> : vector<32x1024xf32>
    %583 = tpu.matmul %555, %579, %cst_106 {dimension_numbers = #tpu.dot_dimension_numbers<[1], [0], [0], [1], [0, 0, 1, 1], [], []>} : vector<32x32xf32>, vector<32x1024xf32>, vector<32x1024xf32> -> vector<32x1024xf32>
    %c0_107 = arith.constant 0 : index
    %c0_108 = arith.constant 0 : index
    %584 = vector.load %arg15[%c0_107, %c0_108] : memref<2048x512xf32, #tpu.memory_space<vmem>>, vector<1024x512xf32>
    %cst_109 = arith.constant dense<0.000000e+00> : vector<32x512xf32>
    %585 = tpu.matmul %579, %584, %cst_109 {dimension_numbers = #tpu.dot_dimension_numbers<[1], [0], [0], [1], [0, 0, 1, 1], [], []>} : vector<32x1024xf32>, vector<1024x512xf32>, vector<32x512xf32> -> vector<32x512xf32>
    %c1024 = arith.constant 1024 : index
    %c0_110 = arith.constant 0 : index
    %586 = vector.load %arg15[%c1024, %c0_110] : memref<2048x512xf32, #tpu.memory_space<vmem>>, vector<1024x512xf32>
    %cst_111 = arith.constant dense<0.000000e+00> : vector<32x512xf32>
    %587 = tpu.matmul %583, %586, %cst_111 {dimension_numbers = #tpu.dot_dimension_numbers<[1], [0], [0], [1], [0, 0, 1, 1], [], []>} : vector<32x1024xf32>, vector<1024x512xf32>, vector<32x512xf32> -> vector<32x512xf32>
    %588 = arith.addf %585, %587 : vector<32x512xf32>
    %589 = vector.broadcast %582 : vector<1x512xf32> to vector<32x512xf32>
    %590 = arith.addf %588, %589 : vector<32x512xf32>
    %cst_112 = arith.constant 0.000000e+00 : f32
    %591 = vector.broadcast %cst_112 : f32 to vector<32x512xf32>
    %592 = arith.maximumf %590, %591 : vector<32x512xf32>
    %c0_113 = arith.constant 0 : index
    %c2048 = arith.constant 2048 : index
    %593 = vector.load %arg12[%c0_113, %c2048] : memref<1x2688xf32, #tpu.memory_space<vmem>>, vector<1x32xf32>
    %cst_114 = arith.constant dense<0.000000e+00> : vector<32x512xf32>
    %594 = tpu.matmul %555, %592, %cst_114 {dimension_numbers = #tpu.dot_dimension_numbers<[1], [0], [0], [1], [0, 0, 1, 1], [], []>} : vector<32x32xf32>, vector<32x512xf32>, vector<32x512xf32> -> vector<32x512xf32>
    %c0_115 = arith.constant 0 : index
    %c0_116 = arith.constant 0 : index
    %595 = vector.load %arg7[%c0_115, %c0_116] : memref<1024x32xf32, #tpu.memory_space<vmem>>, vector<512x32xf32>
    %cst_117 = arith.constant dense<0.000000e+00> : vector<32x32xf32>
    %596 = tpu.matmul %592, %595, %cst_117 {dimension_numbers = #tpu.dot_dimension_numbers<[1], [0], [0], [1], [0, 0, 1, 1], [], []>} : vector<32x512xf32>, vector<512x32xf32>, vector<32x32xf32> -> vector<32x32xf32>
    %c512_118 = arith.constant 512 : index
    %c0_119 = arith.constant 0 : index
    %597 = vector.load %arg7[%c512_118, %c0_119] : memref<1024x32xf32, #tpu.memory_space<vmem>>, vector<512x32xf32>
    %cst_120 = arith.constant dense<0.000000e+00> : vector<32x32xf32>
    %598 = tpu.matmul %594, %597, %cst_120 {dimension_numbers = #tpu.dot_dimension_numbers<[1], [0], [0], [1], [0, 0, 1, 1], [], []>} : vector<32x512xf32>, vector<512x32xf32>, vector<32x32xf32> -> vector<32x32xf32>
    %599 = arith.addf %596, %598 : vector<32x32xf32>
    %600 = vector.broadcast %593 : vector<1x32xf32> to vector<32x32xf32>
    %601 = arith.addf %599, %600 : vector<32x32xf32>
    %cst_121 = arith.constant 0.000000e+00 : f32
    %602 = vector.broadcast %cst_121 : f32 to vector<32x32xf32>
    %603 = arith.maximumf %601, %602 : vector<32x32xf32>
    %c0_122 = arith.constant 0 : index
    %c0_123 = arith.constant 0 : index
    %604 = vector.load %arg9[%c0_122, %c0_123] : memref<128x128xf32, #tpu.memory_space<vmem>>, vector<64x128xf32>
    %cst_124 = arith.constant dense<0.000000e+00> : vector<32x128xf32>
    %605 = tpu.matmul %549, %604, %cst_124 {dimension_numbers = #tpu.dot_dimension_numbers<[1], [0], [0], [1], [0, 0, 1, 1], [], []>} : vector<32x64xf32>, vector<64x128xf32>, vector<32x128xf32> -> vector<32x128xf32>
    %c64 = arith.constant 64 : index
    %c0_125 = arith.constant 0 : index
    %606 = vector.load %arg9[%c64, %c0_125] : memref<128x128xf32, #tpu.memory_space<vmem>>, vector<32x128xf32>
    %cst_126 = arith.constant dense<0.000000e+00> : vector<32x128xf32>
    %607 = tpu.matmul %603, %606, %cst_126 {dimension_numbers = #tpu.dot_dimension_numbers<[1], [0], [0], [1], [0, 0, 1, 1], [], []>} : vector<32x32xf32>, vector<32x128xf32>, vector<32x128xf32> -> vector<32x128xf32>
    %608 = arith.addf %605, %607 : vector<32x128xf32>
    %c96 = arith.constant 96 : index
    %c0_127 = arith.constant 0 : index
    %609 = vector.load %arg9[%c96, %c0_127] : memref<128x128xf32, #tpu.memory_space<vmem>>, vector<32x128xf32>
    %cst_128 = arith.constant dense<0.000000e+00> : vector<32x128xf32>
    %610 = tpu.matmul %554, %609, %cst_128 {dimension_numbers = #tpu.dot_dimension_numbers<[1], [0], [0], [1], [0, 0, 1, 1], [], []>} : vector<32x32xf32>, vector<32x128xf32>, vector<32x128xf32> -> vector<32x128xf32>
    %611 = arith.addf %608, %610 : vector<32x128xf32>
    %c0_129 = arith.constant 0 : index
    %c2304 = arith.constant 2304 : index
    %612 = vector.load %arg12[%c0_129, %c2304] : memref<1x2688xf32, #tpu.memory_space<vmem>>, vector<1x128xf32>
    %613 = vector.broadcast %612 : vector<1x128xf32> to vector<32x128xf32>
    %614 = arith.addf %611, %613 : vector<32x128xf32>
    %cst_130 = arith.constant 0.000000e+00 : f32
    %615 = vector.broadcast %cst_130 : f32 to vector<32x128xf32>
    %616 = arith.maximumf %614, %615 : vector<32x128xf32>
    %c0_131 = arith.constant 0 : index
    %c0_132 = arith.constant 0 : index
    %617 = vector.load %arg10[%c0_131, %c0_132] : memref<128x64xf32, #tpu.memory_space<vmem>>, vector<128x64xf32>
    %cst_133 = arith.constant dense<0.000000e+00> : vector<32x64xf32>
    %618 = tpu.matmul %616, %617, %cst_133 {dimension_numbers = #tpu.dot_dimension_numbers<[1], [0], [0], [1], [0, 0, 1, 1], [], []>} : vector<32x128xf32>, vector<128x64xf32>, vector<32x64xf32> -> vector<32x64xf32>
    %c0_134 = arith.constant 0 : index
    %c2432 = arith.constant 2432 : index
    %619 = vector.load %arg12[%c0_134, %c2432] : memref<1x2688xf32, #tpu.memory_space<vmem>>, vector<1x64xf32>
    %620 = vector.broadcast %619 : vector<1x64xf32> to vector<32x64xf32>
    %621 = arith.addf %618, %620 : vector<32x64xf32>
    %cst_135 = arith.constant 0.000000e+00 : f32
    %622 = vector.broadcast %cst_135 : f32 to vector<32x64xf32>
    %623 = arith.maximumf %621, %622 : vector<32x64xf32>
    %c0_136 = arith.constant 0 : index
    %c0_137 = arith.constant 0 : index
    %624 = vector.load %arg11[%c0_136, %c0_137] : memref<64x2xf32, #tpu.memory_space<vmem>>, vector<64x2xf32>
    %cst_138 = arith.constant dense<0.000000e+00> : vector<32x2xf32>
    %625 = tpu.matmul %623, %624, %cst_138 {dimension_numbers = #tpu.dot_dimension_numbers<[1], [0], [0], [1], [0, 0, 1, 1], [], []>} : vector<32x64xf32>, vector<64x2xf32>, vector<32x2xf32> -> vector<32x2xf32>
    %c0_139 = arith.constant 0 : index
    %c2560 = arith.constant 2560 : index
    %626 = vector.load %arg12[%c0_139, %c2560] : memref<1x2688xf32, #tpu.memory_space<vmem>>, vector<1x2xf32>
    %627 = vector.broadcast %626 : vector<1x2xf32> to vector<32x2xf32>
    %628 = arith.addf %625, %627 : vector<32x2xf32>
    %c0_140 = arith.constant 0 : index
    %c0_141 = arith.constant 0 : index
    %629 = vector.load %arg13[%c0_140, %c0_141] : memref<32x2xf32, #tpu.memory_space<vmem>>, vector<32x2xf32>
    tpu.vector_store %arg13[%c0_140, %c0_141], %628 {strides = array<i32>} : memref<32x2xf32, #tpu.memory_space<vmem>>, vector<32x2xf32>,
    return
  }
}

</mosaic_0001>

<llo_original>
// kernel: adaptive_deformation_forward.1
$region0: #{adaptive_deformation_forward.1}
  #allocation0 [shape = 'u32[]', space=smem, size = 0x4, offset = 0x4, fixed_abs, tag = 'smem constant byte address 0x4 - core index']
  #allocation1 [shape = 'u32[72,128]{1,0:T(1,128)}', space=vmem, size = 0x9000, scoped, tag = 'internal scratch']
  #allocation2 [shape = 'f32[512,1024]{1,0:T(8,128)}', space=vmem, size = 0x200000, scoped, tag = 'scratch operand']
  #allocation3 [shape = 'f32[2048,512]{1,0:T(8,128)}', space=vmem, size = 0x400000, scoped, tag = 'scratch operand']
  #allocation4 [shape = 's32[2]{0}', space=sflag, size = 0x8, scoped, tag = 'scratch operand']
  #allocation15 [shape = 's32[]', space=sflag, size = 0x4, offset = 0, fixed_abs, tag = 'sflag constant byte address 0x0 - dummy sync flag']
  #allocation16 [shape = 's32[]', space=sflag, size = 0x4, offset = 0, fixed_abs, tag = 'sflag constant byte address 0x0 - dummy sync flag']
  #allocation17 [shape = 'u32[]', space=smem, size = 0x4, offset = 0x44, fixed_abs, tag = 'smem constant byte address 0x44 - assertion arg 0']
  #allocation18 [shape = 'u32[]', space=smem, size = 0x4, offset = 0x48, fixed_abs, tag = 'smem constant byte address 0x48 - assertion arg 1']
  #allocation19 [shape = 's32[]', space=sflag, size = 0x4, offset = 0, fixed_abs, tag = 'sflag constant byte address 0x0 - dummy sync flag']
  #allocation20 [shape = 's32[]', space=sflag, size = 0x4, offset = 0, fixed_abs, tag = 'sflag constant byte address 0x0 - dummy sync flag']
  %s0 = inlined_call_operand.vmem [shape: f32[32,4], index: 0, kind: input, shape index: {}]
  %s1 = inlined_call_operand.vmem [shape: f32[32,32], index: 1, kind: input, shape index: {}]
  %s2 = inlined_call_operand.hbm [shape: f32[4,256], index: 2, kind: input, shape index: {}]
  %s3 = inlined_call_operand.hbm [shape: f32[64,256], index: 3, kind: input, shape index: {}]
  %s4 = inlined_call_operand.hbm [shape: f32[8,256], index: 4, kind: input, shape index: {}]
  %s5 = inlined_call_operand.hbm [shape: f32[512,1024], index: 5, kind: input, shape index: {}]
  %s6 = inlined_call_operand.hbm [shape: f32[2048,512], index: 6, kind: input, shape index: {}]
  %s7 = inlined_call_operand.vmem [shape: f32[1024,32], index: 7, kind: input, shape index: {}]
  %s8 = inlined_call_operand.hbm [shape: f32[4,32], index: 8, kind: input, shape index: {}]
  %s9 = inlined_call_operand.hbm [shape: f32[128,128], index: 9, kind: input, shape index: {}]
  %s10 = inlined_call_operand.vmem [shape: f32[128,64], index: 10, kind: input, shape index: {}]
  %s11 = inlined_call_operand.vmem [shape: f32[64,2], index: 11, kind: input, shape index: {}]
  %s12 = inlined_call_operand.hbm [shape: f32[1,2688], index: 12, kind: input, shape index: {}]
  %s13 = inlined_call_operand.vmem [shape: f32[32,2], index: 13, kind: output, shape index: {}]
  %s14 = sld [smem:[#allocation0]]
  $region86: #{adaptive_deformation_forward.1} parent=0
    _
  %s16 = ssub.s32 1, %s14
  %s17 = scalar_select 0, %s16, %s14
  $region1: #{adaptive_deformation_forward.1} parent=0
    #allocation5 [shape = 'u8[4096]{0}', space=vmem, size = 0x1000, scoped, tag = 'input window, operand 2, single buffered']
    #allocation6 [shape = 's32[1]{0}', space=sflag, size = 0x4, scoped, tag = 'scoped memory for adaptive_deformation_forward.1']
    #allocation7 [shape = 'u8[65536]{0}', space=vmem, size = 0x10000, scoped, tag = 'input window, operand 3, single buffered']
    #allocation8 [shape = 's32[1]{0}', space=sflag, size = 0x4, scoped, tag = 'scoped memory for adaptive_deformation_forward.1']
    #allocation9 [shape = 'u8[8192]{0}', space=vmem, size = 0x2000, scoped, tag = 'input window, operand 4, single buffered']
    #allocation10 [shape = 'u8[2048]{0}', space=vmem, size = 0x800, scoped, tag = 'input window, operand 8, single buffered']
    #allocation11 [shape = 's32[1]{0}', space=sflag, size = 0x4, scoped, tag = 'scoped memory for adaptive_deformation_forward.1']
    #allocation12 [shape = 'u8[65536]{0}', space=vmem, size = 0x10000, scoped, tag = 'input window, operand 9, single buffered']
    #allocation13 [shape = 'u8[10752]{0}', space=vmem, size = 0x2c00, scoped, tag = 'input window, operand 12, single buffered']
    #allocation14 [shape = 's32[1]{0}', space=sflag, size = 0x4, scoped, tag = 'scoped memory for adaptive_deformation_forward.1']
    %18 = vsyncpa [#allocation6], 0
    %19 = vsyncpa [#allocation8], 0
    %20 = vsyncpa [#allocation11], 0
    %21 = vsyncpa [#allocation14], 0
    // Predicated region
    $region2: #{adaptive_deformation_forward.1} parent=1 // pred_check
      _
    $region3: #{adaptive_deformation_forward.1} parent=1 // pred_check_branch
      %23 = sbr.rel (0) target = $region5
    $region4: #{adaptive_deformation_forward.1} parent=1 // pred_region
      _
    $region5: #{adaptive_deformation_forward.1} parent=1 // pred_fallthru
      _
    // Predicated region
    $region6: #{adaptive_deformation_forward.1} parent=1 // pred_check
      _
    $region7: #{adaptive_deformation_forward.1} parent=1 // pred_check_branch
      %25 = sbr.rel (0) target = $region9
    $region8: #{adaptive_deformation_forward.1} parent=1 // pred_region
      _
    $region9: #{adaptive_deformation_forward.1} parent=1 // pred_fallthru
      _
    // Predicated region
    $region10: #{adaptive_deformation_forward.1} parent=1 // pred_check
      _
    $region11: #{adaptive_deformation_forward.1} parent=1 // pred_check_branch
      %27 = sbr.rel (0) target = $region13
    $region12: #{adaptive_deformation_forward.1} parent=1 // pred_region
      %29 = vsyncadd [#allocation6], 0
      %s31 = sshll.u32 %s2, 4
      %s32 = int_to_ptr.hbm [resolvable:$true] %s31
      %s33 = sshll.u32 [#allocation5], 4
      %s34 = int_to_ptr.vmem [resolvable:$true] %s33
      %36 = dma.hbm_to_vmem [thread:$0]  %s32, 128, %s34, [#allocation6]
    $region13: #{adaptive_deformation_forward.1} parent=1 // pred_fallthru
      _
    // Predicated region
    $region14: #{adaptive_deformation_forward.1} parent=1 // pred_check
      _
    $region15: #{adaptive_deformation_forward.1} parent=1 // pred_check_branch
      %38 = sbr.rel (0) target = $region17
    $region16: #{adaptive_deformation_forward.1} parent=1 // pred_region
      %40 = vsyncadd [#allocation8], 0
      %s41 = sshll.u32 %s3, 4
      %s42 = int_to_ptr.hbm [resolvable:$true] %s41
      %s43 = sshll.u32 [#allocation7], 4
      %s44 = int_to_ptr.vmem [resolvable:$true] %s43
      %49 = dma.hbm_to_vmem [thread:$0]  %s42, 2048, %s44, [#allocation8], 256, 256, 16
    $region17: #{adaptive_deformation_forward.1} parent=1 // pred_fallthru
      _
    // Predicated region
    $region18: #{adaptive_deformation_forward.1} parent=1 // pred_check
      _
    $region19: #{adaptive_deformation_forward.1} parent=1 // pred_check_branch
      %51 = sbr.rel (0) target = $region21
    $region20: #{adaptive_deformation_forward.1} parent=1 // pred_region
      %53 = vsyncadd [#allocation8], 0
      %s55 = sshll.u32 %s4, 4
      %s56 = int_to_ptr.hbm [resolvable:$true] %s55
      %s57 = sshll.u32 [#allocation9], 4
      %s58 = int_to_ptr.vmem [resolvable:$true] %s57
      %60 = dma.hbm_to_vmem [thread:$0]  %s56, 256, %s58, [#allocation8]
    $region21: #{adaptive_deformation_forward.1} parent=1 // pred_fallthru
      _
    // Predicated region
    $region22: #{adaptive_deformation_forward.1} parent=1 // pred_check
      _
    $region23: #{adaptive_deformation_forward.1} parent=1 // pred_check_branch
      %62 = sbr.rel (0) target = $region25
    $region24: #{adaptive_deformation_forward.1} parent=1 // pred_region
      _
    $region25: #{adaptive_deformation_forward.1} parent=1 // pred_fallthru
      _
    // Predicated region
    $region26: #{adaptive_deformation_forward.1} parent=1 // pred_check
      _
    $region27: #{adaptive_deformation_forward.1} parent=1 // pred_check_branch
      %64 = sbr.rel (0) target = $region29
    $region28: #{adaptive_deformation_forward.1} parent=1 // pred_region
      %66 = vsyncadd [#allocation11], 0
      %s68 = sshll.u32 %s8, 4
      %s69 = int_to_ptr.hbm [resolvable:$true] %s68
      %s70 = sshll.u32 [#allocation10], 4
      %s71 = int_to_ptr.vmem [resolvable:$true] %s70
      %73 = dma.hbm_to_vmem [thread:$0]  %s69, 64, %s71, [#allocation11]
    $region29: #{adaptive_deformation_forward.1} parent=1 // pred_fallthru
      _
    // Predicated region
    $region30: #{adaptive_deformation_forward.1} parent=1 // pred_check
      _
    $region31: #{adaptive_deformation_forward.1} parent=1 // pred_check_branch
      %75 = sbr.rel (0) target = $region33
    $region32: #{adaptive_deformation_forward.1} parent=1 // pred_region
      %77 = vsyncadd [#allocation11], 0
      %s78 = sshll.u32 %s9, 4
      %s79 = int_to_ptr.hbm [resolvable:$true] %s78
      %s80 = sshll.u32 [#allocation12], 4
      %s81 = int_to_ptr.vmem [resolvable:$true] %s80
      %86 = dma.hbm_to_vmem [thread:$0]  %s79, 2048, %s81, [#allocation11], 128, 128, 8
    $region33: #{adaptive_deformation_forward.1} parent=1 // pred_fallthru
      _
    // Predicated region
    $region34: #{adaptive_deformation_forward.1} parent=1 // pred_check
      _
    $region35: #{adaptive_deformation_forward.1} parent=1 // pred_check_branch
      %88 = sbr.rel (0) target = $region37
    $region36: #{adaptive_deformation_forward.1} parent=1 // pred_region
      _
    $region37: #{adaptive_deformation_forward.1} parent=1 // pred_fallthru
      _
    // Predicated region
    $region38: #{adaptive_deformation_forward.1} parent=1 // pred_check
      _
    $region39: #{adaptive_deformation_forward.1} parent=1 // pred_check_branch
      %90 = sbr.rel (0) target = $region41
    $region40: #{adaptive_deformation_forward.1} parent=1 // pred_region
      _
    $region41: #{adaptive_deformation_forward.1} parent=1 // pred_fallthru
      _
    // Predicated region
    $region42: #{adaptive_deformation_forward.1} parent=1 // pred_check
      _
    $region43: #{adaptive_deformation_forward.1} parent=1 // pred_check_branch
      %92 = sbr.rel (0) target = $region45
    $region44: #{adaptive_deformation_forward.1} parent=1 // pred_region
      %94 = vsyncadd [#allocation14], 0
      %s96 = sshll.u32 %s12, 4
      %s97 = int_to_ptr.hbm [resolvable:$true] %s96
      %s98 = sshll.u32 [#allocation13], 4
      %s99 = int_to_ptr.vmem [resolvable:$true] %s98
      %101 = dma.hbm_to_vmem [thread:$0]  %s97, 336, %s99, [#allocation14]
    $region45: #{adaptive_deformation_forward.1} parent=1 // pred_fallthru
      _
    // Predicated region
    $region46: #{adaptive_deformation_forward.1} parent=1 // pred_check
      _
    $region47: #{adaptive_deformation_forward.1} parent=1 // pred_check_branch
      %103 = sbr.rel (0) target = $region49
    $region48: #{adaptive_deformation_forward.1} parent=1 // pred_region
      %105 = dma.done [#allocation6], 128
    $region49: #{adaptive_deformation_forward.1} parent=1 // pred_fallthru
      _
    // Predicated region
    $region50: #{adaptive_deformation_forward.1} parent=1 // pred_check
      _
    $region51: #{adaptive_deformation_forward.1} parent=1 // pred_check_branch
      %107 = sbr.rel (0) target = $region53
    $region52: #{adaptive_deformation_forward.1} parent=1 // pred_region
      %109 = dma.done [#allocation8], 2048
    $region53: #{adaptive_deformation_forward.1} parent=1 // pred_fallthru
      _
    // Predicated region
    $region54: #{adaptive_deformation_forward.1} parent=1 // pred_check
      _
    $region55: #{adaptive_deformation_forward.1} parent=1 // pred_check_branch
      %111 = sbr.rel (0) target = $region57
    $region56: #{adaptive_deformation_forward.1} parent=1 // pred_region
      %113 = dma.done [#allocation8], 256
    $region57: #{adaptive_deformation_forward.1} parent=1 // pred_fallthru
      _
    // Predicated region
    $region58: #{adaptive_deformation_forward.1} parent=1 // pred_check
      _
    $region59: #{adaptive_deformation_forward.1} parent=1 // pred_check_branch
      %115 = sbr.rel (0) target = $region61
    $region60: #{adaptive_deformation_forward.1} parent=1 // pred_region
      %117 = dma.done [#allocation11], 64
    $region61: #{adaptive_deformation_forward.1} parent=1 // pred_fallthru
      _
    // Predicated region
    $region62: #{adaptive_deformation_forward.1} parent=1 // pred_check
      _
    $region63: #{adaptive_deformation_forward.1} parent=1 // pred_check_branch
      %119 = sbr.rel (0) target = $region65
    $region64: #{adaptive_deformation_forward.1} parent=1 // pred_region
      %121 = dma.done [#allocation11], 2048
    $region65: #{adaptive_deformation_forward.1} parent=1 // pred_fallthru
      _
    // Predicated region
    $region66: #{adaptive_deformation_forward.1} parent=1 // pred_check
      _
    $region67: #{adaptive_deformation_forward.1} parent=1 // pred_check_branch
      %123 = sbr.rel (0) target = $region69
    $region68: #{adaptive_deformation_forward.1} parent=1 // pred_region
      %125 = dma.done [#allocation14], 336
    $region69: #{adaptive_deformation_forward.1} parent=1 // pred_fallthru
      _
    // Predicated region
    $region70: #{adaptive_deformation_forward.1} parent=1 // pred_check
      _
    $region71: #{adaptive_deformation_forward.1} parent=1 // pred_check_branch
      %127 = sbr.rel target = $region73
    $region72: #{adaptive_deformation_forward.1} parent=1 // pred_region
      %128 = sst [smem:[#allocation17]] [#allocation16]
      %129 = sst [smem:[#allocation18]] [#allocation15]
    $region73: #{adaptive_deformation_forward.1} parent=1 // pred_fallthru
      _
    %131 = shalt.err (0)
    %s133 = sshll.u32 %s5, 4
    %s134 = int_to_ptr.hbm [resolvable:$true] %s133
    %s135 = sshll.u32 [#allocation2], 4
    %s136 = int_to_ptr.vmem [resolvable:$true] %s135
    %138 = dma.hbm_to_vmem [thread:$0]  %s134, 65536, %s136, [#allocation4]
    %s139 = scalar_lea.sflag [#allocation4], 1
    // Predicated region
    $region74: #{adaptive_deformation_forward.1} parent=1 // pred_check
      _
    $region75: #{adaptive_deformation_forward.1} parent=1 // pred_check_branch
      %141 = sbr.rel target = $region77
    $region76: #{adaptive_deformation_forward.1} parent=1 // pred_region
      %142 = sst [smem:[#allocation17]] [#allocation20]
      %143 = sst [smem:[#allocation18]] [#allocation19]
    $region77: #{adaptive_deformation_forward.1} parent=1 // pred_fallthru
      _
    %145 = shalt.err (0)
    %s147 = sshll.u32 %s6, 4
    %s148 = int_to_ptr.hbm [resolvable:$true] %s147
    %s149 = sshll.u32 [#allocation3], 4
    %s150 = int_to_ptr.vmem [resolvable:$true] %s149
    %152 = dma.hbm_to_vmem [thread:$0]  %s148, 131072, %s150, %s139
    %v153 = vld [vmem:[%s0] sm:$0xff]
    %v154 = vld [vmem:[%s0 + $0x8] sm:$0xff]
    %v155 = vld [vmem:[%s0 + $0x10] sm:$0xff]
    %v156 = vld [vmem:[%s0 + $0x18] sm:$0xff]
    %v157 = vmul.f32 %v153, 0.999995
    %v158 = vmul.f32 %v154, 0.999995
    %v159 = vmul.f32 %v155, 0.999995
    %v160 = vmul.f32 %v156, 0.999995
    %v161 = vld [vmem:[#allocation7] sm:$0xff]
    %v162 = vld [vmem:[#allocation7 + $0x8] sm:$0xff]
    %v163 = vld [vmem:[#allocation7 + $0x10] sm:$0xff]
    %v164 = vld [vmem:[#allocation7 + $0x18] sm:$0xff]
    %v165 = vld [vmem:[#allocation7 + $0x20] sm:$0xff]
    %v166 = vld [vmem:[#allocation7 + $0x28] sm:$0xff]
    %v167 = vld [vmem:[#allocation7 + $0x30] sm:$0xff]
    %v168 = vld [vmem:[#allocation7 + $0x38] sm:$0xff]
    %v169 = vld [vmem:[#allocation7 + $0x40] sm:$0xff]
    %v170 = vld [vmem:[#allocation7 + $0x48] sm:$0xff]
    %v171 = vld [vmem:[#allocation7 + $0x50] sm:$0xff]
    %v172 = vld [vmem:[#allocation7 + $0x58] sm:$0xff]
    %v173 = vld [vmem:[#allocation7 + $0x60] sm:$0xff]
    %v174 = vld [vmem:[#allocation7 + $0x68] sm:$0xff]
    %v175 = vld [vmem:[#allocation7 + $0x70] sm:$0xff]
    %v176 = vld [vmem:[#allocation7 + $0x78] sm:$0xff]
    %v177 = vld [vmem:[#allocation5] sm:$0xff]
    %v178 = vld [vmem:[#allocation13] sm:$0x3]
    %v180 = vperm.slane %v178, 0
    %v181 = vperm.slane %v178, 1
    %185 = vst [vmem:[#allocation1] ss:$2 sm:$0xff] %v177
    %v186 = vld.sshfl [vmem:[#allocation1] sm:$0xff pattern:$0x75316420]
    %v187 = vld.sshfl [vmem:[#allocation1 + $0x8] sm:$0xff pattern:$0x75316420]
    %vm188 = vcmask 31744
    %v190 = vsel %vm188, %v157, 0
    %v193 = vsel %vm188, %v158, 0
    %v196 = vsel %vm188, %v159, 0
    %v199 = vsel %vm188, %v160, 0
    %vm201 = vcmask 1043456
    %v202 = vsel %vm201, %v186, 0
    %v204 = vsel %vm201, %v187, 0
    %206 = vmatpush.msra.mxu0 0.0
    %207 = vmatpush.msra.mxu0 0.0
    %208 = vmatpush.msra.mxu0 0.0
    %209 = vmatpush.msra.mxu0 0.0
    %210 = vmatpush.msra.mxu0 0.0
    %211 = vmatpush.msra.mxu0 0.0
    %212 = vmatpush.msra.mxu0 0.0
    %213 = vmatpush.msra.mxu0 0.0
    %214 = vmatpush.msra.mxu0 0.0
    %215 = vmatpush.msra.mxu0 0.0
    %216 = vmatpush.msra.mxu0 0.0
    %217 = vmatpush.msra.mxu0 0.0
    %218 = vmatpush.msra.mxu0 0.0
    %219 = vmatpush.msra.mxu0 0.0
    %220 = vmatpush.msra.mxu0 0.0
    %221 = vmatpush.msra.mxu0 %v202
    %222 = vmatmul.f32.gmra.mxu0 %v190
    %v223 = vpop.f32.mrf.mxu0
    %v224 = vadd.f32 %v180, %v223
    %225 = vmatmul.f32.gmra.mxu0 %v193
    %v226 = vpop.f32.mrf.mxu0
    %v227 = vadd.f32 %v180, %v226
    %228 = vmatmul.f32.gmra.mxu0 %v196
    %v229 = vpop.f32.mrf.mxu0
    %v230 = vadd.f32 %v180, %v229
    %231 = vmatmul.f32.gmra.mxu0 %v199
    %v232 = vpop.f32.mrf.mxu0
    %v233 = vadd.f32 %v180, %v232
    %234 = vdwg.mxu0
    %235 = vmatpush.msra.mxu0 0.0
    %236 = vmatpush.msra.mxu0 0.0
    %237 = vmatpush.msra.mxu0 0.0
    %238 = vmatpush.msra.mxu0 0.0
    %239 = vmatpush.msra.mxu0 0.0
    %240 = vmatpush.msra.mxu0 0.0
    %241 = vmatpush.msra.mxu0 0.0
    %242 = vmatpush.msra.mxu0 0.0
    %243 = vmatpush.msra.mxu0 0.0
    %244 = vmatpush.msra.mxu0 0.0
    %245 = vmatpush.msra.mxu0 0.0
    %246 = vmatpush.msra.mxu0 0.0
    %247 = vmatpush.msra.mxu0 0.0
    %248 = vmatpush.msra.mxu0 0.0
    %249 = vmatpush.msra.mxu0 0.0
    %250 = vmatpush.msra.mxu0 %v204
    %251 = vmatmul.f32.gmra.mxu0 %v190
    %v252 = vpop.f32.mrf.mxu0
    %v253 = vadd.f32 %v181, %v252
    %254 = vmatmul.f32.gmra.mxu0 %v193
    %v255 = vpop.f32.mrf.mxu0
    %v256 = vadd.f32 %v181, %v255
    %257 = vmatmul.f32.gmra.mxu0 %v196
    %v258 = vpop.f32.mrf.mxu0
    %v259 = vadd.f32 %v181, %v258
    %260 = vmatmul.f32.gmra.mxu0 %v199
    %v261 = vpop.f32.mrf.mxu0
    %v262 = vadd.f32 %v181, %v261
    %263 = vdwg.mxu0
    %v264 = vlaneseq
    %v265 = vand.u32 %v264, 127
    %v266 = vadd.s32 %v265, 128
    %vm267 = vcmp.lt.s32.totalorder %v265, 0
    %v268 = vsub.s32 0, %v265
    %v269 = vsel %vm267, %v268, %v265
    %v270 = vshrl.u32 %v269, 6
    %v271 = vand.u32 %v269, 63
    %v272 = vsub.s32 0, %v271
    %v273 = vsel %vm267, %v272, %v271
    %vm274 = vcmp.lt.s32.totalorder %v266, 0
    %v275 = vsub.s32 0, %v266
    %v276 = vsel %vm274, %v275, %v266
    %v277 = vshrl.u32 %v276, 6
    %v278 = vand.u32 %v276, 63
    %v279 = vsub.s32 0, %v278
    %v280 = vsel %vm274, %v279, %v278
    %vm281 = vcmp.ne.s32.totalorder %v273, 0
    %vm282 = vcmp.ne.s32.totalorder %v280, 0
    %vm283 = vcmp.lt.s32.totalorder %v273, 0
    %vm284 = vcmp.lt.s32.totalorder %v280, 0
    %vm285 = vmand %vm283, %vm281
    %vm286 = vmand %vm284, %vm282
    %v287 = vadd.s32 %v273, 64
    %v288 = vadd.s32 %v280, 64
    %v289 = vsel %vm285, %v287, %v273
    %v290 = vsel %vm286, %v288, %v280
    %vm291 = vcmp.lt.s32.totalorder %v289, 32
    %vm292 = vcmp.lt.s32.totalorder %v290, 32
    %v293 = vsel %vm291, 1, 0
    %v294 = vsel %vm292, 1, 0
    %vm295 = vcmp.eq.s32.totalorder %v293, 1
    %vm296 = vcmp.eq.s32.totalorder %v294, 1
    %v299 = vrot.slane %v233, 6
    %v300 = vrot.slane %v262, 6
    %v303 = vsel %vm295, %v224, %v299
    %v304 = vsel %vm296, %v253, %v300
    %v305 = vrot.slane %v233, 2
    %v306 = vrot.slane %v262, 2
    %v309 = vsel %vm295, %v224, %v305
    %v310 = vsel %vm296, %v253, %v306
    %v313 = vrot.slane %v230, 6
    %v314 = vrot.slane %v259, 6
    %v317 = vsel %vm295, %v227, %v313
    %v318 = vsel %vm296, %v256, %v314
    %v319 = vrot.slane %v230, 2
    %v320 = vrot.slane %v259, 2
    %v323 = vsel %vm295, %v227, %v319
    %v324 = vsel %vm296, %v256, %v320
    %v327 = vrot.slane %v227, 6
    %v328 = vrot.slane %v256, 6
    %v331 = vsel %vm295, %v230, %v327
    %v332 = vsel %vm296, %v259, %v328
    %v333 = vrot.slane %v227, 2
    %v334 = vrot.slane %v256, 2
    %v337 = vsel %vm295, %v230, %v333
    %v338 = vsel %vm296, %v259, %v334
    %v341 = vrot.slane %v224, 6
    %v342 = vrot.slane %v253, 6
    %v345 = vsel %vm295, %v233, %v341
    %v346 = vsel %vm296, %v262, %v342
    %v347 = vrot.slane %v224, 2
    %v348 = vrot.slane %v253, 2
    %v351 = vsel %vm295, %v233, %v347
    %v352 = vsel %vm296, %v262, %v348
    %vm353 = vcmask 523264
    %v355 = vsel %vm353, 0.0, 0
    %357 = vmatpush.msra.mxu0 0.0
    %358 = vmatpush.msra.mxu0 0.0
    %359 = vmatpush.msra.mxu0 0.0
    %360 = vmatpush.msra.mxu0 0.0
    %361 = vmatpush.msra.mxu0 0.0
    %362 = vmatpush.msra.mxu0 0.0
    %363 = vmatpush.msra.mxu0 0.0
    %364 = vmatpush.msra.mxu0 0.0
    %365 = vmatpush.msra.mxu0 %v175
    %366 = vmatpush.msra.mxu0 %v173
    %367 = vmatpush.msra.mxu0 %v171
    %368 = vmatpush.msra.mxu0 %v169
    %369 = vmatpush.msra.mxu0 %v167
    %370 = vmatpush.msra.mxu0 %v165
    %371 = vmatpush.msra.mxu0 %v163
    %372 = vmatpush.msra.mxu0 %v161
    %373 = vmatmul.f32.gmra.mxu0 %v355
    %v374 = vpop.f32.mrf.mxu0
    %v375 = vadd.f32 0.0, %v374
    %376 = vdwg.mxu0
    %377 = vmatpush.msra.mxu0 0.0
    %378 = vmatpush.msra.mxu0 0.0
    %379 = vmatpush.msra.mxu0 0.0
    %380 = vmatpush.msra.mxu0 0.0
    %381 = vmatpush.msra.mxu0 0.0
    %382 = vmatpush.msra.mxu0 0.0
    %383 = vmatpush.msra.mxu0 0.0
    %384 = vmatpush.msra.mxu0 0.0
    %385 = vmatpush.msra.mxu0 %v176
    %386 = vmatpush.msra.mxu0 %v174
    %387 = vmatpush.msra.mxu0 %v172
    %388 = vmatpush.msra.mxu0 %v170
    %389 = vmatpush.msra.mxu0 %v168
    %390 = vmatpush.msra.mxu0 %v166
    %391 = vmatpush.msra.mxu0 %v164
    %392 = vmatpush.msra.mxu0 %v162
    %393 = vmatmul.f32.gmra.mxu0 %v355
    %v394 = vpop.f32.mrf.mxu0
    %v395 = vadd.f32 0.0, %v394
    %396 = vdwg.mxu0
    %v397 = vadd.f32 %v303, %v375
    %v398 = vadd.f32 %v304, %v395
    %v399 = vxor.u32 %v397, 2147483648
    %v400 = vmul.f32 %v399, 1.442695
    %v401 = vpow.pop %v400
    %v402 = vadd.f32 %v401, 1.0
    %v403 = vrcp.pop %v402
    %v404 = vmul.f32 %v402, %v403
    %v405 = vsub.f32 1.0, %v404
    %v406 = vmul.f32 %v403, %v405
    %v407 = vadd.f32 %v403, %v406
    %vm408 = vweird.f32 %v402
    %vm409 = vweird.f32 %v403
    %vm410 = vmor %vm408, %vm409
    %v411 = vsel %vm410, %v403, %v407
    %v412 = vand.u32 2147483647, %v402
    %vm413 = vcmp.eq.f32.partialorder %v412, 8.507059e+37
    %v414 = vand.u32 %v402, 2147483648
    %v415 = vor.u32 1.1754944e-38, %v414
    %v416 = vsel %vm413, %v415, %v411
    %v417 = vmul.f32 1.0, %v416
    %v418 = vtanh.pop %v398
    %v419 = vxor.u32 %v398, 2147483648
    %v420 = vmul.f32 %v419, 1.442695
    %v421 = vpow.pop %v420
    %v422 = vadd.f32 %v421, 1.0
    %v423 = vrcp.pop %v422
    %v424 = vmul.f32 %v422, %v423
    %v425 = vsub.f32 1.0, %v424
    %v426 = vmul.f32 %v423, %v425
    %v427 = vadd.f32 %v423, %v426
    %vm428 = vweird.f32 %v422
    %vm429 = vweird.f32 %v423
    %vm430 = vmor %vm428, %vm429
    %v431 = vsel %vm430, %v423, %v427
    %v432 = vand.u32 2147483647, %v422
    %vm433 = vcmp.eq.f32.partialorder %v432, 8.507059e+37
    %v434 = vand.u32 %v422, 2147483648
    %v435 = vor.u32 1.1754944e-38, %v434
    %v436 = vsel %vm433, %v435, %v431
    %v437 = vmul.f32 1.0, %v436
    %v438 = vmul.f32 %v417, 0.0
    %v439 = vmul.f32 %v417, %v418
    %441 = vrot.lane.b32.xlu0 %v439, 64
    %v442 = vpop.permute.xlu0 %441
    %v444 = vadd.f32 %v438, %v442
    %v445 = vtanh.pop %v444
    %v446 = vmul.f32 %v437, %v445
    %448 = vrot.lane.b32.xlu0 %v446, 64
    %v449 = vpop.permute.xlu0 %448
    %v450 = vsel %vm353, %v449, 0
    %452 = vmatpush.msra.mxu0 0.0
    %453 = vmatpush.msra.mxu0 0.0
    %454 = vmatpush.msra.mxu0 0.0
    %455 = vmatpush.msra.mxu0 0.0
    %456 = vmatpush.msra.mxu0 0.0
    %457 = vmatpush.msra.mxu0 0.0
    %458 = vmatpush.msra.mxu0 0.0
    %459 = vmatpush.msra.mxu0 0.0
    %460 = vmatpush.msra.mxu0 %v175
    %461 = vmatpush.msra.mxu0 %v173
    %462 = vmatpush.msra.mxu0 %v171
    %463 = vmatpush.msra.mxu0 %v169
    %464 = vmatpush.msra.mxu0 %v167
    %465 = vmatpush.msra.mxu0 %v165
    %466 = vmatpush.msra.mxu0 %v163
    %467 = vmatpush.msra.mxu0 %v161
    %468 = vmatmul.f32.gmra.mxu0 %v450
    %v469 = vpop.f32.mrf.mxu0
    %v470 = vadd.f32 0.0, %v469
    %471 = vdwg.mxu0
    %472 = vmatpush.msra.mxu0 0.0
    %473 = vmatpush.msra.mxu0 0.0
    %474 = vmatpush.msra.mxu0 0.0
    %475 = vmatpush.msra.mxu0 0.0
    %476 = vmatpush.msra.mxu0 0.0
    %477 = vmatpush.msra.mxu0 0.0
    %478 = vmatpush.msra.mxu0 0.0
    %479 = vmatpush.msra.mxu0 0.0
    %480 = vmatpush.msra.mxu0 %v176
    %481 = vmatpush.msra.mxu0 %v174
    %482 = vmatpush.msra.mxu0 %v172
    %483 = vmatpush.msra.mxu0 %v170
    %484 = vmatpush.msra.mxu0 %v168
    %485 = vmatpush.msra.mxu0 %v166
    %486 = vmatpush.msra.mxu0 %v164
    %487 = vmatpush.msra.mxu0 %v162
    %488 = vmatmul.f32.gmra.mxu0 %v450
    %v489 = vpop.f32.mrf.mxu0
    %v490 = vadd.f32 0.0, %v489
    %491 = vdwg.mxu0
    %v494 = vrot.slane %v470, 6
    %v495 = vrot.slane %v490, 6
    %v498 = vadd.f32 %v309, %v494
    %v499 = vadd.f32 %v310, %v495
    %v500 = vxor.u32 %v498, 2147483648
    %v501 = vmul.f32 %v500, 1.442695
    %v502 = vpow.pop %v501
    %v503 = vadd.f32 %v502, 1.0
    %v504 = vrcp.pop %v503
    %v505 = vmul.f32 %v503, %v504
    %v506 = vsub.f32 1.0, %v505
    %v507 = vmul.f32 %v504, %v506
    %v508 = vadd.f32 %v504, %v507
    %vm509 = vweird.f32 %v503
    %vm510 = vweird.f32 %v504
    %vm511 = vmor %vm509, %vm510
    %v512 = vsel %vm511, %v504, %v508
    %v513 = vand.u32 2147483647, %v503
    %vm514 = vcmp.eq.f32.partialorder %v513, 8.507059e+37
    %v515 = vand.u32 %v503, 2147483648
    %v516 = vor.u32 1.1754944e-38, %v515
    %v517 = vsel %vm514, %v516, %v512
    %v518 = vmul.f32 1.0, %v517
    %v519 = vtanh.pop %v499
    %v520 = vxor.u32 %v499, 2147483648
    %v521 = vmul.f32 %v520, 1.442695
    %v522 = vpow.pop %v521
    %v523 = vadd.f32 %v522, 1.0
    %v524 = vrcp.pop %v523
    %v525 = vmul.f32 %v523, %v524
    %v526 = vsub.f32 1.0, %v525
    %v527 = vmul.f32 %v524, %v526
    %v528 = vadd.f32 %v524, %v527
    %vm529 = vweird.f32 %v523
    %vm530 = vweird.f32 %v524
    %vm531 = vmor %vm529, %vm530
    %v532 = vsel %vm531, %v524, %v528
    %v533 = vand.u32 2147483647, %v523
    %vm534 = vcmp.eq.f32.partialorder %v533, 8.507059e+37
    %v535 = vand.u32 %v523, 2147483648
    %v536 = vor.u32 1.1754944e-38, %v535
    %v537 = vsel %vm534, %v536, %v532
    %v538 = vmul.f32 1.0, %v537
    %v540 = vrot.slane %v444, 6
    %v542 = vmul.f32 %v518, %v540
    %v543 = vmul.f32 %v518, %v519
    %545 = vrot.lane.b32.xlu0 %v543, 64
    %v546 = vpop.permute.xlu0 %545
    %v548 = vadd.f32 %v542, %v546
    %v549 = vtanh.pop %v548
    %v550 = vmul.f32 %v538, %v549
    %v552 = vrot.slane %v550, 2
    %553 = vrot.lane.b32.xlu0 %v552, 64
    %v554 = vpop.permute.xlu0 %553
    %v555 = vsel %vm353, %v554, 0
    %557 = vmatpush.msra.mxu0 0.0
    %558 = vmatpush.msra.mxu0 0.0
    %559 = vmatpush.msra.mxu0 0.0
    %560 = vmatpush.msra.mxu0 0.0
    %561 = vmatpush.msra.mxu0 0.0
    %562 = vmatpush.msra.mxu0 0.0
    %563 = vmatpush.msra.mxu0 0.0
    %564 = vmatpush.msra.mxu0 0.0
    %565 = vmatpush.msra.mxu0 %v175
    %566 = vmatpush.msra.mxu0 %v173
    %567 = vmatpush.msra.mxu0 %v171
    %568 = vmatpush.msra.mxu0 %v169
    %569 = vmatpush.msra.mxu0 %v167
    %570 = vmatpush.msra.mxu0 %v165
    %571 = vmatpush.msra.mxu0 %v163
    %572 = vmatpush.msra.mxu0 %v161
    %573 = vmatmul.f32.gmra.mxu0 %v555
    %v574 = vpop.f32.mrf.mxu0
    %v575 = vadd.f32 0.0, %v574
    %576 = vdwg.mxu0
    %577 = vmatpush.msra.mxu0 0.0
    %578 = vmatpush.msra.mxu0 0.0
    %579 = vmatpush.msra.mxu0 0.0
    %580 = vmatpush.msra.mxu0 0.0
    %581 = vmatpush.msra.mxu0 0.0
    %582 = vmatpush.msra.mxu0 0.0
    %583 = vmatpush.msra.mxu0 0.0
    %584 = vmatpush.msra.mxu0 0.0
    %585 = vmatpush.msra.mxu0 %v176
    %586 = vmatpush.msra.mxu0 %v174
    %587 = vmatpush.msra.mxu0 %v172
    %588 = vmatpush.msra.mxu0 %v170
    %589 = vmatpush.msra.mxu0 %v168
    %590 = vmatpush.msra.mxu0 %v166
    %591 = vmatpush.msra.mxu0 %v164
    %592 = vmatpush.msra.mxu0 %v162
    %593 = vmatmul.f32.gmra.mxu0 %v555
    %v594 = vpop.f32.mrf.mxu0
    %v595 = vadd.f32 0.0, %v594
    %596 = vdwg.mxu0
    %v599 = vrot.slane %v575, 4
    %v600 = vrot.slane %v595, 4
    %v603 = vadd.f32 %v303, %v599
    %v604 = vadd.f32 %v304, %v600
    %v605 = vxor.u32 %v603, 2147483648
    %v606 = vmul.f32 %v605, 1.442695
    %v607 = vpow.pop %v606
    %v608 = vadd.f32 %v607, 1.0
    %v609 = vrcp.pop %v608
    %v610 = vmul.f32 %v608, %v609
    %v611 = vsub.f32 1.0, %v610
    %v612 = vmul.f32 %v609, %v611
    %v613 = vadd.f32 %v609, %v612
    %vm614 = vweird.f32 %v608
    %vm615 = vweird.f32 %v609
    %vm616 = vmor %vm614, %vm615
    %v617 = vsel %vm616, %v609, %v613
    %v618 = vand.u32 2147483647, %v608
    %vm619 = vcmp.eq.f32.partialorder %v618, 8.507059e+37
    %v620 = vand.u32 %v608, 2147483648
    %v621 = vor.u32 1.1754944e-38, %v620
    %v622 = vsel %vm619, %v621, %v617
    %v623 = vmul.f32 1.0, %v622
    %v624 = vtanh.pop %v604
    %v625 = vxor.u32 %v604, 2147483648
    %v626 = vmul.f32 %v625, 1.442695
    %v627 = vpow.pop %v626
    %v628 = vadd.f32 %v627, 1.0
    %v629 = vrcp.pop %v628
    %v630 = vmul.f32 %v628, %v629
    %v631 = vsub.f32 1.0, %v630
    %v632 = vmul.f32 %v629, %v631
    %v633 = vadd.f32 %v629, %v632
    %vm634 = vweird.f32 %v628
    %vm635 = vweird.f32 %v629
    %vm636 = vmor %vm634, %vm635
    %v637 = vsel %vm636, %v629, %v633
    %v638 = vand.u32 2147483647, %v628
    %vm639 = vcmp.eq.f32.partialorder %v638, 8.507059e+37
    %v640 = vand.u32 %v628, 2147483648
    %v641 = vor.u32 1.1754944e-38, %v640
    %v642 = vsel %vm639, %v641, %v637
    %v643 = vmul.f32 1.0, %v642
    %v645 = vrot.slane %v548, 6
    %v647 = vmul.f32 %v623, %v645
    %v648 = vmul.f32 %v623, %v624
    %650 = vrot.lane.b32.xlu0 %v648, 64
    %v651 = vpop.permute.xlu0 %650
    %v653 = vadd.f32 %v647, %v651
    %v654 = vtanh.pop %v653
    %v655 = vmul.f32 %v643, %v654
    %v657 = vrot.slane %v655, 4
    %658 = vrot.lane.b32.xlu0 %v657, 64
    %v659 = vpop.permute.xlu0 %658
    %v660 = vsel %vm353, %v659, 0
    %662 = vmatpush.msra.mxu0 0.0
    %663 = vmatpush.msra.mxu0 0.0
    %664 = vmatpush.msra.mxu0 0.0
    %665 = vmatpush.msra.mxu0 0.0
    %666 = vmatpush.msra.mxu0 0.0
    %667 = vmatpush.msra.mxu0 0.0
    %668 = vmatpush.msra.mxu0 0.0
    %669 = vmatpush.msra.mxu0 0.0
    %670 = vmatpush.msra.mxu0 %v175
    %671 = vmatpush.msra.mxu0 %v173
    %672 = vmatpush.msra.mxu0 %v171
    %673 = vmatpush.msra.mxu0 %v169
    %674 = vmatpush.msra.mxu0 %v167
    %675 = vmatpush.msra.mxu0 %v165
    %676 = vmatpush.msra.mxu0 %v163
    %677 = vmatpush.msra.mxu0 %v161
    %678 = vmatmul.f32.gmra.mxu0 %v660
    %v679 = vpop.f32.mrf.mxu0
    %v680 = vadd.f32 0.0, %v679
    %681 = vdwg.mxu0
    %682 = vmatpush.msra.mxu0 0.0
    %683 = vmatpush.msra.mxu0 0.0
    %684 = vmatpush.msra.mxu0 0.0
    %685 = vmatpush.msra.mxu0 0.0
    %686 = vmatpush.msra.mxu0 0.0
    %687 = vmatpush.msra.mxu0 0.0
    %688 = vmatpush.msra.mxu0 0.0
    %689 = vmatpush.msra.mxu0 0.0
    %690 = vmatpush.msra.mxu0 %v176
    %691 = vmatpush.msra.mxu0 %v174
    %692 = vmatpush.msra.mxu0 %v172
    %693 = vmatpush.msra.mxu0 %v170
    %694 = vmatpush.msra.mxu0 %v168
    %695 = vmatpush.msra.mxu0 %v166
    %696 = vmatpush.msra.mxu0 %v164
    %697 = vmatpush.msra.mxu0 %v162
    %698 = vmatmul.f32.gmra.mxu0 %v660
    %v699 = vpop.f32.mrf.mxu0
    %v700 = vadd.f32 0.0, %v699
    %701 = vdwg.mxu0
    %v704 = vrot.slane %v680, 2
    %v705 = vrot.slane %v700, 2
    %v708 = vadd.f32 %v309, %v704
    %v709 = vadd.f32 %v310, %v705
    %v710 = vxor.u32 %v708, 2147483648
    %v711 = vmul.f32 %v710, 1.442695
    %v712 = vpow.pop %v711
    %v713 = vadd.f32 %v712, 1.0
    %v714 = vrcp.pop %v713
    %v715 = vmul.f32 %v713, %v714
    %v716 = vsub.f32 1.0, %v715
    %v717 = vmul.f32 %v714, %v716
    %v718 = vadd.f32 %v714, %v717
    %vm719 = vweird.f32 %v713
    %vm720 = vweird.f32 %v714
    %vm721 = vmor %vm719, %vm720
    %v722 = vsel %vm721, %v714, %v718
    %v723 = vand.u32 2147483647, %v713
    %vm724 = vcmp.eq.f32.partialorder %v723, 8.507059e+37
    %v725 = vand.u32 %v713, 2147483648
    %v726 = vor.u32 1.1754944e-38, %v725
    %v727 = vsel %vm724, %v726, %v722
    %v728 = vmul.f32 1.0, %v727
    %v729 = vtanh.pop %v709
    %v730 = vxor.u32 %v709, 2147483648
    %v731 = vmul.f32 %v730, 1.442695
    %v732 = vpow.pop %v731
    %v733 = vadd.f32 %v732, 1.0
    %v734 = vrcp.pop %v733
    %v735 = vmul.f32 %v733, %v734
    %v736 = vsub.f32 1.0, %v735
    %v737 = vmul.f32 %v734, %v736
    %v738 = vadd.f32 %v734, %v737
    %vm739 = vweird.f32 %v733
    %vm740 = vweird.f32 %v734
    %vm741 = vmor %vm739, %vm740
    %v742 = vsel %vm741, %v734, %v738
    %v743 = vand.u32 2147483647, %v733
    %vm744 = vcmp.eq.f32.partialorder %v743, 8.507059e+37
    %v745 = vand.u32 %v733, 2147483648
    %v746 = vor.u32 1.1754944e-38, %v745
    %v747 = vsel %vm744, %v746, %v742
    %v748 = vmul.f32 1.0, %v747
    %v750 = vrot.slane %v653, 6
    %v752 = vmul.f32 %v728, %v750
    %v753 = vmul.f32 %v728, %v729
    %755 = vrot.lane.b32.xlu0 %v753, 64
    %v756 = vpop.permute.xlu0 %755
    %v758 = vadd.f32 %v752, %v756
    %v759 = vtanh.pop %v758
    %v760 = vmul.f32 %v748, %v759
    %v762 = vrot.slane %v760, 6
    %763 = vrot.lane.b32.xlu0 %v762, 64
    %v764 = vpop.permute.xlu0 %763
    %v765 = vsel %vm353, %v764, 0
    %767 = vmatpush.msra.mxu0 0.0
    %768 = vmatpush.msra.mxu0 0.0
    %769 = vmatpush.msra.mxu0 0.0
    %770 = vmatpush.msra.mxu0 0.0
    %771 = vmatpush.msra.mxu0 0.0
    %772 = vmatpush.msra.mxu0 0.0
    %773 = vmatpush.msra.mxu0 0.0
    %774 = vmatpush.msra.mxu0 0.0
    %775 = vmatpush.msra.mxu0 %v175
    %776 = vmatpush.msra.mxu0 %v173
    %777 = vmatpush.msra.mxu0 %v171
    %778 = vmatpush.msra.mxu0 %v169
    %779 = vmatpush.msra.mxu0 %v167
    %780 = vmatpush.msra.mxu0 %v165
    %781 = vmatpush.msra.mxu0 %v163
    %782 = vmatpush.msra.mxu0 %v161
    %783 = vmatmul.f32.gmra.mxu0 %v765
    %v784 = vpop.f32.mrf.mxu0
    %v785 = vadd.f32 0.0, %v784
    %786 = vdwg.mxu0
    %787 = vmatpush.msra.mxu0 0.0
    %788 = vmatpush.msra.mxu0 0.0
    %789 = vmatpush.msra.mxu0 0.0
    %790 = vmatpush.msra.mxu0 0.0
    %791 = vmatpush.msra.mxu0 0.0
    %792 = vmatpush.msra.mxu0 0.0
    %793 = vmatpush.msra.mxu0 0.0
    %794 = vmatpush.msra.mxu0 0.0
    %795 = vmatpush.msra.mxu0 %v176
    %796 = vmatpush.msra.mxu0 %v174
    %797 = vmatpush.msra.mxu0 %v172
    %798 = vmatpush.msra.mxu0 %v170
    %799 = vmatpush.msra.mxu0 %v168
    %800 = vmatpush.msra.mxu0 %v166
    %801 = vmatpush.msra.mxu0 %v164
    %802 = vmatpush.msra.mxu0 %v162
    %803 = vmatmul.f32.gmra.mxu0 %v765
    %v804 = vpop.f32.mrf.mxu0
    %v805 = vadd.f32 0.0, %v804
    %806 = vdwg.mxu0
    %v807 = vadd.f32 %v317, %v785
    %v808 = vadd.f32 %v318, %v805
    %v809 = vxor.u32 %v807, 2147483648
    %v810 = vmul.f32 %v809, 1.442695
    %v811 = vpow.pop %v810
    %v812 = vadd.f32 %v811, 1.0
    %v813 = vrcp.pop %v812
    %v814 = vmul.f32 %v812, %v813
    %v815 = vsub.f32 1.0, %v814
    %v816 = vmul.f32 %v813, %v815
    %v817 = vadd.f32 %v813, %v816
    %vm818 = vweird.f32 %v812
    %vm819 = vweird.f32 %v813
    %vm820 = vmor %vm818, %vm819
    %v821 = vsel %vm820, %v813, %v817
    %v822 = vand.u32 2147483647, %v812
    %vm823 = vcmp.eq.f32.partialorder %v822, 8.507059e+37
    %v824 = vand.u32 %v812, 2147483648
    %v825 = vor.u32 1.1754944e-38, %v824
    %v826 = vsel %vm823, %v825, %v821
    %v827 = vmul.f32 1.0, %v826
    %v828 = vtanh.pop %v808
    %v829 = vxor.u32 %v808, 2147483648
    %v830 = vmul.f32 %v829, 1.442695
    %v831 = vpow.pop %v830
    %v832 = vadd.f32 %v831, 1.0
    %v833 = vrcp.pop %v832
    %v834 = vmul.f32 %v832, %v833
    %v835 = vsub.f32 1.0, %v834
    %v836 = vmul.f32 %v833, %v835
    %v837 = vadd.f32 %v833, %v836
    %vm838 = vweird.f32 %v832
    %vm839 = vweird.f32 %v833
    %vm840 = vmor %vm838, %vm839
    %v841 = vsel %vm840, %v833, %v837
    %v842 = vand.u32 2147483647, %v832
    %vm843 = vcmp.eq.f32.partialorder %v842, 8.507059e+37
    %v844 = vand.u32 %v832, 2147483648
    %v845 = vor.u32 1.1754944e-38, %v844
    %v846 = vsel %vm843, %v845, %v841
    %v847 = vmul.f32 1.0, %v846
    %v849 = vrot.slane %v758, 6
    %v851 = vmul.f32 %v827, %v849
    %v852 = vmul.f32 %v827, %v828
    %854 = vrot.lane.b32.xlu0 %v852, 64
    %v855 = vpop.permute.xlu0 %854
    %v857 = vadd.f32 %v851, %v855
    %v858 = vtanh.pop %v857
    %v859 = vmul.f32 %v847, %v858
    %861 = vrot.lane.b32.xlu0 %v859, 64
    %v862 = vpop.permute.xlu0 %861
    %v863 = vsel %vm353, %v862, 0
    %865 = vmatpush.msra.mxu0 0.0
    %866 = vmatpush.msra.mxu0 0.0
    %867 = vmatpush.msra.mxu0 0.0
    %868 = vmatpush.msra.mxu0 0.0
    %869 = vmatpush.msra.mxu0 0.0
    %870 = vmatpush.msra.mxu0 0.0
    %871 = vmatpush.msra.mxu0 0.0
    %872 = vmatpush.msra.mxu0 0.0
    %873 = vmatpush.msra.mxu0 %v175
    %874 = vmatpush.msra.mxu0 %v173
    %875 = vmatpush.msra.mxu0 %v171
    %876 = vmatpush.msra.mxu0 %v169
    %877 = vmatpush.msra.mxu0 %v167
    %878 = vmatpush.msra.mxu0 %v165
    %879 = vmatpush.msra.mxu0 %v163
    %880 = vmatpush.msra.mxu0 %v161
    %881 = vmatmul.f32.gmra.mxu0 %v863
    %v882 = vpop.f32.mrf.mxu0
    %v883 = vadd.f32 0.0, %v882
    %884 = vdwg.mxu0
    %885 = vmatpush.msra.mxu0 0.0
    %886 = vmatpush.msra.mxu0 0.0
    %887 = vmatpush.msra.mxu0 0.0
    %888 = vmatpush.msra.mxu0 0.0
    %889 = vmatpush.msra.mxu0 0.0
    %890 = vmatpush.msra.mxu0 0.0
    %891 = vmatpush.msra.mxu0 0.0
    %892 = vmatpush.msra.mxu0 0.0
    %893 = vmatpush.msra.mxu0 %v176
    %894 = vmatpush.msra.mxu0 %v174
    %895 = vmatpush.msra.mxu0 %v172
    %896 = vmatpush.msra.mxu0 %v170
    %897 = vmatpush.msra.mxu0 %v168
    %898 = vmatpush.msra.mxu0 %v166
    %899 = vmatpush.msra.mxu0 %v164
    %900 = vmatpush.msra.mxu0 %v162
    %901 = vmatmul.f32.gmra.mxu0 %v863
    %v902 = vpop.f32.mrf.mxu0
    %v903 = vadd.f32 0.0, %v902
    %904 = vdwg.mxu0
    %v907 = vrot.slane %v883, 6
    %v908 = vrot.slane %v903, 6
    %v911 = vadd.f32 %v323, %v907
    %v912 = vadd.f32 %v324, %v908
    %v913 = vxor.u32 %v911, 2147483648
    %v914 = vmul.f32 %v913, 1.442695
    %v915 = vpow.pop %v914
    %v916 = vadd.f32 %v915, 1.0
    %v917 = vrcp.pop %v916
    %v918 = vmul.f32 %v916, %v917
    %v919 = vsub.f32 1.0, %v918
    %v920 = vmul.f32 %v917, %v919
    %v921 = vadd.f32 %v917, %v920
    %vm922 = vweird.f32 %v916
    %vm923 = vweird.f32 %v917
    %vm924 = vmor %vm922, %vm923
    %v925 = vsel %vm924, %v917, %v921
    %v926 = vand.u32 2147483647, %v916
    %vm927 = vcmp.eq.f32.partialorder %v926, 8.507059e+37
    %v928 = vand.u32 %v916, 2147483648
    %v929 = vor.u32 1.1754944e-38, %v928
    %v930 = vsel %vm927, %v929, %v925
    %v931 = vmul.f32 1.0, %v930
    %v932 = vtanh.pop %v912
    %v933 = vxor.u32 %v912, 2147483648
    %v934 = vmul.f32 %v933, 1.442695
    %v935 = vpow.pop %v934
    %v936 = vadd.f32 %v935, 1.0
    %v937 = vrcp.pop %v936
    %v938 = vmul.f32 %v936, %v937
    %v939 = vsub.f32 1.0, %v938
    %v940 = vmul.f32 %v937, %v939
    %v941 = vadd.f32 %v937, %v940
    %vm942 = vweird.f32 %v936
    %vm943 = vweird.f32 %v937
    %vm944 = vmor %vm942, %vm943
    %v945 = vsel %vm944, %v937, %v941
    %v946 = vand.u32 2147483647, %v936
    %vm947 = vcmp.eq.f32.partialorder %v946, 8.507059e+37
    %v948 = vand.u32 %v936, 2147483648
    %v949 = vor.u32 1.1754944e-38, %v948
    %v950 = vsel %vm947, %v949, %v945
    %v951 = vmul.f32 1.0, %v950
    %v953 = vrot.slane %v857, 6
    %v955 = vmul.f32 %v931, %v953
    %v956 = vmul.f32 %v931, %v932
    %958 = vrot.lane.b32.xlu0 %v956, 64
    %v959 = vpop.permute.xlu0 %958
    %v961 = vadd.f32 %v955, %v959
    %v962 = vtanh.pop %v961
    %v963 = vmul.f32 %v951, %v962
    %v965 = vrot.slane %v963, 2
    %966 = vrot.lane.b32.xlu0 %v965, 64
    %v967 = vpop.permute.xlu0 %966
    %v968 = vsel %vm353, %v967, 0
    %970 = vmatpush.msra.mxu0 0.0
    %971 = vmatpush.msra.mxu0 0.0
    %972 = vmatpush.msra.mxu0 0.0
    %973 = vmatpush.msra.mxu0 0.0
    %974 = vmatpush.msra.mxu0 0.0
    %975 = vmatpush.msra.mxu0 0.0
    %976 = vmatpush.msra.mxu0 0.0
    %977 = vmatpush.msra.mxu0 0.0
    %978 = vmatpush.msra.mxu0 %v175
    %979 = vmatpush.msra.mxu0 %v173
    %980 = vmatpush.msra.mxu0 %v171
    %981 = vmatpush.msra.mxu0 %v169
    %982 = vmatpush.msra.mxu0 %v167
    %983 = vmatpush.msra.mxu0 %v165
    %984 = vmatpush.msra.mxu0 %v163
    %985 = vmatpush.msra.mxu0 %v161
    %986 = vmatmul.f32.gmra.mxu0 %v968
    %v987 = vpop.f32.mrf.mxu0
    %v988 = vadd.f32 0.0, %v987
    %989 = vdwg.mxu0
    %990 = vmatpush.msra.mxu0 0.0
    %991 = vmatpush.msra.mxu0 0.0
    %992 = vmatpush.msra.mxu0 0.0
    %993 = vmatpush.msra.mxu0 0.0
    %994 = vmatpush.msra.mxu0 0.0
    %995 = vmatpush.msra.mxu0 0.0
    %996 = vmatpush.msra.mxu0 0.0
    %997 = vmatpush.msra.mxu0 0.0
    %998 = vmatpush.msra.mxu0 %v176
    %999 = vmatpush.msra.mxu0 %v174
    %1000 = vmatpush.msra.mxu0 %v172
    %1001 = vmatpush.msra.mxu0 %v170
    %1002 = vmatpush.msra.mxu0 %v168
    %1003 = vmatpush.msra.mxu0 %v166
    %1004 = vmatpush.msra.mxu0 %v164
    %1005 = vmatpush.msra.mxu0 %v162
    %1006 = vmatmul.f32.gmra.mxu0 %v968
    %v1007 = vpop.f32.mrf.mxu0
    %v1008 = vadd.f32 0.0, %v1007
    %1009 = vdwg.mxu0
    %v1012 = vrot.slane %v988, 4
    %v1013 = vrot.slane %v1008, 4
    %v1016 = vadd.f32 %v317, %v1012
    %v1017 = vadd.f32 %v318, %v1013
    %v1018 = vxor.u32 %v1016, 2147483648
    %v1019 = vmul.f32 %v1018, 1.442695
    %v1020 = vpow.pop %v1019
    %v1021 = vadd.f32 %v1020, 1.0
    %v1022 = vrcp.pop %v1021
    %v1023 = vmul.f32 %v1021, %v1022
    %v1024 = vsub.f32 1.0, %v1023
    %v1025 = vmul.f32 %v1022, %v1024
    %v1026 = vadd.f32 %v1022, %v1025
    %vm1027 = vweird.f32 %v1021
    %vm1028 = vweird.f32 %v1022
    %vm1029 = vmor %vm1027, %vm1028
    %v1030 = vsel %vm1029, %v1022, %v1026
    %v1031 = vand.u32 2147483647, %v1021
    %vm1032 = vcmp.eq.f32.partialorder %v1031, 8.507059e+37
    %v1033 = vand.u32 %v1021, 2147483648
    %v1034 = vor.u32 1.1754944e-38, %v1033
    %v1035 = vsel %vm1032, %v1034, %v1030
    %v1036 = vmul.f32 1.0, %v1035
    %v1037 = vtanh.pop %v1017
    %v1038 = vxor.u32 %v1017, 2147483648
    %v1039 = vmul.f32 %v1038, 1.442695
    %v1040 = vpow.pop %v1039
    %v1041 = vadd.f32 %v1040, 1.0
    %v1042 = vrcp.pop %v1041
    %v1043 = vmul.f32 %v1041, %v1042
    %v1044 = vsub.f32 1.0, %v1043
    %v1045 = vmul.f32 %v1042, %v1044
    %v1046 = vadd.f32 %v1042, %v1045
    %vm1047 = vweird.f32 %v1041
    %vm1048 = vweird.f32 %v1042
    %vm1049 = vmor %vm1047, %vm1048
    %v1050 = vsel %vm1049, %v1042, %v1046
    %v1051 = vand.u32 2147483647, %v1041
    %vm1052 = vcmp.eq.f32.partialorder %v1051, 8.507059e+37
    %v1053 = vand.u32 %v1041, 2147483648
    %v1054 = vor.u32 1.1754944e-38, %v1053
    %v1055 = vsel %vm1052, %v1054, %v1050
    %v1056 = vmul.f32 1.0, %v1055
    %v1058 = vrot.slane %v961, 6
    %v1060 = vmul.f32 %v1036, %v1058
    %v1061 = vmul.f32 %v1036, %v1037
    %1063 = vrot.lane.b32.xlu0 %v1061, 64
    %v1064 = vpop.permute.xlu0 %1063
    %v1066 = vadd.f32 %v1060, %v1064
    %v1067 = vtanh.pop %v1066
    %v1068 = vmul.f32 %v1056, %v1067
    %v1070 = vrot.slane %v1068, 4
    %1071 = vrot.lane.b32.xlu0 %v1070, 64
    %v1072 = vpop.permute.xlu0 %1071
    %v1073 = vsel %vm353, %v1072, 0
    %1075 = vmatpush.msra.mxu0 0.0
    %1076 = vmatpush.msra.mxu0 0.0
    %1077 = vmatpush.msra.mxu0 0.0
    %1078 = vmatpush.msra.mxu0 0.0
    %1079 = vmatpush.msra.mxu0 0.0
    %1080 = vmatpush.msra.mxu0 0.0
    %1081 = vmatpush.msra.mxu0 0.0
    %1082 = vmatpush.msra.mxu0 0.0
    %1083 = vmatpush.msra.mxu0 %v175
    %1084 = vmatpush.msra.mxu0 %v173
    %1085 = vmatpush.msra.mxu0 %v171
    %1086 = vmatpush.msra.mxu0 %v169
    %1087 = vmatpush.msra.mxu0 %v167
    %1088 = vmatpush.msra.mxu0 %v165
    %1089 = vmatpush.msra.mxu0 %v163
    %1090 = vmatpush.msra.mxu0 %v161
    %1091 = vmatmul.f32.gmra.mxu0 %v1073
    %v1092 = vpop.f32.mrf.mxu0
    %v1093 = vadd.f32 0.0, %v1092
    %1094 = vdwg.mxu0
    %1095 = vmatpush.msra.mxu0 0.0
    %1096 = vmatpush.msra.mxu0 0.0
    %1097 = vmatpush.msra.mxu0 0.0
    %1098 = vmatpush.msra.mxu0 0.0
    %1099 = vmatpush.msra.mxu0 0.0
    %1100 = vmatpush.msra.mxu0 0.0
    %1101 = vmatpush.msra.mxu0 0.0
    %1102 = vmatpush.msra.mxu0 0.0
    %1103 = vmatpush.msra.mxu0 %v176
    %1104 = vmatpush.msra.mxu0 %v174
    %1105 = vmatpush.msra.mxu0 %v172
    %1106 = vmatpush.msra.mxu0 %v170
    %1107 = vmatpush.msra.mxu0 %v168
    %1108 = vmatpush.msra.mxu0 %v166
    %1109 = vmatpush.msra.mxu0 %v164
    %1110 = vmatpush.msra.mxu0 %v162
    %1111 = vmatmul.f32.gmra.mxu0 %v1073
    %v1112 = vpop.f32.mrf.mxu0
    %v1113 = vadd.f32 0.0, %v1112
    %1114 = vdwg.mxu0
    %v1117 = vrot.slane %v1093, 2
    %v1118 = vrot.slane %v1113, 2
    %v1121 = vadd.f32 %v323, %v1117
    %v1122 = vadd.f32 %v324, %v1118
    %v1123 = vxor.u32 %v1121, 2147483648
    %v1124 = vmul.f32 %v1123, 1.442695
    %v1125 = vpow.pop %v1124
    %v1126 = vadd.f32 %v1125, 1.0
    %v1127 = vrcp.pop %v1126
    %v1128 = vmul.f32 %v1126, %v1127
    %v1129 = vsub.f32 1.0, %v1128
    %v1130 = vmul.f32 %v1127, %v1129
    %v1131 = vadd.f32 %v1127, %v1130
    %vm1132 = vweird.f32 %v1126
    %vm1133 = vweird.f32 %v1127
    %vm1134 = vmor %vm1132, %vm1133
    %v1135 = vsel %vm1134, %v1127, %v1131
    %v1136 = vand.u32 2147483647, %v1126
    %vm1137 = vcmp.eq.f32.partialorder %v1136, 8.507059e+37
    %v1138 = vand.u32 %v1126, 2147483648
    %v1139 = vor.u32 1.1754944e-38, %v1138
    %v1140 = vsel %vm1137, %v1139, %v1135
    %v1141 = vmul.f32 1.0, %v1140
    %v1142 = vtanh.pop %v1122
    %v1143 = vxor.u32 %v1122, 2147483648
    %v1144 = vmul.f32 %v1143, 1.442695
    %v1145 = vpow.pop %v1144
    %v1146 = vadd.f32 %v1145, 1.0
    %v1147 = vrcp.pop %v1146
    %v1148 = vmul.f32 %v1146, %v1147
    %v1149 = vsub.f32 1.0, %v1148
    %v1150 = vmul.f32 %v1147, %v1149
    %v1151 = vadd.f32 %v1147, %v1150
    %vm1152 = vweird.f32 %v1146
    %vm1153 = vweird.f32 %v1147
    %vm1154 = vmor %vm1152, %vm1153
    %v1155 = vsel %vm1154, %v1147, %v1151
    %v1156 = vand.u32 2147483647, %v1146
    %vm1157 = vcmp.eq.f32.partialorder %v1156, 8.507059e+37
    %v1158 = vand.u32 %v1146, 2147483648
    %v1159 = vor.u32 1.1754944e-38, %v1158
    %v1160 = vsel %vm1157, %v1159, %v1155
    %v1161 = vmul.f32 1.0, %v1160
    %v1163 = vrot.slane %v1066, 6
    %v1165 = vmul.f32 %v1141, %v1163
    %v1166 = vmul.f32 %v1141, %v1142
    %1168 = vrot.lane.b32.xlu0 %v1166, 64
    %v1169 = vpop.permute.xlu0 %1168
    %v1171 = vadd.f32 %v1165, %v1169
    %v1172 = vtanh.pop %v1171
    %v1173 = vmul.f32 %v1161, %v1172
    %v1175 = vrot.slane %v1173, 6
    %1176 = vrot.lane.b32.xlu0 %v1175, 64
    %v1177 = vpop.permute.xlu0 %1176
    %v1178 = vsel %vm353, %v1177, 0
    %1180 = vmatpush.msra.mxu0 0.0
    %1181 = vmatpush.msra.mxu0 0.0
    %1182 = vmatpush.msra.mxu0 0.0
    %1183 = vmatpush.msra.mxu0 0.0
    %1184 = vmatpush.msra.mxu0 0.0
    %1185 = vmatpush.msra.mxu0 0.0
    %1186 = vmatpush.msra.mxu0 0.0
    %1187 = vmatpush.msra.mxu0 0.0
    %1188 = vmatpush.msra.mxu0 %v175
    %1189 = vmatpush.msra.mxu0 %v173
    %1190 = vmatpush.msra.mxu0 %v171
    %1191 = vmatpush.msra.mxu0 %v169
    %1192 = vmatpush.msra.mxu0 %v167
    %1193 = vmatpush.msra.mxu0 %v165
    %1194 = vmatpush.msra.mxu0 %v163
    %1195 = vmatpush.msra.mxu0 %v161
    %1196 = vmatmul.f32.gmra.mxu0 %v1178
    %v1197 = vpop.f32.mrf.mxu0
    %v1198 = vadd.f32 0.0, %v1197
    %1199 = vdwg.mxu0
    %1200 = vmatpush.msra.mxu0 0.0
    %1201 = vmatpush.msra.mxu0 0.0
    %1202 = vmatpush.msra.mxu0 0.0
    %1203 = vmatpush.msra.mxu0 0.0
    %1204 = vmatpush.msra.mxu0 0.0
    %1205 = vmatpush.msra.mxu0 0.0
    %1206 = vmatpush.msra.mxu0 0.0
    %1207 = vmatpush.msra.mxu0 0.0
    %1208 = vmatpush.msra.mxu0 %v176
    %1209 = vmatpush.msra.mxu0 %v174
    %1210 = vmatpush.msra.mxu0 %v172
    %1211 = vmatpush.msra.mxu0 %v170
    %1212 = vmatpush.msra.mxu0 %v168
    %1213 = vmatpush.msra.mxu0 %v166
    %1214 = vmatpush.msra.mxu0 %v164
    %1215 = vmatpush.msra.mxu0 %v162
    %1216 = vmatmul.f32.gmra.mxu0 %v1178
    %v1217 = vpop.f32.mrf.mxu0
    %v1218 = vadd.f32 0.0, %v1217
    %1219 = vdwg.mxu0
    %v1220 = vadd.f32 %v331, %v1198
    %v1221 = vadd.f32 %v332, %v1218
    %v1222 = vxor.u32 %v1220, 2147483648
    %v1223 = vmul.f32 %v1222, 1.442695
    %v1224 = vpow.pop %v1223
    %v1225 = vadd.f32 %v1224, 1.0
    %v1226 = vrcp.pop %v1225
    %v1227 = vmul.f32 %v1225, %v1226
    %v1228 = vsub.f32 1.0, %v1227
    %v1229 = vmul.f32 %v1226, %v1228
    %v1230 = vadd.f32 %v1226, %v1229
    %vm1231 = vweird.f32 %v1225
    %vm1232 = vweird.f32 %v1226
    %vm1233 = vmor %vm1231, %vm1232
    %v1234 = vsel %vm1233, %v1226, %v1230
    %v1235 = vand.u32 2147483647, %v1225
    %vm1236 = vcmp.eq.f32.partialorder %v1235, 8.507059e+37
    %v1237 = vand.u32 %v1225, 2147483648
    %v1238 = vor.u32 1.1754944e-38, %v1237
    %v1239 = vsel %vm1236, %v1238, %v1234
    %v1240 = vmul.f32 1.0, %v1239
    %v1241 = vtanh.pop %v1221
    %v1242 = vxor.u32 %v1221, 2147483648
    %v1243 = vmul.f32 %v1242, 1.442695
    %v1244 = vpow.pop %v1243
    %v1245 = vadd.f32 %v1244, 1.0
    %v1246 = vrcp.pop %v1245
    %v1247 = vmul.f32 %v1245, %v1246
    %v1248 = vsub.f32 1.0, %v1247
    %v1249 = vmul.f32 %v1246, %v1248
    %v1250 = vadd.f32 %v1246, %v1249
    %vm1251 = vweird.f32 %v1245
    %vm1252 = vweird.f32 %v1246
    %vm1253 = vmor %vm1251, %vm1252
    %v1254 = vsel %vm1253, %v1246, %v1250
    %v1255 = vand.u32 2147483647, %v1245
    %vm1256 = vcmp.eq.f32.partialorder %v1255, 8.507059e+37
    %v1257 = vand.u32 %v1245, 2147483648
    %v1258 = vor.u32 1.1754944e-38, %v1257
    %v1259 = vsel %vm1256, %v1258, %v1254
    %v1260 = vmul.f32 1.0, %v1259
    %v1262 = vrot.slane %v1171, 6
    %v1264 = vmul.f32 %v1240, %v1262
    %v1265 = vmul.f32 %v1240, %v1241
    %1267 = vrot.lane.b32.xlu0 %v1265, 64
    %v1268 = vpop.permute.xlu0 %1267
    %v1270 = vadd.f32 %v1264, %v1268
    %v1271 = vtanh.pop %v1270
    %v1272 = vmul.f32 %v1260, %v1271
    %1274 = vrot.lane.b32.xlu0 %v1272, 64
    %v1275 = vpop.permute.xlu0 %1274
    %v1276 = vsel %vm353, %v1275, 0
    %1278 = vmatpush.msra.mxu0 0.0
    %1279 = vmatpush.msra.mxu0 0.0
    %1280 = vmatpush.msra.mxu0 0.0
    %1281 = vmatpush.msra.mxu0 0.0
    %1282 = vmatpush.msra.mxu0 0.0
    %1283 = vmatpush.msra.mxu0 0.0
    %1284 = vmatpush.msra.mxu0 0.0
    %1285 = vmatpush.msra.mxu0 0.0
    %1286 = vmatpush.msra.mxu0 %v175
    %1287 = vmatpush.msra.mxu0 %v173
    %1288 = vmatpush.msra.mxu0 %v171
    %1289 = vmatpush.msra.mxu0 %v169
    %1290 = vmatpush.msra.mxu0 %v167
    %1291 = vmatpush.msra.mxu0 %v165
    %1292 = vmatpush.msra.mxu0 %v163
    %1293 = vmatpush.msra.mxu0 %v161
    %1294 = vmatmul.f32.gmra.mxu0 %v1276
    %v1295 = vpop.f32.mrf.mxu0
    %v1296 = vadd.f32 0.0, %v1295
    %1297 = vdwg.mxu0
    %1298 = vmatpush.msra.mxu0 0.0
    %1299 = vmatpush.msra.mxu0 0.0
    %1300 = vmatpush.msra.mxu0 0.0
    %1301 = vmatpush.msra.mxu0 0.0
    %1302 = vmatpush.msra.mxu0 0.0
    %1303 = vmatpush.msra.mxu0 0.0
    %1304 = vmatpush.msra.mxu0 0.0
    %1305 = vmatpush.msra.mxu0 0.0
    %1306 = vmatpush.msra.mxu0 %v176
    %1307 = vmatpush.msra.mxu0 %v174
    %1308 = vmatpush.msra.mxu0 %v172
    %1309 = vmatpush.msra.mxu0 %v170
    %1310 = vmatpush.msra.mxu0 %v168
    %1311 = vmatpush.msra.mxu0 %v166
    %1312 = vmatpush.msra.mxu0 %v164
    %1313 = vmatpush.msra.mxu0 %v162
    %1314 = vmatmul.f32.gmra.mxu0 %v1276
    %v1315 = vpop.f32.mrf.mxu0
    %v1316 = vadd.f32 0.0, %v1315
    %1317 = vdwg.mxu0
    %v1320 = vrot.slane %v1296, 6
    %v1321 = vrot.slane %v1316, 6
    %v1324 = vadd.f32 %v337, %v1320
    %v1325 = vadd.f32 %v338, %v1321
    %v1326 = vxor.u32 %v1324, 2147483648
    %v1327 = vmul.f32 %v1326, 1.442695
    %v1328 = vpow.pop %v1327
    %v1329 = vadd.f32 %v1328, 1.0
    %v1330 = vrcp.pop %v1329
    %v1331 = vmul.f32 %v1329, %v1330
    %v1332 = vsub.f32 1.0, %v1331
    %v1333 = vmul.f32 %v1330, %v1332
    %v1334 = vadd.f32 %v1330, %v1333
    %vm1335 = vweird.f32 %v1329
    %vm1336 = vweird.f32 %v1330
    %vm1337 = vmor %vm1335, %vm1336
    %v1338 = vsel %vm1337, %v1330, %v1334
    %v1339 = vand.u32 2147483647, %v1329
    %vm1340 = vcmp.eq.f32.partialorder %v1339, 8.507059e+37
    %v1341 = vand.u32 %v1329, 2147483648
    %v1342 = vor.u32 1.1754944e-38, %v1341
    %v1343 = vsel %vm1340, %v1342, %v1338
    %v1344 = vmul.f32 1.0, %v1343
    %v1345 = vtanh.pop %v1325
    %v1346 = vxor.u32 %v1325, 2147483648
    %v1347 = vmul.f32 %v1346, 1.442695
    %v1348 = vpow.pop %v1347
    %v1349 = vadd.f32 %v1348, 1.0
    %v1350 = vrcp.pop %v1349
    %v1351 = vmul.f32 %v1349, %v1350
    %v1352 = vsub.f32 1.0, %v1351
    %v1353 = vmul.f32 %v1350, %v1352
    %v1354 = vadd.f32 %v1350, %v1353
    %vm1355 = vweird.f32 %v1349
    %vm1356 = vweird.f32 %v1350
    %vm1357 = vmor %vm1355, %vm1356
    %v1358 = vsel %vm1357, %v1350, %v1354
    %v1359 = vand.u32 2147483647, %v1349
    %vm1360 = vcmp.eq.f32.partialorder %v1359, 8.507059e+37
    %v1361 = vand.u32 %v1349, 2147483648
    %v1362 = vor.u32 1.1754944e-38, %v1361
    %v1363 = vsel %vm1360, %v1362, %v1358
    %v1364 = vmul.f32 1.0, %v1363
    %v1366 = vrot.slane %v1270, 6
    %v1368 = vmul.f32 %v1344, %v1366
    %v1369 = vmul.f32 %v1344, %v1345
    %1371 = vrot.lane.b32.xlu0 %v1369, 64
    %v1372 = vpop.permute.xlu0 %1371
    %v1374 = vadd.f32 %v1368, %v1372
    %v1375 = vtanh.pop %v1374
    %v1376 = vmul.f32 %v1364, %v1375
    %v1378 = vrot.slane %v1376, 2
    %1379 = vrot.lane.b32.xlu0 %v1378, 64
    %v1380 = vpop.permute.xlu0 %1379
    %v1381 = vsel %vm353, %v1380, 0
    %1383 = vmatpush.msra.mxu0 0.0
    %1384 = vmatpush.msra.mxu0 0.0
    %1385 = vmatpush.msra.mxu0 0.0
    %1386 = vmatpush.msra.mxu0 0.0
    %1387 = vmatpush.msra.mxu0 0.0
    %1388 = vmatpush.msra.mxu0 0.0
    %1389 = vmatpush.msra.mxu0 0.0
    %1390 = vmatpush.msra.mxu0 0.0
    %1391 = vmatpush.msra.mxu0 %v175
    %1392 = vmatpush.msra.mxu0 %v173
    %1393 = vmatpush.msra.mxu0 %v171
    %1394 = vmatpush.msra.mxu0 %v169
    %1395 = vmatpush.msra.mxu0 %v167
    %1396 = vmatpush.msra.mxu0 %v165
    %1397 = vmatpush.msra.mxu0 %v163
    %1398 = vmatpush.msra.mxu0 %v161
    %1399 = vmatmul.f32.gmra.mxu0 %v1381
    %v1400 = vpop.f32.mrf.mxu0
    %v1401 = vadd.f32 0.0, %v1400
    %1402 = vdwg.mxu0
    %1403 = vmatpush.msra.mxu0 0.0
    %1404 = vmatpush.msra.mxu0 0.0
    %1405 = vmatpush.msra.mxu0 0.0
    %1406 = vmatpush.msra.mxu0 0.0
    %1407 = vmatpush.msra.mxu0 0.0
    %1408 = vmatpush.msra.mxu0 0.0
    %1409 = vmatpush.msra.mxu0 0.0
    %1410 = vmatpush.msra.mxu0 0.0
    %1411 = vmatpush.msra.mxu0 %v176
    %1412 = vmatpush.msra.mxu0 %v174
    %1413 = vmatpush.msra.mxu0 %v172
    %1414 = vmatpush.msra.mxu0 %v170
    %1415 = vmatpush.msra.mxu0 %v168
    %1416 = vmatpush.msra.mxu0 %v166
    %1417 = vmatpush.msra.mxu0 %v164
    %1418 = vmatpush.msra.mxu0 %v162
    %1419 = vmatmul.f32.gmra.mxu0 %v1381
    %v1420 = vpop.f32.mrf.mxu0
    %v1421 = vadd.f32 0.0, %v1420
    %1422 = vdwg.mxu0
    %v1425 = vrot.slane %v1401, 4
    %v1426 = vrot.slane %v1421, 4
    %v1429 = vadd.f32 %v331, %v1425
    %v1430 = vadd.f32 %v332, %v1426
    %v1431 = vxor.u32 %v1429, 2147483648
    %v1432 = vmul.f32 %v1431, 1.442695
    %v1433 = vpow.pop %v1432
    %v1434 = vadd.f32 %v1433, 1.0
    %v1435 = vrcp.pop %v1434
    %v1436 = vmul.f32 %v1434, %v1435
    %v1437 = vsub.f32 1.0, %v1436
    %v1438 = vmul.f32 %v1435, %v1437
    %v1439 = vadd.f32 %v1435, %v1438
    %vm1440 = vweird.f32 %v1434
    %vm1441 = vweird.f32 %v1435
    %vm1442 = vmor %vm1440, %vm1441
    %v1443 = vsel %vm1442, %v1435, %v1439
    %v1444 = vand.u32 2147483647, %v1434
    %vm1445 = vcmp.eq.f32.partialorder %v1444, 8.507059e+37
    %v1446 = vand.u32 %v1434, 2147483648
    %v1447 = vor.u32 1.1754944e-38, %v1446
    %v1448 = vsel %vm1445, %v1447, %v1443
    %v1449 = vmul.f32 1.0, %v1448
    %v1450 = vtanh.pop %v1430
    %v1451 = vxor.u32 %v1430, 2147483648
    %v1452 = vmul.f32 %v1451, 1.442695
    %v1453 = vpow.pop %v1452
    %v1454 = vadd.f32 %v1453, 1.0
    %v1455 = vrcp.pop %v1454
    %v1456 = vmul.f32 %v1454, %v1455
    %v1457 = vsub.f32 1.0, %v1456
    %v1458 = vmul.f32 %v1455, %v1457
    %v1459 = vadd.f32 %v1455, %v1458
    %vm1460 = vweird.f32 %v1454
    %vm1461 = vweird.f32 %v1455
    %vm1462 = vmor %vm1460, %vm1461
    %v1463 = vsel %vm1462, %v1455, %v1459
    %v1464 = vand.u32 2147483647, %v1454
    %vm1465 = vcmp.eq.f32.partialorder %v1464, 8.507059e+37
    %v1466 = vand.u32 %v1454, 2147483648
    %v1467 = vor.u32 1.1754944e-38, %v1466
    %v1468 = vsel %vm1465, %v1467, %v1463
    %v1469 = vmul.f32 1.0, %v1468
    %v1471 = vrot.slane %v1374, 6
    %v1473 = vmul.f32 %v1449, %v1471
    %v1474 = vmul.f32 %v1449, %v1450
    %1476 = vrot.lane.b32.xlu0 %v1474, 64
    %v1477 = vpop.permute.xlu0 %1476
    %v1479 = vadd.f32 %v1473, %v1477
    %v1480 = vtanh.pop %v1479
    %v1481 = vmul.f32 %v1469, %v1480
    %v1483 = vrot.slane %v1481, 4
    %1484 = vrot.lane.b32.xlu0 %v1483, 64
    %v1485 = vpop.permute.xlu0 %1484
    %v1486 = vsel %vm353, %v1485, 0
    %1488 = vmatpush.msra.mxu0 0.0
    %1489 = vmatpush.msra.mxu0 0.0
    %1490 = vmatpush.msra.mxu0 0.0
    %1491 = vmatpush.msra.mxu0 0.0
    %1492 = vmatpush.msra.mxu0 0.0
    %1493 = vmatpush.msra.mxu0 0.0
    %1494 = vmatpush.msra.mxu0 0.0
    %1495 = vmatpush.msra.mxu0 0.0
    %1496 = vmatpush.msra.mxu0 %v175
    %1497 = vmatpush.msra.mxu0 %v173
    %1498 = vmatpush.msra.mxu0 %v171
    %1499 = vmatpush.msra.mxu0 %v169
    %1500 = vmatpush.msra.mxu0 %v167
    %1501 = vmatpush.msra.mxu0 %v165
    %1502 = vmatpush.msra.mxu0 %v163
    %1503 = vmatpush.msra.mxu0 %v161
    %1504 = vmatmul.f32.gmra.mxu0 %v1486
    %v1505 = vpop.f32.mrf.mxu0
    %v1506 = vadd.f32 0.0, %v1505
    %1507 = vdwg.mxu0
    %1508 = vmatpush.msra.mxu0 0.0
    %1509 = vmatpush.msra.mxu0 0.0
    %1510 = vmatpush.msra.mxu0 0.0
    %1511 = vmatpush.msra.mxu0 0.0
    %1512 = vmatpush.msra.mxu0 0.0
    %1513 = vmatpush.msra.mxu0 0.0
    %1514 = vmatpush.msra.mxu0 0.0
    %1515 = vmatpush.msra.mxu0 0.0
    %1516 = vmatpush.msra.mxu0 %v176
    %1517 = vmatpush.msra.mxu0 %v174
    %1518 = vmatpush.msra.mxu0 %v172
    %1519 = vmatpush.msra.mxu0 %v170
    %1520 = vmatpush.msra.mxu0 %v168
    %1521 = vmatpush.msra.mxu0 %v166
    %1522 = vmatpush.msra.mxu0 %v164
    %1523 = vmatpush.msra.mxu0 %v162
    %1524 = vmatmul.f32.gmra.mxu0 %v1486
    %v1525 = vpop.f32.mrf.mxu0
    %v1526 = vadd.f32 0.0, %v1525
    %1527 = vdwg.mxu0
    %v1530 = vrot.slane %v1506, 2
    %v1531 = vrot.slane %v1526, 2
    %v1534 = vadd.f32 %v337, %v1530
    %v1535 = vadd.f32 %v338, %v1531
    %v1536 = vxor.u32 %v1534, 2147483648
    %v1537 = vmul.f32 %v1536, 1.442695
    %v1538 = vpow.pop %v1537
    %v1539 = vadd.f32 %v1538, 1.0
    %v1540 = vrcp.pop %v1539
    %v1541 = vmul.f32 %v1539, %v1540
    %v1542 = vsub.f32 1.0, %v1541
    %v1543 = vmul.f32 %v1540, %v1542
    %v1544 = vadd.f32 %v1540, %v1543
    %vm1545 = vweird.f32 %v1539
    %vm1546 = vweird.f32 %v1540
    %vm1547 = vmor %vm1545, %vm1546
    %v1548 = vsel %vm1547, %v1540, %v1544
    %v1549 = vand.u32 2147483647, %v1539
    %vm1550 = vcmp.eq.f32.partialorder %v1549, 8.507059e+37
    %v1551 = vand.u32 %v1539, 2147483648
    %v1552 = vor.u32 1.1754944e-38, %v1551
    %v1553 = vsel %vm1550, %v1552, %v1548
    %v1554 = vmul.f32 1.0, %v1553
    %v1555 = vtanh.pop %v1535
    %v1556 = vxor.u32 %v1535, 2147483648
    %v1557 = vmul.f32 %v1556, 1.442695
    %v1558 = vpow.pop %v1557
    %v1559 = vadd.f32 %v1558, 1.0
    %v1560 = vrcp.pop %v1559
    %v1561 = vmul.f32 %v1559, %v1560
    %v1562 = vsub.f32 1.0, %v1561
    %v1563 = vmul.f32 %v1560, %v1562
    %v1564 = vadd.f32 %v1560, %v1563
    %vm1565 = vweird.f32 %v1559
    %vm1566 = vweird.f32 %v1560
    %vm1567 = vmor %vm1565, %vm1566
    %v1568 = vsel %vm1567, %v1560, %v1564
    %v1569 = vand.u32 2147483647, %v1559
    %vm1570 = vcmp.eq.f32.partialorder %v1569, 8.507059e+37
    %v1571 = vand.u32 %v1559, 2147483648
    %v1572 = vor.u32 1.1754944e-38, %v1571
    %v1573 = vsel %vm1570, %v1572, %v1568
    %v1574 = vmul.f32 1.0, %v1573
    %v1576 = vrot.slane %v1479, 6
    %v1578 = vmul.f32 %v1554, %v1576
    %v1579 = vmul.f32 %v1554, %v1555
    %1581 = vrot.lane.b32.xlu0 %v1579, 64
    %v1582 = vpop.permute.xlu0 %1581
    %v1584 = vadd.f32 %v1578, %v1582
    %v1585 = vtanh.pop %v1584
    %v1586 = vmul.f32 %v1574, %v1585
    %v1588 = vrot.slane %v1586, 6
    %1589 = vrot.lane.b32.xlu0 %v1588, 64
    %v1590 = vpop.permute.xlu0 %1589
    %v1591 = vsel %vm353, %v1590, 0
    %1593 = vmatpush.msra.mxu0 0.0
    %1594 = vmatpush.msra.mxu0 0.0
    %1595 = vmatpush.msra.mxu0 0.0
    %1596 = vmatpush.msra.mxu0 0.0
    %1597 = vmatpush.msra.mxu0 0.0
    %1598 = vmatpush.msra.mxu0 0.0
    %1599 = vmatpush.msra.mxu0 0.0
    %1600 = vmatpush.msra.mxu0 0.0
    %1601 = vmatpush.msra.mxu0 %v175
    %1602 = vmatpush.msra.mxu0 %v173
    %1603 = vmatpush.msra.mxu0 %v171
    %1604 = vmatpush.msra.mxu0 %v169
    %1605 = vmatpush.msra.mxu0 %v167
    %1606 = vmatpush.msra.mxu0 %v165
    %1607 = vmatpush.msra.mxu0 %v163
    %1608 = vmatpush.msra.mxu0 %v161
    %1609 = vmatmul.f32.gmra.mxu0 %v1591
    %v1610 = vpop.f32.mrf.mxu0
    %v1611 = vadd.f32 0.0, %v1610
    %1612 = vdwg.mxu0
    %1613 = vmatpush.msra.mxu0 0.0
    %1614 = vmatpush.msra.mxu0 0.0
    %1615 = vmatpush.msra.mxu0 0.0
    %1616 = vmatpush.msra.mxu0 0.0
    %1617 = vmatpush.msra.mxu0 0.0
    %1618 = vmatpush.msra.mxu0 0.0
    %1619 = vmatpush.msra.mxu0 0.0
    %1620 = vmatpush.msra.mxu0 0.0
    %1621 = vmatpush.msra.mxu0 %v176
    %1622 = vmatpush.msra.mxu0 %v174
    %1623 = vmatpush.msra.mxu0 %v172
    %1624 = vmatpush.msra.mxu0 %v170
    %1625 = vmatpush.msra.mxu0 %v168
    %1626 = vmatpush.msra.mxu0 %v166
    %1627 = vmatpush.msra.mxu0 %v164
    %1628 = vmatpush.msra.mxu0 %v162
    %1629 = vmatmul.f32.gmra.mxu0 %v1591
    %v1630 = vpop.f32.mrf.mxu0
    %v1631 = vadd.f32 0.0, %v1630
    %1632 = vdwg.mxu0
    %v1633 = vadd.f32 %v345, %v1611
    %v1634 = vadd.f32 %v346, %v1631
    %v1635 = vxor.u32 %v1633, 2147483648
    %v1636 = vmul.f32 %v1635, 1.442695
    %v1637 = vpow.pop %v1636
    %v1638 = vadd.f32 %v1637, 1.0
    %v1639 = vrcp.pop %v1638
    %v1640 = vmul.f32 %v1638, %v1639
    %v1641 = vsub.f32 1.0, %v1640
    %v1642 = vmul.f32 %v1639, %v1641
    %v1643 = vadd.f32 %v1639, %v1642
    %vm1644 = vweird.f32 %v1638
    %vm1645 = vweird.f32 %v1639
    %vm1646 = vmor %vm1644, %vm1645
    %v1647 = vsel %vm1646, %v1639, %v1643
    %v1648 = vand.u32 2147483647, %v1638
    %vm1649 = vcmp.eq.f32.partialorder %v1648, 8.507059e+37
    %v1650 = vand.u32 %v1638, 2147483648
    %v1651 = vor.u32 1.1754944e-38, %v1650
    %v1652 = vsel %vm1649, %v1651, %v1647
    %v1653 = vmul.f32 1.0, %v1652
    %v1654 = vtanh.pop %v1634
    %v1655 = vxor.u32 %v1634, 2147483648
    %v1656 = vmul.f32 %v1655, 1.442695
    %v1657 = vpow.pop %v1656
    %v1658 = vadd.f32 %v1657, 1.0
    %v1659 = vrcp.pop %v1658
    %v1660 = vmul.f32 %v1658, %v1659
    %v1661 = vsub.f32 1.0, %v1660
    %v1662 = vmul.f32 %v1659, %v1661
    %v1663 = vadd.f32 %v1659, %v1662
    %vm1664 = vweird.f32 %v1658
    %vm1665 = vweird.f32 %v1659
    %vm1666 = vmor %vm1664, %vm1665
    %v1667 = vsel %vm1666, %v1659, %v1663
    %v1668 = vand.u32 2147483647, %v1658
    %vm1669 = vcmp.eq.f32.partialorder %v1668, 8.507059e+37
    %v1670 = vand.u32 %v1658, 2147483648
    %v1671 = vor.u32 1.1754944e-38, %v1670
    %v1672 = vsel %vm1669, %v1671, %v1667
    %v1673 = vmul.f32 1.0, %v1672
    %v1675 = vrot.slane %v1584, 6
    %v1677 = vmul.f32 %v1653, %v1675
    %v1678 = vmul.f32 %v1653, %v1654
    %1680 = vrot.lane.b32.xlu0 %v1678, 64
    %v1681 = vpop.permute.xlu0 %1680
    %v1683 = vadd.f32 %v1677, %v1681
    %v1684 = vtanh.pop %v1683
    %v1685 = vmul.f32 %v1673, %v1684
    %1687 = vrot.lane.b32.xlu0 %v1685, 64
    %v1688 = vpop.permute.xlu0 %1687
    %v1689 = vsel %vm353, %v1688, 0
    %1691 = vmatpush.msra.mxu0 0.0
    %1692 = vmatpush.msra.mxu0 0.0
    %1693 = vmatpush.msra.mxu0 0.0
    %1694 = vmatpush.msra.mxu0 0.0
    %1695 = vmatpush.msra.mxu0 0.0
    %1696 = vmatpush.msra.mxu0 0.0
    %1697 = vmatpush.msra.mxu0 0.0
    %1698 = vmatpush.msra.mxu0 0.0
    %1699 = vmatpush.msra.mxu0 %v175
    %1700 = vmatpush.msra.mxu0 %v173
    %1701 = vmatpush.msra.mxu0 %v171
    %1702 = vmatpush.msra.mxu0 %v169
    %1703 = vmatpush.msra.mxu0 %v167
    %1704 = vmatpush.msra.mxu0 %v165
    %1705 = vmatpush.msra.mxu0 %v163
    %1706 = vmatpush.msra.mxu0 %v161
    %1707 = vmatmul.f32.gmra.mxu0 %v1689
    %v1708 = vpop.f32.mrf.mxu0
    %v1709 = vadd.f32 0.0, %v1708
    %1710 = vdwg.mxu0
    %1711 = vmatpush.msra.mxu0 0.0
    %1712 = vmatpush.msra.mxu0 0.0
    %1713 = vmatpush.msra.mxu0 0.0
    %1714 = vmatpush.msra.mxu0 0.0
    %1715 = vmatpush.msra.mxu0 0.0
    %1716 = vmatpush.msra.mxu0 0.0
    %1717 = vmatpush.msra.mxu0 0.0
    %1718 = vmatpush.msra.mxu0 0.0
    %1719 = vmatpush.msra.mxu0 %v176
    %1720 = vmatpush.msra.mxu0 %v174
    %1721 = vmatpush.msra.mxu0 %v172
    %1722 = vmatpush.msra.mxu0 %v170
    %1723 = vmatpush.msra.mxu0 %v168
    %1724 = vmatpush.msra.mxu0 %v166
    %1725 = vmatpush.msra.mxu0 %v164
    %1726 = vmatpush.msra.mxu0 %v162
    %1727 = vmatmul.f32.gmra.mxu0 %v1689
    %v1728 = vpop.f32.mrf.mxu0
    %v1729 = vadd.f32 0.0, %v1728
    %1730 = vdwg.mxu0
    %v1733 = vrot.slane %v1709, 6
    %v1734 = vrot.slane %v1729, 6
    %v1737 = vadd.f32 %v351, %v1733
    %v1738 = vadd.f32 %v352, %v1734
    %v1739 = vxor.u32 %v1737, 2147483648
    %v1740 = vmul.f32 %v1739, 1.442695
    %v1741 = vpow.pop %v1740
    %v1742 = vadd.f32 %v1741, 1.0
    %v1743 = vrcp.pop %v1742
    %v1744 = vmul.f32 %v1742, %v1743
    %v1745 = vsub.f32 1.0, %v1744
    %v1746 = vmul.f32 %v1743, %v1745
    %v1747 = vadd.f32 %v1743, %v1746
    %vm1748 = vweird.f32 %v1742
    %vm1749 = vweird.f32 %v1743
    %vm1750 = vmor %vm1748, %vm1749
    %v1751 = vsel %vm1750, %v1743, %v1747
    %v1752 = vand.u32 2147483647, %v1742
    %vm1753 = vcmp.eq.f32.partialorder %v1752, 8.507059e+37
    %v1754 = vand.u32 %v1742, 2147483648
    %v1755 = vor.u32 1.1754944e-38, %v1754
    %v1756 = vsel %vm1753, %v1755, %v1751
    %v1757 = vmul.f32 1.0, %v1756
    %v1758 = vtanh.pop %v1738
    %v1759 = vxor.u32 %v1738, 2147483648
    %v1760 = vmul.f32 %v1759, 1.442695
    %v1761 = vpow.pop %v1760
    %v1762 = vadd.f32 %v1761, 1.0
    %v1763 = vrcp.pop %v1762
    %v1764 = vmul.f32 %v1762, %v1763
    %v1765 = vsub.f32 1.0, %v1764
    %v1766 = vmul.f32 %v1763, %v1765
    %v1767 = vadd.f32 %v1763, %v1766
    %vm1768 = vweird.f32 %v1762
    %vm1769 = vweird.f32 %v1763
    %vm1770 = vmor %vm1768, %vm1769
    %v1771 = vsel %vm1770, %v1763, %v1767
    %v1772 = vand.u32 2147483647, %v1762
    %vm1773 = vcmp.eq.f32.partialorder %v1772, 8.507059e+37
    %v1774 = vand.u32 %v1762, 2147483648
    %v1775 = vor.u32 1.1754944e-38, %v1774
    %v1776 = vsel %vm1773, %v1775, %v1771
    %v1777 = vmul.f32 1.0, %v1776
    %v1779 = vrot.slane %v1683, 6
    %v1781 = vmul.f32 %v1757, %v1779
    %v1782 = vmul.f32 %v1757, %v1758
    %1784 = vrot.lane.b32.xlu0 %v1782, 64
    %v1785 = vpop.permute.xlu0 %1784
    %v1787 = vadd.f32 %v1781, %v1785
    %v1788 = vtanh.pop %v1787
    %v1789 = vmul.f32 %v1777, %v1788
    %v1791 = vrot.slane %v1789, 2
    %1792 = vrot.lane.b32.xlu0 %v1791, 64
    %v1793 = vpop.permute.xlu0 %1792
    %v1794 = vsel %vm353, %v1793, 0
    %1796 = vmatpush.msra.mxu0 0.0
    %1797 = vmatpush.msra.mxu0 0.0
    %1798 = vmatpush.msra.mxu0 0.0
    %1799 = vmatpush.msra.mxu0 0.0
    %1800 = vmatpush.msra.mxu0 0.0
    %1801 = vmatpush.msra.mxu0 0.0
    %1802 = vmatpush.msra.mxu0 0.0
    %1803 = vmatpush.msra.mxu0 0.0
    %1804 = vmatpush.msra.mxu0 %v175
    %1805 = vmatpush.msra.mxu0 %v173
    %1806 = vmatpush.msra.mxu0 %v171
    %1807 = vmatpush.msra.mxu0 %v169
    %1808 = vmatpush.msra.mxu0 %v167
    %1809 = vmatpush.msra.mxu0 %v165
    %1810 = vmatpush.msra.mxu0 %v163
    %1811 = vmatpush.msra.mxu0 %v161
    %1812 = vmatmul.f32.gmra.mxu0 %v1794
    %v1813 = vpop.f32.mrf.mxu0
    %v1814 = vadd.f32 0.0, %v1813
    %1815 = vdwg.mxu0
    %1816 = vmatpush.msra.mxu0 0.0
    %1817 = vmatpush.msra.mxu0 0.0
    %1818 = vmatpush.msra.mxu0 0.0
    %1819 = vmatpush.msra.mxu0 0.0
    %1820 = vmatpush.msra.mxu0 0.0
    %1821 = vmatpush.msra.mxu0 0.0
    %1822 = vmatpush.msra.mxu0 0.0
    %1823 = vmatpush.msra.mxu0 0.0
    %1824 = vmatpush.msra.mxu0 %v176
    %1825 = vmatpush.msra.mxu0 %v174
    %1826 = vmatpush.msra.mxu0 %v172
    %1827 = vmatpush.msra.mxu0 %v170
    %1828 = vmatpush.msra.mxu0 %v168
    %1829 = vmatpush.msra.mxu0 %v166
    %1830 = vmatpush.msra.mxu0 %v164
    %1831 = vmatpush.msra.mxu0 %v162
    %1832 = vmatmul.f32.gmra.mxu0 %v1794
    %v1833 = vpop.f32.mrf.mxu0
    %v1834 = vadd.f32 0.0, %v1833
    %1835 = vdwg.mxu0
    %v1838 = vrot.slane %v1814, 4
    %v1839 = vrot.slane %v1834, 4
    %v1842 = vadd.f32 %v345, %v1838
    %v1843 = vadd.f32 %v346, %v1839
    %v1844 = vxor.u32 %v1842, 2147483648
    %v1845 = vmul.f32 %v1844, 1.442695
    %v1846 = vpow.pop %v1845
    %v1847 = vadd.f32 %v1846, 1.0
    %v1848 = vrcp.pop %v1847
    %v1849 = vmul.f32 %v1847, %v1848
    %v1850 = vsub.f32 1.0, %v1849
    %v1851 = vmul.f32 %v1848, %v1850
    %v1852 = vadd.f32 %v1848, %v1851
    %vm1853 = vweird.f32 %v1847
    %vm1854 = vweird.f32 %v1848
    %vm1855 = vmor %vm1853, %vm1854
    %v1856 = vsel %vm1855, %v1848, %v1852
    %v1857 = vand.u32 2147483647, %v1847
    %vm1858 = vcmp.eq.f32.partialorder %v1857, 8.507059e+37
    %v1859 = vand.u32 %v1847, 2147483648
    %v1860 = vor.u32 1.1754944e-38, %v1859
    %v1861 = vsel %vm1858, %v1860, %v1856
    %v1862 = vmul.f32 1.0, %v1861
    %v1863 = vtanh.pop %v1843
    %v1864 = vxor.u32 %v1843, 2147483648
    %v1865 = vmul.f32 %v1864, 1.442695
    %v1866 = vpow.pop %v1865
    %v1867 = vadd.f32 %v1866, 1.0
    %v1868 = vrcp.pop %v1867
    %v1869 = vmul.f32 %v1867, %v1868
    %v1870 = vsub.f32 1.0, %v1869
    %v1871 = vmul.f32 %v1868, %v1870
    %v1872 = vadd.f32 %v1868, %v1871
    %vm1873 = vweird.f32 %v1867
    %vm1874 = vweird.f32 %v1868
    %vm1875 = vmor %vm1873, %vm1874
    %v1876 = vsel %vm1875, %v1868, %v1872
    %v1877 = vand.u32 2147483647, %v1867
    %vm1878 = vcmp.eq.f32.partialorder %v1877, 8.507059e+37
    %v1879 = vand.u32 %v1867, 2147483648
    %v1880 = vor.u32 1.1754944e-38, %v1879
    %v1881 = vsel %vm1878, %v1880, %v1876
    %v1882 = vmul.f32 1.0, %v1881
    %v1884 = vrot.slane %v1787, 6
    %v1886 = vmul.f32 %v1862, %v1884
    %v1887 = vmul.f32 %v1862, %v1863
    %1889 = vrot.lane.b32.xlu0 %v1887, 64
    %v1890 = vpop.permute.xlu0 %1889
    %v1892 = vadd.f32 %v1886, %v1890
    %v1893 = vtanh.pop %v1892
    %v1894 = vmul.f32 %v1882, %v1893
    %v1896 = vrot.slane %v1894, 4
    %1897 = vrot.lane.b32.xlu0 %v1896, 64
    %v1898 = vpop.permute.xlu0 %1897
    %v1899 = vsel %vm353, %v1898, 0
    %1901 = vmatpush.msra.mxu0 0.0
    %1902 = vmatpush.msra.mxu0 0.0
    %1903 = vmatpush.msra.mxu0 0.0
    %1904 = vmatpush.msra.mxu0 0.0
    %1905 = vmatpush.msra.mxu0 0.0
    %1906 = vmatpush.msra.mxu0 0.0
    %1907 = vmatpush.msra.mxu0 0.0
    %1908 = vmatpush.msra.mxu0 0.0
    %1909 = vmatpush.msra.mxu0 %v175
    %1910 = vmatpush.msra.mxu0 %v173
    %1911 = vmatpush.msra.mxu0 %v171
    %1912 = vmatpush.msra.mxu0 %v169
    %1913 = vmatpush.msra.mxu0 %v167
    %1914 = vmatpush.msra.mxu0 %v165
    %1915 = vmatpush.msra.mxu0 %v163
    %1916 = vmatpush.msra.mxu0 %v161
    %1917 = vmatmul.f32.gmra.mxu0 %v1899
    %v1918 = vpop.f32.mrf.mxu0
    %v1919 = vadd.f32 0.0, %v1918
    %1920 = vdwg.mxu0
    %1921 = vmatpush.msra.mxu0 0.0
    %1922 = vmatpush.msra.mxu0 0.0
    %1923 = vmatpush.msra.mxu0 0.0
    %1924 = vmatpush.msra.mxu0 0.0
    %1925 = vmatpush.msra.mxu0 0.0
    %1926 = vmatpush.msra.mxu0 0.0
    %1927 = vmatpush.msra.mxu0 0.0
    %1928 = vmatpush.msra.mxu0 0.0
    %1929 = vmatpush.msra.mxu0 %v176
    %1930 = vmatpush.msra.mxu0 %v174
    %1931 = vmatpush.msra.mxu0 %v172
    %1932 = vmatpush.msra.mxu0 %v170
    %1933 = vmatpush.msra.mxu0 %v168
    %1934 = vmatpush.msra.mxu0 %v166
    %1935 = vmatpush.msra.mxu0 %v164
    %1936 = vmatpush.msra.mxu0 %v162
    %1937 = vmatmul.f32.gmra.mxu0 %v1899
    %v1938 = vpop.f32.mrf.mxu0
    %v1939 = vadd.f32 0.0, %v1938
    %1940 = vdwg.mxu0
    %v1943 = vrot.slane %v1919, 2
    %v1944 = vrot.slane %v1939, 2
    %v1947 = vadd.f32 %v351, %v1943
    %v1948 = vadd.f32 %v352, %v1944
    %v1949 = vxor.u32 %v1947, 2147483648
    %v1950 = vmul.f32 %v1949, 1.442695
    %v1951 = vpow.pop %v1950
    %v1952 = vadd.f32 %v1951, 1.0
    %v1953 = vrcp.pop %v1952
    %v1954 = vmul.f32 %v1952, %v1953
    %v1955 = vsub.f32 1.0, %v1954
    %v1956 = vmul.f32 %v1953, %v1955
    %v1957 = vadd.f32 %v1953, %v1956
    %vm1958 = vweird.f32 %v1952
    %vm1959 = vweird.f32 %v1953
    %vm1960 = vmor %vm1958, %vm1959
    %v1961 = vsel %vm1960, %v1953, %v1957
    %v1962 = vand.u32 2147483647, %v1952
    %vm1963 = vcmp.eq.f32.partialorder %v1962, 8.507059e+37
    %v1964 = vand.u32 %v1952, 2147483648
    %v1965 = vor.u32 1.1754944e-38, %v1964
    %v1966 = vsel %vm1963, %v1965, %v1961
    %v1967 = vmul.f32 1.0, %v1966
    %v1968 = vtanh.pop %v1948
    %v1969 = vxor.u32 %v1948, 2147483648
    %v1970 = vmul.f32 %v1969, 1.442695
    %v1971 = vpow.pop %v1970
    %v1972 = vadd.f32 %v1971, 1.0
    %v1973 = vrcp.pop %v1972
    %v1974 = vmul.f32 %v1972, %v1973
    %v1975 = vsub.f32 1.0, %v1974
    %v1976 = vmul.f32 %v1973, %v1975
    %v1977 = vadd.f32 %v1973, %v1976
    %vm1978 = vweird.f32 %v1972
    %vm1979 = vweird.f32 %v1973
    %vm1980 = vmor %vm1978, %vm1979
    %v1981 = vsel %vm1980, %v1973, %v1977
    %v1982 = vand.u32 2147483647, %v1972
    %vm1983 = vcmp.eq.f32.partialorder %v1982, 8.507059e+37
    %v1984 = vand.u32 %v1972, 2147483648
    %v1985 = vor.u32 1.1754944e-38, %v1984
    %v1986 = vsel %vm1983, %v1985, %v1981
    %v1987 = vmul.f32 1.0, %v1986
    %v1989 = vrot.slane %v1892, 6
    %v1991 = vmul.f32 %v1967, %v1989
    %v1992 = vmul.f32 %v1967, %v1968
    %1994 = vrot.lane.b32.xlu0 %v1992, 64
    %v1995 = vpop.permute.xlu0 %1994
    %v1997 = vadd.f32 %v1991, %v1995
    %v1998 = vtanh.pop %v1997
    %v1999 = vmul.f32 %v1987, %v1998
    %vm2000 = vcmp.lt.s32.totalorder %v265, 32
    %v2003 = vrot.slane %v1999, 6
    %2004 = vrot.lane.b32.xlu0 %v2003, 64
    %v2005 = vpop.permute.xlu0 %2004
    %v2007 = vsel %vm2000, %v449, %v2005
    %v2010 = vsel %vm2000, %v554, %v1898
    %v2013 = vsel %vm2000, %v659, %v1793
    %v2016 = vsel %vm2000, %v764, %v1688
    %v2019 = vsel %vm2000, %v862, %v1590
    %v2022 = vsel %vm2000, %v967, %v1485
    %v2025 = vsel %vm2000, %v1072, %v1380
    %v2028 = vsel %vm2000, %v1177, %v1275
    %v2029 = vsel %vm2000, %v1275, %v1177
    %v2030 = vsel %vm2000, %v1380, %v1072
    %v2031 = vsel %vm2000, %v1485, %v967
    %v2032 = vsel %vm2000, %v1590, %v862
    %v2033 = vsel %vm2000, %v1688, %v764
    %v2034 = vsel %vm2000, %v1793, %v659
    %v2035 = vsel %vm2000, %v1898, %v554
    %v2036 = vsel %vm2000, %v2005, %v449
    %v2038 = vrot.slane %v2010, 6
    %v2041 = vrot.slane %v2013, 4
    %v2044 = vrot.slane %v2016, 2
    %v2047 = vrot.slane %v2022, 6
    %v2050 = vrot.slane %v2025, 4
    %v2053 = vrot.slane %v2028, 2
    %v2056 = vrot.slane %v2030, 6
    %v2059 = vrot.slane %v2031, 4
    %v2062 = vrot.slane %v2032, 2
    %v2065 = vrot.slane %v2034, 6
    %v2068 = vrot.slane %v2035, 4
    %v2071 = vrot.slane %v2036, 2
    %vm2073 = vcmask 1041408
    %v2074 = vsel %vm2073, %v2007, %v2038
    %v2075 = vsel %vm201, %v2074, %v2041
    %vm2076 = vcmask 1045504
    %v2077 = vsel %vm2076, %v2075, %v2044
    %v2078 = vsel %vm2073, %v2019, %v2047
    %v2079 = vsel %vm201, %v2078, %v2050
    %v2080 = vsel %vm2076, %v2079, %v2053
    %v2081 = vsel %vm2073, %v2029, %v2056
    %v2082 = vsel %vm201, %v2081, %v2059
    %v2083 = vsel %vm2076, %v2082, %v2062
    %v2084 = vsel %vm2073, %v2033, %v2065
    %v2085 = vsel %vm201, %v2084, %v2068
    %v2086 = vsel %vm2076, %v2085, %v2071
    %v2087 = vld [vmem:[#allocation10] sm:$0xf]
    %v2088 = vld [vmem:[#allocation13 + $0x11] sm:$0x1]
    %v2090 = vperm.slane %v2088, 0
    %v2093 = vsel %vm201, %v2087, 0
    %2095 = vmatpush.msra.mxu0 0.0
    %2096 = vmatpush.msra.mxu0 0.0
    %2097 = vmatpush.msra.mxu0 0.0
    %2098 = vmatpush.msra.mxu0 0.0
    %2099 = vmatpush.msra.mxu0 0.0
    %2100 = vmatpush.msra.mxu0 0.0
    %2101 = vmatpush.msra.mxu0 0.0
    %2102 = vmatpush.msra.mxu0 0.0
    %2103 = vmatpush.msra.mxu0 0.0
    %2104 = vmatpush.msra.mxu0 0.0
    %2105 = vmatpush.msra.mxu0 0.0
    %2106 = vmatpush.msra.mxu0 0.0
    %2107 = vmatpush.msra.mxu0 0.0
    %2108 = vmatpush.msra.mxu0 0.0
    %2109 = vmatpush.msra.mxu0 0.0
    %2110 = vmatpush.msra.mxu0 %v2093
    %2111 = vmatmul.f32.gmra.mxu0 %v190
    %v2112 = vpop.f32.mrf.mxu0
    %v2113 = vadd.f32 %v2090, %v2112
    %2114 = vmatmul.f32.gmra.mxu0 %v193
    %v2115 = vpop.f32.mrf.mxu0
    %v2116 = vadd.f32 %v2090, %v2115
    %2117 = vmatmul.f32.gmra.mxu0 %v196
    %v2118 = vpop.f32.mrf.mxu0
    %v2119 = vadd.f32 %v2090, %v2118
    %2120 = vmatmul.f32.gmra.mxu0 %v199
    %v2121 = vpop.f32.mrf.mxu0
    %v2122 = vadd.f32 %v2090, %v2121
    %2123 = vdwg.mxu0
    %v2124 = vld [vmem:[%s1] sm:$0xff]
    %v2125 = vld [vmem:[%s1 + $0x8] sm:$0xff]
    %v2126 = vld [vmem:[%s1 + $0x10] sm:$0xff]
    %v2127 = vld [vmem:[%s1 + $0x18] sm:$0xff]
    %v2128 = vld [vmem:[#allocation13 + $0x2] sm:$0x3]
    %vm2129 = vcmask 261120
    %v2131 = vsel %vm2129, %v2124, 0
    %v2134 = vsel %vm2129, %v2125, 0
    %v2137 = vsel %vm2129, %v2126, 0
    %v2140 = vsel %vm2129, %v2127, 0
    %2142 = vmatpush.msra.mxu0 0.0
    %2143 = vmatpush.msra.mxu0 0.0
    %2144 = vmatpush.msra.mxu0 0.0
    %2145 = vmatpush.msra.mxu0 0.0
    %2146 = vmatpush.msra.mxu0 0.0
    %2147 = vmatpush.msra.mxu0 0.0
    %2148 = vmatpush.msra.mxu0 0.0
    %2149 = vmatpush.msra.mxu0 0.0
    %2150 = vmatpush.msra.mxu0 0.0
    %2151 = vmatpush.msra.mxu0 0.0
    %2152 = vmatpush.msra.mxu0 0.0
    %2153 = vmatpush.msra.mxu0 0.0
    %2154 = vmatpush.msra.mxu0 %v160
    %2155 = vmatpush.msra.mxu0 %v159
    %2156 = vmatpush.msra.mxu0 %v158
    %2157 = vmatpush.msra.mxu0 %v157
    %2158 = vmatmul.f32.gmra.mxu0 %v2131
    %v2159 = vpop.f32.mrf.mxu0
    %v2160 = vadd.f32 0.0, %v2159
    %2161 = vmatmul.f32.gmra.mxu0 %v2134
    %v2162 = vpop.f32.mrf.mxu0
    %v2163 = vadd.f32 0.0, %v2162
    %2164 = vmatmul.f32.gmra.mxu0 %v2137
    %v2165 = vpop.f32.mrf.mxu0
    %v2166 = vadd.f32 0.0, %v2165
    %2167 = vmatmul.f32.gmra.mxu0 %v2140
    %v2168 = vpop.f32.mrf.mxu0
    %v2169 = vadd.f32 0.0, %v2168
    %2170 = vdwg.mxu0
    %v2171 = vld [vmem:[#allocation9] sm:$0xf]
    %v2172 = vld [vmem:[#allocation9 + $0x8] sm:$0xf]
    %v2173 = vld [vmem:[#allocation9] sm:$0xf0]
    %v2174 = vld [vmem:[#allocation9 + $0x8] sm:$0xf0]
    %v2177 = vrot.slane %v2173, 4
    %v2178 = vrot.slane %v2174, 4
    %v2180 = vsel %vm188, %v2160, 0
    %v2183 = vsel %vm188, %v2163, 0
    %v2186 = vsel %vm188, %v2166, 0
    %v2189 = vsel %vm188, %v2169, 0
    %v2191 = vsel %vm201, %v2177, 0
    %v2193 = vsel %vm201, %v2178, 0
    %2195 = vmatpush.msra.mxu0 0.0
    %2196 = vmatpush.msra.mxu0 0.0
    %2197 = vmatpush.msra.mxu0 0.0
    %2198 = vmatpush.msra.mxu0 0.0
    %2199 = vmatpush.msra.mxu0 0.0
    %2200 = vmatpush.msra.mxu0 0.0
    %2201 = vmatpush.msra.mxu0 0.0
    %2202 = vmatpush.msra.mxu0 0.0
    %2203 = vmatpush.msra.mxu0 0.0
    %2204 = vmatpush.msra.mxu0 0.0
    %2205 = vmatpush.msra.mxu0 0.0
    %2206 = vmatpush.msra.mxu0 0.0
    %2207 = vmatpush.msra.mxu0 0.0
    %2208 = vmatpush.msra.mxu0 0.0
    %2209 = vmatpush.msra.mxu0 0.0
    %2210 = vmatpush.msra.mxu0 %v2191
    %2211 = vmatmul.f32.gmra.mxu0 %v2180
    %v2212 = vpop.f32.mrf.mxu0
    %v2213 = vadd.f32 0.0, %v2212
    %2214 = vmatmul.f32.gmra.mxu0 %v2183
    %v2215 = vpop.f32.mrf.mxu0
    %v2216 = vadd.f32 0.0, %v2215
    %2217 = vmatmul.f32.gmra.mxu0 %v2186
    %v2218 = vpop.f32.mrf.mxu0
    %v2219 = vadd.f32 0.0, %v2218
    %2220 = vmatmul.f32.gmra.mxu0 %v2189
    %v2221 = vpop.f32.mrf.mxu0
    %v2222 = vadd.f32 0.0, %v2221
    %2223 = vdwg.mxu0
    %2224 = vmatpush.msra.mxu0 0.0
    %2225 = vmatpush.msra.mxu0 0.0
    %2226 = vmatpush.msra.mxu0 0.0
    %2227 = vmatpush.msra.mxu0 0.0
    %2228 = vmatpush.msra.mxu0 0.0
    %2229 = vmatpush.msra.mxu0 0.0
    %2230 = vmatpush.msra.mxu0 0.0
    %2231 = vmatpush.msra.mxu0 0.0
    %2232 = vmatpush.msra.mxu0 0.0
    %2233 = vmatpush.msra.mxu0 0.0
    %2234 = vmatpush.msra.mxu0 0.0
    %2235 = vmatpush.msra.mxu0 0.0
    %2236 = vmatpush.msra.mxu0 0.0
    %2237 = vmatpush.msra.mxu0 0.0
    %2238 = vmatpush.msra.mxu0 0.0
    %2239 = vmatpush.msra.mxu0 %v2193
    %2240 = vmatmul.f32.gmra.mxu0 %v2180
    %v2241 = vpop.f32.mrf.mxu0
    %v2242 = vadd.f32 0.0, %v2241
    %2243 = vmatmul.f32.gmra.mxu0 %v2183
    %v2244 = vpop.f32.mrf.mxu0
    %v2245 = vadd.f32 0.0, %v2244
    %2246 = vmatmul.f32.gmra.mxu0 %v2186
    %v2247 = vpop.f32.mrf.mxu0
    %v2248 = vadd.f32 0.0, %v2247
    %2249 = vmatmul.f32.gmra.mxu0 %v2189
    %v2250 = vpop.f32.mrf.mxu0
    %v2251 = vadd.f32 0.0, %v2250
    %2252 = vdwg.mxu0
    %v2254 = vsel %vm201, %v2171, 0
    %v2257 = vsel %vm201, %v2172, 0
    %2259 = vmatpush.msra.mxu0 0.0
    %2260 = vmatpush.msra.mxu0 0.0
    %2261 = vmatpush.msra.mxu0 0.0
    %2262 = vmatpush.msra.mxu0 0.0
    %2263 = vmatpush.msra.mxu0 0.0
    %2264 = vmatpush.msra.mxu0 0.0
    %2265 = vmatpush.msra.mxu0 0.0
    %2266 = vmatpush.msra.mxu0 0.0
    %2267 = vmatpush.msra.mxu0 0.0
    %2268 = vmatpush.msra.mxu0 0.0
    %2269 = vmatpush.msra.mxu0 0.0
    %2270 = vmatpush.msra.mxu0 0.0
    %2271 = vmatpush.msra.mxu0 0.0
    %2272 = vmatpush.msra.mxu0 0.0
    %2273 = vmatpush.msra.mxu0 0.0
    %2274 = vmatpush.msra.mxu0 %v2254
    %2275 = vmatmul.f32.gmra.mxu0 %v190
    %v2276 = vpop.f32.mrf.mxu0
    %v2277 = vadd.f32 %v2213, %v2276
    %2278 = vmatmul.f32.gmra.mxu0 %v193
    %v2279 = vpop.f32.mrf.mxu0
    %v2280 = vadd.f32 %v2216, %v2279
    %2281 = vmatmul.f32.gmra.mxu0 %v196
    %v2282 = vpop.f32.mrf.mxu0
    %v2283 = vadd.f32 %v2219, %v2282
    %2284 = vmatmul.f32.gmra.mxu0 %v199
    %v2285 = vpop.f32.mrf.mxu0
    %v2286 = vadd.f32 %v2222, %v2285
    %2287 = vdwg.mxu0
    %2288 = vmatpush.msra.mxu0 0.0
    %2289 = vmatpush.msra.mxu0 0.0
    %2290 = vmatpush.msra.mxu0 0.0
    %2291 = vmatpush.msra.mxu0 0.0
    %2292 = vmatpush.msra.mxu0 0.0
    %2293 = vmatpush.msra.mxu0 0.0
    %2294 = vmatpush.msra.mxu0 0.0
    %2295 = vmatpush.msra.mxu0 0.0
    %2296 = vmatpush.msra.mxu0 0.0
    %2297 = vmatpush.msra.mxu0 0.0
    %2298 = vmatpush.msra.mxu0 0.0
    %2299 = vmatpush.msra.mxu0 0.0
    %2300 = vmatpush.msra.mxu0 0.0
    %2301 = vmatpush.msra.mxu0 0.0
    %2302 = vmatpush.msra.mxu0 0.0
    %2303 = vmatpush.msra.mxu0 %v2257
    %2304 = vmatmul.f32.gmra.mxu0 %v190
    %v2305 = vpop.f32.mrf.mxu0
    %v2306 = vadd.f32 %v2242, %v2305
    %2307 = vmatmul.f32.gmra.mxu0 %v193
    %v2308 = vpop.f32.mrf.mxu0
    %v2309 = vadd.f32 %v2245, %v2308
    %2310 = vmatmul.f32.gmra.mxu0 %v196
    %v2311 = vpop.f32.mrf.mxu0
    %v2312 = vadd.f32 %v2248, %v2311
    %2313 = vmatmul.f32.gmra.mxu0 %v199
    %v2314 = vpop.f32.mrf.mxu0
    %v2315 = vadd.f32 %v2251, %v2314
    %2316 = vdwg.mxu0
    %v2318 = vperm.slane %v2128, 0
    %v2319 = vperm.slane %v2128, 1
    %v2322 = vadd.f32 %v2277, %v2318
    %v2323 = vadd.f32 %v2306, %v2319
    %v2324 = vadd.f32 %v2280, %v2318
    %v2325 = vadd.f32 %v2309, %v2319
    %v2326 = vadd.f32 %v2283, %v2318
    %v2327 = vadd.f32 %v2312, %v2319
    %v2328 = vadd.f32 %v2286, %v2318
    %v2329 = vadd.f32 %v2315, %v2319
    %v2330 = vmax.f32 %v2322, 0.0
    %v2331 = vmax.f32 %v2323, 0.0
    %v2332 = vmax.f32 %v2324, 0.0
    %v2333 = vmax.f32 %v2325, 0.0
    %v2334 = vmax.f32 %v2326, 0.0
    %v2335 = vmax.f32 %v2327, 0.0
    %v2336 = vmax.f32 %v2328, 0.0
    %v2337 = vmax.f32 %v2329, 0.0
    %s2338 = smul.u32 8, 64
    %s2339 = smul.u32 %s2338, 8
    %s2340 = sshll.u32 %s2339, 4
    %2341 = dma.done [#allocation4], %s2340
    %v2342 = vld [vmem:[#allocation13 + $0x4] sm:$0xff]
    %2343 = vmatpush.msra.mxu0 0.0
    %2344 = vmatpush.msra.mxu0 0.0
    %2345 = vmatpush.msra.mxu0 0.0
    %2346 = vmatpush.msra.mxu0 0.0
    %2347 = vmatpush.msra.mxu0 0.0
    %2348 = vmatpush.msra.mxu0 0.0
    %2349 = vmatpush.msra.mxu0 0.0
    %2350 = vmatpush.msra.mxu0 0.0
    %2351 = vmatpush.msra.mxu0 0.0
    %2352 = vmatpush.msra.mxu0 0.0
    %2353 = vmatpush.msra.mxu0 0.0
    %2354 = vmatpush.msra.mxu0 0.0
    %2355 = vmatpush.msra.mxu0 %v2336
    %2356 = vmatpush.msra.mxu0 %v2334
    %2357 = vmatpush.msra.mxu0 %v2332
    %2358 = vmatpush.msra.mxu0 %v2330
    %2359 = vmatmul.f32.gmra.mxu0 %v2131
    %v2360 = vpop.f32.mrf.mxu0
    %v2361 = vadd.f32 0.0, %v2360
    %2362 = vmatmul.f32.gmra.mxu0 %v2134
    %v2363 = vpop.f32.mrf.mxu0
    %v2364 = vadd.f32 0.0, %v2363
    %2365 = vmatmul.f32.gmra.mxu0 %v2137
    %v2366 = vpop.f32.mrf.mxu0
    %v2367 = vadd.f32 0.0, %v2366
    %2368 = vmatmul.f32.gmra.mxu0 %v2140
    %v2369 = vpop.f32.mrf.mxu0
    %v2370 = vadd.f32 0.0, %v2369
    %2371 = vdwg.mxu0
    %2372 = vmatpush.msra.mxu0 0.0
    %2373 = vmatpush.msra.mxu0 0.0
    %2374 = vmatpush.msra.mxu0 0.0
    %2375 = vmatpush.msra.mxu0 0.0
    %2376 = vmatpush.msra.mxu0 0.0
    %2377 = vmatpush.msra.mxu0 0.0
    %2378 = vmatpush.msra.mxu0 0.0
    %2379 = vmatpush.msra.mxu0 0.0
    %2380 = vmatpush.msra.mxu0 0.0
    %2381 = vmatpush.msra.mxu0 0.0
    %2382 = vmatpush.msra.mxu0 0.0
    %2383 = vmatpush.msra.mxu0 0.0
    %2384 = vmatpush.msra.mxu0 %v2337
    %2385 = vmatpush.msra.mxu0 %v2335
    %2386 = vmatpush.msra.mxu0 %v2333
    %2387 = vmatpush.msra.mxu0 %v2331
    %2388 = vmatmul.f32.gmra.mxu0 %v2131
    %v2389 = vpop.f32.mrf.mxu0
    %v2390 = vadd.f32 0.0, %v2389
    %2391 = vmatmul.f32.gmra.mxu0 %v2134
    %v2392 = vpop.f32.mrf.mxu0
    %v2393 = vadd.f32 0.0, %v2392
    %2394 = vmatmul.f32.gmra.mxu0 %v2137
    %v2395 = vpop.f32.mrf.mxu0
    %v2396 = vadd.f32 0.0, %v2395
    %2397 = vmatmul.f32.gmra.mxu0 %v2140
    %v2398 = vpop.f32.mrf.mxu0
    %v2399 = vadd.f32 0.0, %v2398
    %2400 = vdwg.mxu0
    %v2401 = vld [vmem:[#allocation2] sm:$0xff]
    %v2402 = vld [vmem:[#allocation2 + $0x8] sm:$0xff]
    %v2403 = vld [vmem:[#allocation2 + $0x10] sm:$0xff]
    %v2404 = vld [vmem:[#allocation2 + $0x18] sm:$0xff]
    %v2405 = vld [vmem:[#allocation2 + $0x20] sm:$0xff]
    %v2406 = vld [vmem:[#allocation2 + $0x28] sm:$0xff]
    %v2407 = vld [vmem:[#allocation2 + $0x30] sm:$0xff]
    %v2408 = vld [vmem:[#allocation2 + $0x38] sm:$0xff]
    %v2409 = vld [vmem:[#allocation2 + $0x40] sm:$0xff]
    %v2410 = vld [vmem:[#allocation2 + $0x48] sm:$0xff]
    %v2411 = vld [vmem:[#allocation2 + $0x50] sm:$0xff]
    %v2412 = vld [vmem:[#allocation2 + $0x58] sm:$0xff]
    %v2413 = vld [vmem:[#allocation2 + $0x60] sm:$0xff]
    %v2414 = vld [vmem:[#allocation2 + $0x68] sm:$0xff]
    %v2415 = vld [vmem:[#allocation2 + $0x70] sm:$0xff]
    %v2416 = vld [vmem:[#allocation2 + $0x78] sm:$0xff]
    %v2417 = vld [vmem:[#allocation2 + $0x80] sm:$0xff]
    %v2418 = vld [vmem:[#allocation2 + $0x88] sm:$0xff]
    %v2419 = vld [vmem:[#allocation2 + $0x90] sm:$0xff]
    %v2420 = vld [vmem:[#allocation2 + $0x98] sm:$0xff]
    %v2421 = vld [vmem:[#allocation2 + $0xa0] sm:$0xff]
    %v2422 = vld [vmem:[#allocation2 + $0xa8] sm:$0xff]
    %v2423 = vld [vmem:[#allocation2 + $0xb0] sm:$0xff]
    %v2424 = vld [vmem:[#allocation2 + $0xb8] sm:$0xff]
    %v2425 = vld [vmem:[#allocation2 + $0xc0] sm:$0xff]
    %v2426 = vld [vmem:[#allocation2 + $0xc8] sm:$0xff]
    %v2427 = vld [vmem:[#allocation2 + $0xd0] sm:$0xff]
    %v2428 = vld [vmem:[#allocation2 + $0xd8] sm:$0xff]
    %v2429 = vld [vmem:[#allocation2 + $0xe0] sm:$0xff]
    %v2430 = vld [vmem:[#allocation2 + $0xe8] sm:$0xff]
    %v2431 = vld [vmem:[#allocation2 + $0xf0] sm:$0xff]
    %v2432 = vld [vmem:[#allocation2 + $0xf8] sm:$0xff]
    %v2433 = vld [vmem:[#allocation2 + $0x100] sm:$0xff]
    %v2434 = vld [vmem:[#allocation2 + $0x108] sm:$0xff]
    %v2435 = vld [vmem:[#allocation2 + $0x110] sm:$0xff]
    %v2436 = vld [vmem:[#allocation2 + $0x118] sm:$0xff]
    %v2437 = vld [vmem:[#allocation2 + $0x120] sm:$0xff]
    %v2438 = vld [vmem:[#allocation2 + $0x128] sm:$0xff]
    %v2439 = vld [vmem:[#allocation2 + $0x130] sm:$0xff]
    %v2440 = vld [vmem:[#allocation2 + $0x138] sm:$0xff]
    %v2441 = vld [vmem:[#allocation2 + $0x140] sm:$0xff]
    %v2442 = vld [vmem:[#allocation2 + $0x148] sm:$0xff]
    %v2443 = vld [vmem:[#allocation2 + $0x150] sm:$0xff]
    %v2444 = vld [vmem:[#allocation2 + $0x158] sm:$0xff]
    %v2445 = vld [vmem:[#allocation2 + $0x160] sm:$0xff]
    %v2446 = vld [vmem:[#allocation2 + $0x168] sm:$0xff]
    %v2447 = vld [vmem:[#allocation2 + $0x170] sm:$0xff]
    %v2448 = vld [vmem:[#allocation2 + $0x178] sm:$0xff]
    %v2449 = vld [vmem:[#allocation2 + $0x180] sm:$0xff]
    %v2450 = vld [vmem:[#allocation2 + $0x188] sm:$0xff]
    %v2451 = vld [vmem:[#allocation2 + $0x190] sm:$0xff]
    %v2452 = vld [vmem:[#allocation2 + $0x198] sm:$0xff]
    %v2453 = vld [vmem:[#allocation2 + $0x1a0] sm:$0xff]
    %v2454 = vld [vmem:[#allocation2 + $0x1a8] sm:$0xff]
    %v2455 = vld [vmem:[#allocation2 + $0x1b0] sm:$0xff]
    %v2456 = vld [vmem:[#allocation2 + $0x1b8] sm:$0xff]
    %v2457 = vld [vmem:[#allocation2 + $0x1c0] sm:$0xff]
    %v2458 = vld [vmem:[#allocation2 + $0x1c8] sm:$0xff]
    %v2459 = vld [vmem:[#allocation2 + $0x1d0] sm:$0xff]
    %v2460 = vld [vmem:[#allocation2 + $0x1d8] sm:$0xff]
    %v2461 = vld [vmem:[#allocation2 + $0x1e0] sm:$0xff]
    %v2462 = vld [vmem:[#allocation2 + $0x1e8] sm:$0xff]
    %v2463 = vld [vmem:[#allocation2 + $0x1f0] sm:$0xff]
    %v2464 = vld [vmem:[#allocation2 + $0x1f8] sm:$0xff]
    %v2465 = vld [vmem:[#allocation2 + $0x200] sm:$0xff]
    %v2466 = vld [vmem:[#allocation2 + $0x208] sm:$0xff]
    %v2467 = vld [vmem:[#allocation2 + $0x210] sm:$0xff]
    %v2468 = vld [vmem:[#allocation2 + $0x218] sm:$0xff]
    %v2469 = vld [vmem:[#allocation2 + $0x220] sm:$0xff]
    %v2470 = vld [vmem:[#allocation2 + $0x228] sm:$0xff]
    %v2471 = vld [vmem:[#allocation2 + $0x230] sm:$0xff]
    %v2472 = vld [vmem:[#allocation2 + $0x238] sm:$0xff]
    %v2473 = vld [vmem:[#allocation2 + $0x240] sm:$0xff]
    %v2474 = vld [vmem:[#allocation2 + $0x248] sm:$0xff]
    %v2475 = vld [vmem:[#allocation2 + $0x250] sm:$0xff]
    %v2476 = vld [vmem:[#allocation2 + $0x258] sm:$0xff]
    %v2477 = vld [vmem:[#allocation2 + $0x260] sm:$0xff]
    %v2478 = vld [vmem:[#allocation2 + $0x268] sm:$0xff]
    %v2479 = vld [vmem:[#allocation2 + $0x270] sm:$0xff]
    %v2480 = vld [vmem:[#allocation2 + $0x278] sm:$0xff]
    %v2481 = vld [vmem:[#allocation2 + $0x280] sm:$0xff]
    %v2482 = vld [vmem:[#allocation2 + $0x288] sm:$0xff]
    %v2483 = vld [vmem:[#allocation2 + $0x290] sm:$0xff]
    %v2484 = vld [vmem:[#allocation2 + $0x298] sm:$0xff]
    %v2485 = vld [vmem:[#allocation2 + $0x2a0] sm:$0xff]
    %v2486 = vld [vmem:[#allocation2 + $0x2a8] sm:$0xff]
    %v2487 = vld [vmem:[#allocation2 + $0x2b0] sm:$0xff]
    %v2488 = vld [vmem:[#allocation2 + $0x2b8] sm:$0xff]
    %v2489 = vld [vmem:[#allocation2 + $0x2c0] sm:$0xff]
    %v2490 = vld [vmem:[#allocation2 + $0x2c8] sm:$0xff]
    %v2491 = vld [vmem:[#allocation2 + $0x2d0] sm:$0xff]
    %v2492 = vld [vmem:[#allocation2 + $0x2d8] sm:$0xff]
    %v2493 = vld [vmem:[#allocation2 + $0x2e0] sm:$0xff]
    %v2494 = vld [vmem:[#allocation2 + $0x2e8] sm:$0xff]
    %v2495 = vld [vmem:[#allocation2 + $0x2f0] sm:$0xff]
    %v2496 = vld [vmem:[#allocation2 + $0x2f8] sm:$0xff]
    %v2497 = vld [vmem:[#allocation2 + $0x300] sm:$0xff]
    %v2498 = vld [vmem:[#allocation2 + $0x308] sm:$0xff]
    %v2499 = vld [vmem:[#allocation2 + $0x310] sm:$0xff]
    %v2500 = vld [vmem:[#allocation2 + $0x318] sm:$0xff]
    %v2501 = vld [vmem:[#allocation2 + $0x320] sm:$0xff]
    %v2502 = vld [vmem:[#allocation2 + $0x328] sm:$0xff]
    %v2503 = vld [vmem:[#allocation2 + $0x330] sm:$0xff]
    %v2504 = vld [vmem:[#allocation2 + $0x338] sm:$0xff]
    %v2505 = vld [vmem:[#allocation2 + $0x340] sm:$0xff]
    %v2506 = vld [vmem:[#allocation2 + $0x348] sm:$0xff]
    %v2507 = vld [vmem:[#allocation2 + $0x350] sm:$0xff]
    %v2508 = vld [vmem:[#allocation2 + $0x358] sm:$0xff]
    %v2509 = vld [vmem:[#allocation2 + $0x360] sm:$0xff]
    %v2510 = vld [vmem:[#allocation2 + $0x368] sm:$0xff]
    %v2511 = vld [vmem:[#allocation2 + $0x370] sm:$0xff]
    %v2512 = vld [vmem:[#allocation2 + $0x378] sm:$0xff]
    %v2513 = vld [vmem:[#allocation2 + $0x380] sm:$0xff]
    %v2514 = vld [vmem:[#allocation2 + $0x388] sm:$0xff]
    %v2515 = vld [vmem:[#allocation2 + $0x390] sm:$0xff]
    %v2516 = vld [vmem:[#allocation2 + $0x398] sm:$0xff]
    %v2517 = vld [vmem:[#allocation2 + $0x3a0] sm:$0xff]
    %v2518 = vld [vmem:[#allocation2 + $0x3a8] sm:$0xff]
    %v2519 = vld [vmem:[#allocation2 + $0x3b0] sm:$0xff]
    %v2520 = vld [vmem:[#allocation2 + $0x3b8] sm:$0xff]
    %v2521 = vld [vmem:[#allocation2 + $0x3c0] sm:$0xff]
    %v2522 = vld [vmem:[#allocation2 + $0x3c8] sm:$0xff]
    %v2523 = vld [vmem:[#allocation2 + $0x3d0] sm:$0xff]
    %v2524 = vld [vmem:[#allocation2 + $0x3d8] sm:$0xff]
    %v2525 = vld [vmem:[#allocation2 + $0x3e0] sm:$0xff]
    %v2526 = vld [vmem:[#allocation2 + $0x3e8] sm:$0xff]
    %v2527 = vld [vmem:[#allocation2 + $0x3f0] sm:$0xff]
    %v2528 = vld [vmem:[#allocation2 + $0x3f8] sm:$0xff]
    %v2529 = vld [vmem:[#allocation2 + $0x400] sm:$0xff]
    %v2530 = vld [vmem:[#allocation2 + $0x408] sm:$0xff]
    %v2531 = vld [vmem:[#allocation2 + $0x410] sm:$0xff]
    %v2532 = vld [vmem:[#allocation2 + $0x418] sm:$0xff]
    %v2533 = vld [vmem:[#allocation2 + $0x420] sm:$0xff]
    %v2534 = vld [vmem:[#allocation2 + $0x428] sm:$0xff]
    %v2535 = vld [vmem:[#allocation2 + $0x430] sm:$0xff]
    %v2536 = vld [vmem:[#allocation2 + $0x438] sm:$0xff]
    %v2537 = vld [vmem:[#allocation2 + $0x440] sm:$0xff]
    %v2538 = vld [vmem:[#allocation2 + $0x448] sm:$0xff]
    %v2539 = vld [vmem:[#allocation2 + $0x450] sm:$0xff]
    %v2540 = vld [vmem:[#allocation2 + $0x458] sm:$0xff]
    %v2541 = vld [vmem:[#allocation2 + $0x460] sm:$0xff]
    %v2542 = vld [vmem:[#allocation2 + $0x468] sm:$0xff]
    %v2543 = vld [vmem:[#allocation2 + $0x470] sm:$0xff]
    %v2544 = vld [vmem:[#allocation2 + $0x478] sm:$0xff]
    %v2545 = vld [vmem:[#allocation2 + $0x480] sm:$0xff]
    %v2546 = vld [vmem:[#allocation2 + $0x488] sm:$0xff]
    %v2547 = vld [vmem:[#allocation2 + $0x490] sm:$0xff]
    %v2548 = vld [vmem:[#allocation2 + $0x498] sm:$0xff]
    %v2549 = vld [vmem:[#allocation2 + $0x4a0] sm:$0xff]
    %v2550 = vld [vmem:[#allocation2 + $0x4a8] sm:$0xff]
    %v2551 = vld [vmem:[#allocation2 + $0x4b0] sm:$0xff]
    %v2552 = vld [vmem:[#allocation2 + $0x4b8] sm:$0xff]
    %v2553 = vld [vmem:[#allocation2 + $0x4c0] sm:$0xff]
    %v2554 = vld [vmem:[#allocation2 + $0x4c8] sm:$0xff]
    %v2555 = vld [vmem:[#allocation2 + $0x4d0] sm:$0xff]
    %v2556 = vld [vmem:[#allocation2 + $0x4d8] sm:$0xff]
    %v2557 = vld [vmem:[#allocation2 + $0x4e0] sm:$0xff]
    %v2558 = vld [vmem:[#allocation2 + $0x4e8] sm:$0xff]
    %v2559 = vld [vmem:[#allocation2 + $0x4f0] sm:$0xff]
    %v2560 = vld [vmem:[#allocation2 + $0x4f8] sm:$0xff]
    %v2561 = vld [vmem:[#allocation2 + $0x500] sm:$0xff]
    %v2562 = vld [vmem:[#allocation2 + $0x508] sm:$0xff]
    %v2563 = vld [vmem:[#allocation2 + $0x510] sm:$0xff]
    %v2564 = vld [vmem:[#allocation2 + $0x518] sm:$0xff]
    %v2565 = vld [vmem:[#allocation2 + $0x520] sm:$0xff]
    %v2566 = vld [vmem:[#allocation2 + $0x528] sm:$0xff]
    %v2567 = vld [vmem:[#allocation2 + $0x530] sm:$0xff]
    %v2568 = vld [vmem:[#allocation2 + $0x538] sm:$0xff]
    %v2569 = vld [vmem:[#allocation2 + $0x540] sm:$0xff]
    %v2570 = vld [vmem:[#allocation2 + $0x548] sm:$0xff]
    %v2571 = vld [vmem:[#allocation2 + $0x550] sm:$0xff]
    %v2572 = vld [vmem:[#allocation2 + $0x558] sm:$0xff]
    %v2573 = vld [vmem:[#allocation2 + $0x560] sm:$0xff]
    %v2574 = vld [vmem:[#allocation2 + $0x568] sm:$0xff]
    %v2575 = vld [vmem:[#allocation2 + $0x570] sm:$0xff]
    %v2576 = vld [vmem:[#allocation2 + $0x578] sm:$0xff]
    %v2577 = vld [vmem:[#allocation2 + $0x580] sm:$0xff]
    %v2578 = vld [vmem:[#allocation2 + $0x588] sm:$0xff]
    %v2579 = vld [vmem:[#allocation2 + $0x590] sm:$0xff]
    %v2580 = vld [vmem:[#allocation2 + $0x598] sm:$0xff]
    %v2581 = vld [vmem:[#allocation2 + $0x5a0] sm:$0xff]
    %v2582 = vld [vmem:[#allocation2 + $0x5a8] sm:$0xff]
    %v2583 = vld [vmem:[#allocation2 + $0x5b0] sm:$0xff]
    %v2584 = vld [vmem:[#allocation2 + $0x5b8] sm:$0xff]
    %v2585 = vld [vmem:[#allocation2 + $0x5c0] sm:$0xff]
    %v2586 = vld [vmem:[#allocation2 + $0x5c8] sm:$0xff]
    %v2587 = vld [vmem:[#allocation2 + $0x5d0] sm:$0xff]
    %v2588 = vld [vmem:[#allocation2 + $0x5d8] sm:$0xff]
    %v2589 = vld [vmem:[#allocation2 + $0x5e0] sm:$0xff]
    %v2590 = vld [vmem:[#allocation2 + $0x5e8] sm:$0xff]
    %v2591 = vld [vmem:[#allocation2 + $0x5f0] sm:$0xff]
    %v2592 = vld [vmem:[#allocation2 + $0x5f8] sm:$0xff]
    %v2593 = vld [vmem:[#allocation2 + $0x600] sm:$0xff]
    %v2594 = vld [vmem:[#allocation2 + $0x608] sm:$0xff]
    %v2595 = vld [vmem:[#allocation2 + $0x610] sm:$0xff]
    %v2596 = vld [vmem:[#allocation2 + $0x618] sm:$0xff]
    %v2597 = vld [vmem:[#allocation2 + $0x620] sm:$0xff]
    %v2598 = vld [vmem:[#allocation2 + $0x628] sm:$0xff]
    %v2599 = vld [vmem:[#allocation2 + $0x630] sm:$0xff]
    %v2600 = vld [vmem:[#allocation2 + $0x638] sm:$0xff]
    %v2601 = vld [vmem:[#allocation2 + $0x640] sm:$0xff]
    %v2602 = vld [vmem:[#allocation2 + $0x648] sm:$0xff]
    %v2603 = vld [vmem:[#allocation2 + $0x650] sm:$0xff]
    %v2604 = vld [vmem:[#allocation2 + $0x658] sm:$0xff]
    %v2605 = vld [vmem:[#allocation2 + $0x660] sm:$0xff]
    %v2606 = vld [vmem:[#allocation2 + $0x668] sm:$0xff]
    %v2607 = vld [vmem:[#allocation2 + $0x670] sm:$0xff]
    %v2608 = vld [vmem:[#allocation2 + $0x678] sm:$0xff]
    %v2609 = vld [vmem:[#allocation2 + $0x680] sm:$0xff]
    %v2610 = vld [vmem:[#allocation2 + $0x688] sm:$0xff]
    %v2611 = vld [vmem:[#allocation2 + $0x690] sm:$0xff]
    %v2612 = vld [vmem:[#allocation2 + $0x698] sm:$0xff]
    %v2613 = vld [vmem:[#allocation2 + $0x6a0] sm:$0xff]
    %v2614 = vld [vmem:[#allocation2 + $0x6a8] sm:$0xff]
    %v2615 = vld [vmem:[#allocation2 + $0x6b0] sm:$0xff]
    %v2616 = vld [vmem:[#allocation2 + $0x6b8] sm:$0xff]
    %v2617 = vld [vmem:[#allocation2 + $0x6c0] sm:$0xff]
    %v2618 = vld [vmem:[#allocation2 + $0x6c8] sm:$0xff]
    %v2619 = vld [vmem:[#allocation2 + $0x6d0] sm:$0xff]
    %v2620 = vld [vmem:[#allocation2 + $0x6d8] sm:$0xff]
    %v2621 = vld [vmem:[#allocation2 + $0x6e0] sm:$0xff]
    %v2622 = vld [vmem:[#allocation2 + $0x6e8] sm:$0xff]
    %v2623 = vld [vmem:[#allocation2 + $0x6f0] sm:$0xff]
    %v2624 = vld [vmem:[#allocation2 + $0x6f8] sm:$0xff]
    %v2625 = vld [vmem:[#allocation2 + $0x700] sm:$0xff]
    %v2626 = vld [vmem:[#allocation2 + $0x708] sm:$0xff]
    %v2627 = vld [vmem:[#allocation2 + $0x710] sm:$0xff]
    %v2628 = vld [vmem:[#allocation2 + $0x718] sm:$0xff]
    %v2629 = vld [vmem:[#allocation2 + $0x720] sm:$0xff]
    %v2630 = vld [vmem:[#allocation2 + $0x728] sm:$0xff]
    %v2631 = vld [vmem:[#allocation2 + $0x730] sm:$0xff]
    %v2632 = vld [vmem:[#allocation2 + $0x738] sm:$0xff]
    %v2633 = vld [vmem:[#allocation2 + $0x740] sm:$0xff]
    %v2634 = vld [vmem:[#allocation2 + $0x748] sm:$0xff]
    %v2635 = vld [vmem:[#allocation2 + $0x750] sm:$0xff]
    %v2636 = vld [vmem:[#allocation2 + $0x758] sm:$0xff]
    %v2637 = vld [vmem:[#allocation2 + $0x760] sm:$0xff]
    %v2638 = vld [vmem:[#allocation2 + $0x768] sm:$0xff]
    %v2639 = vld [vmem:[#allocation2 + $0x770] sm:$0xff]
    %v2640 = vld [vmem:[#allocation2 + $0x778] sm:$0xff]
    %v2641 = vld [vmem:[#allocation2 + $0x780] sm:$0xff]
    %v2642 = vld [vmem:[#allocation2 + $0x788] sm:$0xff]
    %v2643 = vld [vmem:[#allocation2 + $0x790] sm:$0xff]
    %v2644 = vld [vmem:[#allocation2 + $0x798] sm:$0xff]
    %v2645 = vld [vmem:[#allocation2 + $0x7a0] sm:$0xff]
    %v2646 = vld [vmem:[#allocation2 + $0x7a8] sm:$0xff]
    %v2647 = vld [vmem:[#allocation2 + $0x7b0] sm:$0xff]
    %v2648 = vld [vmem:[#allocation2 + $0x7b8] sm:$0xff]
    %v2649 = vld [vmem:[#allocation2 + $0x7c0] sm:$0xff]
    %v2650 = vld [vmem:[#allocation2 + $0x7c8] sm:$0xff]
    %v2651 = vld [vmem:[#allocation2 + $0x7d0] sm:$0xff]
    %v2652 = vld [vmem:[#allocation2 + $0x7d8] sm:$0xff]
    %v2653 = vld [vmem:[#allocation2 + $0x7e0] sm:$0xff]
    %v2654 = vld [vmem:[#allocation2 + $0x7e8] sm:$0xff]
    %v2655 = vld [vmem:[#allocation2 + $0x7f0] sm:$0xff]
    %v2656 = vld [vmem:[#allocation2 + $0x7f8] sm:$0xff]
    %v2657 = vld [vmem:[#allocation2 + $0x800] sm:$0xff]
    %v2658 = vld [vmem:[#allocation2 + $0x808] sm:$0xff]
    %v2659 = vld [vmem:[#allocation2 + $0x810] sm:$0xff]
    %v2660 = vld [vmem:[#allocation2 + $0x818] sm:$0xff]
    %v2661 = vld [vmem:[#allocation2 + $0x820] sm:$0xff]
    %v2662 = vld [vmem:[#allocation2 + $0x828] sm:$0xff]
    %v2663 = vld [vmem:[#allocation2 + $0x830] sm:$0xff]
    %v2664 = vld [vmem:[#allocation2 + $0x838] sm:$0xff]
    %v2665 = vld [vmem:[#allocation2 + $0x840] sm:$0xff]
    %v2666 = vld [vmem:[#allocation2 + $0x848] sm:$0xff]
    %v2667 = vld [vmem:[#allocation2 + $0x850] sm:$0xff]
    %v2668 = vld [vmem:[#allocation2 + $0x858] sm:$0xff]
    %v2669 = vld [vmem:[#allocation2 + $0x860] sm:$0xff]
    %v2670 = vld [vmem:[#allocation2 + $0x868] sm:$0xff]
    %v2671 = vld [vmem:[#allocation2 + $0x870] sm:$0xff]
    %v2672 = vld [vmem:[#allocation2 + $0x878] sm:$0xff]
    %v2673 = vld [vmem:[#allocation2 + $0x880] sm:$0xff]
    %v2674 = vld [vmem:[#allocation2 + $0x888] sm:$0xff]
    %v2675 = vld [vmem:[#allocation2 + $0x890] sm:$0xff]
    %v2676 = vld [vmem:[#allocation2 + $0x898] sm:$0xff]
    %v2677 = vld [vmem:[#allocation2 + $0x8a0] sm:$0xff]
    %v2678 = vld [vmem:[#allocation2 + $0x8a8] sm:$0xff]
    %v2679 = vld [vmem:[#allocation2 + $0x8b0] sm:$0xff]
    %v2680 = vld [vmem:[#allocation2 + $0x8b8] sm:$0xff]
    %v2681 = vld [vmem:[#allocation2 + $0x8c0] sm:$0xff]
    %v2682 = vld [vmem:[#allocation2 + $0x8c8] sm:$0xff]
    %v2683 = vld [vmem:[#allocation2 + $0x8d0] sm:$0xff]
    %v2684 = vld [vmem:[#allocation2 + $0x8d8] sm:$0xff]
    %v2685 = vld [vmem:[#allocation2 + $0x8e0] sm:$0xff]
    %v2686 = vld [vmem:[#allocation2 + $0x8e8] sm:$0xff]
    %v2687 = vld [vmem:[#allocation2 + $0x8f0] sm:$0xff]
    %v2688 = vld [vmem:[#allocation2 + $0x8f8] sm:$0xff]
    %v2689 = vld [vmem:[#allocation2 + $0x900] sm:$0xff]
    %v2690 = vld [vmem:[#allocation2 + $0x908] sm:$0xff]
    %v2691 = vld [vmem:[#allocation2 + $0x910] sm:$0xff]
    %v2692 = vld [vmem:[#allocation2 + $0x918] sm:$0xff]
    %v2693 = vld [vmem:[#allocation2 + $0x920] sm:$0xff]
    %v2694 = vld [vmem:[#allocation2 + $0x928] sm:$0xff]
    %v2695 = vld [vmem:[#allocation2 + $0x930] sm:$0xff]
    %v2696 = vld [vmem:[#allocation2 + $0x938] sm:$0xff]
    %v2697 = vld [vmem:[#allocation2 + $0x940] sm:$0xff]
    %v2698 = vld [vmem:[#allocation2 + $0x948] sm:$0xff]
    %v2699 = vld [vmem:[#allocation2 + $0x950] sm:$0xff]
    %v2700 = vld [vmem:[#allocation2 + $0x958] sm:$0xff]
    %v2701 = vld [vmem:[#allocation2 + $0x960] sm:$0xff]
    %v2702 = vld [vmem:[#allocation2 + $0x968] sm:$0xff]
    %v2703 = vld [vmem:[#allocation2 + $0x970] sm:$0xff]
    %v2704 = vld [vmem:[#allocation2 + $0x978] sm:$0xff]
    %v2705 = vld [vmem:[#allocation2 + $0x980] sm:$0xff]
    %v2706 = vld [vmem:[#allocation2 + $0x988] sm:$0xff]
    %v2707 = vld [vmem:[#allocation2 + $0x990] sm:$0xff]
    %v2708 = vld [vmem:[#allocation2 + $0x998] sm:$0xff]
    %v2709 = vld [vmem:[#allocation2 + $0x9a0] sm:$0xff]
    %v2710 = vld [vmem:[#allocation2 + $0x9a8] sm:$0xff]
    %v2711 = vld [vmem:[#allocation2 + $0x9b0] sm:$0xff]
    %v2712 = vld [vmem:[#allocation2 + $0x9b8] sm:$0xff]
    %v2713 = vld [vmem:[#allocation2 + $0x9c0] sm:$0xff]
    %v2714 = vld [vmem:[#allocation2 + $0x9c8] sm:$0xff]
    %v2715 = vld [vmem:[#allocation2 + $0x9d0] sm:$0xff]
    %v2716 = vld [vmem:[#allocation2 + $0x9d8] sm:$0xff]
    %v2717 = vld [vmem:[#allocation2 + $0x9e0] sm:$0xff]
    %v2718 = vld [vmem:[#allocation2 + $0x9e8] sm:$0xff]
    %v2719 = vld [vmem:[#allocation2 + $0x9f0] sm:$0xff]
    %v2720 = vld [vmem:[#allocation2 + $0x9f8] sm:$0xff]
    %v2721 = vld [vmem:[#allocation2 + $0xa00] sm:$0xff]
    %v2722 = vld [vmem:[#allocation2 + $0xa08] sm:$0xff]
    %v2723 = vld [vmem:[#allocation2 + $0xa10] sm:$0xff]
    %v2724 = vld [vmem:[#allocation2 + $0xa18] sm:$0xff]
    %v2725 = vld [vmem:[#allocation2 + $0xa20] sm:$0xff]
    %v2726 = vld [vmem:[#allocation2 + $0xa28] sm:$0xff]
    %v2727 = vld [vmem:[#allocation2 + $0xa30] sm:$0xff]
    %v2728 = vld [vmem:[#allocation2 + $0xa38] sm:$0xff]
    %v2729 = vld [vmem:[#allocation2 + $0xa40] sm:$0xff]
    %v2730 = vld [vmem:[#allocation2 + $0xa48] sm:$0xff]
    %v2731 = vld [vmem:[#allocation2 + $0xa50] sm:$0xff]
    %v2732 = vld [vmem:[#allocation2 + $0xa58] sm:$0xff]
    %v2733 = vld [vmem:[#allocation2 + $0xa60] sm:$0xff]
    %v2734 = vld [vmem:[#allocation2 + $0xa68] sm:$0xff]
    %v2735 = vld [vmem:[#allocation2 + $0xa70] sm:$0xff]
    %v2736 = vld [vmem:[#allocation2 + $0xa78] sm:$0xff]
    %v2737 = vld [vmem:[#allocation2 + $0xa80] sm:$0xff]
    %v2738 = vld [vmem:[#allocation2 + $0xa88] sm:$0xff]
    %v2739 = vld [vmem:[#allocation2 + $0xa90] sm:$0xff]
    %v2740 = vld [vmem:[#allocation2 + $0xa98] sm:$0xff]
    %v2741 = vld [vmem:[#allocation2 + $0xaa0] sm:$0xff]
    %v2742 = vld [vmem:[#allocation2 + $0xaa8] sm:$0xff]
    %v2743 = vld [vmem:[#allocation2 + $0xab0] sm:$0xff]
    %v2744 = vld [vmem:[#allocation2 + $0xab8] sm:$0xff]
    %v2745 = vld [vmem:[#allocation2 + $0xac0] sm:$0xff]
    %v2746 = vld [vmem:[#allocation2 + $0xac8] sm:$0xff]
    %v2747 = vld [vmem:[#allocation2 + $0xad0] sm:$0xff]
    %v2748 = vld [vmem:[#allocation2 + $0xad8] sm:$0xff]
    %v2749 = vld [vmem:[#allocation2 + $0xae0] sm:$0xff]
    %v2750 = vld [vmem:[#allocation2 + $0xae8] sm:$0xff]
    %v2751 = vld [vmem:[#allocation2 + $0xaf0] sm:$0xff]
    %v2752 = vld [vmem:[#allocation2 + $0xaf8] sm:$0xff]
    %v2753 = vld [vmem:[#allocation2 + $0xb00] sm:$0xff]
    %v2754 = vld [vmem:[#allocation2 + $0xb08] sm:$0xff]
    %v2755 = vld [vmem:[#allocation2 + $0xb10] sm:$0xff]
    %v2756 = vld [vmem:[#allocation2 + $0xb18] sm:$0xff]
    %v2757 = vld [vmem:[#allocation2 + $0xb20] sm:$0xff]
    %v2758 = vld [vmem:[#allocation2 + $0xb28] sm:$0xff]
    %v2759 = vld [vmem:[#allocation2 + $0xb30] sm:$0xff]
    %v2760 = vld [vmem:[#allocation2 + $0xb38] sm:$0xff]
    %v2761 = vld [vmem:[#allocation2 + $0xb40] sm:$0xff]
    %v2762 = vld [vmem:[#allocation2 + $0xb48] sm:$0xff]
    %v2763 = vld [vmem:[#allocation2 + $0xb50] sm:$0xff]
    %v2764 = vld [vmem:[#allocation2 + $0xb58] sm:$0xff]
    %v2765 = vld [vmem:[#allocation2 + $0xb60] sm:$0xff]
    %v2766 = vld [vmem:[#allocation2 + $0xb68] sm:$0xff]
    %v2767 = vld [vmem:[#allocation2 + $0xb70] sm:$0xff]
    %v2768 = vld [vmem:[#allocation2 + $0xb78] sm:$0xff]
    %v2769 = vld [vmem:[#allocation2 + $0xb80] sm:$0xff]
    %v2770 = vld [vmem:[#allocation2 + $0xb88] sm:$0xff]
    %v2771 = vld [vmem:[#allocation2 + $0xb90] sm:$0xff]
    %v2772 = vld [vmem:[#allocation2 + $0xb98] sm:$0xff]
    %v2773 = vld [vmem:[#allocation2 + $0xba0] sm:$0xff]
    %v2774 = vld [vmem:[#allocation2 + $0xba8] sm:$0xff]
    %v2775 = vld [vmem:[#allocation2 + $0xbb0] sm:$0xff]
    %v2776 = vld [vmem:[#allocation2 + $0xbb8] sm:$0xff]
    %v2777 = vld [vmem:[#allocation2 + $0xbc0] sm:$0xff]
    %v2778 = vld [vmem:[#allocation2 + $0xbc8] sm:$0xff]
    %v2779 = vld [vmem:[#allocation2 + $0xbd0] sm:$0xff]
    %v2780 = vld [vmem:[#allocation2 + $0xbd8] sm:$0xff]
    %v2781 = vld [vmem:[#allocation2 + $0xbe0] sm:$0xff]
    %v2782 = vld [vmem:[#allocation2 + $0xbe8] sm:$0xff]
    %v2783 = vld [vmem:[#allocation2 + $0xbf0] sm:$0xff]
    %v2784 = vld [vmem:[#allocation2 + $0xbf8] sm:$0xff]
    %v2785 = vld [vmem:[#allocation2 + $0xc00] sm:$0xff]
    %v2786 = vld [vmem:[#allocation2 + $0xc08] sm:$0xff]
    %v2787 = vld [vmem:[#allocation2 + $0xc10] sm:$0xff]
    %v2788 = vld [vmem:[#allocation2 + $0xc18] sm:$0xff]
    %v2789 = vld [vmem:[#allocation2 + $0xc20] sm:$0xff]
    %v2790 = vld [vmem:[#allocation2 + $0xc28] sm:$0xff]
    %v2791 = vld [vmem:[#allocation2 + $0xc30] sm:$0xff]
    %v2792 = vld [vmem:[#allocation2 + $0xc38] sm:$0xff]
    %v2793 = vld [vmem:[#allocation2 + $0xc40] sm:$0xff]
    %v2794 = vld [vmem:[#allocation2 + $0xc48] sm:$0xff]
    %v2795 = vld [vmem:[#allocation2 + $0xc50] sm:$0xff]
    %v2796 = vld [vmem:[#allocation2 + $0xc58] sm:$0xff]
    %v2797 = vld [vmem:[#allocation2 + $0xc60] sm:$0xff]
    %v2798 = vld [vmem:[#allocation2 + $0xc68] sm:$0xff]
    %v2799 = vld [vmem:[#allocation2 + $0xc70] sm:$0xff]
    %v2800 = vld [vmem:[#allocation2 + $0xc78] sm:$0xff]
    %v2801 = vld [vmem:[#allocation2 + $0xc80] sm:$0xff]
    %v2802 = vld [vmem:[#allocation2 + $0xc88] sm:$0xff]
    %v2803 = vld [vmem:[#allocation2 + $0xc90] sm:$0xff]
    %v2804 = vld [vmem:[#allocation2 + $0xc98] sm:$0xff]
    %v2805 = vld [vmem:[#allocation2 + $0xca0] sm:$0xff]
    %v2806 = vld [vmem:[#allocation2 + $0xca8] sm:$0xff]
    %v2807 = vld [vmem:[#allocation2 + $0xcb0] sm:$0xff]
    %v2808 = vld [vmem:[#allocation2 + $0xcb8] sm:$0xff]
    %v2809 = vld [vmem:[#allocation2 + $0xcc0] sm:$0xff]
    %v2810 = vld [vmem:[#allocation2 + $0xcc8] sm:$0xff]
    %v2811 = vld [vmem:[#allocation2 + $0xcd0] sm:$0xff]
    %v2812 = vld [vmem:[#allocation2 + $0xcd8] sm:$0xff]
    %v2813 = vld [vmem:[#allocation2 + $0xce0] sm:$0xff]
    %v2814 = vld [vmem:[#allocation2 + $0xce8] sm:$0xff]
    %v2815 = vld [vmem:[#allocation2 + $0xcf0] sm:$0xff]
    %v2816 = vld [vmem:[#allocation2 + $0xcf8] sm:$0xff]
    %v2817 = vld [vmem:[#allocation2 + $0xd00] sm:$0xff]
    %v2818 = vld [vmem:[#allocation2 + $0xd08] sm:$0xff]
    %v2819 = vld [vmem:[#allocation2 + $0xd10] sm:$0xff]
    %v2820 = vld [vmem:[#allocation2 + $0xd18] sm:$0xff]
    %v2821 = vld [vmem:[#allocation2 + $0xd20] sm:$0xff]
    %v2822 = vld [vmem:[#allocation2 + $0xd28] sm:$0xff]
    %v2823 = vld [vmem:[#allocation2 + $0xd30] sm:$0xff]
    %v2824 = vld [vmem:[#allocation2 + $0xd38] sm:$0xff]
    %v2825 = vld [vmem:[#allocation2 + $0xd40] sm:$0xff]
    %v2826 = vld [vmem:[#allocation2 + $0xd48] sm:$0xff]
    %v2827 = vld [vmem:[#allocation2 + $0xd50] sm:$0xff]
    %v2828 = vld [vmem:[#allocation2 + $0xd58] sm:$0xff]
    %v2829 = vld [vmem:[#allocation2 + $0xd60] sm:$0xff]
    %v2830 = vld [vmem:[#allocation2 + $0xd68] sm:$0xff]
    %v2831 = vld [vmem:[#allocation2 + $0xd70] sm:$0xff]
    %v2832 = vld [vmem:[#allocation2 + $0xd78] sm:$0xff]
    %v2833 = vld [vmem:[#allocation2 + $0xd80] sm:$0xff]
    %v2834 = vld [vmem:[#allocation2 + $0xd88] sm:$0xff]
    %v2835 = vld [vmem:[#allocation2 + $0xd90] sm:$0xff]
    %v2836 = vld [vmem:[#allocation2 + $0xd98] sm:$0xff]
    %v2837 = vld [vmem:[#allocation2 + $0xda0] sm:$0xff]
    %v2838 = vld [vmem:[#allocation2 + $0xda8] sm:$0xff]
    %v2839 = vld [vmem:[#allocation2 + $0xdb0] sm:$0xff]
    %v2840 = vld [vmem:[#allocation2 + $0xdb8] sm:$0xff]
    %v2841 = vld [vmem:[#allocation2 + $0xdc0] sm:$0xff]
    %v2842 = vld [vmem:[#allocation2 + $0xdc8] sm:$0xff]
    %v2843 = vld [vmem:[#allocation2 + $0xdd0] sm:$0xff]
    %v2844 = vld [vmem:[#allocation2 + $0xdd8] sm:$0xff]
    %v2845 = vld [vmem:[#allocation2 + $0xde0] sm:$0xff]
    %v2846 = vld [vmem:[#allocation2 + $0xde8] sm:$0xff]
    %v2847 = vld [vmem:[#allocation2 + $0xdf0] sm:$0xff]
    %v2848 = vld [vmem:[#allocation2 + $0xdf8] sm:$0xff]
    %v2849 = vld [vmem:[#allocation2 + $0xe00] sm:$0xff]
    %v2850 = vld [vmem:[#allocation2 + $0xe08] sm:$0xff]
    %v2851 = vld [vmem:[#allocation2 + $0xe10] sm:$0xff]
    %v2852 = vld [vmem:[#allocation2 + $0xe18] sm:$0xff]
    %v2853 = vld [vmem:[#allocation2 + $0xe20] sm:$0xff]
    %v2854 = vld [vmem:[#allocation2 + $0xe28] sm:$0xff]
    %v2855 = vld [vmem:[#allocation2 + $0xe30] sm:$0xff]
    %v2856 = vld [vmem:[#allocation2 + $0xe38] sm:$0xff]
    %v2857 = vld [vmem:[#allocation2 + $0xe40] sm:$0xff]
    %v2858 = vld [vmem:[#allocation2 + $0xe48] sm:$0xff]
    %v2859 = vld [vmem:[#allocation2 + $0xe50] sm:$0xff]
    %v2860 = vld [vmem:[#allocation2 + $0xe58] sm:$0xff]
    %v2861 = vld [vmem:[#allocation2 + $0xe60] sm:$0xff]
    %v2862 = vld [vmem:[#allocation2 + $0xe68] sm:$0xff]
    %v2863 = vld [vmem:[#allocation2 + $0xe70] sm:$0xff]
    %v2864 = vld [vmem:[#allocation2 + $0xe78] sm:$0xff]
    %v2865 = vld [vmem:[#allocation2 + $0xe80] sm:$0xff]
    %v2866 = vld [vmem:[#allocation2 + $0xe88] sm:$0xff]
    %v2867 = vld [vmem:[#allocation2 + $0xe90] sm:$0xff]
    %v2868 = vld [vmem:[#allocation2 + $0xe98] sm:$0xff]
    %v2869 = vld [vmem:[#allocation2 + $0xea0] sm:$0xff]
    %v2870 = vld [vmem:[#allocation2 + $0xea8] sm:$0xff]
    %v2871 = vld [vmem:[#allocation2 + $0xeb0] sm:$0xff]
    %v2872 = vld [vmem:[#allocation2 + $0xeb8] sm:$0xff]
    %v2873 = vld [vmem:[#allocation2 + $0xec0] sm:$0xff]
    %v2874 = vld [vmem:[#allocation2 + $0xec8] sm:$0xff]
    %v2875 = vld [vmem:[#allocation2 + $0xed0] sm:$0xff]
    %v2876 = vld [vmem:[#allocation2 + $0xed8] sm:$0xff]
    %v2877 = vld [vmem:[#allocation2 + $0xee0] sm:$0xff]
    %v2878 = vld [vmem:[#allocation2 + $0xee8] sm:$0xff]
    %v2879 = vld [vmem:[#allocation2 + $0xef0] sm:$0xff]
    %v2880 = vld [vmem:[#allocation2 + $0xef8] sm:$0xff]
    %v2881 = vld [vmem:[#allocation2 + $0xf00] sm:$0xff]
    %v2882 = vld [vmem:[#allocation2 + $0xf08] sm:$0xff]
    %v2883 = vld [vmem:[#allocation2 + $0xf10] sm:$0xff]
    %v2884 = vld [vmem:[#allocation2 + $0xf18] sm:$0xff]
    %v2885 = vld [vmem:[#allocation2 + $0xf20] sm:$0xff]
    %v2886 = vld [vmem:[#allocation2 + $0xf28] sm:$0xff]
    %v2887 = vld [vmem:[#allocation2 + $0xf30] sm:$0xff]
    %v2888 = vld [vmem:[#allocation2 + $0xf38] sm:$0xff]
    %v2889 = vld [vmem:[#allocation2 + $0xf40] sm:$0xff]
    %v2890 = vld [vmem:[#allocation2 + $0xf48] sm:$0xff]
    %v2891 = vld [vmem:[#allocation2 + $0xf50] sm:$0xff]
    %v2892 = vld [vmem:[#allocation2 + $0xf58] sm:$0xff]
    %v2893 = vld [vmem:[#allocation2 + $0xf60] sm:$0xff]
    %v2894 = vld [vmem:[#allocation2 + $0xf68] sm:$0xff]
    %v2895 = vld [vmem:[#allocation2 + $0xf70] sm:$0xff]
    %v2896 = vld [vmem:[#allocation2 + $0xf78] sm:$0xff]
    %v2897 = vld [vmem:[#allocation2 + $0xf80] sm:$0xff]
    %v2898 = vld [vmem:[#allocation2 + $0xf88] sm:$0xff]
    %v2899 = vld [vmem:[#allocation2 + $0xf90] sm:$0xff]
    %v2900 = vld [vmem:[#allocation2 + $0xf98] sm:$0xff]
    %v2901 = vld [vmem:[#allocation2 + $0xfa0] sm:$0xff]
    %v2902 = vld [vmem:[#allocation2 + $0xfa8] sm:$0xff]
    %v2903 = vld [vmem:[#allocation2 + $0xfb0] sm:$0xff]
    %v2904 = vld [vmem:[#allocation2 + $0xfb8] sm:$0xff]
    %v2905 = vld [vmem:[#allocation2 + $0xfc0] sm:$0xff]
    %v2906 = vld [vmem:[#allocation2 + $0xfc8] sm:$0xff]
    %v2907 = vld [vmem:[#allocation2 + $0xfd0] sm:$0xff]
    %v2908 = vld [vmem:[#allocation2 + $0xfd8] sm:$0xff]
    %v2909 = vld [vmem:[#allocation2 + $0xfe0] sm:$0xff]
    %v2910 = vld [vmem:[#allocation2 + $0xfe8] sm:$0xff]
    %v2911 = vld [vmem:[#allocation2 + $0xff0] sm:$0xff]
    %v2912 = vld [vmem:[#allocation2 + $0xff8] sm:$0xff]
    %2913 = vmatpush.msra.mxu0 %v2777
    %2914 = vmatpush.msra.mxu0 %v2769
    %2915 = vmatpush.msra.mxu0 %v2761
    %2916 = vmatpush.msra.mxu0 %v2753
    %2917 = vmatpush.msra.mxu0 %v2745
    %2918 = vmatpush.msra.mxu0 %v2737
    %2919 = vmatpush.msra.mxu0 %v2729
    %2920 = vmatpush.msra.mxu0 %v2721
    %2921 = vmatpush.msra.mxu0 %v2713
    %2922 = vmatpush.msra.mxu0 %v2705
    %2923 = vmatpush.msra.mxu0 %v2697
    %2924 = vmatpush.msra.mxu0 %v2689
    %2925 = vmatpush.msra.mxu0 %v2681
    %2926 = vmatpush.msra.mxu0 %v2673
    %2927 = vmatpush.msra.mxu0 %v2665
    %2928 = vmatpush.msra.mxu0 %v2657
    %2929 = vmatmul.f32.gmra.mxu0 %v2361
    %v2930 = vpop.f32.mrf.mxu0
    %v2931 = vadd.f32 0.0, %v2930
    %2932 = vmatmul.f32.gmra.mxu0 %v2364
    %v2933 = vpop.f32.mrf.mxu0
    %v2934 = vadd.f32 0.0, %v2933
    %2935 = vmatmul.f32.gmra.mxu0 %v2367
    %v2936 = vpop.f32.mrf.mxu0
    %v2937 = vadd.f32 0.0, %v2936
    %2938 = vmatmul.f32.gmra.mxu0 %v2370
    %v2939 = vpop.f32.mrf.mxu0
    %v2940 = vadd.f32 0.0, %v2939
    %2941 = vdwg.mxu0
    %2942 = vmatpush.msra.mxu0 %v2905
    %2943 = vmatpush.msra.mxu0 %v2897
    %2944 = vmatpush.msra.mxu0 %v2889
    %2945 = vmatpush.msra.mxu0 %v2881
    %2946 = vmatpush.msra.mxu0 %v2873
    %2947 = vmatpush.msra.mxu0 %v2865
    %2948 = vmatpush.msra.mxu0 %v2857
    %2949 = vmatpush.msra.mxu0 %v2849
    %2950 = vmatpush.msra.mxu0 %v2841
    %2951 = vmatpush.msra.mxu0 %v2833
    %2952 = vmatpush.msra.mxu0 %v2825
    %2953 = vmatpush.msra.mxu0 %v2817
    %2954 = vmatpush.msra.mxu0 %v2809
    %2955 = vmatpush.msra.mxu0 %v2801
    %2956 = vmatpush.msra.mxu0 %v2793
    %2957 = vmatpush.msra.mxu0 %v2785
    %2958 = vmatmul.f32.gmra.mxu0 %v2390
    %v2959 = vpop.f32.mrf.mxu0
    %v2960 = vadd.f32 %v2931, %v2959
    %2961 = vmatmul.f32.gmra.mxu0 %v2393
    %v2962 = vpop.f32.mrf.mxu0
    %v2963 = vadd.f32 %v2934, %v2962
    %2964 = vmatmul.f32.gmra.mxu0 %v2396
    %v2965 = vpop.f32.mrf.mxu0
    %v2966 = vadd.f32 %v2937, %v2965
    %2967 = vmatmul.f32.gmra.mxu0 %v2399
    %v2968 = vpop.f32.mrf.mxu0
    %v2969 = vadd.f32 %v2940, %v2968
    %2970 = vdwg.mxu0
    %2971 = vmatpush.msra.mxu0 %v2778
    %2972 = vmatpush.msra.mxu0 %v2770
    %2973 = vmatpush.msra.mxu0 %v2762
    %2974 = vmatpush.msra.mxu0 %v2754
    %2975 = vmatpush.msra.mxu0 %v2746
    %2976 = vmatpush.msra.mxu0 %v2738
    %2977 = vmatpush.msra.mxu0 %v2730
    %2978 = vmatpush.msra.mxu0 %v2722
    %2979 = vmatpush.msra.mxu0 %v2714
    %2980 = vmatpush.msra.mxu0 %v2706
    %2981 = vmatpush.msra.mxu0 %v2698
    %2982 = vmatpush.msra.mxu0 %v2690
    %2983 = vmatpush.msra.mxu0 %v2682
    %2984 = vmatpush.msra.mxu0 %v2674
    %2985 = vmatpush.msra.mxu0 %v2666
    %2986 = vmatpush.msra.mxu0 %v2658
    %2987 = vmatmul.f32.gmra.mxu0 %v2361
    %v2988 = vpop.f32.mrf.mxu0
    %v2989 = vadd.f32 0.0, %v2988
    %2990 = vmatmul.f32.gmra.mxu0 %v2364
    %v2991 = vpop.f32.mrf.mxu0
    %v2992 = vadd.f32 0.0, %v2991
    %2993 = vmatmul.f32.gmra.mxu0 %v2367
    %v2994 = vpop.f32.mrf.mxu0
    %v2995 = vadd.f32 0.0, %v2994
    %2996 = vmatmul.f32.gmra.mxu0 %v2370
    %v2997 = vpop.f32.mrf.mxu0
    %v2998 = vadd.f32 0.0, %v2997
    %2999 = vdwg.mxu0
    %3000 = vmatpush.msra.mxu0 %v2906
    %3001 = vmatpush.msra.mxu0 %v2898
    %3002 = vmatpush.msra.mxu0 %v2890
    %3003 = vmatpush.msra.mxu0 %v2882
    %3004 = vmatpush.msra.mxu0 %v2874
    %3005 = vmatpush.msra.mxu0 %v2866
    %3006 = vmatpush.msra.mxu0 %v2858
    %3007 = vmatpush.msra.mxu0 %v2850
    %3008 = vmatpush.msra.mxu0 %v2842
    %3009 = vmatpush.msra.mxu0 %v2834
    %3010 = vmatpush.msra.mxu0 %v2826
    %3011 = vmatpush.msra.mxu0 %v2818
    %3012 = vmatpush.msra.mxu0 %v2810
    %3013 = vmatpush.msra.mxu0 %v2802
    %3014 = vmatpush.msra.mxu0 %v2794
    %3015 = vmatpush.msra.mxu0 %v2786
    %3016 = vmatmul.f32.gmra.mxu0 %v2390
    %v3017 = vpop.f32.mrf.mxu0
    %v3018 = vadd.f32 %v2989, %v3017
    %3019 = vmatmul.f32.gmra.mxu0 %v2393
    %v3020 = vpop.f32.mrf.mxu0
    %v3021 = vadd.f32 %v2992, %v3020
    %3022 = vmatmul.f32.gmra.mxu0 %v2396
    %v3023 = vpop.f32.mrf.mxu0
    %v3024 = vadd.f32 %v2995, %v3023
    %3025 = vmatmul.f32.gmra.mxu0 %v2399
    %v3026 = vpop.f32.mrf.mxu0
    %v3027 = vadd.f32 %v2998, %v3026
    %3028 = vdwg.mxu0
    %3029 = vmatpush.msra.mxu0 %v2779
    %3030 = vmatpush.msra.mxu0 %v2771
    %3031 = vmatpush.msra.mxu0 %v2763
    %3032 = vmatpush.msra.mxu0 %v2755
    %3033 = vmatpush.msra.mxu0 %v2747
    %3034 = vmatpush.msra.mxu0 %v2739
    %3035 = vmatpush.msra.mxu0 %v2731
    %3036 = vmatpush.msra.mxu0 %v2723
    %3037 = vmatpush.msra.mxu0 %v2715
    %3038 = vmatpush.msra.mxu0 %v2707
    %3039 = vmatpush.msra.mxu0 %v2699
    %3040 = vmatpush.msra.mxu0 %v2691
    %3041 = vmatpush.msra.mxu0 %v2683
    %3042 = vmatpush.msra.mxu0 %v2675
    %3043 = vmatpush.msra.mxu0 %v2667
    %3044 = vmatpush.msra.mxu0 %v2659
    %3045 = vmatmul.f32.gmra.mxu0 %v2361
    %v3046 = vpop.f32.mrf.mxu0
    %v3047 = vadd.f32 0.0, %v3046
    %3048 = vmatmul.f32.gmra.mxu0 %v2364
    %v3049 = vpop.f32.mrf.mxu0
    %v3050 = vadd.f32 0.0, %v3049
    %3051 = vmatmul.f32.gmra.mxu0 %v2367
    %v3052 = vpop.f32.mrf.mxu0
    %v3053 = vadd.f32 0.0, %v3052
    %3054 = vmatmul.f32.gmra.mxu0 %v2370
    %v3055 = vpop.f32.mrf.mxu0
    %v3056 = vadd.f32 0.0, %v3055
    %3057 = vdwg.mxu0
    %3058 = vmatpush.msra.mxu0 %v2907
    %3059 = vmatpush.msra.mxu0 %v2899
    %3060 = vmatpush.msra.mxu0 %v2891
    %3061 = vmatpush.msra.mxu0 %v2883
    %3062 = vmatpush.msra.mxu0 %v2875
    %3063 = vmatpush.msra.mxu0 %v2867
    %3064 = vmatpush.msra.mxu0 %v2859
    %3065 = vmatpush.msra.mxu0 %v2851
    %3066 = vmatpush.msra.mxu0 %v2843
    %3067 = vmatpush.msra.mxu0 %v2835
    %3068 = vmatpush.msra.mxu0 %v2827
    %3069 = vmatpush.msra.mxu0 %v2819
    %3070 = vmatpush.msra.mxu0 %v2811
    %3071 = vmatpush.msra.mxu0 %v2803
    %3072 = vmatpush.msra.mxu0 %v2795
    %3073 = vmatpush.msra.mxu0 %v2787
    %3074 = vmatmul.f32.gmra.mxu0 %v2390
    %v3075 = vpop.f32.mrf.mxu0
    %v3076 = vadd.f32 %v3047, %v3075
    %3077 = vmatmul.f32.gmra.mxu0 %v2393
    %v3078 = vpop.f32.mrf.mxu0
    %v3079 = vadd.f32 %v3050, %v3078
    %3080 = vmatmul.f32.gmra.mxu0 %v2396
    %v3081 = vpop.f32.mrf.mxu0
    %v3082 = vadd.f32 %v3053, %v3081
    %3083 = vmatmul.f32.gmra.mxu0 %v2399
    %v3084 = vpop.f32.mrf.mxu0
    %v3085 = vadd.f32 %v3056, %v3084
    %3086 = vdwg.mxu0
    %3087 = vmatpush.msra.mxu0 %v2780
    %3088 = vmatpush.msra.mxu0 %v2772
    %3089 = vmatpush.msra.mxu0 %v2764
    %3090 = vmatpush.msra.mxu0 %v2756
    %3091 = vmatpush.msra.mxu0 %v2748
    %3092 = vmatpush.msra.mxu0 %v2740
    %3093 = vmatpush.msra.mxu0 %v2732
    %3094 = vmatpush.msra.mxu0 %v2724
    %3095 = vmatpush.msra.mxu0 %v2716
    %3096 = vmatpush.msra.mxu0 %v2708
    %3097 = vmatpush.msra.mxu0 %v2700
    %3098 = vmatpush.msra.mxu0 %v2692
    %3099 = vmatpush.msra.mxu0 %v2684
    %3100 = vmatpush.msra.mxu0 %v2676
    %3101 = vmatpush.msra.mxu0 %v2668
    %3102 = vmatpush.msra.mxu0 %v2660
    %3103 = vmatmul.f32.gmra.mxu0 %v2361
    %v3104 = vpop.f32.mrf.mxu0
    %v3105 = vadd.f32 0.0, %v3104
    %3106 = vmatmul.f32.gmra.mxu0 %v2364
    %v3107 = vpop.f32.mrf.mxu0
    %v3108 = vadd.f32 0.0, %v3107
    %3109 = vmatmul.f32.gmra.mxu0 %v2367
    %v3110 = vpop.f32.mrf.mxu0
    %v3111 = vadd.f32 0.0, %v3110
    %3112 = vmatmul.f32.gmra.mxu0 %v2370
    %v3113 = vpop.f32.mrf.mxu0
    %v3114 = vadd.f32 0.0, %v3113
    %3115 = vdwg.mxu0
    %3116 = vmatpush.msra.mxu0 %v2908
    %3117 = vmatpush.msra.mxu0 %v2900
    %3118 = vmatpush.msra.mxu0 %v2892
    %3119 = vmatpush.msra.mxu0 %v2884
    %3120 = vmatpush.msra.mxu0 %v2876
    %3121 = vmatpush.msra.mxu0 %v2868
    %3122 = vmatpush.msra.mxu0 %v2860
    %3123 = vmatpush.msra.mxu0 %v2852
    %3124 = vmatpush.msra.mxu0 %v2844
    %3125 = vmatpush.msra.mxu0 %v2836
    %3126 = vmatpush.msra.mxu0 %v2828
    %3127 = vmatpush.msra.mxu0 %v2820
    %3128 = vmatpush.msra.mxu0 %v2812
    %3129 = vmatpush.msra.mxu0 %v2804
    %3130 = vmatpush.msra.mxu0 %v2796
    %3131 = vmatpush.msra.mxu0 %v2788
    %3132 = vmatmul.f32.gmra.mxu0 %v2390
    %v3133 = vpop.f32.mrf.mxu0
    %v3134 = vadd.f32 %v3105, %v3133
    %3135 = vmatmul.f32.gmra.mxu0 %v2393
    %v3136 = vpop.f32.mrf.mxu0
    %v3137 = vadd.f32 %v3108, %v3136
    %3138 = vmatmul.f32.gmra.mxu0 %v2396
    %v3139 = vpop.f32.mrf.mxu0
    %v3140 = vadd.f32 %v3111, %v3139
    %3141 = vmatmul.f32.gmra.mxu0 %v2399
    %v3142 = vpop.f32.mrf.mxu0
    %v3143 = vadd.f32 %v3114, %v3142
    %3144 = vdwg.mxu0
    %3145 = vmatpush.msra.mxu0 %v2781
    %3146 = vmatpush.msra.mxu0 %v2773
    %3147 = vmatpush.msra.mxu0 %v2765
    %3148 = vmatpush.msra.mxu0 %v2757
    %3149 = vmatpush.msra.mxu0 %v2749
    %3150 = vmatpush.msra.mxu0 %v2741
    %3151 = vmatpush.msra.mxu0 %v2733
    %3152 = vmatpush.msra.mxu0 %v2725
    %3153 = vmatpush.msra.mxu0 %v2717
    %3154 = vmatpush.msra.mxu0 %v2709
    %3155 = vmatpush.msra.mxu0 %v2701
    %3156 = vmatpush.msra.mxu0 %v2693
    %3157 = vmatpush.msra.mxu0 %v2685
    %3158 = vmatpush.msra.mxu0 %v2677
    %3159 = vmatpush.msra.mxu0 %v2669
    %3160 = vmatpush.msra.mxu0 %v2661
    %3161 = vmatmul.f32.gmra.mxu0 %v2361
    %v3162 = vpop.f32.mrf.mxu0
    %v3163 = vadd.f32 0.0, %v3162
    %3164 = vmatmul.f32.gmra.mxu0 %v2364
    %v3165 = vpop.f32.mrf.mxu0
    %v3166 = vadd.f32 0.0, %v3165
    %3167 = vmatmul.f32.gmra.mxu0 %v2367
    %v3168 = vpop.f32.mrf.mxu0
    %v3169 = vadd.f32 0.0, %v3168
    %3170 = vmatmul.f32.gmra.mxu0 %v2370
    %v3171 = vpop.f32.mrf.mxu0
    %v3172 = vadd.f32 0.0, %v3171
    %3173 = vdwg.mxu0
    %3174 = vmatpush.msra.mxu0 %v2909
    %3175 = vmatpush.msra.mxu0 %v2901
    %3176 = vmatpush.msra.mxu0 %v2893
    %3177 = vmatpush.msra.mxu0 %v2885
    %3178 = vmatpush.msra.mxu0 %v2877
    %3179 = vmatpush.msra.mxu0 %v2869
    %3180 = vmatpush.msra.mxu0 %v2861
    %3181 = vmatpush.msra.mxu0 %v2853
    %3182 = vmatpush.msra.mxu0 %v2845
    %3183 = vmatpush.msra.mxu0 %v2837
    %3184 = vmatpush.msra.mxu0 %v2829
    %3185 = vmatpush.msra.mxu0 %v2821
    %3186 = vmatpush.msra.mxu0 %v2813
    %3187 = vmatpush.msra.mxu0 %v2805
    %3188 = vmatpush.msra.mxu0 %v2797
    %3189 = vmatpush.msra.mxu0 %v2789
    %3190 = vmatmul.f32.gmra.mxu0 %v2390
    %v3191 = vpop.f32.mrf.mxu0
    %v3192 = vadd.f32 %v3163, %v3191
    %3193 = vmatmul.f32.gmra.mxu0 %v2393
    %v3194 = vpop.f32.mrf.mxu0
    %v3195 = vadd.f32 %v3166, %v3194
    %3196 = vmatmul.f32.gmra.mxu0 %v2396
    %v3197 = vpop.f32.mrf.mxu0
    %v3198 = vadd.f32 %v3169, %v3197
    %3199 = vmatmul.f32.gmra.mxu0 %v2399
    %v3200 = vpop.f32.mrf.mxu0
    %v3201 = vadd.f32 %v3172, %v3200
    %3202 = vdwg.mxu0
    %3203 = vmatpush.msra.mxu0 %v2782
    %3204 = vmatpush.msra.mxu0 %v2774
    %3205 = vmatpush.msra.mxu0 %v2766
    %3206 = vmatpush.msra.mxu0 %v2758
    %3207 = vmatpush.msra.mxu0 %v2750
    %3208 = vmatpush.msra.mxu0 %v2742
    %3209 = vmatpush.msra.mxu0 %v2734
    %3210 = vmatpush.msra.mxu0 %v2726
    %3211 = vmatpush.msra.mxu0 %v2718
    %3212 = vmatpush.msra.mxu0 %v2710
    %3213 = vmatpush.msra.mxu0 %v2702
    %3214 = vmatpush.msra.mxu0 %v2694
    %3215 = vmatpush.msra.mxu0 %v2686
    %3216 = vmatpush.msra.mxu0 %v2678
    %3217 = vmatpush.msra.mxu0 %v2670
    %3218 = vmatpush.msra.mxu0 %v2662
    %3219 = vmatmul.f32.gmra.mxu0 %v2361
    %v3220 = vpop.f32.mrf.mxu0
    %v3221 = vadd.f32 0.0, %v3220
    %3222 = vmatmul.f32.gmra.mxu0 %v2364
    %v3223 = vpop.f32.mrf.mxu0
    %v3224 = vadd.f32 0.0, %v3223
    %3225 = vmatmul.f32.gmra.mxu0 %v2367
    %v3226 = vpop.f32.mrf.mxu0
    %v3227 = vadd.f32 0.0, %v3226
    %3228 = vmatmul.f32.gmra.mxu0 %v2370
    %v3229 = vpop.f32.mrf.mxu0
    %v3230 = vadd.f32 0.0, %v3229
    %3231 = vdwg.mxu0
    %3232 = vmatpush.msra.mxu0 %v2910
    %3233 = vmatpush.msra.mxu0 %v2902
    %3234 = vmatpush.msra.mxu0 %v2894
    %3235 = vmatpush.msra.mxu0 %v2886
    %3236 = vmatpush.msra.mxu0 %v2878
    %3237 = vmatpush.msra.mxu0 %v2870
    %3238 = vmatpush.msra.mxu0 %v2862
    %3239 = vmatpush.msra.mxu0 %v2854
    %3240 = vmatpush.msra.mxu0 %v2846
    %3241 = vmatpush.msra.mxu0 %v2838
    %3242 = vmatpush.msra.mxu0 %v2830
    %3243 = vmatpush.msra.mxu0 %v2822
    %3244 = vmatpush.msra.mxu0 %v2814
    %3245 = vmatpush.msra.mxu0 %v2806
    %3246 = vmatpush.msra.mxu0 %v2798
    %3247 = vmatpush.msra.mxu0 %v2790
    %3248 = vmatmul.f32.gmra.mxu0 %v2390
    %v3249 = vpop.f32.mrf.mxu0
    %v3250 = vadd.f32 %v3221, %v3249
    %3251 = vmatmul.f32.gmra.mxu0 %v2393
    %v3252 = vpop.f32.mrf.mxu0
    %v3253 = vadd.f32 %v3224, %v3252
    %3254 = vmatmul.f32.gmra.mxu0 %v2396
    %v3255 = vpop.f32.mrf.mxu0
    %v3256 = vadd.f32 %v3227, %v3255
    %3257 = vmatmul.f32.gmra.mxu0 %v2399
    %v3258 = vpop.f32.mrf.mxu0
    %v3259 = vadd.f32 %v3230, %v3258
    %3260 = vdwg.mxu0
    %3261 = vmatpush.msra.mxu0 %v2783
    %3262 = vmatpush.msra.mxu0 %v2775
    %3263 = vmatpush.msra.mxu0 %v2767
    %3264 = vmatpush.msra.mxu0 %v2759
    %3265 = vmatpush.msra.mxu0 %v2751
    %3266 = vmatpush.msra.mxu0 %v2743
    %3267 = vmatpush.msra.mxu0 %v2735
    %3268 = vmatpush.msra.mxu0 %v2727
    %3269 = vmatpush.msra.mxu0 %v2719
    %3270 = vmatpush.msra.mxu0 %v2711
    %3271 = vmatpush.msra.mxu0 %v2703
    %3272 = vmatpush.msra.mxu0 %v2695
    %3273 = vmatpush.msra.mxu0 %v2687
    %3274 = vmatpush.msra.mxu0 %v2679
    %3275 = vmatpush.msra.mxu0 %v2671
    %3276 = vmatpush.msra.mxu0 %v2663
    %3277 = vmatmul.f32.gmra.mxu0 %v2361
    %v3278 = vpop.f32.mrf.mxu0
    %v3279 = vadd.f32 0.0, %v3278
    %3280 = vmatmul.f32.gmra.mxu0 %v2364
    %v3281 = vpop.f32.mrf.mxu0
    %v3282 = vadd.f32 0.0, %v3281
    %3283 = vmatmul.f32.gmra.mxu0 %v2367
    %v3284 = vpop.f32.mrf.mxu0
    %v3285 = vadd.f32 0.0, %v3284
    %3286 = vmatmul.f32.gmra.mxu0 %v2370
    %v3287 = vpop.f32.mrf.mxu0
    %v3288 = vadd.f32 0.0, %v3287
    %3289 = vdwg.mxu0
    %3290 = vmatpush.msra.mxu0 %v2911
    %3291 = vmatpush.msra.mxu0 %v2903
    %3292 = vmatpush.msra.mxu0 %v2895
    %3293 = vmatpush.msra.mxu0 %v2887
    %3294 = vmatpush.msra.mxu0 %v2879
    %3295 = vmatpush.msra.mxu0 %v2871
    %3296 = vmatpush.msra.mxu0 %v2863
    %3297 = vmatpush.msra.mxu0 %v2855
    %3298 = vmatpush.msra.mxu0 %v2847
    %3299 = vmatpush.msra.mxu0 %v2839
    %3300 = vmatpush.msra.mxu0 %v2831
    %3301 = vmatpush.msra.mxu0 %v2823
    %3302 = vmatpush.msra.mxu0 %v2815
    %3303 = vmatpush.msra.mxu0 %v2807
    %3304 = vmatpush.msra.mxu0 %v2799
    %3305 = vmatpush.msra.mxu0 %v2791
    %3306 = vmatmul.f32.gmra.mxu0 %v2390
    %v3307 = vpop.f32.mrf.mxu0
    %v3308 = vadd.f32 %v3279, %v3307
    %3309 = vmatmul.f32.gmra.mxu0 %v2393
    %v3310 = vpop.f32.mrf.mxu0
    %v3311 = vadd.f32 %v3282, %v3310
    %3312 = vmatmul.f32.gmra.mxu0 %v2396
    %v3313 = vpop.f32.mrf.mxu0
    %v3314 = vadd.f32 %v3285, %v3313
    %3315 = vmatmul.f32.gmra.mxu0 %v2399
    %v3316 = vpop.f32.mrf.mxu0
    %v3317 = vadd.f32 %v3288, %v3316
    %3318 = vdwg.mxu0
    %3319 = vmatpush.msra.mxu0 %v2784
    %3320 = vmatpush.msra.mxu0 %v2776
    %3321 = vmatpush.msra.mxu0 %v2768
    %3322 = vmatpush.msra.mxu0 %v2760
    %3323 = vmatpush.msra.mxu0 %v2752
    %3324 = vmatpush.msra.mxu0 %v2744
    %3325 = vmatpush.msra.mxu0 %v2736
    %3326 = vmatpush.msra.mxu0 %v2728
    %3327 = vmatpush.msra.mxu0 %v2720
    %3328 = vmatpush.msra.mxu0 %v2712
    %3329 = vmatpush.msra.mxu0 %v2704
    %3330 = vmatpush.msra.mxu0 %v2696
    %3331 = vmatpush.msra.mxu0 %v2688
    %3332 = vmatpush.msra.mxu0 %v2680
    %3333 = vmatpush.msra.mxu0 %v2672
    %3334 = vmatpush.msra.mxu0 %v2664
    %3335 = vmatmul.f32.gmra.mxu0 %v2361
    %v3336 = vpop.f32.mrf.mxu0
    %v3337 = vadd.f32 0.0, %v3336
    %3338 = vmatmul.f32.gmra.mxu0 %v2364
    %v3339 = vpop.f32.mrf.mxu0
    %v3340 = vadd.f32 0.0, %v3339
    %3341 = vmatmul.f32.gmra.mxu0 %v2367
    %v3342 = vpop.f32.mrf.mxu0
    %v3343 = vadd.f32 0.0, %v3342
    %3344 = vmatmul.f32.gmra.mxu0 %v2370
    %v3345 = vpop.f32.mrf.mxu0
    %v3346 = vadd.f32 0.0, %v3345
    %3347 = vdwg.mxu0
    %3348 = vmatpush.msra.mxu0 %v2912
    %3349 = vmatpush.msra.mxu0 %v2904
    %3350 = vmatpush.msra.mxu0 %v2896
    %3351 = vmatpush.msra.mxu0 %v2888
    %3352 = vmatpush.msra.mxu0 %v2880
    %3353 = vmatpush.msra.mxu0 %v2872
    %3354 = vmatpush.msra.mxu0 %v2864
    %3355 = vmatpush.msra.mxu0 %v2856
    %3356 = vmatpush.msra.mxu0 %v2848
    %3357 = vmatpush.msra.mxu0 %v2840
    %3358 = vmatpush.msra.mxu0 %v2832
    %3359 = vmatpush.msra.mxu0 %v2824
    %3360 = vmatpush.msra.mxu0 %v2816
    %3361 = vmatpush.msra.mxu0 %v2808
    %3362 = vmatpush.msra.mxu0 %v2800
    %3363 = vmatpush.msra.mxu0 %v2792
    %3364 = vmatmul.f32.gmra.mxu0 %v2390
    %v3365 = vpop.f32.mrf.mxu0
    %v3366 = vadd.f32 %v3337, %v3365
    %3367 = vmatmul.f32.gmra.mxu0 %v2393
    %v3368 = vpop.f32.mrf.mxu0
    %v3369 = vadd.f32 %v3340, %v3368
    %3370 = vmatmul.f32.gmra.mxu0 %v2396
    %v3371 = vpop.f32.mrf.mxu0
    %v3372 = vadd.f32 %v3343, %v3371
    %3373 = vmatmul.f32.gmra.mxu0 %v2399
    %v3374 = vpop.f32.mrf.mxu0
    %v3375 = vadd.f32 %v3346, %v3374
    %3376 = vdwg.mxu0
    %3377 = vmatpush.msra.mxu0 %v2521
    %3378 = vmatpush.msra.mxu0 %v2513
    %3379 = vmatpush.msra.mxu0 %v2505
    %3380 = vmatpush.msra.mxu0 %v2497
    %3381 = vmatpush.msra.mxu0 %v2489
    %3382 = vmatpush.msra.mxu0 %v2481
    %3383 = vmatpush.msra.mxu0 %v2473
    %3384 = vmatpush.msra.mxu0 %v2465
    %3385 = vmatpush.msra.mxu0 %v2457
    %3386 = vmatpush.msra.mxu0 %v2449
    %3387 = vmatpush.msra.mxu0 %v2441
    %3388 = vmatpush.msra.mxu0 %v2433
    %3389 = vmatpush.msra.mxu0 %v2425
    %3390 = vmatpush.msra.mxu0 %v2417
    %3391 = vmatpush.msra.mxu0 %v2409
    %3392 = vmatpush.msra.mxu0 %v2401
    %3393 = vmatmul.f32.gmra.mxu0 %v2330
    %v3394 = vpop.f32.mrf.mxu0
    %v3395 = vadd.f32 %v2960, %v3394
    %3396 = vmatmul.f32.gmra.mxu0 %v2332
    %v3397 = vpop.f32.mrf.mxu0
    %v3398 = vadd.f32 %v2963, %v3397
    %3399 = vmatmul.f32.gmra.mxu0 %v2334
    %v3400 = vpop.f32.mrf.mxu0
    %v3401 = vadd.f32 %v2966, %v3400
    %3402 = vmatmul.f32.gmra.mxu0 %v2336
    %v3403 = vpop.f32.mrf.mxu0
    %v3404 = vadd.f32 %v2969, %v3403
    %3405 = vdwg.mxu0
    %3406 = vmatpush.msra.mxu0 %v2649
    %3407 = vmatpush.msra.mxu0 %v2641
    %3408 = vmatpush.msra.mxu0 %v2633
    %3409 = vmatpush.msra.mxu0 %v2625
    %3410 = vmatpush.msra.mxu0 %v2617
    %3411 = vmatpush.msra.mxu0 %v2609
    %3412 = vmatpush.msra.mxu0 %v2601
    %3413 = vmatpush.msra.mxu0 %v2593
    %3414 = vmatpush.msra.mxu0 %v2585
    %3415 = vmatpush.msra.mxu0 %v2577
    %3416 = vmatpush.msra.mxu0 %v2569
    %3417 = vmatpush.msra.mxu0 %v2561
    %3418 = vmatpush.msra.mxu0 %v2553
    %3419 = vmatpush.msra.mxu0 %v2545
    %3420 = vmatpush.msra.mxu0 %v2537
    %3421 = vmatpush.msra.mxu0 %v2529
    %3422 = vmatmul.f32.gmra.mxu0 %v2331
    %v3423 = vpop.f32.mrf.mxu0
    %v3424 = vadd.f32 %v3395, %v3423
    %3425 = vmatmul.f32.gmra.mxu0 %v2333
    %v3426 = vpop.f32.mrf.mxu0
    %v3427 = vadd.f32 %v3398, %v3426
    %3428 = vmatmul.f32.gmra.mxu0 %v2335
    %v3429 = vpop.f32.mrf.mxu0
    %v3430 = vadd.f32 %v3401, %v3429
    %3431 = vmatmul.f32.gmra.mxu0 %v2337
    %v3432 = vpop.f32.mrf.mxu0
    %v3433 = vadd.f32 %v3404, %v3432
    %3434 = vdwg.mxu0
    %3435 = vmatpush.msra.mxu0 %v2522
    %3436 = vmatpush.msra.mxu0 %v2514
    %3437 = vmatpush.msra.mxu0 %v2506
    %3438 = vmatpush.msra.mxu0 %v2498
    %3439 = vmatpush.msra.mxu0 %v2490
    %3440 = vmatpush.msra.mxu0 %v2482
    %3441 = vmatpush.msra.mxu0 %v2474
    %3442 = vmatpush.msra.mxu0 %v2466
    %3443 = vmatpush.msra.mxu0 %v2458
    %3444 = vmatpush.msra.mxu0 %v2450
    %3445 = vmatpush.msra.mxu0 %v2442
    %3446 = vmatpush.msra.mxu0 %v2434
    %3447 = vmatpush.msra.mxu0 %v2426
    %3448 = vmatpush.msra.mxu0 %v2418
    %3449 = vmatpush.msra.mxu0 %v2410
    %3450 = vmatpush.msra.mxu0 %v2402
    %3451 = vmatmul.f32.gmra.mxu0 %v2330
    %v3452 = vpop.f32.mrf.mxu0
    %v3453 = vadd.f32 %v3018, %v3452
    %3454 = vmatmul.f32.gmra.mxu0 %v2332
    %v3455 = vpop.f32.mrf.mxu0
    %v3456 = vadd.f32 %v3021, %v3455
    %3457 = vmatmul.f32.gmra.mxu0 %v2334
    %v3458 = vpop.f32.mrf.mxu0
    %v3459 = vadd.f32 %v3024, %v3458
    %3460 = vmatmul.f32.gmra.mxu0 %v2336
    %v3461 = vpop.f32.mrf.mxu0
    %v3462 = vadd.f32 %v3027, %v3461
    %3463 = vdwg.mxu0
    %3464 = vmatpush.msra.mxu0 %v2650
    %3465 = vmatpush.msra.mxu0 %v2642
    %3466 = vmatpush.msra.mxu0 %v2634
    %3467 = vmatpush.msra.mxu0 %v2626
    %3468 = vmatpush.msra.mxu0 %v2618
    %3469 = vmatpush.msra.mxu0 %v2610
    %3470 = vmatpush.msra.mxu0 %v2602
    %3471 = vmatpush.msra.mxu0 %v2594
    %3472 = vmatpush.msra.mxu0 %v2586
    %3473 = vmatpush.msra.mxu0 %v2578
    %3474 = vmatpush.msra.mxu0 %v2570
    %3475 = vmatpush.msra.mxu0 %v2562
    %3476 = vmatpush.msra.mxu0 %v2554
    %3477 = vmatpush.msra.mxu0 %v2546
    %3478 = vmatpush.msra.mxu0 %v2538
    %3479 = vmatpush.msra.mxu0 %v2530
    %3480 = vmatmul.f32.gmra.mxu0 %v2331
    %v3481 = vpop.f32.mrf.mxu0
    %v3482 = vadd.f32 %v3453, %v3481
    %3483 = vmatmul.f32.gmra.mxu0 %v2333
    %v3484 = vpop.f32.mrf.mxu0
    %v3485 = vadd.f32 %v3456, %v3484
    %3486 = vmatmul.f32.gmra.mxu0 %v2335
    %v3487 = vpop.f32.mrf.mxu0
    %v3488 = vadd.f32 %v3459, %v3487
    %3489 = vmatmul.f32.gmra.mxu0 %v2337
    %v3490 = vpop.f32.mrf.mxu0
    %v3491 = vadd.f32 %v3462, %v3490
    %3492 = vdwg.mxu0
    %3493 = vmatpush.msra.mxu0 %v2523
    %3494 = vmatpush.msra.mxu0 %v2515
    %3495 = vmatpush.msra.mxu0 %v2507
    %3496 = vmatpush.msra.mxu0 %v2499
    %3497 = vmatpush.msra.mxu0 %v2491
    %3498 = vmatpush.msra.mxu0 %v2483
    %3499 = vmatpush.msra.mxu0 %v2475
    %3500 = vmatpush.msra.mxu0 %v2467
    %3501 = vmatpush.msra.mxu0 %v2459
    %3502 = vmatpush.msra.mxu0 %v2451
    %3503 = vmatpush.msra.mxu0 %v2443
    %3504 = vmatpush.msra.mxu0 %v2435
    %3505 = vmatpush.msra.mxu0 %v2427
    %3506 = vmatpush.msra.mxu0 %v2419
    %3507 = vmatpush.msra.mxu0 %v2411
    %3508 = vmatpush.msra.mxu0 %v2403
    %3509 = vmatmul.f32.gmra.mxu0 %v2330
    %v3510 = vpop.f32.mrf.mxu0
    %v3511 = vadd.f32 %v3076, %v3510
    %3512 = vmatmul.f32.gmra.mxu0 %v2332
    %v3513 = vpop.f32.mrf.mxu0
    %v3514 = vadd.f32 %v3079, %v3513
    %3515 = vmatmul.f32.gmra.mxu0 %v2334
    %v3516 = vpop.f32.mrf.mxu0
    %v3517 = vadd.f32 %v3082, %v3516
    %3518 = vmatmul.f32.gmra.mxu0 %v2336
    %v3519 = vpop.f32.mrf.mxu0
    %v3520 = vadd.f32 %v3085, %v3519
    %3521 = vdwg.mxu0
    %3522 = vmatpush.msra.mxu0 %v2651
    %3523 = vmatpush.msra.mxu0 %v2643
    %3524 = vmatpush.msra.mxu0 %v2635
    %3525 = vmatpush.msra.mxu0 %v2627
    %3526 = vmatpush.msra.mxu0 %v2619
    %3527 = vmatpush.msra.mxu0 %v2611
    %3528 = vmatpush.msra.mxu0 %v2603
    %3529 = vmatpush.msra.mxu0 %v2595
    %3530 = vmatpush.msra.mxu0 %v2587
    %3531 = vmatpush.msra.mxu0 %v2579
    %3532 = vmatpush.msra.mxu0 %v2571
    %3533 = vmatpush.msra.mxu0 %v2563
    %3534 = vmatpush.msra.mxu0 %v2555
    %3535 = vmatpush.msra.mxu0 %v2547
    %3536 = vmatpush.msra.mxu0 %v2539
    %3537 = vmatpush.msra.mxu0 %v2531
    %3538 = vmatmul.f32.gmra.mxu0 %v2331
    %v3539 = vpop.f32.mrf.mxu0
    %v3540 = vadd.f32 %v3511, %v3539
    %3541 = vmatmul.f32.gmra.mxu0 %v2333
    %v3542 = vpop.f32.mrf.mxu0
    %v3543 = vadd.f32 %v3514, %v3542
    %3544 = vmatmul.f32.gmra.mxu0 %v2335
    %v3545 = vpop.f32.mrf.mxu0
    %v3546 = vadd.f32 %v3517, %v3545
    %3547 = vmatmul.f32.gmra.mxu0 %v2337
    %v3548 = vpop.f32.mrf.mxu0
    %v3549 = vadd.f32 %v3520, %v3548
    %3550 = vdwg.mxu0
    %3551 = vmatpush.msra.mxu0 %v2524
    %3552 = vmatpush.msra.mxu0 %v2516
    %3553 = vmatpush.msra.mxu0 %v2508
    %3554 = vmatpush.msra.mxu0 %v2500
    %3555 = vmatpush.msra.mxu0 %v2492
    %3556 = vmatpush.msra.mxu0 %v2484
    %3557 = vmatpush.msra.mxu0 %v2476
    %3558 = vmatpush.msra.mxu0 %v2468
    %3559 = vmatpush.msra.mxu0 %v2460
    %3560 = vmatpush.msra.mxu0 %v2452
    %3561 = vmatpush.msra.mxu0 %v2444
    %3562 = vmatpush.msra.mxu0 %v2436
    %3563 = vmatpush.msra.mxu0 %v2428
    %3564 = vmatpush.msra.mxu0 %v2420
    %3565 = vmatpush.msra.mxu0 %v2412
    %3566 = vmatpush.msra.mxu0 %v2404
    %3567 = vmatmul.f32.gmra.mxu0 %v2330
    %v3568 = vpop.f32.mrf.mxu0
    %v3569 = vadd.f32 %v3134, %v3568
    %3570 = vmatmul.f32.gmra.mxu0 %v2332
    %v3571 = vpop.f32.mrf.mxu0
    %v3572 = vadd.f32 %v3137, %v3571
    %3573 = vmatmul.f32.gmra.mxu0 %v2334
    %v3574 = vpop.f32.mrf.mxu0
    %v3575 = vadd.f32 %v3140, %v3574
    %3576 = vmatmul.f32.gmra.mxu0 %v2336
    %v3577 = vpop.f32.mrf.mxu0
    %v3578 = vadd.f32 %v3143, %v3577
    %3579 = vdwg.mxu0
    %3580 = vmatpush.msra.mxu0 %v2652
    %3581 = vmatpush.msra.mxu0 %v2644
    %3582 = vmatpush.msra.mxu0 %v2636
    %3583 = vmatpush.msra.mxu0 %v2628
    %3584 = vmatpush.msra.mxu0 %v2620
    %3585 = vmatpush.msra.mxu0 %v2612
    %3586 = vmatpush.msra.mxu0 %v2604
    %3587 = vmatpush.msra.mxu0 %v2596
    %3588 = vmatpush.msra.mxu0 %v2588
    %3589 = vmatpush.msra.mxu0 %v2580
    %3590 = vmatpush.msra.mxu0 %v2572
    %3591 = vmatpush.msra.mxu0 %v2564
    %3592 = vmatpush.msra.mxu0 %v2556
    %3593 = vmatpush.msra.mxu0 %v2548
    %3594 = vmatpush.msra.mxu0 %v2540
    %3595 = vmatpush.msra.mxu0 %v2532
    %3596 = vmatmul.f32.gmra.mxu0 %v2331
    %v3597 = vpop.f32.mrf.mxu0
    %v3598 = vadd.f32 %v3569, %v3597
    %3599 = vmatmul.f32.gmra.mxu0 %v2333
    %v3600 = vpop.f32.mrf.mxu0
    %v3601 = vadd.f32 %v3572, %v3600
    %3602 = vmatmul.f32.gmra.mxu0 %v2335
    %v3603 = vpop.f32.mrf.mxu0
    %v3604 = vadd.f32 %v3575, %v3603
    %3605 = vmatmul.f32.gmra.mxu0 %v2337
    %v3606 = vpop.f32.mrf.mxu0
    %v3607 = vadd.f32 %v3578, %v3606
    %3608 = vdwg.mxu0
    %3609 = vmatpush.msra.mxu0 %v2525
    %3610 = vmatpush.msra.mxu0 %v2517
    %3611 = vmatpush.msra.mxu0 %v2509
    %3612 = vmatpush.msra.mxu0 %v2501
    %3613 = vmatpush.msra.mxu0 %v2493
    %3614 = vmatpush.msra.mxu0 %v2485
    %3615 = vmatpush.msra.mxu0 %v2477
    %3616 = vmatpush.msra.mxu0 %v2469
    %3617 = vmatpush.msra.mxu0 %v2461
    %3618 = vmatpush.msra.mxu0 %v2453
    %3619 = vmatpush.msra.mxu0 %v2445
    %3620 = vmatpush.msra.mxu0 %v2437
    %3621 = vmatpush.msra.mxu0 %v2429
    %3622 = vmatpush.msra.mxu0 %v2421
    %3623 = vmatpush.msra.mxu0 %v2413
    %3624 = vmatpush.msra.mxu0 %v2405
    %3625 = vmatmul.f32.gmra.mxu0 %v2330
    %v3626 = vpop.f32.mrf.mxu0
    %v3627 = vadd.f32 %v3192, %v3626
    %3628 = vmatmul.f32.gmra.mxu0 %v2332
    %v3629 = vpop.f32.mrf.mxu0
    %v3630 = vadd.f32 %v3195, %v3629
    %3631 = vmatmul.f32.gmra.mxu0 %v2334
    %v3632 = vpop.f32.mrf.mxu0
    %v3633 = vadd.f32 %v3198, %v3632
    %3634 = vmatmul.f32.gmra.mxu0 %v2336
    %v3635 = vpop.f32.mrf.mxu0
    %v3636 = vadd.f32 %v3201, %v3635
    %3637 = vdwg.mxu0
    %3638 = vmatpush.msra.mxu0 %v2653
    %3639 = vmatpush.msra.mxu0 %v2645
    %3640 = vmatpush.msra.mxu0 %v2637
    %3641 = vmatpush.msra.mxu0 %v2629
    %3642 = vmatpush.msra.mxu0 %v2621
    %3643 = vmatpush.msra.mxu0 %v2613
    %3644 = vmatpush.msra.mxu0 %v2605
    %3645 = vmatpush.msra.mxu0 %v2597
    %3646 = vmatpush.msra.mxu0 %v2589
    %3647 = vmatpush.msra.mxu0 %v2581
    %3648 = vmatpush.msra.mxu0 %v2573
    %3649 = vmatpush.msra.mxu0 %v2565
    %3650 = vmatpush.msra.mxu0 %v2557
    %3651 = vmatpush.msra.mxu0 %v2549
    %3652 = vmatpush.msra.mxu0 %v2541
    %3653 = vmatpush.msra.mxu0 %v2533
    %3654 = vmatmul.f32.gmra.mxu0 %v2331
    %v3655 = vpop.f32.mrf.mxu0
    %v3656 = vadd.f32 %v3627, %v3655
    %3657 = vmatmul.f32.gmra.mxu0 %v2333
    %v3658 = vpop.f32.mrf.mxu0
    %v3659 = vadd.f32 %v3630, %v3658
    %3660 = vmatmul.f32.gmra.mxu0 %v2335
    %v3661 = vpop.f32.mrf.mxu0
    %v3662 = vadd.f32 %v3633, %v3661
    %3663 = vmatmul.f32.gmra.mxu0 %v2337
    %v3664 = vpop.f32.mrf.mxu0
    %v3665 = vadd.f32 %v3636, %v3664
    %3666 = vdwg.mxu0
    %3667 = vmatpush.msra.mxu0 %v2526
    %3668 = vmatpush.msra.mxu0 %v2518
    %3669 = vmatpush.msra.mxu0 %v2510
    %3670 = vmatpush.msra.mxu0 %v2502
    %3671 = vmatpush.msra.mxu0 %v2494
    %3672 = vmatpush.msra.mxu0 %v2486
    %3673 = vmatpush.msra.mxu0 %v2478
    %3674 = vmatpush.msra.mxu0 %v2470
    %3675 = vmatpush.msra.mxu0 %v2462
    %3676 = vmatpush.msra.mxu0 %v2454
    %3677 = vmatpush.msra.mxu0 %v2446
    %3678 = vmatpush.msra.mxu0 %v2438
    %3679 = vmatpush.msra.mxu0 %v2430
    %3680 = vmatpush.msra.mxu0 %v2422
    %3681 = vmatpush.msra.mxu0 %v2414
    %3682 = vmatpush.msra.mxu0 %v2406
    %3683 = vmatmul.f32.gmra.mxu0 %v2330
    %v3684 = vpop.f32.mrf.mxu0
    %v3685 = vadd.f32 %v3250, %v3684
    %3686 = vmatmul.f32.gmra.mxu0 %v2332
    %v3687 = vpop.f32.mrf.mxu0
    %v3688 = vadd.f32 %v3253, %v3687
    %3689 = vmatmul.f32.gmra.mxu0 %v2334
    %v3690 = vpop.f32.mrf.mxu0
    %v3691 = vadd.f32 %v3256, %v3690
    %3692 = vmatmul.f32.gmra.mxu0 %v2336
    %v3693 = vpop.f32.mrf.mxu0
    %v3694 = vadd.f32 %v3259, %v3693
    %3695 = vdwg.mxu0
    %3696 = vmatpush.msra.mxu0 %v2654
    %3697 = vmatpush.msra.mxu0 %v2646
    %3698 = vmatpush.msra.mxu0 %v2638
    %3699 = vmatpush.msra.mxu0 %v2630
    %3700 = vmatpush.msra.mxu0 %v2622
    %3701 = vmatpush.msra.mxu0 %v2614
    %3702 = vmatpush.msra.mxu0 %v2606
    %3703 = vmatpush.msra.mxu0 %v2598
    %3704 = vmatpush.msra.mxu0 %v2590
    %3705 = vmatpush.msra.mxu0 %v2582
    %3706 = vmatpush.msra.mxu0 %v2574
    %3707 = vmatpush.msra.mxu0 %v2566
    %3708 = vmatpush.msra.mxu0 %v2558
    %3709 = vmatpush.msra.mxu0 %v2550
    %3710 = vmatpush.msra.mxu0 %v2542
    %3711 = vmatpush.msra.mxu0 %v2534
    %3712 = vmatmul.f32.gmra.mxu0 %v2331
    %v3713 = vpop.f32.mrf.mxu0
    %v3714 = vadd.f32 %v3685, %v3713
    %3715 = vmatmul.f32.gmra.mxu0 %v2333
    %v3716 = vpop.f32.mrf.mxu0
    %v3717 = vadd.f32 %v3688, %v3716
    %3718 = vmatmul.f32.gmra.mxu0 %v2335
    %v3719 = vpop.f32.mrf.mxu0
    %v3720 = vadd.f32 %v3691, %v3719
    %3721 = vmatmul.f32.gmra.mxu0 %v2337
    %v3722 = vpop.f32.mrf.mxu0
    %v3723 = vadd.f32 %v3694, %v3722
    %3724 = vdwg.mxu0
    %3725 = vmatpush.msra.mxu0 %v2527
    %3726 = vmatpush.msra.mxu0 %v2519
    %3727 = vmatpush.msra.mxu0 %v2511
    %3728 = vmatpush.msra.mxu0 %v2503
    %3729 = vmatpush.msra.mxu0 %v2495
    %3730 = vmatpush.msra.mxu0 %v2487
    %3731 = vmatpush.msra.mxu0 %v2479
    %3732 = vmatpush.msra.mxu0 %v2471
    %3733 = vmatpush.msra.mxu0 %v2463
    %3734 = vmatpush.msra.mxu0 %v2455
    %3735 = vmatpush.msra.mxu0 %v2447
    %3736 = vmatpush.msra.mxu0 %v2439
    %3737 = vmatpush.msra.mxu0 %v2431
    %3738 = vmatpush.msra.mxu0 %v2423
    %3739 = vmatpush.msra.mxu0 %v2415
    %3740 = vmatpush.msra.mxu0 %v2407
    %3741 = vmatmul.f32.gmra.mxu0 %v2330
    %v3742 = vpop.f32.mrf.mxu0
    %v3743 = vadd.f32 %v3308, %v3742
    %3744 = vmatmul.f32.gmra.mxu0 %v2332
    %v3745 = vpop.f32.mrf.mxu0
    %v3746 = vadd.f32 %v3311, %v3745
    %3747 = vmatmul.f32.gmra.mxu0 %v2334
    %v3748 = vpop.f32.mrf.mxu0
    %v3749 = vadd.f32 %v3314, %v3748
    %3750 = vmatmul.f32.gmra.mxu0 %v2336
    %v3751 = vpop.f32.mrf.mxu0
    %v3752 = vadd.f32 %v3317, %v3751
    %3753 = vdwg.mxu0
    %3754 = vmatpush.msra.mxu0 %v2655
    %3755 = vmatpush.msra.mxu0 %v2647
    %3756 = vmatpush.msra.mxu0 %v2639
    %3757 = vmatpush.msra.mxu0 %v2631
    %3758 = vmatpush.msra.mxu0 %v2623
    %3759 = vmatpush.msra.mxu0 %v2615
    %3760 = vmatpush.msra.mxu0 %v2607
    %3761 = vmatpush.msra.mxu0 %v2599
    %3762 = vmatpush.msra.mxu0 %v2591
    %3763 = vmatpush.msra.mxu0 %v2583
    %3764 = vmatpush.msra.mxu0 %v2575
    %3765 = vmatpush.msra.mxu0 %v2567
    %3766 = vmatpush.msra.mxu0 %v2559
    %3767 = vmatpush.msra.mxu0 %v2551
    %3768 = vmatpush.msra.mxu0 %v2543
    %3769 = vmatpush.msra.mxu0 %v2535
    %3770 = vmatmul.f32.gmra.mxu0 %v2331
    %v3771 = vpop.f32.mrf.mxu0
    %v3772 = vadd.f32 %v3743, %v3771
    %3773 = vmatmul.f32.gmra.mxu0 %v2333
    %v3774 = vpop.f32.mrf.mxu0
    %v3775 = vadd.f32 %v3746, %v3774
    %3776 = vmatmul.f32.gmra.mxu0 %v2335
    %v3777 = vpop.f32.mrf.mxu0
    %v3778 = vadd.f32 %v3749, %v3777
    %3779 = vmatmul.f32.gmra.mxu0 %v2337
    %v3780 = vpop.f32.mrf.mxu0
    %v3781 = vadd.f32 %v3752, %v3780
    %3782 = vdwg.mxu0
    %3783 = vmatpush.msra.mxu0 %v2528
    %3784 = vmatpush.msra.mxu0 %v2520
    %3785 = vmatpush.msra.mxu0 %v2512
    %3786 = vmatpush.msra.mxu0 %v2504
    %3787 = vmatpush.msra.mxu0 %v2496
    %3788 = vmatpush.msra.mxu0 %v2488
    %3789 = vmatpush.msra.mxu0 %v2480
    %3790 = vmatpush.msra.mxu0 %v2472
    %3791 = vmatpush.msra.mxu0 %v2464
    %3792 = vmatpush.msra.mxu0 %v2456
    %3793 = vmatpush.msra.mxu0 %v2448
    %3794 = vmatpush.msra.mxu0 %v2440
    %3795 = vmatpush.msra.mxu0 %v2432
    %3796 = vmatpush.msra.mxu0 %v2424
    %3797 = vmatpush.msra.mxu0 %v2416
    %3798 = vmatpush.msra.mxu0 %v2408
    %3799 = vmatmul.f32.gmra.mxu0 %v2330
    %v3800 = vpop.f32.mrf.mxu0
    %v3801 = vadd.f32 %v3366, %v3800
    %3802 = vmatmul.f32.gmra.mxu0 %v2332
    %v3803 = vpop.f32.mrf.mxu0
    %v3804 = vadd.f32 %v3369, %v3803
    %3805 = vmatmul.f32.gmra.mxu0 %v2334
    %v3806 = vpop.f32.mrf.mxu0
    %v3807 = vadd.f32 %v3372, %v3806
    %3808 = vmatmul.f32.gmra.mxu0 %v2336
    %v3809 = vpop.f32.mrf.mxu0
    %v3810 = vadd.f32 %v3375, %v3809
    %3811 = vdwg.mxu0
    %3812 = vmatpush.msra.mxu0 %v2656
    %3813 = vmatpush.msra.mxu0 %v2648
    %3814 = vmatpush.msra.mxu0 %v2640
    %3815 = vmatpush.msra.mxu0 %v2632
    %3816 = vmatpush.msra.mxu0 %v2624
    %3817 = vmatpush.msra.mxu0 %v2616
    %3818 = vmatpush.msra.mxu0 %v2608
    %3819 = vmatpush.msra.mxu0 %v2600
    %3820 = vmatpush.msra.mxu0 %v2592
    %3821 = vmatpush.msra.mxu0 %v2584
    %3822 = vmatpush.msra.mxu0 %v2576
    %3823 = vmatpush.msra.mxu0 %v2568
    %3824 = vmatpush.msra.mxu0 %v2560
    %3825 = vmatpush.msra.mxu0 %v2552
    %3826 = vmatpush.msra.mxu0 %v2544
    %3827 = vmatpush.msra.mxu0 %v2536
    %3828 = vmatmul.f32.gmra.mxu0 %v2331
    %v3829 = vpop.f32.mrf.mxu0
    %v3830 = vadd.f32 %v3801, %v3829
    %3831 = vmatmul.f32.gmra.mxu0 %v2333
    %v3832 = vpop.f32.mrf.mxu0
    %v3833 = vadd.f32 %v3804, %v3832
    %3834 = vmatmul.f32.gmra.mxu0 %v2335
    %v3835 = vpop.f32.mrf.mxu0
    %v3836 = vadd.f32 %v3807, %v3835
    %3837 = vmatmul.f32.gmra.mxu0 %v2337
    %v3838 = vpop.f32.mrf.mxu0
    %v3839 = vadd.f32 %v3810, %v3838
    %3840 = vdwg.mxu0
    %v3842 = vperm.slane %v2342, 0
    %v3843 = vperm.slane %v2342, 1
    %v3844 = vperm.slane %v2342, 2
    %v3845 = vperm.slane %v2342, 3
    %v3846 = vperm.slane %v2342, 4
    %v3847 = vperm.slane %v2342, 5
    %v3848 = vperm.slane %v2342, 6
    %v3849 = vperm.slane %v2342, 7
    %v3858 = vadd.f32 %v3424, %v3842
    %v3859 = vadd.f32 %v3482, %v3843
    %v3860 = vadd.f32 %v3540, %v3844
    %v3861 = vadd.f32 %v3598, %v3845
    %v3862 = vadd.f32 %v3656, %v3846
    %v3863 = vadd.f32 %v3714, %v3847
    %v3864 = vadd.f32 %v3772, %v3848
    %v3865 = vadd.f32 %v3830, %v3849
    %v3866 = vadd.f32 %v3427, %v3842
    %v3867 = vadd.f32 %v3485, %v3843
    %v3868 = vadd.f32 %v3543, %v3844
    %v3869 = vadd.f32 %v3601, %v3845
    %v3870 = vadd.f32 %v3659, %v3846
    %v3871 = vadd.f32 %v3717, %v3847
    %v3872 = vadd.f32 %v3775, %v3848
    %v3873 = vadd.f32 %v3833, %v3849
    %v3874 = vadd.f32 %v3430, %v3842
    %v3875 = vadd.f32 %v3488, %v3843
    %v3876 = vadd.f32 %v3546, %v3844
    %v3877 = vadd.f32 %v3604, %v3845
    %v3878 = vadd.f32 %v3662, %v3846
    %v3879 = vadd.f32 %v3720, %v3847
    %v3880 = vadd.f32 %v3778, %v3848
    %v3881 = vadd.f32 %v3836, %v3849
    %v3882 = vadd.f32 %v3433, %v3842
    %v3883 = vadd.f32 %v3491, %v3843
    %v3884 = vadd.f32 %v3549, %v3844
    %v3885 = vadd.f32 %v3607, %v3845
    %v3886 = vadd.f32 %v3665, %v3846
    %v3887 = vadd.f32 %v3723, %v3847
    %v3888 = vadd.f32 %v3781, %v3848
    %v3889 = vadd.f32 %v3839, %v3849
    %v3890 = vmax.f32 %v3858, 0.0
    %v3891 = vmax.f32 %v3859, 0.0
    %v3892 = vmax.f32 %v3860, 0.0
    %v3893 = vmax.f32 %v3861, 0.0
    %v3894 = vmax.f32 %v3862, 0.0
    %v3895 = vmax.f32 %v3863, 0.0
    %v3896 = vmax.f32 %v3864, 0.0
    %v3897 = vmax.f32 %v3865, 0.0
    %v3898 = vmax.f32 %v3866, 0.0
    %v3899 = vmax.f32 %v3867, 0.0
    %v3900 = vmax.f32 %v3868, 0.0
    %v3901 = vmax.f32 %v3869, 0.0
    %v3902 = vmax.f32 %v3870, 0.0
    %v3903 = vmax.f32 %v3871, 0.0
    %v3904 = vmax.f32 %v3872, 0.0
    %v3905 = vmax.f32 %v3873, 0.0
    %v3906 = vmax.f32 %v3874, 0.0
    %v3907 = vmax.f32 %v3875, 0.0
    %v3908 = vmax.f32 %v3876, 0.0
    %v3909 = vmax.f32 %v3877, 0.0
    %v3910 = vmax.f32 %v3878, 0.0
    %v3911 = vmax.f32 %v3879, 0.0
    %v3912 = vmax.f32 %v3880, 0.0
    %v3913 = vmax.f32 %v3881, 0.0
    %v3914 = vmax.f32 %v3882, 0.0
    %v3915 = vmax.f32 %v3883, 0.0
    %v3916 = vmax.f32 %v3884, 0.0
    %v3917 = vmax.f32 %v3885, 0.0
    %v3918 = vmax.f32 %v3886, 0.0
    %v3919 = vmax.f32 %v3887, 0.0
    %v3920 = vmax.f32 %v3888, 0.0
    %v3921 = vmax.f32 %v3889, 0.0
    %s3922 = smul.u32 8, 256
    %s3923 = smul.u32 %s3922, 4
    %s3924 = sshll.u32 %s3923, 4
    %3925 = dma.done %s139, %s3924
    %v3926 = vld [vmem:[#allocation13 + $0xc] sm:$0xf]
    %3927 = vmatpush.msra.mxu0 0.0
    %3928 = vmatpush.msra.mxu0 0.0
    %3929 = vmatpush.msra.mxu0 0.0
    %3930 = vmatpush.msra.mxu0 0.0
    %3931 = vmatpush.msra.mxu0 0.0
    %3932 = vmatpush.msra.mxu0 0.0
    %3933 = vmatpush.msra.mxu0 0.0
    %3934 = vmatpush.msra.mxu0 0.0
    %3935 = vmatpush.msra.mxu0 0.0
    %3936 = vmatpush.msra.mxu0 0.0
    %3937 = vmatpush.msra.mxu0 0.0
    %3938 = vmatpush.msra.mxu0 0.0
    %3939 = vmatpush.msra.mxu0 %v3914
    %3940 = vmatpush.msra.mxu0 %v3906
    %3941 = vmatpush.msra.mxu0 %v3898
    %3942 = vmatpush.msra.mxu0 %v3890
    %3943 = vmatmul.f32.gmra.mxu0 %v2131
    %v3944 = vpop.f32.mrf.mxu0
    %v3945 = vadd.f32 0.0, %v3944
    %3946 = vmatmul.f32.gmra.mxu0 %v2134
    %v3947 = vpop.f32.mrf.mxu0
    %v3948 = vadd.f32 0.0, %v3947
    %3949 = vmatmul.f32.gmra.mxu0 %v2137
    %v3950 = vpop.f32.mrf.mxu0
    %v3951 = vadd.f32 0.0, %v3950
    %3952 = vmatmul.f32.gmra.mxu0 %v2140
    %v3953 = vpop.f32.mrf.mxu0
    %v3954 = vadd.f32 0.0, %v3953
    %3955 = vdwg.mxu0
    %3956 = vmatpush.msra.mxu0 0.0
    %3957 = vmatpush.msra.mxu0 0.0
    %3958 = vmatpush.msra.mxu0 0.0
    %3959 = vmatpush.msra.mxu0 0.0
    %3960 = vmatpush.msra.mxu0 0.0
    %3961 = vmatpush.msra.mxu0 0.0
    %3962 = vmatpush.msra.mxu0 0.0
    %3963 = vmatpush.msra.mxu0 0.0
    %3964 = vmatpush.msra.mxu0 0.0
    %3965 = vmatpush.msra.mxu0 0.0
    %3966 = vmatpush.msra.mxu0 0.0
    %3967 = vmatpush.msra.mxu0 0.0
    %3968 = vmatpush.msra.mxu0 %v3915
    %3969 = vmatpush.msra.mxu0 %v3907
    %3970 = vmatpush.msra.mxu0 %v3899
    %3971 = vmatpush.msra.mxu0 %v3891
    %3972 = vmatmul.f32.gmra.mxu0 %v2131
    %v3973 = vpop.f32.mrf.mxu0
    %v3974 = vadd.f32 0.0, %v3973
    %3975 = vmatmul.f32.gmra.mxu0 %v2134
    %v3976 = vpop.f32.mrf.mxu0
    %v3977 = vadd.f32 0.0, %v3976
    %3978 = vmatmul.f32.gmra.mxu0 %v2137
    %v3979 = vpop.f32.mrf.mxu0
    %v3980 = vadd.f32 0.0, %v3979
    %3981 = vmatmul.f32.gmra.mxu0 %v2140
    %v3982 = vpop.f32.mrf.mxu0
    %v3983 = vadd.f32 0.0, %v3982
    %3984 = vdwg.mxu0
    %3985 = vmatpush.msra.mxu0 0.0
    %3986 = vmatpush.msra.mxu0 0.0
    %3987 = vmatpush.msra.mxu0 0.0
    %3988 = vmatpush.msra.mxu0 0.0
    %3989 = vmatpush.msra.mxu0 0.0
    %3990 = vmatpush.msra.mxu0 0.0
    %3991 = vmatpush.msra.mxu0 0.0
    %3992 = vmatpush.msra.mxu0 0.0
    %3993 = vmatpush.msra.mxu0 0.0
    %3994 = vmatpush.msra.mxu0 0.0
    %3995 = vmatpush.msra.mxu0 0.0
    %3996 = vmatpush.msra.mxu0 0.0
    %3997 = vmatpush.msra.mxu0 %v3916
    %3998 = vmatpush.msra.mxu0 %v3908
    %3999 = vmatpush.msra.mxu0 %v3900
    %4000 = vmatpush.msra.mxu0 %v3892
    %4001 = vmatmul.f32.gmra.mxu0 %v2131
    %v4002 = vpop.f32.mrf.mxu0
    %v4003 = vadd.f32 0.0, %v4002
    %4004 = vmatmul.f32.gmra.mxu0 %v2134
    %v4005 = vpop.f32.mrf.mxu0
    %v4006 = vadd.f32 0.0, %v4005
    %4007 = vmatmul.f32.gmra.mxu0 %v2137
    %v4008 = vpop.f32.mrf.mxu0
    %v4009 = vadd.f32 0.0, %v4008
    %4010 = vmatmul.f32.gmra.mxu0 %v2140
    %v4011 = vpop.f32.mrf.mxu0
    %v4012 = vadd.f32 0.0, %v4011
    %4013 = vdwg.mxu0
    %4014 = vmatpush.msra.mxu0 0.0
    %4015 = vmatpush.msra.mxu0 0.0
    %4016 = vmatpush.msra.mxu0 0.0
    %4017 = vmatpush.msra.mxu0 0.0
    %4018 = vmatpush.msra.mxu0 0.0
    %4019 = vmatpush.msra.mxu0 0.0
    %4020 = vmatpush.msra.mxu0 0.0
    %4021 = vmatpush.msra.mxu0 0.0
    %4022 = vmatpush.msra.mxu0 0.0
    %4023 = vmatpush.msra.mxu0 0.0
    %4024 = vmatpush.msra.mxu0 0.0
    %4025 = vmatpush.msra.mxu0 0.0
    %4026 = vmatpush.msra.mxu0 %v3917
    %4027 = vmatpush.msra.mxu0 %v3909
    %4028 = vmatpush.msra.mxu0 %v3901
    %4029 = vmatpush.msra.mxu0 %v3893
    %4030 = vmatmul.f32.gmra.mxu0 %v2131
    %v4031 = vpop.f32.mrf.mxu0
    %v4032 = vadd.f32 0.0, %v4031
    %4033 = vmatmul.f32.gmra.mxu0 %v2134
    %v4034 = vpop.f32.mrf.mxu0
    %v4035 = vadd.f32 0.0, %v4034
    %4036 = vmatmul.f32.gmra.mxu0 %v2137
    %v4037 = vpop.f32.mrf.mxu0
    %v4038 = vadd.f32 0.0, %v4037
    %4039 = vmatmul.f32.gmra.mxu0 %v2140
    %v4040 = vpop.f32.mrf.mxu0
    %v4041 = vadd.f32 0.0, %v4040
    %4042 = vdwg.mxu0
    %4043 = vmatpush.msra.mxu0 0.0
    %4044 = vmatpush.msra.mxu0 0.0
    %4045 = vmatpush.msra.mxu0 0.0
    %4046 = vmatpush.msra.mxu0 0.0
    %4047 = vmatpush.msra.mxu0 0.0
    %4048 = vmatpush.msra.mxu0 0.0
    %4049 = vmatpush.msra.mxu0 0.0
    %4050 = vmatpush.msra.mxu0 0.0
    %4051 = vmatpush.msra.mxu0 0.0
    %4052 = vmatpush.msra.mxu0 0.0
    %4053 = vmatpush.msra.mxu0 0.0
    %4054 = vmatpush.msra.mxu0 0.0
    %4055 = vmatpush.msra.mxu0 %v3918
    %4056 = vmatpush.msra.mxu0 %v3910
    %4057 = vmatpush.msra.mxu0 %v3902
    %4058 = vmatpush.msra.mxu0 %v3894
    %4059 = vmatmul.f32.gmra.mxu0 %v2131
    %v4060 = vpop.f32.mrf.mxu0
    %v4061 = vadd.f32 0.0, %v4060
    %4062 = vmatmul.f32.gmra.mxu0 %v2134
    %v4063 = vpop.f32.mrf.mxu0
    %v4064 = vadd.f32 0.0, %v4063
    %4065 = vmatmul.f32.gmra.mxu0 %v2137
    %v4066 = vpop.f32.mrf.mxu0
    %v4067 = vadd.f32 0.0, %v4066
    %4068 = vmatmul.f32.gmra.mxu0 %v2140
    %v4069 = vpop.f32.mrf.mxu0
    %v4070 = vadd.f32 0.0, %v4069
    %4071 = vdwg.mxu0
    %4072 = vmatpush.msra.mxu0 0.0
    %4073 = vmatpush.msra.mxu0 0.0
    %4074 = vmatpush.msra.mxu0 0.0
    %4075 = vmatpush.msra.mxu0 0.0
    %4076 = vmatpush.msra.mxu0 0.0
    %4077 = vmatpush.msra.mxu0 0.0
    %4078 = vmatpush.msra.mxu0 0.0
    %4079 = vmatpush.msra.mxu0 0.0
    %4080 = vmatpush.msra.mxu0 0.0
    %4081 = vmatpush.msra.mxu0 0.0
    %4082 = vmatpush.msra.mxu0 0.0
    %4083 = vmatpush.msra.mxu0 0.0
    %4084 = vmatpush.msra.mxu0 %v3919
    %4085 = vmatpush.msra.mxu0 %v3911
    %4086 = vmatpush.msra.mxu0 %v3903
    %4087 = vmatpush.msra.mxu0 %v3895
    %4088 = vmatmul.f32.gmra.mxu0 %v2131
    %v4089 = vpop.f32.mrf.mxu0
    %v4090 = vadd.f32 0.0, %v4089
    %4091 = vmatmul.f32.gmra.mxu0 %v2134
    %v4092 = vpop.f32.mrf.mxu0
    %v4093 = vadd.f32 0.0, %v4092
    %4094 = vmatmul.f32.gmra.mxu0 %v2137
    %v4095 = vpop.f32.mrf.mxu0
    %v4096 = vadd.f32 0.0, %v4095
    %4097 = vmatmul.f32.gmra.mxu0 %v2140
    %v4098 = vpop.f32.mrf.mxu0
    %v4099 = vadd.f32 0.0, %v4098
    %4100 = vdwg.mxu0
    %4101 = vmatpush.msra.mxu0 0.0
    %4102 = vmatpush.msra.mxu0 0.0
    %4103 = vmatpush.msra.mxu0 0.0
    %4104 = vmatpush.msra.mxu0 0.0
    %4105 = vmatpush.msra.mxu0 0.0
    %4106 = vmatpush.msra.mxu0 0.0
    %4107 = vmatpush.msra.mxu0 0.0
    %4108 = vmatpush.msra.mxu0 0.0
    %4109 = vmatpush.msra.mxu0 0.0
    %4110 = vmatpush.msra.mxu0 0.0
    %4111 = vmatpush.msra.mxu0 0.0
    %4112 = vmatpush.msra.mxu0 0.0
    %4113 = vmatpush.msra.mxu0 %v3920
    %4114 = vmatpush.msra.mxu0 %v3912
    %4115 = vmatpush.msra.mxu0 %v3904
    %4116 = vmatpush.msra.mxu0 %v3896
    %4117 = vmatmul.f32.gmra.mxu0 %v2131
    %v4118 = vpop.f32.mrf.mxu0
    %v4119 = vadd.f32 0.0, %v4118
    %4120 = vmatmul.f32.gmra.mxu0 %v2134
    %v4121 = vpop.f32.mrf.mxu0
    %v4122 = vadd.f32 0.0, %v4121
    %4123 = vmatmul.f32.gmra.mxu0 %v2137
    %v4124 = vpop.f32.mrf.mxu0
    %v4125 = vadd.f32 0.0, %v4124
    %4126 = vmatmul.f32.gmra.mxu0 %v2140
    %v4127 = vpop.f32.mrf.mxu0
    %v4128 = vadd.f32 0.0, %v4127
    %4129 = vdwg.mxu0
    %4130 = vmatpush.msra.mxu0 0.0
    %4131 = vmatpush.msra.mxu0 0.0
    %4132 = vmatpush.msra.mxu0 0.0
    %4133 = vmatpush.msra.mxu0 0.0
    %4134 = vmatpush.msra.mxu0 0.0
    %4135 = vmatpush.msra.mxu0 0.0
    %4136 = vmatpush.msra.mxu0 0.0
    %4137 = vmatpush.msra.mxu0 0.0
    %4138 = vmatpush.msra.mxu0 0.0
    %4139 = vmatpush.msra.mxu0 0.0
    %4140 = vmatpush.msra.mxu0 0.0
    %4141 = vmatpush.msra.mxu0 0.0
    %4142 = vmatpush.msra.mxu0 %v3921
    %4143 = vmatpush.msra.mxu0 %v3913
    %4144 = vmatpush.msra.mxu0 %v3905
    %4145 = vmatpush.msra.mxu0 %v3897
    %4146 = vmatmul.f32.gmra.mxu0 %v2131
    %v4147 = vpop.f32.mrf.mxu0
    %v4148 = vadd.f32 0.0, %v4147
    %4149 = vmatmul.f32.gmra.mxu0 %v2134
    %v4150 = vpop.f32.mrf.mxu0
    %v4151 = vadd.f32 0.0, %v4150
    %4152 = vmatmul.f32.gmra.mxu0 %v2137
    %v4153 = vpop.f32.mrf.mxu0
    %v4154 = vadd.f32 0.0, %v4153
    %4155 = vmatmul.f32.gmra.mxu0 %v2140
    %v4156 = vpop.f32.mrf.mxu0
    %v4157 = vadd.f32 0.0, %v4156
    %4158 = vdwg.mxu0
    %v4159 = vld [vmem:[#allocation3] sm:$0xff]
    %v4160 = vld [vmem:[#allocation3 + $0x8] sm:$0xff]
    %v4161 = vld [vmem:[#allocation3 + $0x10] sm:$0xff]
    %v4162 = vld [vmem:[#allocation3 + $0x18] sm:$0xff]
    %v4163 = vld [vmem:[#allocation3 + $0x20] sm:$0xff]
    %v4164 = vld [vmem:[#allocation3 + $0x28] sm:$0xff]
    %v4165 = vld [vmem:[#allocation3 + $0x30] sm:$0xff]
    %v4166 = vld [vmem:[#allocation3 + $0x38] sm:$0xff]
    %v4167 = vld [vmem:[#allocation3 + $0x40] sm:$0xff]
    %v4168 = vld [vmem:[#allocation3 + $0x48] sm:$0xff]
    %v4169 = vld [vmem:[#allocation3 + $0x50] sm:$0xff]
    %v4170 = vld [vmem:[#allocation3 + $0x58] sm:$0xff]
    %v4171 = vld [vmem:[#allocation3 + $0x60] sm:$0xff]
    %v4172 = vld [vmem:[#allocation3 + $0x68] sm:$0xff]
    %v4173 = vld [vmem:[#allocation3 + $0x70] sm:$0xff]
    %v4174 = vld [vmem:[#allocation3 + $0x78] sm:$0xff]
    %v4175 = vld [vmem:[#allocation3 + $0x80] sm:$0xff]
    %v4176 = vld [vmem:[#allocation3 + $0x88] sm:$0xff]
    %v4177 = vld [vmem:[#allocation3 + $0x90] sm:$0xff]
    %v4178 = vld [vmem:[#allocation3 + $0x98] sm:$0xff]
    %v4179 = vld [vmem:[#allocation3 + $0xa0] sm:$0xff]
    %v4180 = vld [vmem:[#allocation3 + $0xa8] sm:$0xff]
    %v4181 = vld [vmem:[#allocation3 + $0xb0] sm:$0xff]
    %v4182 = vld [vmem:[#allocation3 + $0xb8] sm:$0xff]
    %v4183 = vld [vmem:[#allocation3 + $0xc0] sm:$0xff]
    %v4184 = vld [vmem:[#allocation3 + $0xc8] sm:$0xff]
    %v4185 = vld [vmem:[#allocation3 + $0xd0] sm:$0xff]
    %v4186 = vld [vmem:[#allocation3 + $0xd8] sm:$0xff]
    %v4187 = vld [vmem:[#allocation3 + $0xe0] sm:$0xff]
    %v4188 = vld [vmem:[#allocation3 + $0xe8] sm:$0xff]
    %v4189 = vld [vmem:[#allocation3 + $0xf0] sm:$0xff]
    %v4190 = vld [vmem:[#allocation3 + $0xf8] sm:$0xff]
    %v4191 = vld [vmem:[#allocation3 + $0x100] sm:$0xff]
    %v4192 = vld [vmem:[#allocation3 + $0x108] sm:$0xff]
    %v4193 = vld [vmem:[#allocation3 + $0x110] sm:$0xff]
    %v4194 = vld [vmem:[#allocation3 + $0x118] sm:$0xff]
    %v4195 = vld [vmem:[#allocation3 + $0x120] sm:$0xff]
    %v4196 = vld [vmem:[#allocation3 + $0x128] sm:$0xff]
    %v4197 = vld [vmem:[#allocation3 + $0x130] sm:$0xff]
    %v4198 = vld [vmem:[#allocation3 + $0x138] sm:$0xff]
    %v4199 = vld [vmem:[#allocation3 + $0x140] sm:$0xff]
    %v4200 = vld [vmem:[#allocation3 + $0x148] sm:$0xff]
    %v4201 = vld [vmem:[#allocation3 + $0x150] sm:$0xff]
    %v4202 = vld [vmem:[#allocation3 + $0x158] sm:$0xff]
    %v4203 = vld [vmem:[#allocation3 + $0x160] sm:$0xff]
    %v4204 = vld [vmem:[#allocation3 + $0x168] sm:$0xff]
    %v4205 = vld [vmem:[#allocation3 + $0x170] sm:$0xff]
    %v4206 = vld [vmem:[#allocation3 + $0x178] sm:$0xff]
    %v4207 = vld [vmem:[#allocation3 + $0x180] sm:$0xff]
    %v4208 = vld [vmem:[#allocation3 + $0x188] sm:$0xff]
    %v4209 = vld [vmem:[#allocation3 + $0x190] sm:$0xff]
    %v4210 = vld [vmem:[#allocation3 + $0x198] sm:$0xff]
    %v4211 = vld [vmem:[#allocation3 + $0x1a0] sm:$0xff]
    %v4212 = vld [vmem:[#allocation3 + $0x1a8] sm:$0xff]
    %v4213 = vld [vmem:[#allocation3 + $0x1b0] sm:$0xff]
    %v4214 = vld [vmem:[#allocation3 + $0x1b8] sm:$0xff]
    %v4215 = vld [vmem:[#allocation3 + $0x1c0] sm:$0xff]
    %v4216 = vld [vmem:[#allocation3 + $0x1c8] sm:$0xff]
    %v4217 = vld [vmem:[#allocation3 + $0x1d0] sm:$0xff]
    %v4218 = vld [vmem:[#allocation3 + $0x1d8] sm:$0xff]
    %v4219 = vld [vmem:[#allocation3 + $0x1e0] sm:$0xff]
    %v4220 = vld [vmem:[#allocation3 + $0x1e8] sm:$0xff]
    %v4221 = vld [vmem:[#allocation3 + $0x1f0] sm:$0xff]
    %v4222 = vld [vmem:[#allocation3 + $0x1f8] sm:$0xff]
    %v4223 = vld [vmem:[#allocation3 + $0x200] sm:$0xff]
    %v4224 = vld [vmem:[#allocation3 + $0x208] sm:$0xff]
    %v4225 = vld [vmem:[#allocation3 + $0x210] sm:$0xff]
    %v4226 = vld [vmem:[#allocation3 + $0x218] sm:$0xff]
    %v4227 = vld [vmem:[#allocation3 + $0x220] sm:$0xff]
    %v4228 = vld [vmem:[#allocation3 + $0x228] sm:$0xff]
    %v4229 = vld [vmem:[#allocation3 + $0x230] sm:$0xff]
    %v4230 = vld [vmem:[#allocation3 + $0x238] sm:$0xff]
    %v4231 = vld [vmem:[#allocation3 + $0x240] sm:$0xff]
    %v4232 = vld [vmem:[#allocation3 + $0x248] sm:$0xff]
    %v4233 = vld [vmem:[#allocation3 + $0x250] sm:$0xff]
    %v4234 = vld [vmem:[#allocation3 + $0x258] sm:$0xff]
    %v4235 = vld [vmem:[#allocation3 + $0x260] sm:$0xff]
    %v4236 = vld [vmem:[#allocation3 + $0x268] sm:$0xff]
    %v4237 = vld [vmem:[#allocation3 + $0x270] sm:$0xff]
    %v4238 = vld [vmem:[#allocation3 + $0x278] sm:$0xff]
    %v4239 = vld [vmem:[#allocation3 + $0x280] sm:$0xff]
    %v4240 = vld [vmem:[#allocation3 + $0x288] sm:$0xff]
    %v4241 = vld [vmem:[#allocation3 + $0x290] sm:$0xff]
    %v4242 = vld [vmem:[#allocation3 + $0x298] sm:$0xff]
    %v4243 = vld [vmem:[#allocation3 + $0x2a0] sm:$0xff]
    %v4244 = vld [vmem:[#allocation3 + $0x2a8] sm:$0xff]
    %v4245 = vld [vmem:[#allocation3 + $0x2b0] sm:$0xff]
    %v4246 = vld [vmem:[#allocation3 + $0x2b8] sm:$0xff]
    %v4247 = vld [vmem:[#allocation3 + $0x2c0] sm:$0xff]
    %v4248 = vld [vmem:[#allocation3 + $0x2c8] sm:$0xff]
    %v4249 = vld [vmem:[#allocation3 + $0x2d0] sm:$0xff]
    %v4250 = vld [vmem:[#allocation3 + $0x2d8] sm:$0xff]
    %v4251 = vld [vmem:[#allocation3 + $0x2e0] sm:$0xff]
    %v4252 = vld [vmem:[#allocation3 + $0x2e8] sm:$0xff]
    %v4253 = vld [vmem:[#allocation3 + $0x2f0] sm:$0xff]
    %v4254 = vld [vmem:[#allocation3 + $0x2f8] sm:$0xff]
    %v4255 = vld [vmem:[#allocation3 + $0x300] sm:$0xff]
    %v4256 = vld [vmem:[#allocation3 + $0x308] sm:$0xff]
    %v4257 = vld [vmem:[#allocation3 + $0x310] sm:$0xff]
    %v4258 = vld [vmem:[#allocation3 + $0x318] sm:$0xff]
    %v4259 = vld [vmem:[#allocation3 + $0x320] sm:$0xff]
    %v4260 = vld [vmem:[#allocation3 + $0x328] sm:$0xff]
    %v4261 = vld [vmem:[#allocation3 + $0x330] sm:$0xff]
    %v4262 = vld [vmem:[#allocation3 + $0x338] sm:$0xff]
    %v4263 = vld [vmem:[#allocation3 + $0x340] sm:$0xff]
    %v4264 = vld [vmem:[#allocation3 + $0x348] sm:$0xff]
    %v4265 = vld [vmem:[#allocation3 + $0x350] sm:$0xff]
    %v4266 = vld [vmem:[#allocation3 + $0x358] sm:$0xff]
    %v4267 = vld [vmem:[#allocation3 + $0x360] sm:$0xff]
    %v4268 = vld [vmem:[#allocation3 + $0x368] sm:$0xff]
    %v4269 = vld [vmem:[#allocation3 + $0x370] sm:$0xff]
    %v4270 = vld [vmem:[#allocation3 + $0x378] sm:$0xff]
    %v4271 = vld [vmem:[#allocation3 + $0x380] sm:$0xff]
    %v4272 = vld [vmem:[#allocation3 + $0x388] sm:$0xff]
    %v4273 = vld [vmem:[#allocation3 + $0x390] sm:$0xff]
    %v4274 = vld [vmem:[#allocation3 + $0x398] sm:$0xff]
    %v4275 = vld [vmem:[#allocation3 + $0x3a0] sm:$0xff]
    %v4276 = vld [vmem:[#allocation3 + $0x3a8] sm:$0xff]
    %v4277 = vld [vmem:[#allocation3 + $0x3b0] sm:$0xff]
    %v4278 = vld [vmem:[#allocation3 + $0x3b8] sm:$0xff]
    %v4279 = vld [vmem:[#allocation3 + $0x3c0] sm:$0xff]
    %v4280 = vld [vmem:[#allocation3 + $0x3c8] sm:$0xff]
    %v4281 = vld [vmem:[#allocation3 + $0x3d0] sm:$0xff]
    %v4282 = vld [vmem:[#allocation3 + $0x3d8] sm:$0xff]
    %v4283 = vld [vmem:[#allocation3 + $0x3e0] sm:$0xff]
    %v4284 = vld [vmem:[#allocation3 + $0x3e8] sm:$0xff]
    %v4285 = vld [vmem:[#allocation3 + $0x3f0] sm:$0xff]
    %v4286 = vld [vmem:[#allocation3 + $0x3f8] sm:$0xff]
    %v4287 = vld [vmem:[#allocation3 + $0x400] sm:$0xff]
    %v4288 = vld [vmem:[#allocation3 + $0x408] sm:$0xff]
    %v4289 = vld [vmem:[#allocation3 + $0x410] sm:$0xff]
    %v4290 = vld [vmem:[#allocation3 + $0x418] sm:$0xff]
    %v4291 = vld [vmem:[#allocation3 + $0x420] sm:$0xff]
    %v4292 = vld [vmem:[#allocation3 + $0x428] sm:$0xff]
    %v4293 = vld [vmem:[#allocation3 + $0x430] sm:$0xff]
    %v4294 = vld [vmem:[#allocation3 + $0x438] sm:$0xff]
    %v4295 = vld [vmem:[#allocation3 + $0x440] sm:$0xff]
    %v4296 = vld [vmem:[#allocation3 + $0x448] sm:$0xff]
    %v4297 = vld [vmem:[#allocation3 + $0x450] sm:$0xff]
    %v4298 = vld [vmem:[#allocation3 + $0x458] sm:$0xff]
    %v4299 = vld [vmem:[#allocation3 + $0x460] sm:$0xff]
    %v4300 = vld [vmem:[#allocation3 + $0x468] sm:$0xff]
    %v4301 = vld [vmem:[#allocation3 + $0x470] sm:$0xff]
    %v4302 = vld [vmem:[#allocation3 + $0x478] sm:$0xff]
    %v4303 = vld [vmem:[#allocation3 + $0x480] sm:$0xff]
    %v4304 = vld [vmem:[#allocation3 + $0x488] sm:$0xff]
    %v4305 = vld [vmem:[#allocation3 + $0x490] sm:$0xff]
    %v4306 = vld [vmem:[#allocation3 + $0x498] sm:$0xff]
    %v4307 = vld [vmem:[#allocation3 + $0x4a0] sm:$0xff]
    %v4308 = vld [vmem:[#allocation3 + $0x4a8] sm:$0xff]
    %v4309 = vld [vmem:[#allocation3 + $0x4b0] sm:$0xff]
    %v4310 = vld [vmem:[#allocation3 + $0x4b8] sm:$0xff]
    %v4311 = vld [vmem:[#allocation3 + $0x4c0] sm:$0xff]
    %v4312 = vld [vmem:[#allocation3 + $0x4c8] sm:$0xff]
    %v4313 = vld [vmem:[#allocation3 + $0x4d0] sm:$0xff]
    %v4314 = vld [vmem:[#allocation3 + $0x4d8] sm:$0xff]
    %v4315 = vld [vmem:[#allocation3 + $0x4e0] sm:$0xff]
    %v4316 = vld [vmem:[#allocation3 + $0x4e8] sm:$0xff]
    %v4317 = vld [vmem:[#allocation3 + $0x4f0] sm:$0xff]
    %v4318 = vld [vmem:[#allocation3 + $0x4f8] sm:$0xff]
    %v4319 = vld [vmem:[#allocation3 + $0x500] sm:$0xff]
    %v4320 = vld [vmem:[#allocation3 + $0x508] sm:$0xff]
    %v4321 = vld [vmem:[#allocation3 + $0x510] sm:$0xff]
    %v4322 = vld [vmem:[#allocation3 + $0x518] sm:$0xff]
    %v4323 = vld [vmem:[#allocation3 + $0x520] sm:$0xff]
    %v4324 = vld [vmem:[#allocation3 + $0x528] sm:$0xff]
    %v4325 = vld [vmem:[#allocation3 + $0x530] sm:$0xff]
    %v4326 = vld [vmem:[#allocation3 + $0x538] sm:$0xff]
    %v4327 = vld [vmem:[#allocation3 + $0x540] sm:$0xff]
    %v4328 = vld [vmem:[#allocation3 + $0x548] sm:$0xff]
    %v4329 = vld [vmem:[#allocation3 + $0x550] sm:$0xff]
    %v4330 = vld [vmem:[#allocation3 + $0x558] sm:$0xff]
    %v4331 = vld [vmem:[#allocation3 + $0x560] sm:$0xff]
    %v4332 = vld [vmem:[#allocation3 + $0x568] sm:$0xff]
    %v4333 = vld [vmem:[#allocation3 + $0x570] sm:$0xff]
    %v4334 = vld [vmem:[#allocation3 + $0x578] sm:$0xff]
    %v4335 = vld [vmem:[#allocation3 + $0x580] sm:$0xff]
    %v4336 = vld [vmem:[#allocation3 + $0x588] sm:$0xff]
    %v4337 = vld [vmem:[#allocation3 + $0x590] sm:$0xff]
    %v4338 = vld [vmem:[#allocation3 + $0x598] sm:$0xff]
    %v4339 = vld [vmem:[#allocation3 + $0x5a0] sm:$0xff]
    %v4340 = vld [vmem:[#allocation3 + $0x5a8] sm:$0xff]
    %v4341 = vld [vmem:[#allocation3 + $0x5b0] sm:$0xff]
    %v4342 = vld [vmem:[#allocation3 + $0x5b8] sm:$0xff]
    %v4343 = vld [vmem:[#allocation3 + $0x5c0] sm:$0xff]
    %v4344 = vld [vmem:[#allocation3 + $0x5c8] sm:$0xff]
    %v4345 = vld [vmem:[#allocation3 + $0x5d0] sm:$0xff]
    %v4346 = vld [vmem:[#allocation3 + $0x5d8] sm:$0xff]
    %v4347 = vld [vmem:[#allocation3 + $0x5e0] sm:$0xff]
    %v4348 = vld [vmem:[#allocation3 + $0x5e8] sm:$0xff]
    %v4349 = vld [vmem:[#allocation3 + $0x5f0] sm:$0xff]
    %v4350 = vld [vmem:[#allocation3 + $0x5f8] sm:$0xff]
    %v4351 = vld [vmem:[#allocation3 + $0x600] sm:$0xff]
    %v4352 = vld [vmem:[#allocation3 + $0x608] sm:$0xff]
    %v4353 = vld [vmem:[#allocation3 + $0x610] sm:$0xff]
    %v4354 = vld [vmem:[#allocation3 + $0x618] sm:$0xff]
    %v4355 = vld [vmem:[#allocation3 + $0x620] sm:$0xff]
    %v4356 = vld [vmem:[#allocation3 + $0x628] sm:$0xff]
    %v4357 = vld [vmem:[#allocation3 + $0x630] sm:$0xff]
    %v4358 = vld [vmem:[#allocation3 + $0x638] sm:$0xff]
    %v4359 = vld [vmem:[#allocation3 + $0x640] sm:$0xff]
    %v4360 = vld [vmem:[#allocation3 + $0x648] sm:$0xff]
    %v4361 = vld [vmem:[#allocation3 + $0x650] sm:$0xff]
    %v4362 = vld [vmem:[#allocation3 + $0x658] sm:$0xff]
    %v4363 = vld [vmem:[#allocation3 + $0x660] sm:$0xff]
    %v4364 = vld [vmem:[#allocation3 + $0x668] sm:$0xff]
    %v4365 = vld [vmem:[#allocation3 + $0x670] sm:$0xff]
    %v4366 = vld [vmem:[#allocation3 + $0x678] sm:$0xff]
    %v4367 = vld [vmem:[#allocation3 + $0x680] sm:$0xff]
    %v4368 = vld [vmem:[#allocation3 + $0x688] sm:$0xff]
    %v4369 = vld [vmem:[#allocation3 + $0x690] sm:$0xff]
    %v4370 = vld [vmem:[#allocation3 + $0x698] sm:$0xff]
    %v4371 = vld [vmem:[#allocation3 + $0x6a0] sm:$0xff]
    %v4372 = vld [vmem:[#allocation3 + $0x6a8] sm:$0xff]
    %v4373 = vld [vmem:[#allocation3 + $0x6b0] sm:$0xff]
    %v4374 = vld [vmem:[#allocation3 + $0x6b8] sm:$0xff]
    %v4375 = vld [vmem:[#allocation3 + $0x6c0] sm:$0xff]
    %v4376 = vld [vmem:[#allocation3 + $0x6c8] sm:$0xff]
    %v4377 = vld [vmem:[#allocation3 + $0x6d0] sm:$0xff]
    %v4378 = vld [vmem:[#allocation3 + $0x6d8] sm:$0xff]
    %v4379 = vld [vmem:[#allocation3 + $0x6e0] sm:$0xff]
    %v4380 = vld [vmem:[#allocation3 + $0x6e8] sm:$0xff]
    %v4381 = vld [vmem:[#allocation3 + $0x6f0] sm:$0xff]
    %v4382 = vld [vmem:[#allocation3 + $0x6f8] sm:$0xff]
    %v4383 = vld [vmem:[#allocation3 + $0x700] sm:$0xff]
    %v4384 = vld [vmem:[#allocation3 + $0x708] sm:$0xff]
    %v4385 = vld [vmem:[#allocation3 + $0x710] sm:$0xff]
    %v4386 = vld [vmem:[#allocation3 + $0x718] sm:$0xff]
    %v4387 = vld [vmem:[#allocation3 + $0x720] sm:$0xff]
    %v4388 = vld [vmem:[#allocation3 + $0x728] sm:$0xff]
    %v4389 = vld [vmem:[#allocation3 + $0x730] sm:$0xff]
    %v4390 = vld [vmem:[#allocation3 + $0x738] sm:$0xff]
    %v4391 = vld [vmem:[#allocation3 + $0x740] sm:$0xff]
    %v4392 = vld [vmem:[#allocation3 + $0x748] sm:$0xff]
    %v4393 = vld [vmem:[#allocation3 + $0x750] sm:$0xff]
    %v4394 = vld [vmem:[#allocation3 + $0x758] sm:$0xff]
    %v4395 = vld [vmem:[#allocation3 + $0x760] sm:$0xff]
    %v4396 = vld [vmem:[#allocation3 + $0x768] sm:$0xff]
    %v4397 = vld [vmem:[#allocation3 + $0x770] sm:$0xff]
    %v4398 = vld [vmem:[#allocation3 + $0x778] sm:$0xff]
    %v4399 = vld [vmem:[#allocation3 + $0x780] sm:$0xff]
    %v4400 = vld [vmem:[#allocation3 + $0x788] sm:$0xff]
    %v4401 = vld [vmem:[#allocation3 + $0x790] sm:$0xff]
    %v4402 = vld [vmem:[#allocation3 + $0x798] sm:$0xff]
    %v4403 = vld [vmem:[#allocation3 + $0x7a0] sm:$0xff]
    %v4404 = vld [vmem:[#allocation3 + $0x7a8] sm:$0xff]
    %v4405 = vld [vmem:[#allocation3 + $0x7b0] sm:$0xff]
    %v4406 = vld [vmem:[#allocation3 + $0x7b8] sm:$0xff]
    %v4407 = vld [vmem:[#allocation3 + $0x7c0] sm:$0xff]
    %v4408 = vld [vmem:[#allocation3 + $0x7c8] sm:$0xff]
    %v4409 = vld [vmem:[#allocation3 + $0x7d0] sm:$0xff]
    %v4410 = vld [vmem:[#allocation3 + $0x7d8] sm:$0xff]
    %v4411 = vld [vmem:[#allocation3 + $0x7e0] sm:$0xff]
    %v4412 = vld [vmem:[#allocation3 + $0x7e8] sm:$0xff]
    %v4413 = vld [vmem:[#allocation3 + $0x7f0] sm:$0xff]
    %v4414 = vld [vmem:[#allocation3 + $0x7f8] sm:$0xff]
    %v4415 = vld [vmem:[#allocation3 + $0x800] sm:$0xff]
    %v4416 = vld [vmem:[#allocation3 + $0x808] sm:$0xff]
    %v4417 = vld [vmem:[#allocation3 + $0x810] sm:$0xff]
    %v4418 = vld [vmem:[#allocation3 + $0x818] sm:$0xff]
    %v4419 = vld [vmem:[#allocation3 + $0x820] sm:$0xff]
    %v4420 = vld [vmem:[#allocation3 + $0x828] sm:$0xff]
    %v4421 = vld [vmem:[#allocation3 + $0x830] sm:$0xff]
    %v4422 = vld [vmem:[#allocation3 + $0x838] sm:$0xff]
    %v4423 = vld [vmem:[#allocation3 + $0x840] sm:$0xff]
    %v4424 = vld [vmem:[#allocation3 + $0x848] sm:$0xff]
    %v4425 = vld [vmem:[#allocation3 + $0x850] sm:$0xff]
    %v4426 = vld [vmem:[#allocation3 + $0x858] sm:$0xff]
    %v4427 = vld [vmem:[#allocation3 + $0x860] sm:$0xff]
    %v4428 = vld [vmem:[#allocation3 + $0x868] sm:$0xff]
    %v4429 = vld [vmem:[#allocation3 + $0x870] sm:$0xff]
    %v4430 = vld [vmem:[#allocation3 + $0x878] sm:$0xff]
    %v4431 = vld [vmem:[#allocation3 + $0x880] sm:$0xff]
    %v4432 = vld [vmem:[#allocation3 + $0x888] sm:$0xff]
    %v4433 = vld [vmem:[#allocation3 + $0x890] sm:$0xff]
    %v4434 = vld [vmem:[#allocation3 + $0x898] sm:$0xff]
    %v4435 = vld [vmem:[#allocation3 + $0x8a0] sm:$0xff]
    %v4436 = vld [vmem:[#allocation3 + $0x8a8] sm:$0xff]
    %v4437 = vld [vmem:[#allocation3 + $0x8b0] sm:$0xff]
    %v4438 = vld [vmem:[#allocation3 + $0x8b8] sm:$0xff]
    %v4439 = vld [vmem:[#allocation3 + $0x8c0] sm:$0xff]
    %v4440 = vld [vmem:[#allocation3 + $0x8c8] sm:$0xff]
    %v4441 = vld [vmem:[#allocation3 + $0x8d0] sm:$0xff]
    %v4442 = vld [vmem:[#allocation3 + $0x8d8] sm:$0xff]
    %v4443 = vld [vmem:[#allocation3 + $0x8e0] sm:$0xff]
    %v4444 = vld [vmem:[#allocation3 + $0x8e8] sm:$0xff]
    %v4445 = vld [vmem:[#allocation3 + $0x8f0] sm:$0xff]
    %v4446 = vld [vmem:[#allocation3 + $0x8f8] sm:$0xff]
    %v4447 = vld [vmem:[#allocation3 + $0x900] sm:$0xff]
    %v4448 = vld [vmem:[#allocation3 + $0x908] sm:$0xff]
    %v4449 = vld [vmem:[#allocation3 + $0x910] sm:$0xff]
    %v4450 = vld [vmem:[#allocation3 + $0x918] sm:$0xff]
    %v4451 = vld [vmem:[#allocation3 + $0x920] sm:$0xff]
    %v4452 = vld [vmem:[#allocation3 + $0x928] sm:$0xff]
    %v4453 = vld [vmem:[#allocation3 + $0x930] sm:$0xff]
    %v4454 = vld [vmem:[#allocation3 + $0x938] sm:$0xff]
    %v4455 = vld [vmem:[#allocation3 + $0x940] sm:$0xff]
    %v4456 = vld [vmem:[#allocation3 + $0x948] sm:$0xff]
    %v4457 = vld [vmem:[#allocation3 + $0x950] sm:$0xff]
    %v4458 = vld [vmem:[#allocation3 + $0x958] sm:$0xff]
    %v4459 = vld [vmem:[#allocation3 + $0x960] sm:$0xff]
    %v4460 = vld [vmem:[#allocation3 + $0x968] sm:$0xff]
    %v4461 = vld [vmem:[#allocation3 + $0x970] sm:$0xff]
    %v4462 = vld [vmem:[#allocation3 + $0x978] sm:$0xff]
    %v4463 = vld [vmem:[#allocation3 + $0x980] sm:$0xff]
    %v4464 = vld [vmem:[#allocation3 + $0x988] sm:$0xff]
    %v4465 = vld [vmem:[#allocation3 + $0x990] sm:$0xff]
    %v4466 = vld [vmem:[#allocation3 + $0x998] sm:$0xff]
    %v4467 = vld [vmem:[#allocation3 + $0x9a0] sm:$0xff]
    %v4468 = vld [vmem:[#allocation3 + $0x9a8] sm:$0xff]
    %v4469 = vld [vmem:[#allocation3 + $0x9b0] sm:$0xff]
    %v4470 = vld [vmem:[#allocation3 + $0x9b8] sm:$0xff]
    %v4471 = vld [vmem:[#allocation3 + $0x9c0] sm:$0xff]
    %v4472 = vld [vmem:[#allocation3 + $0x9c8] sm:$0xff]
    %v4473 = vld [vmem:[#allocation3 + $0x9d0] sm:$0xff]
    %v4474 = vld [vmem:[#allocation3 + $0x9d8] sm:$0xff]
    %v4475 = vld [vmem:[#allocation3 + $0x9e0] sm:$0xff]
    %v4476 = vld [vmem:[#allocation3 + $0x9e8] sm:$0xff]
    %v4477 = vld [vmem:[#allocation3 + $0x9f0] sm:$0xff]
    %v4478 = vld [vmem:[#allocation3 + $0x9f8] sm:$0xff]
    %v4479 = vld [vmem:[#allocation3 + $0xa00] sm:$0xff]
    %v4480 = vld [vmem:[#allocation3 + $0xa08] sm:$0xff]
    %v4481 = vld [vmem:[#allocation3 + $0xa10] sm:$0xff]
    %v4482 = vld [vmem:[#allocation3 + $0xa18] sm:$0xff]
    %v4483 = vld [vmem:[#allocation3 + $0xa20] sm:$0xff]
    %v4484 = vld [vmem:[#allocation3 + $0xa28] sm:$0xff]
    %v4485 = vld [vmem:[#allocation3 + $0xa30] sm:$0xff]
    %v4486 = vld [vmem:[#allocation3 + $0xa38] sm:$0xff]
    %v4487 = vld [vmem:[#allocation3 + $0xa40] sm:$0xff]
    %v4488 = vld [vmem:[#allocation3 + $0xa48] sm:$0xff]
    %v4489 = vld [vmem:[#allocation3 + $0xa50] sm:$0xff]
    %v4490 = vld [vmem:[#allocation3 + $0xa58] sm:$0xff]
    %v4491 = vld [vmem:[#allocation3 + $0xa60] sm:$0xff]
    %v4492 = vld [vmem:[#allocation3 + $0xa68] sm:$0xff]
    %v4493 = vld [vmem:[#allocation3 + $0xa70] sm:$0xff]
    %v4494 = vld [vmem:[#allocation3 + $0xa78] sm:$0xff]
    %v4495 = vld [vmem:[#allocation3 + $0xa80] sm:$0xff]
    %v4496 = vld [vmem:[#allocation3 + $0xa88] sm:$0xff]
    %v4497 = vld [vmem:[#allocation3 + $0xa90] sm:$0xff]
    %v4498 = vld [vmem:[#allocation3 + $0xa98] sm:$0xff]
    %v4499 = vld [vmem:[#allocation3 + $0xaa0] sm:$0xff]
    %v4500 = vld [vmem:[#allocation3 + $0xaa8] sm:$0xff]
    %v4501 = vld [vmem:[#allocation3 + $0xab0] sm:$0xff]
    %v4502 = vld [vmem:[#allocation3 + $0xab8] sm:$0xff]
    %v4503 = vld [vmem:[#allocation3 + $0xac0] sm:$0xff]
    %v4504 = vld [vmem:[#allocation3 + $0xac8] sm:$0xff]
    %v4505 = vld [vmem:[#allocation3 + $0xad0] sm:$0xff]
    %v4506 = vld [vmem:[#allocation3 + $0xad8] sm:$0xff]
    %v4507 = vld [vmem:[#allocation3 + $0xae0] sm:$0xff]
    %v4508 = vld [vmem:[#allocation3 + $0xae8] sm:$0xff]
    %v4509 = vld [vmem:[#allocation3 + $0xaf0] sm:$0xff]
    %v4510 = vld [vmem:[#allocation3 + $0xaf8] sm:$0xff]
    %v4511 = vld [vmem:[#allocation3 + $0xb00] sm:$0xff]
    %v4512 = vld [vmem:[#allocation3 + $0xb08] sm:$0xff]
    %v4513 = vld [vmem:[#allocation3 + $0xb10] sm:$0xff]
    %v4514 = vld [vmem:[#allocation3 + $0xb18] sm:$0xff]
    %v4515 = vld [vmem:[#allocation3 + $0xb20] sm:$0xff]
    %v4516 = vld [vmem:[#allocation3 + $0xb28] sm:$0xff]
    %v4517 = vld [vmem:[#allocation3 + $0xb30] sm:$0xff]
    %v4518 = vld [vmem:[#allocation3 + $0xb38] sm:$0xff]
    %v4519 = vld [vmem:[#allocation3 + $0xb40] sm:$0xff]
    %v4520 = vld [vmem:[#allocation3 + $0xb48] sm:$0xff]
    %v4521 = vld [vmem:[#allocation3 + $0xb50] sm:$0xff]
    %v4522 = vld [vmem:[#allocation3 + $0xb58] sm:$0xff]
    %v4523 = vld [vmem:[#allocation3 + $0xb60] sm:$0xff]
    %v4524 = vld [vmem:[#allocation3 + $0xb68] sm:$0xff]
    %v4525 = vld [vmem:[#allocation3 + $0xb70] sm:$0xff]
    %v4526 = vld [vmem:[#allocation3 + $0xb78] sm:$0xff]
    %v4527 = vld [vmem:[#allocation3 + $0xb80] sm:$0xff]
    %v4528 = vld [vmem:[#allocation3 + $0xb88] sm:$0xff]
    %v4529 = vld [vmem:[#allocation3 + $0xb90] sm:$0xff]
    %v4530 = vld [vmem:[#allocation3 + $0xb98] sm:$0xff]
    %v4531 = vld [vmem:[#allocation3 + $0xba0] sm:$0xff]
    %v4532 = vld [vmem:[#allocation3 + $0xba8] sm:$0xff]
    %v4533 = vld [vmem:[#allocation3 + $0xbb0] sm:$0xff]
    %v4534 = vld [vmem:[#allocation3 + $0xbb8] sm:$0xff]
    %v4535 = vld [vmem:[#allocation3 + $0xbc0] sm:$0xff]
    %v4536 = vld [vmem:[#allocation3 + $0xbc8] sm:$0xff]
    %v4537 = vld [vmem:[#allocation3 + $0xbd0] sm:$0xff]
    %v4538 = vld [vmem:[#allocation3 + $0xbd8] sm:$0xff]
    %v4539 = vld [vmem:[#allocation3 + $0xbe0] sm:$0xff]
    %v4540 = vld [vmem:[#allocation3 + $0xbe8] sm:$0xff]
    %v4541 = vld [vmem:[#allocation3 + $0xbf0] sm:$0xff]
    %v4542 = vld [vmem:[#allocation3 + $0xbf8] sm:$0xff]
    %v4543 = vld [vmem:[#allocation3 + $0xc00] sm:$0xff]
    %v4544 = vld [vmem:[#allocation3 + $0xc08] sm:$0xff]
    %v4545 = vld [vmem:[#allocation3 + $0xc10] sm:$0xff]
    %v4546 = vld [vmem:[#allocation3 + $0xc18] sm:$0xff]
    %v4547 = vld [vmem:[#allocation3 + $0xc20] sm:$0xff]
    %v4548 = vld [vmem:[#allocation3 + $0xc28] sm:$0xff]
    %v4549 = vld [vmem:[#allocation3 + $0xc30] sm:$0xff]
    %v4550 = vld [vmem:[#allocation3 + $0xc38] sm:$0xff]
    %v4551 = vld [vmem:[#allocation3 + $0xc40] sm:$0xff]
    %v4552 = vld [vmem:[#allocation3 + $0xc48] sm:$0xff]
    %v4553 = vld [vmem:[#allocation3 + $0xc50] sm:$0xff]
    %v4554 = vld [vmem:[#allocation3 + $0xc58] sm:$0xff]
    %v4555 = vld [vmem:[#allocation3 + $0xc60] sm:$0xff]
    %v4556 = vld [vmem:[#allocation3 + $0xc68] sm:$0xff]
    %v4557 = vld [vmem:[#allocation3 + $0xc70] sm:$0xff]
    %v4558 = vld [vmem:[#allocation3 + $0xc78] sm:$0xff]
    %v4559 = vld [vmem:[#allocation3 + $0xc80] sm:$0xff]
    %v4560 = vld [vmem:[#allocation3 + $0xc88] sm:$0xff]
    %v4561 = vld [vmem:[#allocation3 + $0xc90] sm:$0xff]
    %v4562 = vld [vmem:[#allocation3 + $0xc98] sm:$0xff]
    %v4563 = vld [vmem:[#allocation3 + $0xca0] sm:$0xff]
    %v4564 = vld [vmem:[#allocation3 + $0xca8] sm:$0xff]
    %v4565 = vld [vmem:[#allocation3 + $0xcb0] sm:$0xff]
    %v4566 = vld [vmem:[#allocation3 + $0xcb8] sm:$0xff]
    %v4567 = vld [vmem:[#allocation3 + $0xcc0] sm:$0xff]
    %v4568 = vld [vmem:[#allocation3 + $0xcc8] sm:$0xff]
    %v4569 = vld [vmem:[#allocation3 + $0xcd0] sm:$0xff]
    %v4570 = vld [vmem:[#allocation3 + $0xcd8] sm:$0xff]
    %v4571 = vld [vmem:[#allocation3 + $0xce0] sm:$0xff]
    %v4572 = vld [vmem:[#allocation3 + $0xce8] sm:$0xff]
    %v4573 = vld [vmem:[#allocation3 + $0xcf0] sm:$0xff]
    %v4574 = vld [vmem:[#allocation3 + $0xcf8] sm:$0xff]
    %v4575 = vld [vmem:[#allocation3 + $0xd00] sm:$0xff]
    %v4576 = vld [vmem:[#allocation3 + $0xd08] sm:$0xff]
    %v4577 = vld [vmem:[#allocation3 + $0xd10] sm:$0xff]
    %v4578 = vld [vmem:[#allocation3 + $0xd18] sm:$0xff]
    %v4579 = vld [vmem:[#allocation3 + $0xd20] sm:$0xff]
    %v4580 = vld [vmem:[#allocation3 + $0xd28] sm:$0xff]
    %v4581 = vld [vmem:[#allocation3 + $0xd30] sm:$0xff]
    %v4582 = vld [vmem:[#allocation3 + $0xd38] sm:$0xff]
    %v4583 = vld [vmem:[#allocation3 + $0xd40] sm:$0xff]
    %v4584 = vld [vmem:[#allocation3 + $0xd48] sm:$0xff]
    %v4585 = vld [vmem:[#allocation3 + $0xd50] sm:$0xff]
    %v4586 = vld [vmem:[#allocation3 + $0xd58] sm:$0xff]
    %v4587 = vld [vmem:[#allocation3 + $0xd60] sm:$0xff]
    %v4588 = vld [vmem:[#allocation3 + $0xd68] sm:$0xff]
    %v4589 = vld [vmem:[#allocation3 + $0xd70] sm:$0xff]
    %v4590 = vld [vmem:[#allocation3 + $0xd78] sm:$0xff]
    %v4591 = vld [vmem:[#allocation3 + $0xd80] sm:$0xff]
    %v4592 = vld [vmem:[#allocation3 + $0xd88] sm:$0xff]
    %v4593 = vld [vmem:[#allocation3 + $0xd90] sm:$0xff]
    %v4594 = vld [vmem:[#allocation3 + $0xd98] sm:$0xff]
    %v4595 = vld [vmem:[#allocation3 + $0xda0] sm:$0xff]
    %v4596 = vld [vmem:[#allocation3 + $0xda8] sm:$0xff]
    %v4597 = vld [vmem:[#allocation3 + $0xdb0] sm:$0xff]
    %v4598 = vld [vmem:[#allocation3 + $0xdb8] sm:$0xff]
    %v4599 = vld [vmem:[#allocation3 + $0xdc0] sm:$0xff]
    %v4600 = vld [vmem:[#allocation3 + $0xdc8] sm:$0xff]
    %v4601 = vld [vmem:[#allocation3 + $0xdd0] sm:$0xff]
    %v4602 = vld [vmem:[#allocation3 + $0xdd8] sm:$0xff]
    %v4603 = vld [vmem:[#allocation3 + $0xde0] sm:$0xff]
    %v4604 = vld [vmem:[#allocation3 + $0xde8] sm:$0xff]
    %v4605 = vld [vmem:[#allocation3 + $0xdf0] sm:$0xff]
    %v4606 = vld [vmem:[#allocation3 + $0xdf8] sm:$0xff]
    %v4607 = vld [vmem:[#allocation3 + $0xe00] sm:$0xff]
    %v4608 = vld [vmem:[#allocation3 + $0xe08] sm:$0xff]
    %v4609 = vld [vmem:[#allocation3 + $0xe10] sm:$0xff]
    %v4610 = vld [vmem:[#allocation3 + $0xe18] sm:$0xff]
    %v4611 = vld [vmem:[#allocation3 + $0xe20] sm:$0xff]
    %v4612 = vld [vmem:[#allocation3 + $0xe28] sm:$0xff]
    %v4613 = vld [vmem:[#allocation3 + $0xe30] sm:$0xff]
    %v4614 = vld [vmem:[#allocation3 + $0xe38] sm:$0xff]
    %v4615 = vld [vmem:[#allocation3 + $0xe40] sm:$0xff]
    %v4616 = vld [vmem:[#allocation3 + $0xe48] sm:$0xff]
    %v4617 = vld [vmem:[#allocation3 + $0xe50] sm:$0xff]
    %v4618 = vld [vmem:[#allocation3 + $0xe58] sm:$0xff]
    %v4619 = vld [vmem:[#allocation3 + $0xe60] sm:$0xff]
    %v4620 = vld [vmem:[#allocation3 + $0xe68] sm:$0xff]
    %v4621 = vld [vmem:[#allocation3 + $0xe70] sm:$0xff]
    %v4622 = vld [vmem:[#allocation3 + $0xe78] sm:$0xff]
    %v4623 = vld [vmem:[#allocation3 + $0xe80] sm:$0xff]
    %v4624 = vld [vmem:[#allocation3 + $0xe88] sm:$0xff]
    %v4625 = vld [vmem:[#allocation3 + $0xe90] sm:$0xff]
    %v4626 = vld [vmem:[#allocation3 + $0xe98] sm:$0xff]
    %v4627 = vld [vmem:[#allocation3 + $0xea0] sm:$0xff]
    %v4628 = vld [vmem:[#allocation3 + $0xea8] sm:$0xff]
    %v4629 = vld [vmem:[#allocation3 + $0xeb0] sm:$0xff]
    %v4630 = vld [vmem:[#allocation3 + $0xeb8] sm:$0xff]
    %v4631 = vld [vmem:[#allocation3 + $0xec0] sm:$0xff]
    %v4632 = vld [vmem:[#allocation3 + $0xec8] sm:$0xff]
    %v4633 = vld [vmem:[#allocation3 + $0xed0] sm:$0xff]
    %v4634 = vld [vmem:[#allocation3 + $0xed8] sm:$0xff]
    %v4635 = vld [vmem:[#allocation3 + $0xee0] sm:$0xff]
    %v4636 = vld [vmem:[#allocation3 + $0xee8] sm:$0xff]
    %v4637 = vld [vmem:[#allocation3 + $0xef0] sm:$0xff]
    %v4638 = vld [vmem:[#allocation3 + $0xef8] sm:$0xff]
    %v4639 = vld [vmem:[#allocation3 + $0xf00] sm:$0xff]
    %v4640 = vld [vmem:[#allocation3 + $0xf08] sm:$0xff]
    %v4641 = vld [vmem:[#allocation3 + $0xf10] sm:$0xff]
    %v4642 = vld [vmem:[#allocation3 + $0xf18] sm:$0xff]
    %v4643 = vld [vmem:[#allocation3 + $0xf20] sm:$0xff]
    %v4644 = vld [vmem:[#allocation3 + $0xf28] sm:$0xff]
    %v4645 = vld [vmem:[#allocation3 + $0xf30] sm:$0xff]
    %v4646 = vld [vmem:[#allocation3 + $0xf38] sm:$0xff]
    %v4647 = vld [vmem:[#allocation3 + $0xf40] sm:$0xff]
    %v4648 = vld [vmem:[#allocation3 + $0xf48] sm:$0xff]
    %v4649 = vld [vmem:[#allocation3 + $0xf50] sm:$0xff]
    %v4650 = vld [vmem:[#allocation3 + $0xf58] sm:$0xff]
    %v4651 = vld [vmem:[#allocation3 + $0xf60] sm:$0xff]
    %v4652 = vld [vmem:[#allocation3 + $0xf68] sm:$0xff]
    %v4653 = vld [vmem:[#allocation3 + $0xf70] sm:$0xff]
    %v4654 = vld [vmem:[#allocation3 + $0xf78] sm:$0xff]
    %v4655 = vld [vmem:[#allocation3 + $0xf80] sm:$0xff]
    %v4656 = vld [vmem:[#allocation3 + $0xf88] sm:$0xff]
    %v4657 = vld [vmem:[#allocation3 + $0xf90] sm:$0xff]
    %v4658 = vld [vmem:[#allocation3 + $0xf98] sm:$0xff]
    %v4659 = vld [vmem:[#allocation3 + $0xfa0] sm:$0xff]
    %v4660 = vld [vmem:[#allocation3 + $0xfa8] sm:$0xff]
    %v4661 = vld [vmem:[#allocation3 + $0xfb0] sm:$0xff]
    %v4662 = vld [vmem:[#allocation3 + $0xfb8] sm:$0xff]
    %v4663 = vld [vmem:[#allocation3 + $0xfc0] sm:$0xff]
    %v4664 = vld [vmem:[#allocation3 + $0xfc8] sm:$0xff]
    %v4665 = vld [vmem:[#allocation3 + $0xfd0] sm:$0xff]
    %v4666 = vld [vmem:[#allocation3 + $0xfd8] sm:$0xff]
    %v4667 = vld [vmem:[#allocation3 + $0xfe0] sm:$0xff]
    %v4668 = vld [vmem:[#allocation3 + $0xfe8] sm:$0xff]
    %v4669 = vld [vmem:[#allocation3 + $0xff0] sm:$0xff]
    %v4670 = vld [vmem:[#allocation3 + $0xff8] sm:$0xff]
    %v4671 = vld [vmem:[#allocation3 + $0x1000] sm:$0xff]
    %v4672 = vld [vmem:[#allocation3 + $0x1008] sm:$0xff]
    %v4673 = vld [vmem:[#allocation3 + $0x1010] sm:$0xff]
    %v4674 = vld [vmem:[#allocation3 + $0x1018] sm:$0xff]
    %v4675 = vld [vmem:[#allocation3 + $0x1020] sm:$0xff]
    %v4676 = vld [vmem:[#allocation3 + $0x1028] sm:$0xff]
    %v4677 = vld [vmem:[#allocation3 + $0x1030] sm:$0xff]
    %v4678 = vld [vmem:[#allocation3 + $0x1038] sm:$0xff]
    %v4679 = vld [vmem:[#allocation3 + $0x1040] sm:$0xff]
    %v4680 = vld [vmem:[#allocation3 + $0x1048] sm:$0xff]
    %v4681 = vld [vmem:[#allocation3 + $0x1050] sm:$0xff]
    %v4682 = vld [vmem:[#allocation3 + $0x1058] sm:$0xff]
    %v4683 = vld [vmem:[#allocation3 + $0x1060] sm:$0xff]
    %v4684 = vld [vmem:[#allocation3 + $0x1068] sm:$0xff]
    %v4685 = vld [vmem:[#allocation3 + $0x1070] sm:$0xff]
    %v4686 = vld [vmem:[#allocation3 + $0x1078] sm:$0xff]
    %v4687 = vld [vmem:[#allocation3 + $0x1080] sm:$0xff]
    %v4688 = vld [vmem:[#allocation3 + $0x1088] sm:$0xff]
    %v4689 = vld [vmem:[#allocation3 + $0x1090] sm:$0xff]
    %v4690 = vld [vmem:[#allocation3 + $0x1098] sm:$0xff]
    %v4691 = vld [vmem:[#allocation3 + $0x10a0] sm:$0xff]
    %v4692 = vld [vmem:[#allocation3 + $0x10a8] sm:$0xff]
    %v4693 = vld [vmem:[#allocation3 + $0x10b0] sm:$0xff]
    %v4694 = vld [vmem:[#allocation3 + $0x10b8] sm:$0xff]
    %v4695 = vld [vmem:[#allocation3 + $0x10c0] sm:$0xff]
    %v4696 = vld [vmem:[#allocation3 + $0x10c8] sm:$0xff]
    %v4697 = vld [vmem:[#allocation3 + $0x10d0] sm:$0xff]
    %v4698 = vld [vmem:[#allocation3 + $0x10d8] sm:$0xff]
    %v4699 = vld [vmem:[#allocation3 + $0x10e0] sm:$0xff]
    %v4700 = vld [vmem:[#allocation3 + $0x10e8] sm:$0xff]
    %v4701 = vld [vmem:[#allocation3 + $0x10f0] sm:$0xff]
    %v4702 = vld [vmem:[#allocation3 + $0x10f8] sm:$0xff]
    %v4703 = vld [vmem:[#allocation3 + $0x1100] sm:$0xff]
    %v4704 = vld [vmem:[#allocation3 + $0x1108] sm:$0xff]
    %v4705 = vld [vmem:[#allocation3 + $0x1110] sm:$0xff]
    %v4706 = vld [vmem:[#allocation3 + $0x1118] sm:$0xff]
    %v4707 = vld [vmem:[#allocation3 + $0x1120] sm:$0xff]
    %v4708 = vld [vmem:[#allocation3 + $0x1128] sm:$0xff]
    %v4709 = vld [vmem:[#allocation3 + $0x1130] sm:$0xff]
    %v4710 = vld [vmem:[#allocation3 + $0x1138] sm:$0xff]
    %v4711 = vld [vmem:[#allocation3 + $0x1140] sm:$0xff]
    %v4712 = vld [vmem:[#allocation3 + $0x1148] sm:$0xff]
    %v4713 = vld [vmem:[#allocation3 + $0x1150] sm:$0xff]
    %v4714 = vld [vmem:[#allocation3 + $0x1158] sm:$0xff]
    %v4715 = vld [vmem:[#allocation3 + $0x1160] sm:$0xff]
    %v4716 = vld [vmem:[#allocation3 + $0x1168] sm:$0xff]
    %v4717 = vld [vmem:[#allocation3 + $0x1170] sm:$0xff]
    %v4718 = vld [vmem:[#allocation3 + $0x1178] sm:$0xff]
    %v4719 = vld [vmem:[#allocation3 + $0x1180] sm:$0xff]
    %v4720 = vld [vmem:[#allocation3 + $0x1188] sm:$0xff]
    %v4721 = vld [vmem:[#allocation3 + $0x1190] sm:$0xff]
    %v4722 = vld [vmem:[#allocation3 + $0x1198] sm:$0xff]
    %v4723 = vld [vmem:[#allocation3 + $0x11a0] sm:$0xff]
    %v4724 = vld [vmem:[#allocation3 + $0x11a8] sm:$0xff]
    %v4725 = vld [vmem:[#allocation3 + $0x11b0] sm:$0xff]
    %v4726 = vld [vmem:[#allocation3 + $0x11b8] sm:$0xff]
    %v4727 = vld [vmem:[#allocation3 + $0x11c0] sm:$0xff]
    %v4728 = vld [vmem:[#allocation3 + $0x11c8] sm:$0xff]
    %v4729 = vld [vmem:[#allocation3 + $0x11d0] sm:$0xff]
    %v4730 = vld [vmem:[#allocation3 + $0x11d8] sm:$0xff]
    %v4731 = vld [vmem:[#allocation3 + $0x11e0] sm:$0xff]
    %v4732 = vld [vmem:[#allocation3 + $0x11e8] sm:$0xff]
    %v4733 = vld [vmem:[#allocation3 + $0x11f0] sm:$0xff]
    %v4734 = vld [vmem:[#allocation3 + $0x11f8] sm:$0xff]
    %v4735 = vld [vmem:[#allocation3 + $0x1200] sm:$0xff]
    %v4736 = vld [vmem:[#allocation3 + $0x1208] sm:$0xff]
    %v4737 = vld [vmem:[#allocation3 + $0x1210] sm:$0xff]
    %v4738 = vld [vmem:[#allocation3 + $0x1218] sm:$0xff]
    %v4739 = vld [vmem:[#allocation3 + $0x1220] sm:$0xff]
    %v4740 = vld [vmem:[#allocation3 + $0x1228] sm:$0xff]
    %v4741 = vld [vmem:[#allocation3 + $0x1230] sm:$0xff]
    %v4742 = vld [vmem:[#allocation3 + $0x1238] sm:$0xff]
    %v4743 = vld [vmem:[#allocation3 + $0x1240] sm:$0xff]
    %v4744 = vld [vmem:[#allocation3 + $0x1248] sm:$0xff]
    %v4745 = vld [vmem:[#allocation3 + $0x1250] sm:$0xff]
    %v4746 = vld [vmem:[#allocation3 + $0x1258] sm:$0xff]
    %v4747 = vld [vmem:[#allocation3 + $0x1260] sm:$0xff]
    %v4748 = vld [vmem:[#allocation3 + $0x1268] sm:$0xff]
    %v4749 = vld [vmem:[#allocation3 + $0x1270] sm:$0xff]
    %v4750 = vld [vmem:[#allocation3 + $0x1278] sm:$0xff]
    %v4751 = vld [vmem:[#allocation3 + $0x1280] sm:$0xff]
    %v4752 = vld [vmem:[#allocation3 + $0x1288] sm:$0xff]
    %v4753 = vld [vmem:[#allocation3 + $0x1290] sm:$0xff]
    %v4754 = vld [vmem:[#allocation3 + $0x1298] sm:$0xff]
    %v4755 = vld [vmem:[#allocation3 + $0x12a0] sm:$0xff]
    %v4756 = vld [vmem:[#allocation3 + $0x12a8] sm:$0xff]
    %v4757 = vld [vmem:[#allocation3 + $0x12b0] sm:$0xff]
    %v4758 = vld [vmem:[#allocation3 + $0x12b8] sm:$0xff]
    %v4759 = vld [vmem:[#allocation3 + $0x12c0] sm:$0xff]
    %v4760 = vld [vmem:[#allocation3 + $0x12c8] sm:$0xff]
    %v4761 = vld [vmem:[#allocation3 + $0x12d0] sm:$0xff]
    %v4762 = vld [vmem:[#allocation3 + $0x12d8] sm:$0xff]
    %v4763 = vld [vmem:[#allocation3 + $0x12e0] sm:$0xff]
    %v4764 = vld [vmem:[#allocation3 + $0x12e8] sm:$0xff]
    %v4765 = vld [vmem:[#allocation3 + $0x12f0] sm:$0xff]
    %v4766 = vld [vmem:[#allocation3 + $0x12f8] sm:$0xff]
    %v4767 = vld [vmem:[#allocation3 + $0x1300] sm:$0xff]
    %v4768 = vld [vmem:[#allocation3 + $0x1308] sm:$0xff]
    %v4769 = vld [vmem:[#allocation3 + $0x1310] sm:$0xff]
    %v4770 = vld [vmem:[#allocation3 + $0x1318] sm:$0xff]
    %v4771 = vld [vmem:[#allocation3 + $0x1320] sm:$0xff]
    %v4772 = vld [vmem:[#allocation3 + $0x1328] sm:$0xff]
    %v4773 = vld [vmem:[#allocation3 + $0x1330] sm:$0xff]
    %v4774 = vld [vmem:[#allocation3 + $0x1338] sm:$0xff]
    %v4775 = vld [vmem:[#allocation3 + $0x1340] sm:$0xff]
    %v4776 = vld [vmem:[#allocation3 + $0x1348] sm:$0xff]
    %v4777 = vld [vmem:[#allocation3 + $0x1350] sm:$0xff]
    %v4778 = vld [vmem:[#allocation3 + $0x1358] sm:$0xff]
    %v4779 = vld [vmem:[#allocation3 + $0x1360] sm:$0xff]
    %v4780 = vld [vmem:[#allocation3 + $0x1368] sm:$0xff]
    %v4781 = vld [vmem:[#allocation3 + $0x1370] sm:$0xff]
    %v4782 = vld [vmem:[#allocation3 + $0x1378] sm:$0xff]
    %v4783 = vld [vmem:[#allocation3 + $0x1380] sm:$0xff]
    %v4784 = vld [vmem:[#allocation3 + $0x1388] sm:$0xff]
    %v4785 = vld [vmem:[#allocation3 + $0x1390] sm:$0xff]
    %v4786 = vld [vmem:[#allocation3 + $0x1398] sm:$0xff]
    %v4787 = vld [vmem:[#allocation3 + $0x13a0] sm:$0xff]
    %v4788 = vld [vmem:[#allocation3 + $0x13a8] sm:$0xff]
    %v4789 = vld [vmem:[#allocation3 + $0x13b0] sm:$0xff]
    %v4790 = vld [vmem:[#allocation3 + $0x13b8] sm:$0xff]
    %v4791 = vld [vmem:[#allocation3 + $0x13c0] sm:$0xff]
    %v4792 = vld [vmem:[#allocation3 + $0x13c8] sm:$0xff]
    %v4793 = vld [vmem:[#allocation3 + $0x13d0] sm:$0xff]
    %v4794 = vld [vmem:[#allocation3 + $0x13d8] sm:$0xff]
    %v4795 = vld [vmem:[#allocation3 + $0x13e0] sm:$0xff]
    %v4796 = vld [vmem:[#allocation3 + $0x13e8] sm:$0xff]
    %v4797 = vld [vmem:[#allocation3 + $0x13f0] sm:$0xff]
    %v4798 = vld [vmem:[#allocation3 + $0x13f8] sm:$0xff]
    %v4799 = vld [vmem:[#allocation3 + $0x1400] sm:$0xff]
    %v4800 = vld [vmem:[#allocation3 + $0x1408] sm:$0xff]
    %v4801 = vld [vmem:[#allocation3 + $0x1410] sm:$0xff]
    %v4802 = vld [vmem:[#allocation3 + $0x1418] sm:$0xff]
    %v4803 = vld [vmem:[#allocation3 + $0x1420] sm:$0xff]
    %v4804 = vld [vmem:[#allocation3 + $0x1428] sm:$0xff]
    %v4805 = vld [vmem:[#allocation3 + $0x1430] sm:$0xff]
    %v4806 = vld [vmem:[#allocation3 + $0x1438] sm:$0xff]
    %v4807 = vld [vmem:[#allocation3 + $0x1440] sm:$0xff]
    %v4808 = vld [vmem:[#allocation3 + $0x1448] sm:$0xff]
    %v4809 = vld [vmem:[#allocation3 + $0x1450] sm:$0xff]
    %v4810 = vld [vmem:[#allocation3 + $0x1458] sm:$0xff]
    %v4811 = vld [vmem:[#allocation3 + $0x1460] sm:$0xff]
    %v4812 = vld [vmem:[#allocation3 + $0x1468] sm:$0xff]
    %v4813 = vld [vmem:[#allocation3 + $0x1470] sm:$0xff]
    %v4814 = vld [vmem:[#allocation3 + $0x1478] sm:$0xff]
    %v4815 = vld [vmem:[#allocation3 + $0x1480] sm:$0xff]
    %v4816 = vld [vmem:[#allocation3 + $0x1488] sm:$0xff]
    %v4817 = vld [vmem:[#allocation3 + $0x1490] sm:$0xff]
    %v4818 = vld [vmem:[#allocation3 + $0x1498] sm:$0xff]
    %v4819 = vld [vmem:[#allocation3 + $0x14a0] sm:$0xff]
    %v4820 = vld [vmem:[#allocation3 + $0x14a8] sm:$0xff]
    %v4821 = vld [vmem:[#allocation3 + $0x14b0] sm:$0xff]
    %v4822 = vld [vmem:[#allocation3 + $0x14b8] sm:$0xff]
    %v4823 = vld [vmem:[#allocation3 + $0x14c0] sm:$0xff]
    %v4824 = vld [vmem:[#allocation3 + $0x14c8] sm:$0xff]
    %v4825 = vld [vmem:[#allocation3 + $0x14d0] sm:$0xff]
    %v4826 = vld [vmem:[#allocation3 + $0x14d8] sm:$0xff]
    %v4827 = vld [vmem:[#allocation3 + $0x14e0] sm:$0xff]
    %v4828 = vld [vmem:[#allocation3 + $0x14e8] sm:$0xff]
    %v4829 = vld [vmem:[#allocation3 + $0x14f0] sm:$0xff]
    %v4830 = vld [vmem:[#allocation3 + $0x14f8] sm:$0xff]
    %v4831 = vld [vmem:[#allocation3 + $0x1500] sm:$0xff]
    %v4832 = vld [vmem:[#allocation3 + $0x1508] sm:$0xff]
    %v4833 = vld [vmem:[#allocation3 + $0x1510] sm:$0xff]
    %v4834 = vld [vmem:[#allocation3 + $0x1518] sm:$0xff]
    %v4835 = vld [vmem:[#allocation3 + $0x1520] sm:$0xff]
    %v4836 = vld [vmem:[#allocation3 + $0x1528] sm:$0xff]
    %v4837 = vld [vmem:[#allocation3 + $0x1530] sm:$0xff]
    %v4838 = vld [vmem:[#allocation3 + $0x1538] sm:$0xff]
    %v4839 = vld [vmem:[#allocation3 + $0x1540] sm:$0xff]
    %v4840 = vld [vmem:[#allocation3 + $0x1548] sm:$0xff]
    %v4841 = vld [vmem:[#allocation3 + $0x1550] sm:$0xff]
    %v4842 = vld [vmem:[#allocation3 + $0x1558] sm:$0xff]
    %v4843 = vld [vmem:[#allocation3 + $0x1560] sm:$0xff]
    %v4844 = vld [vmem:[#allocation3 + $0x1568] sm:$0xff]
    %v4845 = vld [vmem:[#allocation3 + $0x1570] sm:$0xff]
    %v4846 = vld [vmem:[#allocation3 + $0x1578] sm:$0xff]
    %v4847 = vld [vmem:[#allocation3 + $0x1580] sm:$0xff]
    %v4848 = vld [vmem:[#allocation3 + $0x1588] sm:$0xff]
    %v4849 = vld [vmem:[#allocation3 + $0x1590] sm:$0xff]
    %v4850 = vld [vmem:[#allocation3 + $0x1598] sm:$0xff]
    %v4851 = vld [vmem:[#allocation3 + $0x15a0] sm:$0xff]
    %v4852 = vld [vmem:[#allocation3 + $0x15a8] sm:$0xff]
    %v4853 = vld [vmem:[#allocation3 + $0x15b0] sm:$0xff]
    %v4854 = vld [vmem:[#allocation3 + $0x15b8] sm:$0xff]
    %v4855 = vld [vmem:[#allocation3 + $0x15c0] sm:$0xff]
    %v4856 = vld [vmem:[#allocation3 + $0x15c8] sm:$0xff]
    %v4857 = vld [vmem:[#allocation3 + $0x15d0] sm:$0xff]
    %v4858 = vld [vmem:[#allocation3 + $0x15d8] sm:$0xff]
    %v4859 = vld [vmem:[#allocation3 + $0x15e0] sm:$0xff]
    %v4860 = vld [vmem:[#allocation3 + $0x15e8] sm:$0xff]
    %v4861 = vld [vmem:[#allocation3 + $0x15f0] sm:$0xff]
    %v4862 = vld [vmem:[#allocation3 + $0x15f8] sm:$0xff]
    %v4863 = vld [vmem:[#allocation3 + $0x1600] sm:$0xff]
    %v4864 = vld [vmem:[#allocation3 + $0x1608] sm:$0xff]
    %v4865 = vld [vmem:[#allocation3 + $0x1610] sm:$0xff]
    %v4866 = vld [vmem:[#allocation3 + $0x1618] sm:$0xff]
    %v4867 = vld [vmem:[#allocation3 + $0x1620] sm:$0xff]
    %v4868 = vld [vmem:[#allocation3 + $0x1628] sm:$0xff]
    %v4869 = vld [vmem:[#allocation3 + $0x1630] sm:$0xff]
    %v4870 = vld [vmem:[#allocation3 + $0x1638] sm:$0xff]
    %v4871 = vld [vmem:[#allocation3 + $0x1640] sm:$0xff]
    %v4872 = vld [vmem:[#allocation3 + $0x1648] sm:$0xff]
    %v4873 = vld [vmem:[#allocation3 + $0x1650] sm:$0xff]
    %v4874 = vld [vmem:[#allocation3 + $0x1658] sm:$0xff]
    %v4875 = vld [vmem:[#allocation3 + $0x1660] sm:$0xff]
    %v4876 = vld [vmem:[#allocation3 + $0x1668] sm:$0xff]
    %v4877 = vld [vmem:[#allocation3 + $0x1670] sm:$0xff]
    %v4878 = vld [vmem:[#allocation3 + $0x1678] sm:$0xff]
    %v4879 = vld [vmem:[#allocation3 + $0x1680] sm:$0xff]
    %v4880 = vld [vmem:[#allocation3 + $0x1688] sm:$0xff]
    %v4881 = vld [vmem:[#allocation3 + $0x1690] sm:$0xff]
    %v4882 = vld [vmem:[#allocation3 + $0x1698] sm:$0xff]
    %v4883 = vld [vmem:[#allocation3 + $0x16a0] sm:$0xff]
    %v4884 = vld [vmem:[#allocation3 + $0x16a8] sm:$0xff]
    %v4885 = vld [vmem:[#allocation3 + $0x16b0] sm:$0xff]
    %v4886 = vld [vmem:[#allocation3 + $0x16b8] sm:$0xff]
    %v4887 = vld [vmem:[#allocation3 + $0x16c0] sm:$0xff]
    %v4888 = vld [vmem:[#allocation3 + $0x16c8] sm:$0xff]
    %v4889 = vld [vmem:[#allocation3 + $0x16d0] sm:$0xff]
    %v4890 = vld [vmem:[#allocation3 + $0x16d8] sm:$0xff]
    %v4891 = vld [vmem:[#allocation3 + $0x16e0] sm:$0xff]
    %v4892 = vld [vmem:[#allocation3 + $0x16e8] sm:$0xff]
    %v4893 = vld [vmem:[#allocation3 + $0x16f0] sm:$0xff]
    %v4894 = vld [vmem:[#allocation3 + $0x16f8] sm:$0xff]
    %v4895 = vld [vmem:[#allocation3 + $0x1700] sm:$0xff]
    %v4896 = vld [vmem:[#allocation3 + $0x1708] sm:$0xff]
    %v4897 = vld [vmem:[#allocation3 + $0x1710] sm:$0xff]
    %v4898 = vld [vmem:[#allocation3 + $0x1718] sm:$0xff]
    %v4899 = vld [vmem:[#allocation3 + $0x1720] sm:$0xff]
    %v4900 = vld [vmem:[#allocation3 + $0x1728] sm:$0xff]
    %v4901 = vld [vmem:[#allocation3 + $0x1730] sm:$0xff]
    %v4902 = vld [vmem:[#allocation3 + $0x1738] sm:$0xff]
    %v4903 = vld [vmem:[#allocation3 + $0x1740] sm:$0xff]
    %v4904 = vld [vmem:[#allocation3 + $0x1748] sm:$0xff]
    %v4905 = vld [vmem:[#allocation3 + $0x1750] sm:$0xff]
    %v4906 = vld [vmem:[#allocation3 + $0x1758] sm:$0xff]
    %v4907 = vld [vmem:[#allocation3 + $0x1760] sm:$0xff]
    %v4908 = vld [vmem:[#allocation3 + $0x1768] sm:$0xff]
    %v4909 = vld [vmem:[#allocation3 + $0x1770] sm:$0xff]
    %v4910 = vld [vmem:[#allocation3 + $0x1778] sm:$0xff]
    %v4911 = vld [vmem:[#allocation3 + $0x1780] sm:$0xff]
    %v4912 = vld [vmem:[#allocation3 + $0x1788] sm:$0xff]
    %v4913 = vld [vmem:[#allocation3 + $0x1790] sm:$0xff]
    %v4914 = vld [vmem:[#allocation3 + $0x1798] sm:$0xff]
    %v4915 = vld [vmem:[#allocation3 + $0x17a0] sm:$0xff]
    %v4916 = vld [vmem:[#allocation3 + $0x17a8] sm:$0xff]
    %v4917 = vld [vmem:[#allocation3 + $0x17b0] sm:$0xff]
    %v4918 = vld [vmem:[#allocation3 + $0x17b8] sm:$0xff]
    %v4919 = vld [vmem:[#allocation3 + $0x17c0] sm:$0xff]
    %v4920 = vld [vmem:[#allocation3 + $0x17c8] sm:$0xff]
    %v4921 = vld [vmem:[#allocation3 + $0x17d0] sm:$0xff]
    %v4922 = vld [vmem:[#allocation3 + $0x17d8] sm:$0xff]
    %v4923 = vld [vmem:[#allocation3 + $0x17e0] sm:$0xff]
    %v4924 = vld [vmem:[#allocation3 + $0x17e8] sm:$0xff]
    %v4925 = vld [vmem:[#allocation3 + $0x17f0] sm:$0xff]
    %v4926 = vld [vmem:[#allocation3 + $0x17f8] sm:$0xff]
    %v4927 = vld [vmem:[#allocation3 + $0x1800] sm:$0xff]
    %v4928 = vld [vmem:[#allocation3 + $0x1808] sm:$0xff]
    %v4929 = vld [vmem:[#allocation3 + $0x1810] sm:$0xff]
    %v4930 = vld [vmem:[#allocation3 + $0x1818] sm:$0xff]
    %v4931 = vld [vmem:[#allocation3 + $0x1820] sm:$0xff]
    %v4932 = vld [vmem:[#allocation3 + $0x1828] sm:$0xff]
    %v4933 = vld [vmem:[#allocation3 + $0x1830] sm:$0xff]
    %v4934 = vld [vmem:[#allocation3 + $0x1838] sm:$0xff]
    %v4935 = vld [vmem:[#allocation3 + $0x1840] sm:$0xff]
    %v4936 = vld [vmem:[#allocation3 + $0x1848] sm:$0xff]
    %v4937 = vld [vmem:[#allocation3 + $0x1850] sm:$0xff]
    %v4938 = vld [vmem:[#allocation3 + $0x1858] sm:$0xff]
    %v4939 = vld [vmem:[#allocation3 + $0x1860] sm:$0xff]
    %v4940 = vld [vmem:[#allocation3 + $0x1868] sm:$0xff]
    %v4941 = vld [vmem:[#allocation3 + $0x1870] sm:$0xff]
    %v4942 = vld [vmem:[#allocation3 + $0x1878] sm:$0xff]
    %v4943 = vld [vmem:[#allocation3 + $0x1880] sm:$0xff]
    %v4944 = vld [vmem:[#allocation3 + $0x1888] sm:$0xff]
    %v4945 = vld [vmem:[#allocation3 + $0x1890] sm:$0xff]
    %v4946 = vld [vmem:[#allocation3 + $0x1898] sm:$0xff]
    %v4947 = vld [vmem:[#allocation3 + $0x18a0] sm:$0xff]
    %v4948 = vld [vmem:[#allocation3 + $0x18a8] sm:$0xff]
    %v4949 = vld [vmem:[#allocation3 + $0x18b0] sm:$0xff]
    %v4950 = vld [vmem:[#allocation3 + $0x18b8] sm:$0xff]
    %v4951 = vld [vmem:[#allocation3 + $0x18c0] sm:$0xff]
    %v4952 = vld [vmem:[#allocation3 + $0x18c8] sm:$0xff]
    %v4953 = vld [vmem:[#allocation3 + $0x18d0] sm:$0xff]
    %v4954 = vld [vmem:[#allocation3 + $0x18d8] sm:$0xff]
    %v4955 = vld [vmem:[#allocation3 + $0x18e0] sm:$0xff]
    %v4956 = vld [vmem:[#allocation3 + $0x18e8] sm:$0xff]
    %v4957 = vld [vmem:[#allocation3 + $0x18f0] sm:$0xff]
    %v4958 = vld [vmem:[#allocation3 + $0x18f8] sm:$0xff]
    %v4959 = vld [vmem:[#allocation3 + $0x1900] sm:$0xff]
    %v4960 = vld [vmem:[#allocation3 + $0x1908] sm:$0xff]
    %v4961 = vld [vmem:[#allocation3 + $0x1910] sm:$0xff]
    %v4962 = vld [vmem:[#allocation3 + $0x1918] sm:$0xff]
    %v4963 = vld [vmem:[#allocation3 + $0x1920] sm:$0xff]
    %v4964 = vld [vmem:[#allocation3 + $0x1928] sm:$0xff]
    %v4965 = vld [vmem:[#allocation3 + $0x1930] sm:$0xff]
    %v4966 = vld [vmem:[#allocation3 + $0x1938] sm:$0xff]
    %v4967 = vld [vmem:[#allocation3 + $0x1940] sm:$0xff]
    %v4968 = vld [vmem:[#allocation3 + $0x1948] sm:$0xff]
    %v4969 = vld [vmem:[#allocation3 + $0x1950] sm:$0xff]
    %v4970 = vld [vmem:[#allocation3 + $0x1958] sm:$0xff]
    %v4971 = vld [vmem:[#allocation3 + $0x1960] sm:$0xff]
    %v4972 = vld [vmem:[#allocation3 + $0x1968] sm:$0xff]
    %v4973 = vld [vmem:[#allocation3 + $0x1970] sm:$0xff]
    %v4974 = vld [vmem:[#allocation3 + $0x1978] sm:$0xff]
    %v4975 = vld [vmem:[#allocation3 + $0x1980] sm:$0xff]
    %v4976 = vld [vmem:[#allocation3 + $0x1988] sm:$0xff]
    %v4977 = vld [vmem:[#allocation3 + $0x1990] sm:$0xff]
    %v4978 = vld [vmem:[#allocation3 + $0x1998] sm:$0xff]
    %v4979 = vld [vmem:[#allocation3 + $0x19a0] sm:$0xff]
    %v4980 = vld [vmem:[#allocation3 + $0x19a8] sm:$0xff]
    %v4981 = vld [vmem:[#allocation3 + $0x19b0] sm:$0xff]
    %v4982 = vld [vmem:[#allocation3 + $0x19b8] sm:$0xff]
    %v4983 = vld [vmem:[#allocation3 + $0x19c0] sm:$0xff]
    %v4984 = vld [vmem:[#allocation3 + $0x19c8] sm:$0xff]
    %v4985 = vld [vmem:[#allocation3 + $0x19d0] sm:$0xff]
    %v4986 = vld [vmem:[#allocation3 + $0x19d8] sm:$0xff]
    %v4987 = vld [vmem:[#allocation3 + $0x19e0] sm:$0xff]
    %v4988 = vld [vmem:[#allocation3 + $0x19e8] sm:$0xff]
    %v4989 = vld [vmem:[#allocation3 + $0x19f0] sm:$0xff]
    %v4990 = vld [vmem:[#allocation3 + $0x19f8] sm:$0xff]
    %v4991 = vld [vmem:[#allocation3 + $0x1a00] sm:$0xff]
    %v4992 = vld [vmem:[#allocation3 + $0x1a08] sm:$0xff]
    %v4993 = vld [vmem:[#allocation3 + $0x1a10] sm:$0xff]
    %v4994 = vld [vmem:[#allocation3 + $0x1a18] sm:$0xff]
    %v4995 = vld [vmem:[#allocation3 + $0x1a20] sm:$0xff]
    %v4996 = vld [vmem:[#allocation3 + $0x1a28] sm:$0xff]
    %v4997 = vld [vmem:[#allocation3 + $0x1a30] sm:$0xff]
    %v4998 = vld [vmem:[#allocation3 + $0x1a38] sm:$0xff]
    %v4999 = vld [vmem:[#allocation3 + $0x1a40] sm:$0xff]
    %v5000 = vld [vmem:[#allocation3 + $0x1a48] sm:$0xff]
    %v5001 = vld [vmem:[#allocation3 + $0x1a50] sm:$0xff]
    %v5002 = vld [vmem:[#allocation3 + $0x1a58] sm:$0xff]
    %v5003 = vld [vmem:[#allocation3 + $0x1a60] sm:$0xff]
    %v5004 = vld [vmem:[#allocation3 + $0x1a68] sm:$0xff]
    %v5005 = vld [vmem:[#allocation3 + $0x1a70] sm:$0xff]
    %v5006 = vld [vmem:[#allocation3 + $0x1a78] sm:$0xff]
    %v5007 = vld [vmem:[#allocation3 + $0x1a80] sm:$0xff]
    %v5008 = vld [vmem:[#allocation3 + $0x1a88] sm:$0xff]
    %v5009 = vld [vmem:[#allocation3 + $0x1a90] sm:$0xff]
    %v5010 = vld [vmem:[#allocation3 + $0x1a98] sm:$0xff]
    %v5011 = vld [vmem:[#allocation3 + $0x1aa0] sm:$0xff]
    %v5012 = vld [vmem:[#allocation3 + $0x1aa8] sm:$0xff]
    %v5013 = vld [vmem:[#allocation3 + $0x1ab0] sm:$0xff]
    %v5014 = vld [vmem:[#allocation3 + $0x1ab8] sm:$0xff]
    %v5015 = vld [vmem:[#allocation3 + $0x1ac0] sm:$0xff]
    %v5016 = vld [vmem:[#allocation3 + $0x1ac8] sm:$0xff]
    %v5017 = vld [vmem:[#allocation3 + $0x1ad0] sm:$0xff]
    %v5018 = vld [vmem:[#allocation3 + $0x1ad8] sm:$0xff]
    %v5019 = vld [vmem:[#allocation3 + $0x1ae0] sm:$0xff]
    %v5020 = vld [vmem:[#allocation3 + $0x1ae8] sm:$0xff]
    %v5021 = vld [vmem:[#allocation3 + $0x1af0] sm:$0xff]
    %v5022 = vld [vmem:[#allocation3 + $0x1af8] sm:$0xff]
    %v5023 = vld [vmem:[#allocation3 + $0x1b00] sm:$0xff]
    %v5024 = vld [vmem:[#allocation3 + $0x1b08] sm:$0xff]
    %v5025 = vld [vmem:[#allocation3 + $0x1b10] sm:$0xff]
    %v5026 = vld [vmem:[#allocation3 + $0x1b18] sm:$0xff]
    %v5027 = vld [vmem:[#allocation3 + $0x1b20] sm:$0xff]
    %v5028 = vld [vmem:[#allocation3 + $0x1b28] sm:$0xff]
    %v5029 = vld [vmem:[#allocation3 + $0x1b30] sm:$0xff]
    %v5030 = vld [vmem:[#allocation3 + $0x1b38] sm:$0xff]
    %v5031 = vld [vmem:[#allocation3 + $0x1b40] sm:$0xff]
    %v5032 = vld [vmem:[#allocation3 + $0x1b48] sm:$0xff]
    %v5033 = vld [vmem:[#allocation3 + $0x1b50] sm:$0xff]
    %v5034 = vld [vmem:[#allocation3 + $0x1b58] sm:$0xff]
    %v5035 = vld [vmem:[#allocation3 + $0x1b60] sm:$0xff]
    %v5036 = vld [vmem:[#allocation3 + $0x1b68] sm:$0xff]
    %v5037 = vld [vmem:[#allocation3 + $0x1b70] sm:$0xff]
    %v5038 = vld [vmem:[#allocation3 + $0x1b78] sm:$0xff]
    %v5039 = vld [vmem:[#allocation3 + $0x1b80] sm:$0xff]
    %v5040 = vld [vmem:[#allocation3 + $0x1b88] sm:$0xff]
    %v5041 = vld [vmem:[#allocation3 + $0x1b90] sm:$0xff]
    %v5042 = vld [vmem:[#allocation3 + $0x1b98] sm:$0xff]
    %v5043 = vld [vmem:[#allocation3 + $0x1ba0] sm:$0xff]
    %v5044 = vld [vmem:[#allocation3 + $0x1ba8] sm:$0xff]
    %v5045 = vld [vmem:[#allocation3 + $0x1bb0] sm:$0xff]
    %v5046 = vld [vmem:[#allocation3 + $0x1bb8] sm:$0xff]
    %v5047 = vld [vmem:[#allocation3 + $0x1bc0] sm:$0xff]
    %v5048 = vld [vmem:[#allocation3 + $0x1bc8] sm:$0xff]
    %v5049 = vld [vmem:[#allocation3 + $0x1bd0] sm:$0xff]
    %v5050 = vld [vmem:[#allocation3 + $0x1bd8] sm:$0xff]
    %v5051 = vld [vmem:[#allocation3 + $0x1be0] sm:$0xff]
    %v5052 = vld [vmem:[#allocation3 + $0x1be8] sm:$0xff]
    %v5053 = vld [vmem:[#allocation3 + $0x1bf0] sm:$0xff]
    %v5054 = vld [vmem:[#allocation3 + $0x1bf8] sm:$0xff]
    %v5055 = vld [vmem:[#allocation3 + $0x1c00] sm:$0xff]
    %v5056 = vld [vmem:[#allocation3 + $0x1c08] sm:$0xff]
    %v5057 = vld [vmem:[#allocation3 + $0x1c10] sm:$0xff]
    %v5058 = vld [vmem:[#allocation3 + $0x1c18] sm:$0xff]
    %v5059 = vld [vmem:[#allocation3 + $0x1c20] sm:$0xff]
    %v5060 = vld [vmem:[#allocation3 + $0x1c28] sm:$0xff]
    %v5061 = vld [vmem:[#allocation3 + $0x1c30] sm:$0xff]
    %v5062 = vld [vmem:[#allocation3 + $0x1c38] sm:$0xff]
    %v5063 = vld [vmem:[#allocation3 + $0x1c40] sm:$0xff]
    %v5064 = vld [vmem:[#allocation3 + $0x1c48] sm:$0xff]
    %v5065 = vld [vmem:[#allocation3 + $0x1c50] sm:$0xff]
    %v5066 = vld [vmem:[#allocation3 + $0x1c58] sm:$0xff]
    %v5067 = vld [vmem:[#allocation3 + $0x1c60] sm:$0xff]
    %v5068 = vld [vmem:[#allocation3 + $0x1c68] sm:$0xff]
    %v5069 = vld [vmem:[#allocation3 + $0x1c70] sm:$0xff]
    %v5070 = vld [vmem:[#allocation3 + $0x1c78] sm:$0xff]
    %v5071 = vld [vmem:[#allocation3 + $0x1c80] sm:$0xff]
    %v5072 = vld [vmem:[#allocation3 + $0x1c88] sm:$0xff]
    %v5073 = vld [vmem:[#allocation3 + $0x1c90] sm:$0xff]
    %v5074 = vld [vmem:[#allocation3 + $0x1c98] sm:$0xff]
    %v5075 = vld [vmem:[#allocation3 + $0x1ca0] sm:$0xff]
    %v5076 = vld [vmem:[#allocation3 + $0x1ca8] sm:$0xff]
    %v5077 = vld [vmem:[#allocation3 + $0x1cb0] sm:$0xff]
    %v5078 = vld [vmem:[#allocation3 + $0x1cb8] sm:$0xff]
    %v5079 = vld [vmem:[#allocation3 + $0x1cc0] sm:$0xff]
    %v5080 = vld [vmem:[#allocation3 + $0x1cc8] sm:$0xff]
    %v5081 = vld [vmem:[#allocation3 + $0x1cd0] sm:$0xff]
    %v5082 = vld [vmem:[#allocation3 + $0x1cd8] sm:$0xff]
    %v5083 = vld [vmem:[#allocation3 + $0x1ce0] sm:$0xff]
    %v5084 = vld [vmem:[#allocation3 + $0x1ce8] sm:$0xff]
    %v5085 = vld [vmem:[#allocation3 + $0x1cf0] sm:$0xff]
    %v5086 = vld [vmem:[#allocation3 + $0x1cf8] sm:$0xff]
    %v5087 = vld [vmem:[#allocation3 + $0x1d00] sm:$0xff]
    %v5088 = vld [vmem:[#allocation3 + $0x1d08] sm:$0xff]
    %v5089 = vld [vmem:[#allocation3 + $0x1d10] sm:$0xff]
    %v5090 = vld [vmem:[#allocation3 + $0x1d18] sm:$0xff]
    %v5091 = vld [vmem:[#allocation3 + $0x1d20] sm:$0xff]
    %v5092 = vld [vmem:[#allocation3 + $0x1d28] sm:$0xff]
    %v5093 = vld [vmem:[#allocation3 + $0x1d30] sm:$0xff]
    %v5094 = vld [vmem:[#allocation3 + $0x1d38] sm:$0xff]
    %v5095 = vld [vmem:[#allocation3 + $0x1d40] sm:$0xff]
    %v5096 = vld [vmem:[#allocation3 + $0x1d48] sm:$0xff]
    %v5097 = vld [vmem:[#allocation3 + $0x1d50] sm:$0xff]
    %v5098 = vld [vmem:[#allocation3 + $0x1d58] sm:$0xff]
    %v5099 = vld [vmem:[#allocation3 + $0x1d60] sm:$0xff]
    %v5100 = vld [vmem:[#allocation3 + $0x1d68] sm:$0xff]
    %v5101 = vld [vmem:[#allocation3 + $0x1d70] sm:$0xff]
    %v5102 = vld [vmem:[#allocation3 + $0x1d78] sm:$0xff]
    %v5103 = vld [vmem:[#allocation3 + $0x1d80] sm:$0xff]
    %v5104 = vld [vmem:[#allocation3 + $0x1d88] sm:$0xff]
    %v5105 = vld [vmem:[#allocation3 + $0x1d90] sm:$0xff]
    %v5106 = vld [vmem:[#allocation3 + $0x1d98] sm:$0xff]
    %v5107 = vld [vmem:[#allocation3 + $0x1da0] sm:$0xff]
    %v5108 = vld [vmem:[#allocation3 + $0x1da8] sm:$0xff]
    %v5109 = vld [vmem:[#allocation3 + $0x1db0] sm:$0xff]
    %v5110 = vld [vmem:[#allocation3 + $0x1db8] sm:$0xff]
    %v5111 = vld [vmem:[#allocation3 + $0x1dc0] sm:$0xff]
    %v5112 = vld [vmem:[#allocation3 + $0x1dc8] sm:$0xff]
    %v5113 = vld [vmem:[#allocation3 + $0x1dd0] sm:$0xff]
    %v5114 = vld [vmem:[#allocation3 + $0x1dd8] sm:$0xff]
    %v5115 = vld [vmem:[#allocation3 + $0x1de0] sm:$0xff]
    %v5116 = vld [vmem:[#allocation3 + $0x1de8] sm:$0xff]
    %v5117 = vld [vmem:[#allocation3 + $0x1df0] sm:$0xff]
    %v5118 = vld [vmem:[#allocation3 + $0x1df8] sm:$0xff]
    %v5119 = vld [vmem:[#allocation3 + $0x1e00] sm:$0xff]
    %v5120 = vld [vmem:[#allocation3 + $0x1e08] sm:$0xff]
    %v5121 = vld [vmem:[#allocation3 + $0x1e10] sm:$0xff]
    %v5122 = vld [vmem:[#allocation3 + $0x1e18] sm:$0xff]
    %v5123 = vld [vmem:[#allocation3 + $0x1e20] sm:$0xff]
    %v5124 = vld [vmem:[#allocation3 + $0x1e28] sm:$0xff]
    %v5125 = vld [vmem:[#allocation3 + $0x1e30] sm:$0xff]
    %v5126 = vld [vmem:[#allocation3 + $0x1e38] sm:$0xff]
    %v5127 = vld [vmem:[#allocation3 + $0x1e40] sm:$0xff]
    %v5128 = vld [vmem:[#allocation3 + $0x1e48] sm:$0xff]
    %v5129 = vld [vmem:[#allocation3 + $0x1e50] sm:$0xff]
    %v5130 = vld [vmem:[#allocation3 + $0x1e58] sm:$0xff]
    %v5131 = vld [vmem:[#allocation3 + $0x1e60] sm:$0xff]
    %v5132 = vld [vmem:[#allocation3 + $0x1e68] sm:$0xff]
    %v5133 = vld [vmem:[#allocation3 + $0x1e70] sm:$0xff]
    %v5134 = vld [vmem:[#allocation3 + $0x1e78] sm:$0xff]
    %v5135 = vld [vmem:[#allocation3 + $0x1e80] sm:$0xff]
    %v5136 = vld [vmem:[#allocation3 + $0x1e88] sm:$0xff]
    %v5137 = vld [vmem:[#allocation3 + $0x1e90] sm:$0xff]
    %v5138 = vld [vmem:[#allocation3 + $0x1e98] sm:$0xff]
    %v5139 = vld [vmem:[#allocation3 + $0x1ea0] sm:$0xff]
    %v5140 = vld [vmem:[#allocation3 + $0x1ea8] sm:$0xff]
    %v5141 = vld [vmem:[#allocation3 + $0x1eb0] sm:$0xff]
    %v5142 = vld [vmem:[#allocation3 + $0x1eb8] sm:$0xff]
    %v5143 = vld [vmem:[#allocation3 + $0x1ec0] sm:$0xff]
    %v5144 = vld [vmem:[#allocation3 + $0x1ec8] sm:$0xff]
    %v5145 = vld [vmem:[#allocation3 + $0x1ed0] sm:$0xff]
    %v5146 = vld [vmem:[#allocation3 + $0x1ed8] sm:$0xff]
    %v5147 = vld [vmem:[#allocation3 + $0x1ee0] sm:$0xff]
    %v5148 = vld [vmem:[#allocation3 + $0x1ee8] sm:$0xff]
    %v5149 = vld [vmem:[#allocation3 + $0x1ef0] sm:$0xff]
    %v5150 = vld [vmem:[#allocation3 + $0x1ef8] sm:$0xff]
    %v5151 = vld [vmem:[#allocation3 + $0x1f00] sm:$0xff]
    %v5152 = vld [vmem:[#allocation3 + $0x1f08] sm:$0xff]
    %v5153 = vld [vmem:[#allocation3 + $0x1f10] sm:$0xff]
    %v5154 = vld [vmem:[#allocation3 + $0x1f18] sm:$0xff]
    %v5155 = vld [vmem:[#allocation3 + $0x1f20] sm:$0xff]
    %v5156 = vld [vmem:[#allocation3 + $0x1f28] sm:$0xff]
    %v5157 = vld [vmem:[#allocation3 + $0x1f30] sm:$0xff]
    %v5158 = vld [vmem:[#allocation3 + $0x1f38] sm:$0xff]
    %v5159 = vld [vmem:[#allocation3 + $0x1f40] sm:$0xff]
    %v5160 = vld [vmem:[#allocation3 + $0x1f48] sm:$0xff]
    %v5161 = vld [vmem:[#allocation3 + $0x1f50] sm:$0xff]
    %v5162 = vld [vmem:[#allocation3 + $0x1f58] sm:$0xff]
    %v5163 = vld [vmem:[#allocation3 + $0x1f60] sm:$0xff]
    %v5164 = vld [vmem:[#allocation3 + $0x1f68] sm:$0xff]
    %v5165 = vld [vmem:[#allocation3 + $0x1f70] sm:$0xff]
    %v5166 = vld [vmem:[#allocation3 + $0x1f78] sm:$0xff]
    %v5167 = vld [vmem:[#allocation3 + $0x1f80] sm:$0xff]
    %v5168 = vld [vmem:[#allocation3 + $0x1f88] sm:$0xff]
    %v5169 = vld [vmem:[#allocation3 + $0x1f90] sm:$0xff]
    %v5170 = vld [vmem:[#allocation3 + $0x1f98] sm:$0xff]
    %v5171 = vld [vmem:[#allocation3 + $0x1fa0] sm:$0xff]
    %v5172 = vld [vmem:[#allocation3 + $0x1fa8] sm:$0xff]
    %v5173 = vld [vmem:[#allocation3 + $0x1fb0] sm:$0xff]
    %v5174 = vld [vmem:[#allocation3 + $0x1fb8] sm:$0xff]
    %v5175 = vld [vmem:[#allocation3 + $0x1fc0] sm:$0xff]
    %v5176 = vld [vmem:[#allocation3 + $0x1fc8] sm:$0xff]
    %v5177 = vld [vmem:[#allocation3 + $0x1fd0] sm:$0xff]
    %v5178 = vld [vmem:[#allocation3 + $0x1fd8] sm:$0xff]
    %v5179 = vld [vmem:[#allocation3 + $0x1fe0] sm:$0xff]
    %v5180 = vld [vmem:[#allocation3 + $0x1fe8] sm:$0xff]
    %v5181 = vld [vmem:[#allocation3 + $0x1ff0] sm:$0xff]
    %v5182 = vld [vmem:[#allocation3 + $0x1ff8] sm:$0xff]
    %5183 = vmatpush.msra.mxu0 %v4731
    %5184 = vmatpush.msra.mxu0 %v4727
    %5185 = vmatpush.msra.mxu0 %v4723
    %5186 = vmatpush.msra.mxu0 %v4719
    %5187 = vmatpush.msra.mxu0 %v4715
    %5188 = vmatpush.msra.mxu0 %v4711
    %5189 = vmatpush.msra.mxu0 %v4707
    %5190 = vmatpush.msra.mxu0 %v4703
    %5191 = vmatpush.msra.mxu0 %v4699
    %5192 = vmatpush.msra.mxu0 %v4695
    %5193 = vmatpush.msra.mxu0 %v4691
    %5194 = vmatpush.msra.mxu0 %v4687
    %5195 = vmatpush.msra.mxu0 %v4683
    %5196 = vmatpush.msra.mxu0 %v4679
    %5197 = vmatpush.msra.mxu0 %v4675
    %5198 = vmatpush.msra.mxu0 %v4671
    %5199 = vmatmul.f32.gmra.mxu0 %v3945
    %v5200 = vpop.f32.mrf.mxu0
    %v5201 = vadd.f32 0.0, %v5200
    %5202 = vmatmul.f32.gmra.mxu0 %v3948
    %v5203 = vpop.f32.mrf.mxu0
    %v5204 = vadd.f32 0.0, %v5203
    %5205 = vmatmul.f32.gmra.mxu0 %v3951
    %v5206 = vpop.f32.mrf.mxu0
    %v5207 = vadd.f32 0.0, %v5206
    %5208 = vmatmul.f32.gmra.mxu0 %v3954
    %v5209 = vpop.f32.mrf.mxu0
    %v5210 = vadd.f32 0.0, %v5209
    %5211 = vdwg.mxu0
    %5212 = vmatpush.msra.mxu0 %v4795
    %5213 = vmatpush.msra.mxu0 %v4791
    %5214 = vmatpush.msra.mxu0 %v4787
    %5215 = vmatpush.msra.mxu0 %v4783
    %5216 = vmatpush.msra.mxu0 %v4779
    %5217 = vmatpush.msra.mxu0 %v4775
    %5218 = vmatpush.msra.mxu0 %v4771
    %5219 = vmatpush.msra.mxu0 %v4767
    %5220 = vmatpush.msra.mxu0 %v4763
    %5221 = vmatpush.msra.mxu0 %v4759
    %5222 = vmatpush.msra.mxu0 %v4755
    %5223 = vmatpush.msra.mxu0 %v4751
    %5224 = vmatpush.msra.mxu0 %v4747
    %5225 = vmatpush.msra.mxu0 %v4743
    %5226 = vmatpush.msra.mxu0 %v4739
    %5227 = vmatpush.msra.mxu0 %v4735
    %5228 = vmatmul.f32.gmra.mxu0 %v3974
    %v5229 = vpop.f32.mrf.mxu0
    %v5230 = vadd.f32 %v5201, %v5229
    %5231 = vmatmul.f32.gmra.mxu0 %v3977
    %v5232 = vpop.f32.mrf.mxu0
    %v5233 = vadd.f32 %v5204, %v5232
    %5234 = vmatmul.f32.gmra.mxu0 %v3980
    %v5235 = vpop.f32.mrf.mxu0
    %v5236 = vadd.f32 %v5207, %v5235
    %5237 = vmatmul.f32.gmra.mxu0 %v3983
    %v5238 = vpop.f32.mrf.mxu0
    %v5239 = vadd.f32 %v5210, %v5238
    %5240 = vdwg.mxu0
    %5241 = vmatpush.msra.mxu0 %v4859
    %5242 = vmatpush.msra.mxu0 %v4855
    %5243 = vmatpush.msra.mxu0 %v4851
    %5244 = vmatpush.msra.mxu0 %v4847
    %5245 = vmatpush.msra.mxu0 %v4843
    %5246 = vmatpush.msra.mxu0 %v4839
    %5247 = vmatpush.msra.mxu0 %v4835
    %5248 = vmatpush.msra.mxu0 %v4831
    %5249 = vmatpush.msra.mxu0 %v4827
    %5250 = vmatpush.msra.mxu0 %v4823
    %5251 = vmatpush.msra.mxu0 %v4819
    %5252 = vmatpush.msra.mxu0 %v4815
    %5253 = vmatpush.msra.mxu0 %v4811
    %5254 = vmatpush.msra.mxu0 %v4807
    %5255 = vmatpush.msra.mxu0 %v4803
    %5256 = vmatpush.msra.mxu0 %v4799
    %5257 = vmatmul.f32.gmra.mxu0 %v4003
    %v5258 = vpop.f32.mrf.mxu0
    %v5259 = vadd.f32 %v5230, %v5258
    %5260 = vmatmul.f32.gmra.mxu0 %v4006
    %v5261 = vpop.f32.mrf.mxu0
    %v5262 = vadd.f32 %v5233, %v5261
    %5263 = vmatmul.f32.gmra.mxu0 %v4009
    %v5264 = vpop.f32.mrf.mxu0
    %v5265 = vadd.f32 %v5236, %v5264
    %5266 = vmatmul.f32.gmra.mxu0 %v4012
    %v5267 = vpop.f32.mrf.mxu0
    %v5268 = vadd.f32 %v5239, %v5267
    %5269 = vdwg.mxu0
    %5270 = vmatpush.msra.mxu0 %v4923
    %5271 = vmatpush.msra.mxu0 %v4919
    %5272 = vmatpush.msra.mxu0 %v4915
    %5273 = vmatpush.msra.mxu0 %v4911
    %5274 = vmatpush.msra.mxu0 %v4907
    %5275 = vmatpush.msra.mxu0 %v4903
    %5276 = vmatpush.msra.mxu0 %v4899
    %5277 = vmatpush.msra.mxu0 %v4895
    %5278 = vmatpush.msra.mxu0 %v4891
    %5279 = vmatpush.msra.mxu0 %v4887
    %5280 = vmatpush.msra.mxu0 %v4883
    %5281 = vmatpush.msra.mxu0 %v4879
    %5282 = vmatpush.msra.mxu0 %v4875
    %5283 = vmatpush.msra.mxu0 %v4871
    %5284 = vmatpush.msra.mxu0 %v4867
    %5285 = vmatpush.msra.mxu0 %v4863
    %5286 = vmatmul.f32.gmra.mxu0 %v4032
    %v5287 = vpop.f32.mrf.mxu0
    %v5288 = vadd.f32 %v5259, %v5287
    %5289 = vmatmul.f32.gmra.mxu0 %v4035
    %v5290 = vpop.f32.mrf.mxu0
    %v5291 = vadd.f32 %v5262, %v5290
    %5292 = vmatmul.f32.gmra.mxu0 %v4038
    %v5293 = vpop.f32.mrf.mxu0
    %v5294 = vadd.f32 %v5265, %v5293
    %5295 = vmatmul.f32.gmra.mxu0 %v4041
    %v5296 = vpop.f32.mrf.mxu0
    %v5297 = vadd.f32 %v5268, %v5296
    %5298 = vdwg.mxu0
    %5299 = vmatpush.msra.mxu0 %v4987
    %5300 = vmatpush.msra.mxu0 %v4983
    %5301 = vmatpush.msra.mxu0 %v4979
    %5302 = vmatpush.msra.mxu0 %v4975
    %5303 = vmatpush.msra.mxu0 %v4971
    %5304 = vmatpush.msra.mxu0 %v4967
    %5305 = vmatpush.msra.mxu0 %v4963
    %5306 = vmatpush.msra.mxu0 %v4959
    %5307 = vmatpush.msra.mxu0 %v4955
    %5308 = vmatpush.msra.mxu0 %v4951
    %5309 = vmatpush.msra.mxu0 %v4947
    %5310 = vmatpush.msra.mxu0 %v4943
    %5311 = vmatpush.msra.mxu0 %v4939
    %5312 = vmatpush.msra.mxu0 %v4935
    %5313 = vmatpush.msra.mxu0 %v4931
    %5314 = vmatpush.msra.mxu0 %v4927
    %5315 = vmatmul.f32.gmra.mxu0 %v4061
    %v5316 = vpop.f32.mrf.mxu0
    %v5317 = vadd.f32 %v5288, %v5316
    %5318 = vmatmul.f32.gmra.mxu0 %v4064
    %v5319 = vpop.f32.mrf.mxu0
    %v5320 = vadd.f32 %v5291, %v5319
    %5321 = vmatmul.f32.gmra.mxu0 %v4067
    %v5322 = vpop.f32.mrf.mxu0
    %v5323 = vadd.f32 %v5294, %v5322
    %5324 = vmatmul.f32.gmra.mxu0 %v4070
    %v5325 = vpop.f32.mrf.mxu0
    %v5326 = vadd.f32 %v5297, %v5325
    %5327 = vdwg.mxu0
    %5328 = vmatpush.msra.mxu0 %v5051
    %5329 = vmatpush.msra.mxu0 %v5047
    %5330 = vmatpush.msra.mxu0 %v5043
    %5331 = vmatpush.msra.mxu0 %v5039
    %5332 = vmatpush.msra.mxu0 %v5035
    %5333 = vmatpush.msra.mxu0 %v5031
    %5334 = vmatpush.msra.mxu0 %v5027
    %5335 = vmatpush.msra.mxu0 %v5023
    %5336 = vmatpush.msra.mxu0 %v5019
    %5337 = vmatpush.msra.mxu0 %v5015
    %5338 = vmatpush.msra.mxu0 %v5011
    %5339 = vmatpush.msra.mxu0 %v5007
    %5340 = vmatpush.msra.mxu0 %v5003
    %5341 = vmatpush.msra.mxu0 %v4999
    %5342 = vmatpush.msra.mxu0 %v4995
    %5343 = vmatpush.msra.mxu0 %v4991
    %5344 = vmatmul.f32.gmra.mxu0 %v4090
    %v5345 = vpop.f32.mrf.mxu0
    %v5346 = vadd.f32 %v5317, %v5345
    %5347 = vmatmul.f32.gmra.mxu0 %v4093
    %v5348 = vpop.f32.mrf.mxu0
    %v5349 = vadd.f32 %v5320, %v5348
    %5350 = vmatmul.f32.gmra.mxu0 %v4096
    %v5351 = vpop.f32.mrf.mxu0
    %v5352 = vadd.f32 %v5323, %v5351
    %5353 = vmatmul.f32.gmra.mxu0 %v4099
    %v5354 = vpop.f32.mrf.mxu0
    %v5355 = vadd.f32 %v5326, %v5354
    %5356 = vdwg.mxu0
    %5357 = vmatpush.msra.mxu0 %v5115
    %5358 = vmatpush.msra.mxu0 %v5111
    %5359 = vmatpush.msra.mxu0 %v5107
    %5360 = vmatpush.msra.mxu0 %v5103
    %5361 = vmatpush.msra.mxu0 %v5099
    %5362 = vmatpush.msra.mxu0 %v5095
    %5363 = vmatpush.msra.mxu0 %v5091
    %5364 = vmatpush.msra.mxu0 %v5087
    %5365 = vmatpush.msra.mxu0 %v5083
    %5366 = vmatpush.msra.mxu0 %v5079
    %5367 = vmatpush.msra.mxu0 %v5075
    %5368 = vmatpush.msra.mxu0 %v5071
    %5369 = vmatpush.msra.mxu0 %v5067
    %5370 = vmatpush.msra.mxu0 %v5063
    %5371 = vmatpush.msra.mxu0 %v5059
    %5372 = vmatpush.msra.mxu0 %v5055
    %5373 = vmatmul.f32.gmra.mxu0 %v4119
    %v5374 = vpop.f32.mrf.mxu0
    %v5375 = vadd.f32 %v5346, %v5374
    %5376 = vmatmul.f32.gmra.mxu0 %v4122
    %v5377 = vpop.f32.mrf.mxu0
    %v5378 = vadd.f32 %v5349, %v5377
    %5379 = vmatmul.f32.gmra.mxu0 %v4125
    %v5380 = vpop.f32.mrf.mxu0
    %v5381 = vadd.f32 %v5352, %v5380
    %5382 = vmatmul.f32.gmra.mxu0 %v4128
    %v5383 = vpop.f32.mrf.mxu0
    %v5384 = vadd.f32 %v5355, %v5383
    %5385 = vdwg.mxu0
    %5386 = vmatpush.msra.mxu0 %v5179
    %5387 = vmatpush.msra.mxu0 %v5175
    %5388 = vmatpush.msra.mxu0 %v5171
    %5389 = vmatpush.msra.mxu0 %v5167
    %5390 = vmatpush.msra.mxu0 %v5163
    %5391 = vmatpush.msra.mxu0 %v5159
    %5392 = vmatpush.msra.mxu0 %v5155
    %5393 = vmatpush.msra.mxu0 %v5151
    %5394 = vmatpush.msra.mxu0 %v5147
    %5395 = vmatpush.msra.mxu0 %v5143
    %5396 = vmatpush.msra.mxu0 %v5139
    %5397 = vmatpush.msra.mxu0 %v5135
    %5398 = vmatpush.msra.mxu0 %v5131
    %5399 = vmatpush.msra.mxu0 %v5127
    %5400 = vmatpush.msra.mxu0 %v5123
    %5401 = vmatpush.msra.mxu0 %v5119
    %5402 = vmatmul.f32.gmra.mxu0 %v4148
    %v5403 = vpop.f32.mrf.mxu0
    %v5404 = vadd.f32 %v5375, %v5403
    %5405 = vmatmul.f32.gmra.mxu0 %v4151
    %v5406 = vpop.f32.mrf.mxu0
    %v5407 = vadd.f32 %v5378, %v5406
    %5408 = vmatmul.f32.gmra.mxu0 %v4154
    %v5409 = vpop.f32.mrf.mxu0
    %v5410 = vadd.f32 %v5381, %v5409
    %5411 = vmatmul.f32.gmra.mxu0 %v4157
    %v5412 = vpop.f32.mrf.mxu0
    %v5413 = vadd.f32 %v5384, %v5412
    %5414 = vdwg.mxu0
    %5415 = vmatpush.msra.mxu0 %v4732
    %5416 = vmatpush.msra.mxu0 %v4728
    %5417 = vmatpush.msra.mxu0 %v4724
    %5418 = vmatpush.msra.mxu0 %v4720
    %5419 = vmatpush.msra.mxu0 %v4716
    %5420 = vmatpush.msra.mxu0 %v4712
    %5421 = vmatpush.msra.mxu0 %v4708
    %5422 = vmatpush.msra.mxu0 %v4704
    %5423 = vmatpush.msra.mxu0 %v4700
    %5424 = vmatpush.msra.mxu0 %v4696
    %5425 = vmatpush.msra.mxu0 %v4692
    %5426 = vmatpush.msra.mxu0 %v4688
    %5427 = vmatpush.msra.mxu0 %v4684
    %5428 = vmatpush.msra.mxu0 %v4680
    %5429 = vmatpush.msra.mxu0 %v4676
    %5430 = vmatpush.msra.mxu0 %v4672
    %5431 = vmatmul.f32.gmra.mxu0 %v3945
    %v5432 = vpop.f32.mrf.mxu0
    %v5433 = vadd.f32 0.0, %v5432
    %5434 = vmatmul.f32.gmra.mxu0 %v3948
    %v5435 = vpop.f32.mrf.mxu0
    %v5436 = vadd.f32 0.0, %v5435
    %5437 = vmatmul.f32.gmra.mxu0 %v3951
    %v5438 = vpop.f32.mrf.mxu0
    %v5439 = vadd.f32 0.0, %v5438
    %5440 = vmatmul.f32.gmra.mxu0 %v3954
    %v5441 = vpop.f32.mrf.mxu0
    %v5442 = vadd.f32 0.0, %v5441
    %5443 = vdwg.mxu0
    %5444 = vmatpush.msra.mxu0 %v4796
    %5445 = vmatpush.msra.mxu0 %v4792
    %5446 = vmatpush.msra.mxu0 %v4788
    %5447 = vmatpush.msra.mxu0 %v4784
    %5448 = vmatpush.msra.mxu0 %v4780
    %5449 = vmatpush.msra.mxu0 %v4776
    %5450 = vmatpush.msra.mxu0 %v4772
    %5451 = vmatpush.msra.mxu0 %v4768
    %5452 = vmatpush.msra.mxu0 %v4764
    %5453 = vmatpush.msra.mxu0 %v4760
    %5454 = vmatpush.msra.mxu0 %v4756
    %5455 = vmatpush.msra.mxu0 %v4752
    %5456 = vmatpush.msra.mxu0 %v4748
    %5457 = vmatpush.msra.mxu0 %v4744
    %5458 = vmatpush.msra.mxu0 %v4740
    %5459 = vmatpush.msra.mxu0 %v4736
    %5460 = vmatmul.f32.gmra.mxu0 %v3974
    %v5461 = vpop.f32.mrf.mxu0
    %v5462 = vadd.f32 %v5433, %v5461
    %5463 = vmatmul.f32.gmra.mxu0 %v3977
    %v5464 = vpop.f32.mrf.mxu0
    %v5465 = vadd.f32 %v5436, %v5464
    %5466 = vmatmul.f32.gmra.mxu0 %v3980
    %v5467 = vpop.f32.mrf.mxu0
    %v5468 = vadd.f32 %v5439, %v5467
    %5469 = vmatmul.f32.gmra.mxu0 %v3983
    %v5470 = vpop.f32.mrf.mxu0
    %v5471 = vadd.f32 %v5442, %v5470
    %5472 = vdwg.mxu0
    %5473 = vmatpush.msra.mxu0 %v4860
    %5474 = vmatpush.msra.mxu0 %v4856
    %5475 = vmatpush.msra.mxu0 %v4852
    %5476 = vmatpush.msra.mxu0 %v4848
    %5477 = vmatpush.msra.mxu0 %v4844
    %5478 = vmatpush.msra.mxu0 %v4840
    %5479 = vmatpush.msra.mxu0 %v4836
    %5480 = vmatpush.msra.mxu0 %v4832
    %5481 = vmatpush.msra.mxu0 %v4828
    %5482 = vmatpush.msra.mxu0 %v4824
    %5483 = vmatpush.msra.mxu0 %v4820
    %5484 = vmatpush.msra.mxu0 %v4816
    %5485 = vmatpush.msra.mxu0 %v4812
    %5486 = vmatpush.msra.mxu0 %v4808
    %5487 = vmatpush.msra.mxu0 %v4804
    %5488 = vmatpush.msra.mxu0 %v4800
    %5489 = vmatmul.f32.gmra.mxu0 %v4003
    %v5490 = vpop.f32.mrf.mxu0
    %v5491 = vadd.f32 %v5462, %v5490
    %5492 = vmatmul.f32.gmra.mxu0 %v4006
    %v5493 = vpop.f32.mrf.mxu0
    %v5494 = vadd.f32 %v5465, %v5493
    %5495 = vmatmul.f32.gmra.mxu0 %v4009
    %v5496 = vpop.f32.mrf.mxu0
    %v5497 = vadd.f32 %v5468, %v5496
    %5498 = vmatmul.f32.gmra.mxu0 %v4012
    %v5499 = vpop.f32.mrf.mxu0
    %v5500 = vadd.f32 %v5471, %v5499
    %5501 = vdwg.mxu0
    %5502 = vmatpush.msra.mxu0 %v4924
    %5503 = vmatpush.msra.mxu0 %v4920
    %5504 = vmatpush.msra.mxu0 %v4916
    %5505 = vmatpush.msra.mxu0 %v4912
    %5506 = vmatpush.msra.mxu0 %v4908
    %5507 = vmatpush.msra.mxu0 %v4904
    %5508 = vmatpush.msra.mxu0 %v4900
    %5509 = vmatpush.msra.mxu0 %v4896
    %5510 = vmatpush.msra.mxu0 %v4892
    %5511 = vmatpush.msra.mxu0 %v4888
    %5512 = vmatpush.msra.mxu0 %v4884
    %5513 = vmatpush.msra.mxu0 %v4880
    %5514 = vmatpush.msra.mxu0 %v4876
    %5515 = vmatpush.msra.mxu0 %v4872
    %5516 = vmatpush.msra.mxu0 %v4868
    %5517 = vmatpush.msra.mxu0 %v4864
    %5518 = vmatmul.f32.gmra.mxu0 %v4032
    %v5519 = vpop.f32.mrf.mxu0
    %v5520 = vadd.f32 %v5491, %v5519
    %5521 = vmatmul.f32.gmra.mxu0 %v4035
    %v5522 = vpop.f32.mrf.mxu0
    %v5523 = vadd.f32 %v5494, %v5522
    %5524 = vmatmul.f32.gmra.mxu0 %v4038
    %v5525 = vpop.f32.mrf.mxu0
    %v5526 = vadd.f32 %v5497, %v5525
    %5527 = vmatmul.f32.gmra.mxu0 %v4041
    %v5528 = vpop.f32.mrf.mxu0
    %v5529 = vadd.f32 %v5500, %v5528
    %5530 = vdwg.mxu0
    %5531 = vmatpush.msra.mxu0 %v4988
    %5532 = vmatpush.msra.mxu0 %v4984
    %5533 = vmatpush.msra.mxu0 %v4980
    %5534 = vmatpush.msra.mxu0 %v4976
    %5535 = vmatpush.msra.mxu0 %v4972
    %5536 = vmatpush.msra.mxu0 %v4968
    %5537 = vmatpush.msra.mxu0 %v4964
    %5538 = vmatpush.msra.mxu0 %v4960
    %5539 = vmatpush.msra.mxu0 %v4956
    %5540 = vmatpush.msra.mxu0 %v4952
    %5541 = vmatpush.msra.mxu0 %v4948
    %5542 = vmatpush.msra.mxu0 %v4944
    %5543 = vmatpush.msra.mxu0 %v4940
    %5544 = vmatpush.msra.mxu0 %v4936
    %5545 = vmatpush.msra.mxu0 %v4932
    %5546 = vmatpush.msra.mxu0 %v4928
    %5547 = vmatmul.f32.gmra.mxu0 %v4061
    %v5548 = vpop.f32.mrf.mxu0
    %v5549 = vadd.f32 %v5520, %v5548
    %5550 = vmatmul.f32.gmra.mxu0 %v4064
    %v5551 = vpop.f32.mrf.mxu0
    %v5552 = vadd.f32 %v5523, %v5551
    %5553 = vmatmul.f32.gmra.mxu0 %v4067
    %v5554 = vpop.f32.mrf.mxu0
    %v5555 = vadd.f32 %v5526, %v5554
    %5556 = vmatmul.f32.gmra.mxu0 %v4070
    %v5557 = vpop.f32.mrf.mxu0
    %v5558 = vadd.f32 %v5529, %v5557
    %5559 = vdwg.mxu0
    %5560 = vmatpush.msra.mxu0 %v5052
    %5561 = vmatpush.msra.mxu0 %v5048
    %5562 = vmatpush.msra.mxu0 %v5044
    %5563 = vmatpush.msra.mxu0 %v5040
    %5564 = vmatpush.msra.mxu0 %v5036
    %5565 = vmatpush.msra.mxu0 %v5032
    %5566 = vmatpush.msra.mxu0 %v5028
    %5567 = vmatpush.msra.mxu0 %v5024
    %5568 = vmatpush.msra.mxu0 %v5020
    %5569 = vmatpush.msra.mxu0 %v5016
    %5570 = vmatpush.msra.mxu0 %v5012
    %5571 = vmatpush.msra.mxu0 %v5008
    %5572 = vmatpush.msra.mxu0 %v5004
    %5573 = vmatpush.msra.mxu0 %v5000
    %5574 = vmatpush.msra.mxu0 %v4996
    %5575 = vmatpush.msra.mxu0 %v4992
    %5576 = vmatmul.f32.gmra.mxu0 %v4090
    %v5577 = vpop.f32.mrf.mxu0
    %v5578 = vadd.f32 %v5549, %v5577
    %5579 = vmatmul.f32.gmra.mxu0 %v4093
    %v5580 = vpop.f32.mrf.mxu0
    %v5581 = vadd.f32 %v5552, %v5580
    %5582 = vmatmul.f32.gmra.mxu0 %v4096
    %v5583 = vpop.f32.mrf.mxu0
    %v5584 = vadd.f32 %v5555, %v5583
    %5585 = vmatmul.f32.gmra.mxu0 %v4099
    %v5586 = vpop.f32.mrf.mxu0
    %v5587 = vadd.f32 %v5558, %v5586
    %5588 = vdwg.mxu0
    %5589 = vmatpush.msra.mxu0 %v5116
    %5590 = vmatpush.msra.mxu0 %v5112
    %5591 = vmatpush.msra.mxu0 %v5108
    %5592 = vmatpush.msra.mxu0 %v5104
    %5593 = vmatpush.msra.mxu0 %v5100
    %5594 = vmatpush.msra.mxu0 %v5096
    %5595 = vmatpush.msra.mxu0 %v5092
    %5596 = vmatpush.msra.mxu0 %v5088
    %5597 = vmatpush.msra.mxu0 %v5084
    %5598 = vmatpush.msra.mxu0 %v5080
    %5599 = vmatpush.msra.mxu0 %v5076
    %5600 = vmatpush.msra.mxu0 %v5072
    %5601 = vmatpush.msra.mxu0 %v5068
    %5602 = vmatpush.msra.mxu0 %v5064
    %5603 = vmatpush.msra.mxu0 %v5060
    %5604 = vmatpush.msra.mxu0 %v5056
    %5605 = vmatmul.f32.gmra.mxu0 %v4119
    %v5606 = vpop.f32.mrf.mxu0
    %v5607 = vadd.f32 %v5578, %v5606
    %5608 = vmatmul.f32.gmra.mxu0 %v4122
    %v5609 = vpop.f32.mrf.mxu0
    %v5610 = vadd.f32 %v5581, %v5609
    %5611 = vmatmul.f32.gmra.mxu0 %v4125
    %v5612 = vpop.f32.mrf.mxu0
    %v5613 = vadd.f32 %v5584, %v5612
    %5614 = vmatmul.f32.gmra.mxu0 %v4128
    %v5615 = vpop.f32.mrf.mxu0
    %v5616 = vadd.f32 %v5587, %v5615
    %5617 = vdwg.mxu0
    %5618 = vmatpush.msra.mxu0 %v5180
    %5619 = vmatpush.msra.mxu0 %v5176
    %5620 = vmatpush.msra.mxu0 %v5172
    %5621 = vmatpush.msra.mxu0 %v5168
    %5622 = vmatpush.msra.mxu0 %v5164
    %5623 = vmatpush.msra.mxu0 %v5160
    %5624 = vmatpush.msra.mxu0 %v5156
    %5625 = vmatpush.msra.mxu0 %v5152
    %5626 = vmatpush.msra.mxu0 %v5148
    %5627 = vmatpush.msra.mxu0 %v5144
    %5628 = vmatpush.msra.mxu0 %v5140
    %5629 = vmatpush.msra.mxu0 %v5136
    %5630 = vmatpush.msra.mxu0 %v5132
    %5631 = vmatpush.msra.mxu0 %v5128
    %5632 = vmatpush.msra.mxu0 %v5124
    %5633 = vmatpush.msra.mxu0 %v5120
    %5634 = vmatmul.f32.gmra.mxu0 %v4148
    %v5635 = vpop.f32.mrf.mxu0
    %v5636 = vadd.f32 %v5607, %v5635
    %5637 = vmatmul.f32.gmra.mxu0 %v4151
    %v5638 = vpop.f32.mrf.mxu0
    %v5639 = vadd.f32 %v5610, %v5638
    %5640 = vmatmul.f32.gmra.mxu0 %v4154
    %v5641 = vpop.f32.mrf.mxu0
    %v5642 = vadd.f32 %v5613, %v5641
    %5643 = vmatmul.f32.gmra.mxu0 %v4157
    %v5644 = vpop.f32.mrf.mxu0
    %v5645 = vadd.f32 %v5616, %v5644
    %5646 = vdwg.mxu0
    %5647 = vmatpush.msra.mxu0 %v4733
    %5648 = vmatpush.msra.mxu0 %v4729
    %5649 = vmatpush.msra.mxu0 %v4725
    %5650 = vmatpush.msra.mxu0 %v4721
    %5651 = vmatpush.msra.mxu0 %v4717
    %5652 = vmatpush.msra.mxu0 %v4713
    %5653 = vmatpush.msra.mxu0 %v4709
    %5654 = vmatpush.msra.mxu0 %v4705
    %5655 = vmatpush.msra.mxu0 %v4701
    %5656 = vmatpush.msra.mxu0 %v4697
    %5657 = vmatpush.msra.mxu0 %v4693
    %5658 = vmatpush.msra.mxu0 %v4689
    %5659 = vmatpush.msra.mxu0 %v4685
    %5660 = vmatpush.msra.mxu0 %v4681
    %5661 = vmatpush.msra.mxu0 %v4677
    %5662 = vmatpush.msra.mxu0 %v4673
    %5663 = vmatmul.f32.gmra.mxu0 %v3945
    %v5664 = vpop.f32.mrf.mxu0
    %v5665 = vadd.f32 0.0, %v5664
    %5666 = vmatmul.f32.gmra.mxu0 %v3948
    %v5667 = vpop.f32.mrf.mxu0
    %v5668 = vadd.f32 0.0, %v5667
    %5669 = vmatmul.f32.gmra.mxu0 %v3951
    %v5670 = vpop.f32.mrf.mxu0
    %v5671 = vadd.f32 0.0, %v5670
    %5672 = vmatmul.f32.gmra.mxu0 %v3954
    %v5673 = vpop.f32.mrf.mxu0
    %v5674 = vadd.f32 0.0, %v5673
    %5675 = vdwg.mxu0
    %5676 = vmatpush.msra.mxu0 %v4797
    %5677 = vmatpush.msra.mxu0 %v4793
    %5678 = vmatpush.msra.mxu0 %v4789
    %5679 = vmatpush.msra.mxu0 %v4785
    %5680 = vmatpush.msra.mxu0 %v4781
    %5681 = vmatpush.msra.mxu0 %v4777
    %5682 = vmatpush.msra.mxu0 %v4773
    %5683 = vmatpush.msra.mxu0 %v4769
    %5684 = vmatpush.msra.mxu0 %v4765
    %5685 = vmatpush.msra.mxu0 %v4761
    %5686 = vmatpush.msra.mxu0 %v4757
    %5687 = vmatpush.msra.mxu0 %v4753
    %5688 = vmatpush.msra.mxu0 %v4749
    %5689 = vmatpush.msra.mxu0 %v4745
    %5690 = vmatpush.msra.mxu0 %v4741
    %5691 = vmatpush.msra.mxu0 %v4737
    %5692 = vmatmul.f32.gmra.mxu0 %v3974
    %v5693 = vpop.f32.mrf.mxu0
    %v5694 = vadd.f32 %v5665, %v5693
    %5695 = vmatmul.f32.gmra.mxu0 %v3977
    %v5696 = vpop.f32.mrf.mxu0
    %v5697 = vadd.f32 %v5668, %v5696
    %5698 = vmatmul.f32.gmra.mxu0 %v3980
    %v5699 = vpop.f32.mrf.mxu0
    %v5700 = vadd.f32 %v5671, %v5699
    %5701 = vmatmul.f32.gmra.mxu0 %v3983
    %v5702 = vpop.f32.mrf.mxu0
    %v5703 = vadd.f32 %v5674, %v5702
    %5704 = vdwg.mxu0
    %5705 = vmatpush.msra.mxu0 %v4861
    %5706 = vmatpush.msra.mxu0 %v4857
    %5707 = vmatpush.msra.mxu0 %v4853
    %5708 = vmatpush.msra.mxu0 %v4849
    %5709 = vmatpush.msra.mxu0 %v4845
    %5710 = vmatpush.msra.mxu0 %v4841
    %5711 = vmatpush.msra.mxu0 %v4837
    %5712 = vmatpush.msra.mxu0 %v4833
    %5713 = vmatpush.msra.mxu0 %v4829
    %5714 = vmatpush.msra.mxu0 %v4825
    %5715 = vmatpush.msra.mxu0 %v4821
    %5716 = vmatpush.msra.mxu0 %v4817
    %5717 = vmatpush.msra.mxu0 %v4813
    %5718 = vmatpush.msra.mxu0 %v4809
    %5719 = vmatpush.msra.mxu0 %v4805
    %5720 = vmatpush.msra.mxu0 %v4801
    %5721 = vmatmul.f32.gmra.mxu0 %v4003
    %v5722 = vpop.f32.mrf.mxu0
    %v5723 = vadd.f32 %v5694, %v5722
    %5724 = vmatmul.f32.gmra.mxu0 %v4006
    %v5725 = vpop.f32.mrf.mxu0
    %v5726 = vadd.f32 %v5697, %v5725
    %5727 = vmatmul.f32.gmra.mxu0 %v4009
    %v5728 = vpop.f32.mrf.mxu0
    %v5729 = vadd.f32 %v5700, %v5728
    %5730 = vmatmul.f32.gmra.mxu0 %v4012
    %v5731 = vpop.f32.mrf.mxu0
    %v5732 = vadd.f32 %v5703, %v5731
    %5733 = vdwg.mxu0
    %5734 = vmatpush.msra.mxu0 %v4925
    %5735 = vmatpush.msra.mxu0 %v4921
    %5736 = vmatpush.msra.mxu0 %v4917
    %5737 = vmatpush.msra.mxu0 %v4913
    %5738 = vmatpush.msra.mxu0 %v4909
    %5739 = vmatpush.msra.mxu0 %v4905
    %5740 = vmatpush.msra.mxu0 %v4901
    %5741 = vmatpush.msra.mxu0 %v4897
    %5742 = vmatpush.msra.mxu0 %v4893
    %5743 = vmatpush.msra.mxu0 %v4889
    %5744 = vmatpush.msra.mxu0 %v4885
    %5745 = vmatpush.msra.mxu0 %v4881
    %5746 = vmatpush.msra.mxu0 %v4877
    %5747 = vmatpush.msra.mxu0 %v4873
    %5748 = vmatpush.msra.mxu0 %v4869
    %5749 = vmatpush.msra.mxu0 %v4865
    %5750 = vmatmul.f32.gmra.mxu0 %v4032
    %v5751 = vpop.f32.mrf.mxu0
    %v5752 = vadd.f32 %v5723, %v5751
    %5753 = vmatmul.f32.gmra.mxu0 %v4035
    %v5754 = vpop.f32.mrf.mxu0
    %v5755 = vadd.f32 %v5726, %v5754
    %5756 = vmatmul.f32.gmra.mxu0 %v4038
    %v5757 = vpop.f32.mrf.mxu0
    %v5758 = vadd.f32 %v5729, %v5757
    %5759 = vmatmul.f32.gmra.mxu0 %v4041
    %v5760 = vpop.f32.mrf.mxu0
    %v5761 = vadd.f32 %v5732, %v5760
    %5762 = vdwg.mxu0
    %5763 = vmatpush.msra.mxu0 %v4989
    %5764 = vmatpush.msra.mxu0 %v4985
    %5765 = vmatpush.msra.mxu0 %v4981
    %5766 = vmatpush.msra.mxu0 %v4977
    %5767 = vmatpush.msra.mxu0 %v4973
    %5768 = vmatpush.msra.mxu0 %v4969
    %5769 = vmatpush.msra.mxu0 %v4965
    %5770 = vmatpush.msra.mxu0 %v4961
    %5771 = vmatpush.msra.mxu0 %v4957
    %5772 = vmatpush.msra.mxu0 %v4953
    %5773 = vmatpush.msra.mxu0 %v4949
    %5774 = vmatpush.msra.mxu0 %v4945
    %5775 = vmatpush.msra.mxu0 %v4941
    %5776 = vmatpush.msra.mxu0 %v4937
    %5777 = vmatpush.msra.mxu0 %v4933
    %5778 = vmatpush.msra.mxu0 %v4929
    %5779 = vmatmul.f32.gmra.mxu0 %v4061
    %v5780 = vpop.f32.mrf.mxu0
    %v5781 = vadd.f32 %v5752, %v5780
    %5782 = vmatmul.f32.gmra.mxu0 %v4064
    %v5783 = vpop.f32.mrf.mxu0
    %v5784 = vadd.f32 %v5755, %v5783
    %5785 = vmatmul.f32.gmra.mxu0 %v4067
    %v5786 = vpop.f32.mrf.mxu0
    %v5787 = vadd.f32 %v5758, %v5786
    %5788 = vmatmul.f32.gmra.mxu0 %v4070
    %v5789 = vpop.f32.mrf.mxu0
    %v5790 = vadd.f32 %v5761, %v5789
    %5791 = vdwg.mxu0
    %5792 = vmatpush.msra.mxu0 %v5053
    %5793 = vmatpush.msra.mxu0 %v5049
    %5794 = vmatpush.msra.mxu0 %v5045
    %5795 = vmatpush.msra.mxu0 %v5041
    %5796 = vmatpush.msra.mxu0 %v5037
    %5797 = vmatpush.msra.mxu0 %v5033
    %5798 = vmatpush.msra.mxu0 %v5029
    %5799 = vmatpush.msra.mxu0 %v5025
    %5800 = vmatpush.msra.mxu0 %v5021
    %5801 = vmatpush.msra.mxu0 %v5017
    %5802 = vmatpush.msra.mxu0 %v5013
    %5803 = vmatpush.msra.mxu0 %v5009
    %5804 = vmatpush.msra.mxu0 %v5005
    %5805 = vmatpush.msra.mxu0 %v5001
    %5806 = vmatpush.msra.mxu0 %v4997
    %5807 = vmatpush.msra.mxu0 %v4993
    %5808 = vmatmul.f32.gmra.mxu0 %v4090
    %v5809 = vpop.f32.mrf.mxu0
    %v5810 = vadd.f32 %v5781, %v5809
    %5811 = vmatmul.f32.gmra.mxu0 %v4093
    %v5812 = vpop.f32.mrf.mxu0
    %v5813 = vadd.f32 %v5784, %v5812
    %5814 = vmatmul.f32.gmra.mxu0 %v4096
    %v5815 = vpop.f32.mrf.mxu0
    %v5816 = vadd.f32 %v5787, %v5815
    %5817 = vmatmul.f32.gmra.mxu0 %v4099
    %v5818 = vpop.f32.mrf.mxu0
    %v5819 = vadd.f32 %v5790, %v5818
    %5820 = vdwg.mxu0
    %5821 = vmatpush.msra.mxu0 %v5117
    %5822 = vmatpush.msra.mxu0 %v5113
    %5823 = vmatpush.msra.mxu0 %v5109
    %5824 = vmatpush.msra.mxu0 %v5105
    %5825 = vmatpush.msra.mxu0 %v5101
    %5826 = vmatpush.msra.mxu0 %v5097
    %5827 = vmatpush.msra.mxu0 %v5093
    %5828 = vmatpush.msra.mxu0 %v5089
    %5829 = vmatpush.msra.mxu0 %v5085
    %5830 = vmatpush.msra.mxu0 %v5081
    %5831 = vmatpush.msra.mxu0 %v5077
    %5832 = vmatpush.msra.mxu0 %v5073
    %5833 = vmatpush.msra.mxu0 %v5069
    %5834 = vmatpush.msra.mxu0 %v5065
    %5835 = vmatpush.msra.mxu0 %v5061
    %5836 = vmatpush.msra.mxu0 %v5057
    %5837 = vmatmul.f32.gmra.mxu0 %v4119
    %v5838 = vpop.f32.mrf.mxu0
    %v5839 = vadd.f32 %v5810, %v5838
    %5840 = vmatmul.f32.gmra.mxu0 %v4122
    %v5841 = vpop.f32.mrf.mxu0
    %v5842 = vadd.f32 %v5813, %v5841
    %5843 = vmatmul.f32.gmra.mxu0 %v4125
    %v5844 = vpop.f32.mrf.mxu0
    %v5845 = vadd.f32 %v5816, %v5844
    %5846 = vmatmul.f32.gmra.mxu0 %v4128
    %v5847 = vpop.f32.mrf.mxu0
    %v5848 = vadd.f32 %v5819, %v5847
    %5849 = vdwg.mxu0
    %5850 = vmatpush.msra.mxu0 %v5181
    %5851 = vmatpush.msra.mxu0 %v5177
    %5852 = vmatpush.msra.mxu0 %v5173
    %5853 = vmatpush.msra.mxu0 %v5169
    %5854 = vmatpush.msra.mxu0 %v5165
    %5855 = vmatpush.msra.mxu0 %v5161
    %5856 = vmatpush.msra.mxu0 %v5157
    %5857 = vmatpush.msra.mxu0 %v5153
    %5858 = vmatpush.msra.mxu0 %v5149
    %5859 = vmatpush.msra.mxu0 %v5145
    %5860 = vmatpush.msra.mxu0 %v5141
    %5861 = vmatpush.msra.mxu0 %v5137
    %5862 = vmatpush.msra.mxu0 %v5133
    %5863 = vmatpush.msra.mxu0 %v5129
    %5864 = vmatpush.msra.mxu0 %v5125
    %5865 = vmatpush.msra.mxu0 %v5121
    %5866 = vmatmul.f32.gmra.mxu0 %v4148
    %v5867 = vpop.f32.mrf.mxu0
    %v5868 = vadd.f32 %v5839, %v5867
    %5869 = vmatmul.f32.gmra.mxu0 %v4151
    %v5870 = vpop.f32.mrf.mxu0
    %v5871 = vadd.f32 %v5842, %v5870
    %5872 = vmatmul.f32.gmra.mxu0 %v4154
    %v5873 = vpop.f32.mrf.mxu0
    %v5874 = vadd.f32 %v5845, %v5873
    %5875 = vmatmul.f32.gmra.mxu0 %v4157
    %v5876 = vpop.f32.mrf.mxu0
    %v5877 = vadd.f32 %v5848, %v5876
    %5878 = vdwg.mxu0
    %5879 = vmatpush.msra.mxu0 %v4734
    %5880 = vmatpush.msra.mxu0 %v4730
    %5881 = vmatpush.msra.mxu0 %v4726
    %5882 = vmatpush.msra.mxu0 %v4722
    %5883 = vmatpush.msra.mxu0 %v4718
    %5884 = vmatpush.msra.mxu0 %v4714
    %5885 = vmatpush.msra.mxu0 %v4710
    %5886 = vmatpush.msra.mxu0 %v4706
    %5887 = vmatpush.msra.mxu0 %v4702
    %5888 = vmatpush.msra.mxu0 %v4698
    %5889 = vmatpush.msra.mxu0 %v4694
    %5890 = vmatpush.msra.mxu0 %v4690
    %5891 = vmatpush.msra.mxu0 %v4686
    %5892 = vmatpush.msra.mxu0 %v4682
    %5893 = vmatpush.msra.mxu0 %v4678
    %5894 = vmatpush.msra.mxu0 %v4674
    %5895 = vmatmul.f32.gmra.mxu0 %v3945
    %v5896 = vpop.f32.mrf.mxu0
    %v5897 = vadd.f32 0.0, %v5896
    %5898 = vmatmul.f32.gmra.mxu0 %v3948
    %v5899 = vpop.f32.mrf.mxu0
    %v5900 = vadd.f32 0.0, %v5899
    %5901 = vmatmul.f32.gmra.mxu0 %v3951
    %v5902 = vpop.f32.mrf.mxu0
    %v5903 = vadd.f32 0.0, %v5902
    %5904 = vmatmul.f32.gmra.mxu0 %v3954
    %v5905 = vpop.f32.mrf.mxu0
    %v5906 = vadd.f32 0.0, %v5905
    %5907 = vdwg.mxu0
    %5908 = vmatpush.msra.mxu0 %v4798
    %5909 = vmatpush.msra.mxu0 %v4794
    %5910 = vmatpush.msra.mxu0 %v4790
    %5911 = vmatpush.msra.mxu0 %v4786
    %5912 = vmatpush.msra.mxu0 %v4782
    %5913 = vmatpush.msra.mxu0 %v4778
    %5914 = vmatpush.msra.mxu0 %v4774
    %5915 = vmatpush.msra.mxu0 %v4770
    %5916 = vmatpush.msra.mxu0 %v4766
    %5917 = vmatpush.msra.mxu0 %v4762
    %5918 = vmatpush.msra.mxu0 %v4758
    %5919 = vmatpush.msra.mxu0 %v4754
    %5920 = vmatpush.msra.mxu0 %v4750
    %5921 = vmatpush.msra.mxu0 %v4746
    %5922 = vmatpush.msra.mxu0 %v4742
    %5923 = vmatpush.msra.mxu0 %v4738
    %5924 = vmatmul.f32.gmra.mxu0 %v3974
    %v5925 = vpop.f32.mrf.mxu0
    %v5926 = vadd.f32 %v5897, %v5925
    %5927 = vmatmul.f32.gmra.mxu0 %v3977
    %v5928 = vpop.f32.mrf.mxu0
    %v5929 = vadd.f32 %v5900, %v5928
    %5930 = vmatmul.f32.gmra.mxu0 %v3980
    %v5931 = vpop.f32.mrf.mxu0
    %v5932 = vadd.f32 %v5903, %v5931
    %5933 = vmatmul.f32.gmra.mxu0 %v3983
    %v5934 = vpop.f32.mrf.mxu0
    %v5935 = vadd.f32 %v5906, %v5934
    %5936 = vdwg.mxu0
    %5937 = vmatpush.msra.mxu0 %v4862
    %5938 = vmatpush.msra.mxu0 %v4858
    %5939 = vmatpush.msra.mxu0 %v4854
    %5940 = vmatpush.msra.mxu0 %v4850
    %5941 = vmatpush.msra.mxu0 %v4846
    %5942 = vmatpush.msra.mxu0 %v4842
    %5943 = vmatpush.msra.mxu0 %v4838
    %5944 = vmatpush.msra.mxu0 %v4834
    %5945 = vmatpush.msra.mxu0 %v4830
    %5946 = vmatpush.msra.mxu0 %v4826
    %5947 = vmatpush.msra.mxu0 %v4822
    %5948 = vmatpush.msra.mxu0 %v4818
    %5949 = vmatpush.msra.mxu0 %v4814
    %5950 = vmatpush.msra.mxu0 %v4810
    %5951 = vmatpush.msra.mxu0 %v4806
    %5952 = vmatpush.msra.mxu0 %v4802
    %5953 = vmatmul.f32.gmra.mxu0 %v4003
    %v5954 = vpop.f32.mrf.mxu0
    %v5955 = vadd.f32 %v5926, %v5954
    %5956 = vmatmul.f32.gmra.mxu0 %v4006
    %v5957 = vpop.f32.mrf.mxu0
    %v5958 = vadd.f32 %v5929, %v5957
    %5959 = vmatmul.f32.gmra.mxu0 %v4009
    %v5960 = vpop.f32.mrf.mxu0
    %v5961 = vadd.f32 %v5932, %v5960
    %5962 = vmatmul.f32.gmra.mxu0 %v4012
    %v5963 = vpop.f32.mrf.mxu0
    %v5964 = vadd.f32 %v5935, %v5963
    %5965 = vdwg.mxu0
    %5966 = vmatpush.msra.mxu0 %v4926
    %5967 = vmatpush.msra.mxu0 %v4922
    %5968 = vmatpush.msra.mxu0 %v4918
    %5969 = vmatpush.msra.mxu0 %v4914
    %5970 = vmatpush.msra.mxu0 %v4910
    %5971 = vmatpush.msra.mxu0 %v4906
    %5972 = vmatpush.msra.mxu0 %v4902
    %5973 = vmatpush.msra.mxu0 %v4898
    %5974 = vmatpush.msra.mxu0 %v4894
    %5975 = vmatpush.msra.mxu0 %v4890
    %5976 = vmatpush.msra.mxu0 %v4886
    %5977 = vmatpush.msra.mxu0 %v4882
    %5978 = vmatpush.msra.mxu0 %v4878
    %5979 = vmatpush.msra.mxu0 %v4874
    %5980 = vmatpush.msra.mxu0 %v4870
    %5981 = vmatpush.msra.mxu0 %v4866
    %5982 = vmatmul.f32.gmra.mxu0 %v4032
    %v5983 = vpop.f32.mrf.mxu0
    %v5984 = vadd.f32 %v5955, %v5983
    %5985 = vmatmul.f32.gmra.mxu0 %v4035
    %v5986 = vpop.f32.mrf.mxu0
    %v5987 = vadd.f32 %v5958, %v5986
    %5988 = vmatmul.f32.gmra.mxu0 %v4038
    %v5989 = vpop.f32.mrf.mxu0
    %v5990 = vadd.f32 %v5961, %v5989
    %5991 = vmatmul.f32.gmra.mxu0 %v4041
    %v5992 = vpop.f32.mrf.mxu0
    %v5993 = vadd.f32 %v5964, %v5992
    %5994 = vdwg.mxu0
    %5995 = vmatpush.msra.mxu0 %v4990
    %5996 = vmatpush.msra.mxu0 %v4986
    %5997 = vmatpush.msra.mxu0 %v4982
    %5998 = vmatpush.msra.mxu0 %v4978
    %5999 = vmatpush.msra.mxu0 %v4974
    %6000 = vmatpush.msra.mxu0 %v4970
    %6001 = vmatpush.msra.mxu0 %v4966
    %6002 = vmatpush.msra.mxu0 %v4962
    %6003 = vmatpush.msra.mxu0 %v4958
    %6004 = vmatpush.msra.mxu0 %v4954
    %6005 = vmatpush.msra.mxu0 %v4950
    %6006 = vmatpush.msra.mxu0 %v4946
    %6007 = vmatpush.msra.mxu0 %v4942
    %6008 = vmatpush.msra.mxu0 %v4938
    %6009 = vmatpush.msra.mxu0 %v4934
    %6010 = vmatpush.msra.mxu0 %v4930
    %6011 = vmatmul.f32.gmra.mxu0 %v4061
    %v6012 = vpop.f32.mrf.mxu0
    %v6013 = vadd.f32 %v5984, %v6012
    %6014 = vmatmul.f32.gmra.mxu0 %v4064
    %v6015 = vpop.f32.mrf.mxu0
    %v6016 = vadd.f32 %v5987, %v6015
    %6017 = vmatmul.f32.gmra.mxu0 %v4067
    %v6018 = vpop.f32.mrf.mxu0
    %v6019 = vadd.f32 %v5990, %v6018
    %6020 = vmatmul.f32.gmra.mxu0 %v4070
    %v6021 = vpop.f32.mrf.mxu0
    %v6022 = vadd.f32 %v5993, %v6021
    %6023 = vdwg.mxu0
    %6024 = vmatpush.msra.mxu0 %v5054
    %6025 = vmatpush.msra.mxu0 %v5050
    %6026 = vmatpush.msra.mxu0 %v5046
    %6027 = vmatpush.msra.mxu0 %v5042
    %6028 = vmatpush.msra.mxu0 %v5038
    %6029 = vmatpush.msra.mxu0 %v5034
    %6030 = vmatpush.msra.mxu0 %v5030
    %6031 = vmatpush.msra.mxu0 %v5026
    %6032 = vmatpush.msra.mxu0 %v5022
    %6033 = vmatpush.msra.mxu0 %v5018
    %6034 = vmatpush.msra.mxu0 %v5014
    %6035 = vmatpush.msra.mxu0 %v5010
    %6036 = vmatpush.msra.mxu0 %v5006
    %6037 = vmatpush.msra.mxu0 %v5002
    %6038 = vmatpush.msra.mxu0 %v4998
    %6039 = vmatpush.msra.mxu0 %v4994
    %6040 = vmatmul.f32.gmra.mxu0 %v4090
    %v6041 = vpop.f32.mrf.mxu0
    %v6042 = vadd.f32 %v6013, %v6041
    %6043 = vmatmul.f32.gmra.mxu0 %v4093
    %v6044 = vpop.f32.mrf.mxu0
    %v6045 = vadd.f32 %v6016, %v6044
    %6046 = vmatmul.f32.gmra.mxu0 %v4096
    %v6047 = vpop.f32.mrf.mxu0
    %v6048 = vadd.f32 %v6019, %v6047
    %6049 = vmatmul.f32.gmra.mxu0 %v4099
    %v6050 = vpop.f32.mrf.mxu0
    %v6051 = vadd.f32 %v6022, %v6050
    %6052 = vdwg.mxu0
    %6053 = vmatpush.msra.mxu0 %v5118
    %6054 = vmatpush.msra.mxu0 %v5114
    %6055 = vmatpush.msra.mxu0 %v5110
    %6056 = vmatpush.msra.mxu0 %v5106
    %6057 = vmatpush.msra.mxu0 %v5102
    %6058 = vmatpush.msra.mxu0 %v5098
    %6059 = vmatpush.msra.mxu0 %v5094
    %6060 = vmatpush.msra.mxu0 %v5090
    %6061 = vmatpush.msra.mxu0 %v5086
    %6062 = vmatpush.msra.mxu0 %v5082
    %6063 = vmatpush.msra.mxu0 %v5078
    %6064 = vmatpush.msra.mxu0 %v5074
    %6065 = vmatpush.msra.mxu0 %v5070
    %6066 = vmatpush.msra.mxu0 %v5066
    %6067 = vmatpush.msra.mxu0 %v5062
    %6068 = vmatpush.msra.mxu0 %v5058
    %6069 = vmatmul.f32.gmra.mxu0 %v4119
    %v6070 = vpop.f32.mrf.mxu0
    %v6071 = vadd.f32 %v6042, %v6070
    %6072 = vmatmul.f32.gmra.mxu0 %v4122
    %v6073 = vpop.f32.mrf.mxu0
    %v6074 = vadd.f32 %v6045, %v6073
    %6075 = vmatmul.f32.gmra.mxu0 %v4125
    %v6076 = vpop.f32.mrf.mxu0
    %v6077 = vadd.f32 %v6048, %v6076
    %6078 = vmatmul.f32.gmra.mxu0 %v4128
    %v6079 = vpop.f32.mrf.mxu0
    %v6080 = vadd.f32 %v6051, %v6079
    %6081 = vdwg.mxu0
    %6082 = vmatpush.msra.mxu0 %v5182
    %6083 = vmatpush.msra.mxu0 %v5178
    %6084 = vmatpush.msra.mxu0 %v5174
    %6085 = vmatpush.msra.mxu0 %v5170
    %6086 = vmatpush.msra.mxu0 %v5166
    %6087 = vmatpush.msra.mxu0 %v5162
    %6088 = vmatpush.msra.mxu0 %v5158
    %6089 = vmatpush.msra.mxu0 %v5154
    %6090 = vmatpush.msra.mxu0 %v5150
    %6091 = vmatpush.msra.mxu0 %v5146
    %6092 = vmatpush.msra.mxu0 %v5142
    %6093 = vmatpush.msra.mxu0 %v5138
    %6094 = vmatpush.msra.mxu0 %v5134
    %6095 = vmatpush.msra.mxu0 %v5130
    %6096 = vmatpush.msra.mxu0 %v5126
    %6097 = vmatpush.msra.mxu0 %v5122
    %6098 = vmatmul.f32.gmra.mxu0 %v4148
    %v6099 = vpop.f32.mrf.mxu0
    %v6100 = vadd.f32 %v6071, %v6099
    %6101 = vmatmul.f32.gmra.mxu0 %v4151
    %v6102 = vpop.f32.mrf.mxu0
    %v6103 = vadd.f32 %v6074, %v6102
    %6104 = vmatmul.f32.gmra.mxu0 %v4154
    %v6105 = vpop.f32.mrf.mxu0
    %v6106 = vadd.f32 %v6077, %v6105
    %6107 = vmatmul.f32.gmra.mxu0 %v4157
    %v6108 = vpop.f32.mrf.mxu0
    %v6109 = vadd.f32 %v6080, %v6108
    %6110 = vdwg.mxu0
    %6111 = vmatpush.msra.mxu0 %v4219
    %6112 = vmatpush.msra.mxu0 %v4215
    %6113 = vmatpush.msra.mxu0 %v4211
    %6114 = vmatpush.msra.mxu0 %v4207
    %6115 = vmatpush.msra.mxu0 %v4203
    %6116 = vmatpush.msra.mxu0 %v4199
    %6117 = vmatpush.msra.mxu0 %v4195
    %6118 = vmatpush.msra.mxu0 %v4191
    %6119 = vmatpush.msra.mxu0 %v4187
    %6120 = vmatpush.msra.mxu0 %v4183
    %6121 = vmatpush.msra.mxu0 %v4179
    %6122 = vmatpush.msra.mxu0 %v4175
    %6123 = vmatpush.msra.mxu0 %v4171
    %6124 = vmatpush.msra.mxu0 %v4167
    %6125 = vmatpush.msra.mxu0 %v4163
    %6126 = vmatpush.msra.mxu0 %v4159
    %6127 = vmatmul.f32.gmra.mxu0 %v3890
    %v6128 = vpop.f32.mrf.mxu0
    %v6129 = vadd.f32 %v5404, %v6128
    %6130 = vmatmul.f32.gmra.mxu0 %v3898
    %v6131 = vpop.f32.mrf.mxu0
    %v6132 = vadd.f32 %v5407, %v6131
    %6133 = vmatmul.f32.gmra.mxu0 %v3906
    %v6134 = vpop.f32.mrf.mxu0
    %v6135 = vadd.f32 %v5410, %v6134
    %6136 = vmatmul.f32.gmra.mxu0 %v3914
    %v6137 = vpop.f32.mrf.mxu0
    %v6138 = vadd.f32 %v5413, %v6137
    %6139 = vdwg.mxu0
    %6140 = vmatpush.msra.mxu0 %v4283
    %6141 = vmatpush.msra.mxu0 %v4279
    %6142 = vmatpush.msra.mxu0 %v4275
    %6143 = vmatpush.msra.mxu0 %v4271
    %6144 = vmatpush.msra.mxu0 %v4267
    %6145 = vmatpush.msra.mxu0 %v4263
    %6146 = vmatpush.msra.mxu0 %v4259
    %6147 = vmatpush.msra.mxu0 %v4255
    %6148 = vmatpush.msra.mxu0 %v4251
    %6149 = vmatpush.msra.mxu0 %v4247
    %6150 = vmatpush.msra.mxu0 %v4243
    %6151 = vmatpush.msra.mxu0 %v4239
    %6152 = vmatpush.msra.mxu0 %v4235
    %6153 = vmatpush.msra.mxu0 %v4231
    %6154 = vmatpush.msra.mxu0 %v4227
    %6155 = vmatpush.msra.mxu0 %v4223
    %6156 = vmatmul.f32.gmra.mxu0 %v3891
    %v6157 = vpop.f32.mrf.mxu0
    %v6158 = vadd.f32 %v6129, %v6157
    %6159 = vmatmul.f32.gmra.mxu0 %v3899
    %v6160 = vpop.f32.mrf.mxu0
    %v6161 = vadd.f32 %v6132, %v6160
    %6162 = vmatmul.f32.gmra.mxu0 %v3907
    %v6163 = vpop.f32.mrf.mxu0
    %v6164 = vadd.f32 %v6135, %v6163
    %6165 = vmatmul.f32.gmra.mxu0 %v3915
    %v6166 = vpop.f32.mrf.mxu0
    %v6167 = vadd.f32 %v6138, %v6166
    %6168 = vdwg.mxu0
    %6169 = vmatpush.msra.mxu0 %v4347
    %6170 = vmatpush.msra.mxu0 %v4343
    %6171 = vmatpush.msra.mxu0 %v4339
    %6172 = vmatpush.msra.mxu0 %v4335
    %6173 = vmatpush.msra.mxu0 %v4331
    %6174 = vmatpush.msra.mxu0 %v4327
    %6175 = vmatpush.msra.mxu0 %v4323
    %6176 = vmatpush.msra.mxu0 %v4319
    %6177 = vmatpush.msra.mxu0 %v4315
    %6178 = vmatpush.msra.mxu0 %v4311
    %6179 = vmatpush.msra.mxu0 %v4307
    %6180 = vmatpush.msra.mxu0 %v4303
    %6181 = vmatpush.msra.mxu0 %v4299
    %6182 = vmatpush.msra.mxu0 %v4295
    %6183 = vmatpush.msra.mxu0 %v4291
    %6184 = vmatpush.msra.mxu0 %v4287
    %6185 = vmatmul.f32.gmra.mxu0 %v3892
    %v6186 = vpop.f32.mrf.mxu0
    %v6187 = vadd.f32 %v6158, %v6186
    %6188 = vmatmul.f32.gmra.mxu0 %v3900
    %v6189 = vpop.f32.mrf.mxu0
    %v6190 = vadd.f32 %v6161, %v6189
    %6191 = vmatmul.f32.gmra.mxu0 %v3908
    %v6192 = vpop.f32.mrf.mxu0
    %v6193 = vadd.f32 %v6164, %v6192
    %6194 = vmatmul.f32.gmra.mxu0 %v3916
    %v6195 = vpop.f32.mrf.mxu0
    %v6196 = vadd.f32 %v6167, %v6195
    %6197 = vdwg.mxu0
    %6198 = vmatpush.msra.mxu0 %v4411
    %6199 = vmatpush.msra.mxu0 %v4407
    %6200 = vmatpush.msra.mxu0 %v4403
    %6201 = vmatpush.msra.mxu0 %v4399
    %6202 = vmatpush.msra.mxu0 %v4395
    %6203 = vmatpush.msra.mxu0 %v4391
    %6204 = vmatpush.msra.mxu0 %v4387
    %6205 = vmatpush.msra.mxu0 %v4383
    %6206 = vmatpush.msra.mxu0 %v4379
    %6207 = vmatpush.msra.mxu0 %v4375
    %6208 = vmatpush.msra.mxu0 %v4371
    %6209 = vmatpush.msra.mxu0 %v4367
    %6210 = vmatpush.msra.mxu0 %v4363
    %6211 = vmatpush.msra.mxu0 %v4359
    %6212 = vmatpush.msra.mxu0 %v4355
    %6213 = vmatpush.msra.mxu0 %v4351
    %6214 = vmatmul.f32.gmra.mxu0 %v3893
    %v6215 = vpop.f32.mrf.mxu0
    %v6216 = vadd.f32 %v6187, %v6215
    %6217 = vmatmul.f32.gmra.mxu0 %v3901
    %v6218 = vpop.f32.mrf.mxu0
    %v6219 = vadd.f32 %v6190, %v6218
    %6220 = vmatmul.f32.gmra.mxu0 %v3909
    %v6221 = vpop.f32.mrf.mxu0
    %v6222 = vadd.f32 %v6193, %v6221
    %6223 = vmatmul.f32.gmra.mxu0 %v3917
    %v6224 = vpop.f32.mrf.mxu0
    %v6225 = vadd.f32 %v6196, %v6224
    %6226 = vdwg.mxu0
    %6227 = vmatpush.msra.mxu0 %v4475
    %6228 = vmatpush.msra.mxu0 %v4471
    %6229 = vmatpush.msra.mxu0 %v4467
    %6230 = vmatpush.msra.mxu0 %v4463
    %6231 = vmatpush.msra.mxu0 %v4459
    %6232 = vmatpush.msra.mxu0 %v4455
    %6233 = vmatpush.msra.mxu0 %v4451
    %6234 = vmatpush.msra.mxu0 %v4447
    %6235 = vmatpush.msra.mxu0 %v4443
    %6236 = vmatpush.msra.mxu0 %v4439
    %6237 = vmatpush.msra.mxu0 %v4435
    %6238 = vmatpush.msra.mxu0 %v4431
    %6239 = vmatpush.msra.mxu0 %v4427
    %6240 = vmatpush.msra.mxu0 %v4423
    %6241 = vmatpush.msra.mxu0 %v4419
    %6242 = vmatpush.msra.mxu0 %v4415
    %6243 = vmatmul.f32.gmra.mxu0 %v3894
    %v6244 = vpop.f32.mrf.mxu0
    %v6245 = vadd.f32 %v6216, %v6244
    %6246 = vmatmul.f32.gmra.mxu0 %v3902
    %v6247 = vpop.f32.mrf.mxu0
    %v6248 = vadd.f32 %v6219, %v6247
    %6249 = vmatmul.f32.gmra.mxu0 %v3910
    %v6250 = vpop.f32.mrf.mxu0
    %v6251 = vadd.f32 %v6222, %v6250
    %6252 = vmatmul.f32.gmra.mxu0 %v3918
    %v6253 = vpop.f32.mrf.mxu0
    %v6254 = vadd.f32 %v6225, %v6253
    %6255 = vdwg.mxu0
    %6256 = vmatpush.msra.mxu0 %v4539
    %6257 = vmatpush.msra.mxu0 %v4535
    %6258 = vmatpush.msra.mxu0 %v4531
    %6259 = vmatpush.msra.mxu0 %v4527
    %6260 = vmatpush.msra.mxu0 %v4523
    %6261 = vmatpush.msra.mxu0 %v4519
    %6262 = vmatpush.msra.mxu0 %v4515
    %6263 = vmatpush.msra.mxu0 %v4511
    %6264 = vmatpush.msra.mxu0 %v4507
    %6265 = vmatpush.msra.mxu0 %v4503
    %6266 = vmatpush.msra.mxu0 %v4499
    %6267 = vmatpush.msra.mxu0 %v4495
    %6268 = vmatpush.msra.mxu0 %v4491
    %6269 = vmatpush.msra.mxu0 %v4487
    %6270 = vmatpush.msra.mxu0 %v4483
    %6271 = vmatpush.msra.mxu0 %v4479
    %6272 = vmatmul.f32.gmra.mxu0 %v3895
    %v6273 = vpop.f32.mrf.mxu0
    %v6274 = vadd.f32 %v6245, %v6273
    %6275 = vmatmul.f32.gmra.mxu0 %v3903
    %v6276 = vpop.f32.mrf.mxu0
    %v6277 = vadd.f32 %v6248, %v6276
    %6278 = vmatmul.f32.gmra.mxu0 %v3911
    %v6279 = vpop.f32.mrf.mxu0
    %v6280 = vadd.f32 %v6251, %v6279
    %6281 = vmatmul.f32.gmra.mxu0 %v3919
    %v6282 = vpop.f32.mrf.mxu0
    %v6283 = vadd.f32 %v6254, %v6282
    %6284 = vdwg.mxu0
    %6285 = vmatpush.msra.mxu0 %v4603
    %6286 = vmatpush.msra.mxu0 %v4599
    %6287 = vmatpush.msra.mxu0 %v4595
    %6288 = vmatpush.msra.mxu0 %v4591
    %6289 = vmatpush.msra.mxu0 %v4587
    %6290 = vmatpush.msra.mxu0 %v4583
    %6291 = vmatpush.msra.mxu0 %v4579
    %6292 = vmatpush.msra.mxu0 %v4575
    %6293 = vmatpush.msra.mxu0 %v4571
    %6294 = vmatpush.msra.mxu0 %v4567
    %6295 = vmatpush.msra.mxu0 %v4563
    %6296 = vmatpush.msra.mxu0 %v4559
    %6297 = vmatpush.msra.mxu0 %v4555
    %6298 = vmatpush.msra.mxu0 %v4551
    %6299 = vmatpush.msra.mxu0 %v4547
    %6300 = vmatpush.msra.mxu0 %v4543
    %6301 = vmatmul.f32.gmra.mxu0 %v3896
    %v6302 = vpop.f32.mrf.mxu0
    %v6303 = vadd.f32 %v6274, %v6302
    %6304 = vmatmul.f32.gmra.mxu0 %v3904
    %v6305 = vpop.f32.mrf.mxu0
    %v6306 = vadd.f32 %v6277, %v6305
    %6307 = vmatmul.f32.gmra.mxu0 %v3912
    %v6308 = vpop.f32.mrf.mxu0
    %v6309 = vadd.f32 %v6280, %v6308
    %6310 = vmatmul.f32.gmra.mxu0 %v3920
    %v6311 = vpop.f32.mrf.mxu0
    %v6312 = vadd.f32 %v6283, %v6311
    %6313 = vdwg.mxu0
    %6314 = vmatpush.msra.mxu0 %v4667
    %6315 = vmatpush.msra.mxu0 %v4663
    %6316 = vmatpush.msra.mxu0 %v4659
    %6317 = vmatpush.msra.mxu0 %v4655
    %6318 = vmatpush.msra.mxu0 %v4651
    %6319 = vmatpush.msra.mxu0 %v4647
    %6320 = vmatpush.msra.mxu0 %v4643
    %6321 = vmatpush.msra.mxu0 %v4639
    %6322 = vmatpush.msra.mxu0 %v4635
    %6323 = vmatpush.msra.mxu0 %v4631
    %6324 = vmatpush.msra.mxu0 %v4627
    %6325 = vmatpush.msra.mxu0 %v4623
    %6326 = vmatpush.msra.mxu0 %v4619
    %6327 = vmatpush.msra.mxu0 %v4615
    %6328 = vmatpush.msra.mxu0 %v4611
    %6329 = vmatpush.msra.mxu0 %v4607
    %6330 = vmatmul.f32.gmra.mxu0 %v3897
    %v6331 = vpop.f32.mrf.mxu0
    %v6332 = vadd.f32 %v6303, %v6331
    %6333 = vmatmul.f32.gmra.mxu0 %v3905
    %v6334 = vpop.f32.mrf.mxu0
    %v6335 = vadd.f32 %v6306, %v6334
    %6336 = vmatmul.f32.gmra.mxu0 %v3913
    %v6337 = vpop.f32.mrf.mxu0
    %v6338 = vadd.f32 %v6309, %v6337
    %6339 = vmatmul.f32.gmra.mxu0 %v3921
    %v6340 = vpop.f32.mrf.mxu0
    %v6341 = vadd.f32 %v6312, %v6340
    %6342 = vdwg.mxu0
    %6343 = vmatpush.msra.mxu0 %v4220
    %6344 = vmatpush.msra.mxu0 %v4216
    %6345 = vmatpush.msra.mxu0 %v4212
    %6346 = vmatpush.msra.mxu0 %v4208
    %6347 = vmatpush.msra.mxu0 %v4204
    %6348 = vmatpush.msra.mxu0 %v4200
    %6349 = vmatpush.msra.mxu0 %v4196
    %6350 = vmatpush.msra.mxu0 %v4192
    %6351 = vmatpush.msra.mxu0 %v4188
    %6352 = vmatpush.msra.mxu0 %v4184
    %6353 = vmatpush.msra.mxu0 %v4180
    %6354 = vmatpush.msra.mxu0 %v4176
    %6355 = vmatpush.msra.mxu0 %v4172
    %6356 = vmatpush.msra.mxu0 %v4168
    %6357 = vmatpush.msra.mxu0 %v4164
    %6358 = vmatpush.msra.mxu0 %v4160
    %6359 = vmatmul.f32.gmra.mxu0 %v3890
    %v6360 = vpop.f32.mrf.mxu0
    %v6361 = vadd.f32 %v5636, %v6360
    %6362 = vmatmul.f32.gmra.mxu0 %v3898
    %v6363 = vpop.f32.mrf.mxu0
    %v6364 = vadd.f32 %v5639, %v6363
    %6365 = vmatmul.f32.gmra.mxu0 %v3906
    %v6366 = vpop.f32.mrf.mxu0
    %v6367 = vadd.f32 %v5642, %v6366
    %6368 = vmatmul.f32.gmra.mxu0 %v3914
    %v6369 = vpop.f32.mrf.mxu0
    %v6370 = vadd.f32 %v5645, %v6369
    %6371 = vdwg.mxu0
    %6372 = vmatpush.msra.mxu0 %v4284
    %6373 = vmatpush.msra.mxu0 %v4280
    %6374 = vmatpush.msra.mxu0 %v4276
    %6375 = vmatpush.msra.mxu0 %v4272
    %6376 = vmatpush.msra.mxu0 %v4268
    %6377 = vmatpush.msra.mxu0 %v4264
    %6378 = vmatpush.msra.mxu0 %v4260
    %6379 = vmatpush.msra.mxu0 %v4256
    %6380 = vmatpush.msra.mxu0 %v4252
    %6381 = vmatpush.msra.mxu0 %v4248
    %6382 = vmatpush.msra.mxu0 %v4244
    %6383 = vmatpush.msra.mxu0 %v4240
    %6384 = vmatpush.msra.mxu0 %v4236
    %6385 = vmatpush.msra.mxu0 %v4232
    %6386 = vmatpush.msra.mxu0 %v4228
    %6387 = vmatpush.msra.mxu0 %v4224
    %6388 = vmatmul.f32.gmra.mxu0 %v3891
    %v6389 = vpop.f32.mrf.mxu0
    %v6390 = vadd.f32 %v6361, %v6389
    %6391 = vmatmul.f32.gmra.mxu0 %v3899
    %v6392 = vpop.f32.mrf.mxu0
    %v6393 = vadd.f32 %v6364, %v6392
    %6394 = vmatmul.f32.gmra.mxu0 %v3907
    %v6395 = vpop.f32.mrf.mxu0
    %v6396 = vadd.f32 %v6367, %v6395
    %6397 = vmatmul.f32.gmra.mxu0 %v3915
    %v6398 = vpop.f32.mrf.mxu0
    %v6399 = vadd.f32 %v6370, %v6398
    %6400 = vdwg.mxu0
    %6401 = vmatpush.msra.mxu0 %v4348
    %6402 = vmatpush.msra.mxu0 %v4344
    %6403 = vmatpush.msra.mxu0 %v4340
    %6404 = vmatpush.msra.mxu0 %v4336
    %6405 = vmatpush.msra.mxu0 %v4332
    %6406 = vmatpush.msra.mxu0 %v4328
    %6407 = vmatpush.msra.mxu0 %v4324
    %6408 = vmatpush.msra.mxu0 %v4320
    %6409 = vmatpush.msra.mxu0 %v4316
    %6410 = vmatpush.msra.mxu0 %v4312
    %6411 = vmatpush.msra.mxu0 %v4308
    %6412 = vmatpush.msra.mxu0 %v4304
    %6413 = vmatpush.msra.mxu0 %v4300
    %6414 = vmatpush.msra.mxu0 %v4296
    %6415 = vmatpush.msra.mxu0 %v4292
    %6416 = vmatpush.msra.mxu0 %v4288
    %6417 = vmatmul.f32.gmra.mxu0 %v3892
    %v6418 = vpop.f32.mrf.mxu0
    %v6419 = vadd.f32 %v6390, %v6418
    %6420 = vmatmul.f32.gmra.mxu0 %v3900
    %v6421 = vpop.f32.mrf.mxu0
    %v6422 = vadd.f32 %v6393, %v6421
    %6423 = vmatmul.f32.gmra.mxu0 %v3908
    %v6424 = vpop.f32.mrf.mxu0
    %v6425 = vadd.f32 %v6396, %v6424
    %6426 = vmatmul.f32.gmra.mxu0 %v3916
    %v6427 = vpop.f32.mrf.mxu0
    %v6428 = vadd.f32 %v6399, %v6427
    %6429 = vdwg.mxu0
    %6430 = vmatpush.msra.mxu0 %v4412
    %6431 = vmatpush.msra.mxu0 %v4408
    %6432 = vmatpush.msra.mxu0 %v4404
    %6433 = vmatpush.msra.mxu0 %v4400
    %6434 = vmatpush.msra.mxu0 %v4396
    %6435 = vmatpush.msra.mxu0 %v4392
    %6436 = vmatpush.msra.mxu0 %v4388
    %6437 = vmatpush.msra.mxu0 %v4384
    %6438 = vmatpush.msra.mxu0 %v4380
    %6439 = vmatpush.msra.mxu0 %v4376
    %6440 = vmatpush.msra.mxu0 %v4372
    %6441 = vmatpush.msra.mxu0 %v4368
    %6442 = vmatpush.msra.mxu0 %v4364
    %6443 = vmatpush.msra.mxu0 %v4360
    %6444 = vmatpush.msra.mxu0 %v4356
    %6445 = vmatpush.msra.mxu0 %v4352
    %6446 = vmatmul.f32.gmra.mxu0 %v3893
    %v6447 = vpop.f32.mrf.mxu0
    %v6448 = vadd.f32 %v6419, %v6447
    %6449 = vmatmul.f32.gmra.mxu0 %v3901
    %v6450 = vpop.f32.mrf.mxu0
    %v6451 = vadd.f32 %v6422, %v6450
    %6452 = vmatmul.f32.gmra.mxu0 %v3909
    %v6453 = vpop.f32.mrf.mxu0
    %v6454 = vadd.f32 %v6425, %v6453
    %6455 = vmatmul.f32.gmra.mxu0 %v3917
    %v6456 = vpop.f32.mrf.mxu0
    %v6457 = vadd.f32 %v6428, %v6456
    %6458 = vdwg.mxu0
    %6459 = vmatpush.msra.mxu0 %v4476
    %6460 = vmatpush.msra.mxu0 %v4472
    %6461 = vmatpush.msra.mxu0 %v4468
    %6462 = vmatpush.msra.mxu0 %v4464
    %6463 = vmatpush.msra.mxu0 %v4460
    %6464 = vmatpush.msra.mxu0 %v4456
    %6465 = vmatpush.msra.mxu0 %v4452
    %6466 = vmatpush.msra.mxu0 %v4448
    %6467 = vmatpush.msra.mxu0 %v4444
    %6468 = vmatpush.msra.mxu0 %v4440
    %6469 = vmatpush.msra.mxu0 %v4436
    %6470 = vmatpush.msra.mxu0 %v4432
    %6471 = vmatpush.msra.mxu0 %v4428
    %6472 = vmatpush.msra.mxu0 %v4424
    %6473 = vmatpush.msra.mxu0 %v4420
    %6474 = vmatpush.msra.mxu0 %v4416
    %6475 = vmatmul.f32.gmra.mxu0 %v3894
    %v6476 = vpop.f32.mrf.mxu0
    %v6477 = vadd.f32 %v6448, %v6476
    %6478 = vmatmul.f32.gmra.mxu0 %v3902
    %v6479 = vpop.f32.mrf.mxu0
    %v6480 = vadd.f32 %v6451, %v6479
    %6481 = vmatmul.f32.gmra.mxu0 %v3910
    %v6482 = vpop.f32.mrf.mxu0
    %v6483 = vadd.f32 %v6454, %v6482
    %6484 = vmatmul.f32.gmra.mxu0 %v3918
    %v6485 = vpop.f32.mrf.mxu0
    %v6486 = vadd.f32 %v6457, %v6485
    %6487 = vdwg.mxu0
    %6488 = vmatpush.msra.mxu0 %v4540
    %6489 = vmatpush.msra.mxu0 %v4536
    %6490 = vmatpush.msra.mxu0 %v4532
    %6491 = vmatpush.msra.mxu0 %v4528
    %6492 = vmatpush.msra.mxu0 %v4524
    %6493 = vmatpush.msra.mxu0 %v4520
    %6494 = vmatpush.msra.mxu0 %v4516
    %6495 = vmatpush.msra.mxu0 %v4512
    %6496 = vmatpush.msra.mxu0 %v4508
    %6497 = vmatpush.msra.mxu0 %v4504
    %6498 = vmatpush.msra.mxu0 %v4500
    %6499 = vmatpush.msra.mxu0 %v4496
    %6500 = vmatpush.msra.mxu0 %v4492
    %6501 = vmatpush.msra.mxu0 %v4488
    %6502 = vmatpush.msra.mxu0 %v4484
    %6503 = vmatpush.msra.mxu0 %v4480
    %6504 = vmatmul.f32.gmra.mxu0 %v3895
    %v6505 = vpop.f32.mrf.mxu0
    %v6506 = vadd.f32 %v6477, %v6505
    %6507 = vmatmul.f32.gmra.mxu0 %v3903
    %v6508 = vpop.f32.mrf.mxu0
    %v6509 = vadd.f32 %v6480, %v6508
    %6510 = vmatmul.f32.gmra.mxu0 %v3911
    %v6511 = vpop.f32.mrf.mxu0
    %v6512 = vadd.f32 %v6483, %v6511
    %6513 = vmatmul.f32.gmra.mxu0 %v3919
    %v6514 = vpop.f32.mrf.mxu0
    %v6515 = vadd.f32 %v6486, %v6514
    %6516 = vdwg.mxu0
    %6517 = vmatpush.msra.mxu0 %v4604
    %6518 = vmatpush.msra.mxu0 %v4600
    %6519 = vmatpush.msra.mxu0 %v4596
    %6520 = vmatpush.msra.mxu0 %v4592
    %6521 = vmatpush.msra.mxu0 %v4588
    %6522 = vmatpush.msra.mxu0 %v4584
    %6523 = vmatpush.msra.mxu0 %v4580
    %6524 = vmatpush.msra.mxu0 %v4576
    %6525 = vmatpush.msra.mxu0 %v4572
    %6526 = vmatpush.msra.mxu0 %v4568
    %6527 = vmatpush.msra.mxu0 %v4564
    %6528 = vmatpush.msra.mxu0 %v4560
    %6529 = vmatpush.msra.mxu0 %v4556
    %6530 = vmatpush.msra.mxu0 %v4552
    %6531 = vmatpush.msra.mxu0 %v4548
    %6532 = vmatpush.msra.mxu0 %v4544
    %6533 = vmatmul.f32.gmra.mxu0 %v3896
    %v6534 = vpop.f32.mrf.mxu0
    %v6535 = vadd.f32 %v6506, %v6534
    %6536 = vmatmul.f32.gmra.mxu0 %v3904
    %v6537 = vpop.f32.mrf.mxu0
    %v6538 = vadd.f32 %v6509, %v6537
    %6539 = vmatmul.f32.gmra.mxu0 %v3912
    %v6540 = vpop.f32.mrf.mxu0
    %v6541 = vadd.f32 %v6512, %v6540
    %6542 = vmatmul.f32.gmra.mxu0 %v3920
    %v6543 = vpop.f32.mrf.mxu0
    %v6544 = vadd.f32 %v6515, %v6543
    %6545 = vdwg.mxu0
    %6546 = vmatpush.msra.mxu0 %v4668
    %6547 = vmatpush.msra.mxu0 %v4664
    %6548 = vmatpush.msra.mxu0 %v4660
    %6549 = vmatpush.msra.mxu0 %v4656
    %6550 = vmatpush.msra.mxu0 %v4652
    %6551 = vmatpush.msra.mxu0 %v4648
    %6552 = vmatpush.msra.mxu0 %v4644
    %6553 = vmatpush.msra.mxu0 %v4640
    %6554 = vmatpush.msra.mxu0 %v4636
    %6555 = vmatpush.msra.mxu0 %v4632
    %6556 = vmatpush.msra.mxu0 %v4628
    %6557 = vmatpush.msra.mxu0 %v4624
    %6558 = vmatpush.msra.mxu0 %v4620
    %6559 = vmatpush.msra.mxu0 %v4616
    %6560 = vmatpush.msra.mxu0 %v4612
    %6561 = vmatpush.msra.mxu0 %v4608
    %6562 = vmatmul.f32.gmra.mxu0 %v3897
    %v6563 = vpop.f32.mrf.mxu0
    %v6564 = vadd.f32 %v6535, %v6563
    %6565 = vmatmul.f32.gmra.mxu0 %v3905
    %v6566 = vpop.f32.mrf.mxu0
    %v6567 = vadd.f32 %v6538, %v6566
    %6568 = vmatmul.f32.gmra.mxu0 %v3913
    %v6569 = vpop.f32.mrf.mxu0
    %v6570 = vadd.f32 %v6541, %v6569
    %6571 = vmatmul.f32.gmra.mxu0 %v3921
    %v6572 = vpop.f32.mrf.mxu0
    %v6573 = vadd.f32 %v6544, %v6572
    %6574 = vdwg.mxu0
    %6575 = vmatpush.msra.mxu0 %v4221
    %6576 = vmatpush.msra.mxu0 %v4217
    %6577 = vmatpush.msra.mxu0 %v4213
    %6578 = vmatpush.msra.mxu0 %v4209
    %6579 = vmatpush.msra.mxu0 %v4205
    %6580 = vmatpush.msra.mxu0 %v4201
    %6581 = vmatpush.msra.mxu0 %v4197
    %6582 = vmatpush.msra.mxu0 %v4193
    %6583 = vmatpush.msra.mxu0 %v4189
    %6584 = vmatpush.msra.mxu0 %v4185
    %6585 = vmatpush.msra.mxu0 %v4181
    %6586 = vmatpush.msra.mxu0 %v4177
    %6587 = vmatpush.msra.mxu0 %v4173
    %6588 = vmatpush.msra.mxu0 %v4169
    %6589 = vmatpush.msra.mxu0 %v4165
    %6590 = vmatpush.msra.mxu0 %v4161
    %6591 = vmatmul.f32.gmra.mxu0 %v3890
    %v6592 = vpop.f32.mrf.mxu0
    %v6593 = vadd.f32 %v5868, %v6592
    %6594 = vmatmul.f32.gmra.mxu0 %v3898
    %v6595 = vpop.f32.mrf.mxu0
    %v6596 = vadd.f32 %v5871, %v6595
    %6597 = vmatmul.f32.gmra.mxu0 %v3906
    %v6598 = vpop.f32.mrf.mxu0
    %v6599 = vadd.f32 %v5874, %v6598
    %6600 = vmatmul.f32.gmra.mxu0 %v3914
    %v6601 = vpop.f32.mrf.mxu0
    %v6602 = vadd.f32 %v5877, %v6601
    %6603 = vdwg.mxu0
    %6604 = vmatpush.msra.mxu0 %v4285
    %6605 = vmatpush.msra.mxu0 %v4281
    %6606 = vmatpush.msra.mxu0 %v4277
    %6607 = vmatpush.msra.mxu0 %v4273
    %6608 = vmatpush.msra.mxu0 %v4269
    %6609 = vmatpush.msra.mxu0 %v4265
    %6610 = vmatpush.msra.mxu0 %v4261
    %6611 = vmatpush.msra.mxu0 %v4257
    %6612 = vmatpush.msra.mxu0 %v4253
    %6613 = vmatpush.msra.mxu0 %v4249
    %6614 = vmatpush.msra.mxu0 %v4245
    %6615 = vmatpush.msra.mxu0 %v4241
    %6616 = vmatpush.msra.mxu0 %v4237
    %6617 = vmatpush.msra.mxu0 %v4233
    %6618 = vmatpush.msra.mxu0 %v4229
    %6619 = vmatpush.msra.mxu0 %v4225
    %6620 = vmatmul.f32.gmra.mxu0 %v3891
    %v6621 = vpop.f32.mrf.mxu0
    %v6622 = vadd.f32 %v6593, %v6621
    %6623 = vmatmul.f32.gmra.mxu0 %v3899
    %v6624 = vpop.f32.mrf.mxu0
    %v6625 = vadd.f32 %v6596, %v6624
    %6626 = vmatmul.f32.gmra.mxu0 %v3907
    %v6627 = vpop.f32.mrf.mxu0
    %v6628 = vadd.f32 %v6599, %v6627
    %6629 = vmatmul.f32.gmra.mxu0 %v3915
    %v6630 = vpop.f32.mrf.mxu0
    %v6631 = vadd.f32 %v6602, %v6630
    %6632 = vdwg.mxu0
    %6633 = vmatpush.msra.mxu0 %v4349
    %6634 = vmatpush.msra.mxu0 %v4345
    %6635 = vmatpush.msra.mxu0 %v4341
    %6636 = vmatpush.msra.mxu0 %v4337
    %6637 = vmatpush.msra.mxu0 %v4333
    %6638 = vmatpush.msra.mxu0 %v4329
    %6639 = vmatpush.msra.mxu0 %v4325
    %6640 = vmatpush.msra.mxu0 %v4321
    %6641 = vmatpush.msra.mxu0 %v4317
    %6642 = vmatpush.msra.mxu0 %v4313
    %6643 = vmatpush.msra.mxu0 %v4309
    %6644 = vmatpush.msra.mxu0 %v4305
    %6645 = vmatpush.msra.mxu0 %v4301
    %6646 = vmatpush.msra.mxu0 %v4297
    %6647 = vmatpush.msra.mxu0 %v4293
    %6648 = vmatpush.msra.mxu0 %v4289
    %6649 = vmatmul.f32.gmra.mxu0 %v3892
    %v6650 = vpop.f32.mrf.mxu0
    %v6651 = vadd.f32 %v6622, %v6650
    %6652 = vmatmul.f32.gmra.mxu0 %v3900
    %v6653 = vpop.f32.mrf.mxu0
    %v6654 = vadd.f32 %v6625, %v6653
    %6655 = vmatmul.f32.gmra.mxu0 %v3908
    %v6656 = vpop.f32.mrf.mxu0
    %v6657 = vadd.f32 %v6628, %v6656
    %6658 = vmatmul.f32.gmra.mxu0 %v3916
    %v6659 = vpop.f32.mrf.mxu0
    %v6660 = vadd.f32 %v6631, %v6659
    %6661 = vdwg.mxu0
    %6662 = vmatpush.msra.mxu0 %v4413
    %6663 = vmatpush.msra.mxu0 %v4409
    %6664 = vmatpush.msra.mxu0 %v4405
    %6665 = vmatpush.msra.mxu0 %v4401
    %6666 = vmatpush.msra.mxu0 %v4397
    %6667 = vmatpush.msra.mxu0 %v4393
    %6668 = vmatpush.msra.mxu0 %v4389
    %6669 = vmatpush.msra.mxu0 %v4385
    %6670 = vmatpush.msra.mxu0 %v4381
    %6671 = vmatpush.msra.mxu0 %v4377
    %6672 = vmatpush.msra.mxu0 %v4373
    %6673 = vmatpush.msra.mxu0 %v4369
    %6674 = vmatpush.msra.mxu0 %v4365
    %6675 = vmatpush.msra.mxu0 %v4361
    %6676 = vmatpush.msra.mxu0 %v4357
    %6677 = vmatpush.msra.mxu0 %v4353
    %6678 = vmatmul.f32.gmra.mxu0 %v3893
    %v6679 = vpop.f32.mrf.mxu0
    %v6680 = vadd.f32 %v6651, %v6679
    %6681 = vmatmul.f32.gmra.mxu0 %v3901
    %v6682 = vpop.f32.mrf.mxu0
    %v6683 = vadd.f32 %v6654, %v6682
    %6684 = vmatmul.f32.gmra.mxu0 %v3909
    %v6685 = vpop.f32.mrf.mxu0
    %v6686 = vadd.f32 %v6657, %v6685
    %6687 = vmatmul.f32.gmra.mxu0 %v3917
    %v6688 = vpop.f32.mrf.mxu0
    %v6689 = vadd.f32 %v6660, %v6688
    %6690 = vdwg.mxu0
    %6691 = vmatpush.msra.mxu0 %v4477
    %6692 = vmatpush.msra.mxu0 %v4473
    %6693 = vmatpush.msra.mxu0 %v4469
    %6694 = vmatpush.msra.mxu0 %v4465
    %6695 = vmatpush.msra.mxu0 %v4461
    %6696 = vmatpush.msra.mxu0 %v4457
    %6697 = vmatpush.msra.mxu0 %v4453
    %6698 = vmatpush.msra.mxu0 %v4449
    %6699 = vmatpush.msra.mxu0 %v4445
    %6700 = vmatpush.msra.mxu0 %v4441
    %6701 = vmatpush.msra.mxu0 %v4437
    %6702 = vmatpush.msra.mxu0 %v4433
    %6703 = vmatpush.msra.mxu0 %v4429
    %6704 = vmatpush.msra.mxu0 %v4425
    %6705 = vmatpush.msra.mxu0 %v4421
    %6706 = vmatpush.msra.mxu0 %v4417
    %6707 = vmatmul.f32.gmra.mxu0 %v3894
    %v6708 = vpop.f32.mrf.mxu0
    %v6709 = vadd.f32 %v6680, %v6708
    %6710 = vmatmul.f32.gmra.mxu0 %v3902
    %v6711 = vpop.f32.mrf.mxu0
    %v6712 = vadd.f32 %v6683, %v6711
    %6713 = vmatmul.f32.gmra.mxu0 %v3910
    %v6714 = vpop.f32.mrf.mxu0
    %v6715 = vadd.f32 %v6686, %v6714
    %6716 = vmatmul.f32.gmra.mxu0 %v3918
    %v6717 = vpop.f32.mrf.mxu0
    %v6718 = vadd.f32 %v6689, %v6717
    %6719 = vdwg.mxu0
    %6720 = vmatpush.msra.mxu0 %v4541
    %6721 = vmatpush.msra.mxu0 %v4537
    %6722 = vmatpush.msra.mxu0 %v4533
    %6723 = vmatpush.msra.mxu0 %v4529
    %6724 = vmatpush.msra.mxu0 %v4525
    %6725 = vmatpush.msra.mxu0 %v4521
    %6726 = vmatpush.msra.mxu0 %v4517
    %6727 = vmatpush.msra.mxu0 %v4513
    %6728 = vmatpush.msra.mxu0 %v4509
    %6729 = vmatpush.msra.mxu0 %v4505
    %6730 = vmatpush.msra.mxu0 %v4501
    %6731 = vmatpush.msra.mxu0 %v4497
    %6732 = vmatpush.msra.mxu0 %v4493
    %6733 = vmatpush.msra.mxu0 %v4489
    %6734 = vmatpush.msra.mxu0 %v4485
    %6735 = vmatpush.msra.mxu0 %v4481
    %6736 = vmatmul.f32.gmra.mxu0 %v3895
    %v6737 = vpop.f32.mrf.mxu0
    %v6738 = vadd.f32 %v6709, %v6737
    %6739 = vmatmul.f32.gmra.mxu0 %v3903
    %v6740 = vpop.f32.mrf.mxu0
    %v6741 = vadd.f32 %v6712, %v6740
    %6742 = vmatmul.f32.gmra.mxu0 %v3911
    %v6743 = vpop.f32.mrf.mxu0
    %v6744 = vadd.f32 %v6715, %v6743
    %6745 = vmatmul.f32.gmra.mxu0 %v3919
    %v6746 = vpop.f32.mrf.mxu0
    %v6747 = vadd.f32 %v6718, %v6746
    %6748 = vdwg.mxu0
    %6749 = vmatpush.msra.mxu0 %v4605
    %6750 = vmatpush.msra.mxu0 %v4601
    %6751 = vmatpush.msra.mxu0 %v4597
    %6752 = vmatpush.msra.mxu0 %v4593
    %6753 = vmatpush.msra.mxu0 %v4589
    %6754 = vmatpush.msra.mxu0 %v4585
    %6755 = vmatpush.msra.mxu0 %v4581
    %6756 = vmatpush.msra.mxu0 %v4577
    %6757 = vmatpush.msra.mxu0 %v4573
    %6758 = vmatpush.msra.mxu0 %v4569
    %6759 = vmatpush.msra.mxu0 %v4565
    %6760 = vmatpush.msra.mxu0 %v4561
    %6761 = vmatpush.msra.mxu0 %v4557
    %6762 = vmatpush.msra.mxu0 %v4553
    %6763 = vmatpush.msra.mxu0 %v4549
    %6764 = vmatpush.msra.mxu0 %v4545
    %6765 = vmatmul.f32.gmra.mxu0 %v3896
    %v6766 = vpop.f32.mrf.mxu0
    %v6767 = vadd.f32 %v6738, %v6766
    %6768 = vmatmul.f32.gmra.mxu0 %v3904
    %v6769 = vpop.f32.mrf.mxu0
    %v6770 = vadd.f32 %v6741, %v6769
    %6771 = vmatmul.f32.gmra.mxu0 %v3912
    %v6772 = vpop.f32.mrf.mxu0
    %v6773 = vadd.f32 %v6744, %v6772
    %6774 = vmatmul.f32.gmra.mxu0 %v3920
    %v6775 = vpop.f32.mrf.mxu0
    %v6776 = vadd.f32 %v6747, %v6775
    %6777 = vdwg.mxu0
    %6778 = vmatpush.msra.mxu0 %v4669
    %6779 = vmatpush.msra.mxu0 %v4665
    %6780 = vmatpush.msra.mxu0 %v4661
    %6781 = vmatpush.msra.mxu0 %v4657
    %6782 = vmatpush.msra.mxu0 %v4653
    %6783 = vmatpush.msra.mxu0 %v4649
    %6784 = vmatpush.msra.mxu0 %v4645
    %6785 = vmatpush.msra.mxu0 %v4641
    %6786 = vmatpush.msra.mxu0 %v4637
    %6787 = vmatpush.msra.mxu0 %v4633
    %6788 = vmatpush.msra.mxu0 %v4629
    %6789 = vmatpush.msra.mxu0 %v4625
    %6790 = vmatpush.msra.mxu0 %v4621
    %6791 = vmatpush.msra.mxu0 %v4617
    %6792 = vmatpush.msra.mxu0 %v4613
    %6793 = vmatpush.msra.mxu0 %v4609
    %6794 = vmatmul.f32.gmra.mxu0 %v3897
    %v6795 = vpop.f32.mrf.mxu0
    %v6796 = vadd.f32 %v6767, %v6795
    %6797 = vmatmul.f32.gmra.mxu0 %v3905
    %v6798 = vpop.f32.mrf.mxu0
    %v6799 = vadd.f32 %v6770, %v6798
    %6800 = vmatmul.f32.gmra.mxu0 %v3913
    %v6801 = vpop.f32.mrf.mxu0
    %v6802 = vadd.f32 %v6773, %v6801
    %6803 = vmatmul.f32.gmra.mxu0 %v3921
    %v6804 = vpop.f32.mrf.mxu0
    %v6805 = vadd.f32 %v6776, %v6804
    %6806 = vdwg.mxu0
    %6807 = vmatpush.msra.mxu0 %v4222
    %6808 = vmatpush.msra.mxu0 %v4218
    %6809 = vmatpush.msra.mxu0 %v4214
    %6810 = vmatpush.msra.mxu0 %v4210
    %6811 = vmatpush.msra.mxu0 %v4206
    %6812 = vmatpush.msra.mxu0 %v4202
    %6813 = vmatpush.msra.mxu0 %v4198
    %6814 = vmatpush.msra.mxu0 %v4194
    %6815 = vmatpush.msra.mxu0 %v4190
    %6816 = vmatpush.msra.mxu0 %v4186
    %6817 = vmatpush.msra.mxu0 %v4182
    %6818 = vmatpush.msra.mxu0 %v4178
    %6819 = vmatpush.msra.mxu0 %v4174
    %6820 = vmatpush.msra.mxu0 %v4170
    %6821 = vmatpush.msra.mxu0 %v4166
    %6822 = vmatpush.msra.mxu0 %v4162
    %6823 = vmatmul.f32.gmra.mxu0 %v3890
    %v6824 = vpop.f32.mrf.mxu0
    %v6825 = vadd.f32 %v6100, %v6824
    %6826 = vmatmul.f32.gmra.mxu0 %v3898
    %v6827 = vpop.f32.mrf.mxu0
    %v6828 = vadd.f32 %v6103, %v6827
    %6829 = vmatmul.f32.gmra.mxu0 %v3906
    %v6830 = vpop.f32.mrf.mxu0
    %v6831 = vadd.f32 %v6106, %v6830
    %6832 = vmatmul.f32.gmra.mxu0 %v3914
    %v6833 = vpop.f32.mrf.mxu0
    %v6834 = vadd.f32 %v6109, %v6833
    %6835 = vdwg.mxu0
    %6836 = vmatpush.msra.mxu0 %v4286
    %6837 = vmatpush.msra.mxu0 %v4282
    %6838 = vmatpush.msra.mxu0 %v4278
    %6839 = vmatpush.msra.mxu0 %v4274
    %6840 = vmatpush.msra.mxu0 %v4270
    %6841 = vmatpush.msra.mxu0 %v4266
    %6842 = vmatpush.msra.mxu0 %v4262
    %6843 = vmatpush.msra.mxu0 %v4258
    %6844 = vmatpush.msra.mxu0 %v4254
    %6845 = vmatpush.msra.mxu0 %v4250
    %6846 = vmatpush.msra.mxu0 %v4246
    %6847 = vmatpush.msra.mxu0 %v4242
    %6848 = vmatpush.msra.mxu0 %v4238
    %6849 = vmatpush.msra.mxu0 %v4234
    %6850 = vmatpush.msra.mxu0 %v4230
    %6851 = vmatpush.msra.mxu0 %v4226
    %6852 = vmatmul.f32.gmra.mxu0 %v3891
    %v6853 = vpop.f32.mrf.mxu0
    %v6854 = vadd.f32 %v6825, %v6853
    %6855 = vmatmul.f32.gmra.mxu0 %v3899
    %v6856 = vpop.f32.mrf.mxu0
    %v6857 = vadd.f32 %v6828, %v6856
    %6858 = vmatmul.f32.gmra.mxu0 %v3907
    %v6859 = vpop.f32.mrf.mxu0
    %v6860 = vadd.f32 %v6831, %v6859
    %6861 = vmatmul.f32.gmra.mxu0 %v3915
    %v6862 = vpop.f32.mrf.mxu0
    %v6863 = vadd.f32 %v6834, %v6862
    %6864 = vdwg.mxu0
    %6865 = vmatpush.msra.mxu0 %v4350
    %6866 = vmatpush.msra.mxu0 %v4346
    %6867 = vmatpush.msra.mxu0 %v4342
    %6868 = vmatpush.msra.mxu0 %v4338
    %6869 = vmatpush.msra.mxu0 %v4334
    %6870 = vmatpush.msra.mxu0 %v4330
    %6871 = vmatpush.msra.mxu0 %v4326
    %6872 = vmatpush.msra.mxu0 %v4322
    %6873 = vmatpush.msra.mxu0 %v4318
    %6874 = vmatpush.msra.mxu0 %v4314
    %6875 = vmatpush.msra.mxu0 %v4310
    %6876 = vmatpush.msra.mxu0 %v4306
    %6877 = vmatpush.msra.mxu0 %v4302
    %6878 = vmatpush.msra.mxu0 %v4298
    %6879 = vmatpush.msra.mxu0 %v4294
    %6880 = vmatpush.msra.mxu0 %v4290
    %6881 = vmatmul.f32.gmra.mxu0 %v3892
    %v6882 = vpop.f32.mrf.mxu0
    %v6883 = vadd.f32 %v6854, %v6882
    %6884 = vmatmul.f32.gmra.mxu0 %v3900
    %v6885 = vpop.f32.mrf.mxu0
    %v6886 = vadd.f32 %v6857, %v6885
    %6887 = vmatmul.f32.gmra.mxu0 %v3908
    %v6888 = vpop.f32.mrf.mxu0
    %v6889 = vadd.f32 %v6860, %v6888
    %6890 = vmatmul.f32.gmra.mxu0 %v3916
    %v6891 = vpop.f32.mrf.mxu0
    %v6892 = vadd.f32 %v6863, %v6891
    %6893 = vdwg.mxu0
    %6894 = vmatpush.msra.mxu0 %v4414
    %6895 = vmatpush.msra.mxu0 %v4410
    %6896 = vmatpush.msra.mxu0 %v4406
    %6897 = vmatpush.msra.mxu0 %v4402
    %6898 = vmatpush.msra.mxu0 %v4398
    %6899 = vmatpush.msra.mxu0 %v4394
    %6900 = vmatpush.msra.mxu0 %v4390
    %6901 = vmatpush.msra.mxu0 %v4386
    %6902 = vmatpush.msra.mxu0 %v4382
    %6903 = vmatpush.msra.mxu0 %v4378
    %6904 = vmatpush.msra.mxu0 %v4374
    %6905 = vmatpush.msra.mxu0 %v4370
    %6906 = vmatpush.msra.mxu0 %v4366
    %6907 = vmatpush.msra.mxu0 %v4362
    %6908 = vmatpush.msra.mxu0 %v4358
    %6909 = vmatpush.msra.mxu0 %v4354
    %6910 = vmatmul.f32.gmra.mxu0 %v3893
    %v6911 = vpop.f32.mrf.mxu0
    %v6912 = vadd.f32 %v6883, %v6911
    %6913 = vmatmul.f32.gmra.mxu0 %v3901
    %v6914 = vpop.f32.mrf.mxu0
    %v6915 = vadd.f32 %v6886, %v6914
    %6916 = vmatmul.f32.gmra.mxu0 %v3909
    %v6917 = vpop.f32.mrf.mxu0
    %v6918 = vadd.f32 %v6889, %v6917
    %6919 = vmatmul.f32.gmra.mxu0 %v3917
    %v6920 = vpop.f32.mrf.mxu0
    %v6921 = vadd.f32 %v6892, %v6920
    %6922 = vdwg.mxu0
    %6923 = vmatpush.msra.mxu0 %v4478
    %6924 = vmatpush.msra.mxu0 %v4474
    %6925 = vmatpush.msra.mxu0 %v4470
    %6926 = vmatpush.msra.mxu0 %v4466
    %6927 = vmatpush.msra.mxu0 %v4462
    %6928 = vmatpush.msra.mxu0 %v4458
    %6929 = vmatpush.msra.mxu0 %v4454
    %6930 = vmatpush.msra.mxu0 %v4450
    %6931 = vmatpush.msra.mxu0 %v4446
    %6932 = vmatpush.msra.mxu0 %v4442
    %6933 = vmatpush.msra.mxu0 %v4438
    %6934 = vmatpush.msra.mxu0 %v4434
    %6935 = vmatpush.msra.mxu0 %v4430
    %6936 = vmatpush.msra.mxu0 %v4426
    %6937 = vmatpush.msra.mxu0 %v4422
    %6938 = vmatpush.msra.mxu0 %v4418
    %6939 = vmatmul.f32.gmra.mxu0 %v3894
    %v6940 = vpop.f32.mrf.mxu0
    %v6941 = vadd.f32 %v6912, %v6940
    %6942 = vmatmul.f32.gmra.mxu0 %v3902
    %v6943 = vpop.f32.mrf.mxu0
    %v6944 = vadd.f32 %v6915, %v6943
    %6945 = vmatmul.f32.gmra.mxu0 %v3910
    %v6946 = vpop.f32.mrf.mxu0
    %v6947 = vadd.f32 %v6918, %v6946
    %6948 = vmatmul.f32.gmra.mxu0 %v3918
    %v6949 = vpop.f32.mrf.mxu0
    %v6950 = vadd.f32 %v6921, %v6949
    %6951 = vdwg.mxu0
    %6952 = vmatpush.msra.mxu0 %v4542
    %6953 = vmatpush.msra.mxu0 %v4538
    %6954 = vmatpush.msra.mxu0 %v4534
    %6955 = vmatpush.msra.mxu0 %v4530
    %6956 = vmatpush.msra.mxu0 %v4526
    %6957 = vmatpush.msra.mxu0 %v4522
    %6958 = vmatpush.msra.mxu0 %v4518
    %6959 = vmatpush.msra.mxu0 %v4514
    %6960 = vmatpush.msra.mxu0 %v4510
    %6961 = vmatpush.msra.mxu0 %v4506
    %6962 = vmatpush.msra.mxu0 %v4502
    %6963 = vmatpush.msra.mxu0 %v4498
    %6964 = vmatpush.msra.mxu0 %v4494
    %6965 = vmatpush.msra.mxu0 %v4490
    %6966 = vmatpush.msra.mxu0 %v4486
    %6967 = vmatpush.msra.mxu0 %v4482
    %6968 = vmatmul.f32.gmra.mxu0 %v3895
    %v6969 = vpop.f32.mrf.mxu0
    %v6970 = vadd.f32 %v6941, %v6969
    %6971 = vmatmul.f32.gmra.mxu0 %v3903
    %v6972 = vpop.f32.mrf.mxu0
    %v6973 = vadd.f32 %v6944, %v6972
    %6974 = vmatmul.f32.gmra.mxu0 %v3911
    %v6975 = vpop.f32.mrf.mxu0
    %v6976 = vadd.f32 %v6947, %v6975
    %6977 = vmatmul.f32.gmra.mxu0 %v3919
    %v6978 = vpop.f32.mrf.mxu0
    %v6979 = vadd.f32 %v6950, %v6978
    %6980 = vdwg.mxu0
    %6981 = vmatpush.msra.mxu0 %v4606
    %6982 = vmatpush.msra.mxu0 %v4602
    %6983 = vmatpush.msra.mxu0 %v4598
    %6984 = vmatpush.msra.mxu0 %v4594
    %6985 = vmatpush.msra.mxu0 %v4590
    %6986 = vmatpush.msra.mxu0 %v4586
    %6987 = vmatpush.msra.mxu0 %v4582
    %6988 = vmatpush.msra.mxu0 %v4578
    %6989 = vmatpush.msra.mxu0 %v4574
    %6990 = vmatpush.msra.mxu0 %v4570
    %6991 = vmatpush.msra.mxu0 %v4566
    %6992 = vmatpush.msra.mxu0 %v4562
    %6993 = vmatpush.msra.mxu0 %v4558
    %6994 = vmatpush.msra.mxu0 %v4554
    %6995 = vmatpush.msra.mxu0 %v4550
    %6996 = vmatpush.msra.mxu0 %v4546
    %6997 = vmatmul.f32.gmra.mxu0 %v3896
    %v6998 = vpop.f32.mrf.mxu0
    %v6999 = vadd.f32 %v6970, %v6998
    %7000 = vmatmul.f32.gmra.mxu0 %v3904
    %v7001 = vpop.f32.mrf.mxu0
    %v7002 = vadd.f32 %v6973, %v7001
    %7003 = vmatmul.f32.gmra.mxu0 %v3912
    %v7004 = vpop.f32.mrf.mxu0
    %v7005 = vadd.f32 %v6976, %v7004
    %7006 = vmatmul.f32.gmra.mxu0 %v3920
    %v7007 = vpop.f32.mrf.mxu0
    %v7008 = vadd.f32 %v6979, %v7007
    %7009 = vdwg.mxu0
    %7010 = vmatpush.msra.mxu0 %v4670
    %7011 = vmatpush.msra.mxu0 %v4666
    %7012 = vmatpush.msra.mxu0 %v4662
    %7013 = vmatpush.msra.mxu0 %v4658
    %7014 = vmatpush.msra.mxu0 %v4654
    %7015 = vmatpush.msra.mxu0 %v4650
    %7016 = vmatpush.msra.mxu0 %v4646
    %7017 = vmatpush.msra.mxu0 %v4642
    %7018 = vmatpush.msra.mxu0 %v4638
    %7019 = vmatpush.msra.mxu0 %v4634
    %7020 = vmatpush.msra.mxu0 %v4630
    %7021 = vmatpush.msra.mxu0 %v4626
    %7022 = vmatpush.msra.mxu0 %v4622
    %7023 = vmatpush.msra.mxu0 %v4618
    %7024 = vmatpush.msra.mxu0 %v4614
    %7025 = vmatpush.msra.mxu0 %v4610
    %7026 = vmatmul.f32.gmra.mxu0 %v3897
    %v7027 = vpop.f32.mrf.mxu0
    %v7028 = vadd.f32 %v6999, %v7027
    %7029 = vmatmul.f32.gmra.mxu0 %v3905
    %v7030 = vpop.f32.mrf.mxu0
    %v7031 = vadd.f32 %v7002, %v7030
    %7032 = vmatmul.f32.gmra.mxu0 %v3913
    %v7033 = vpop.f32.mrf.mxu0
    %v7034 = vadd.f32 %v7005, %v7033
    %7035 = vmatmul.f32.gmra.mxu0 %v3921
    %v7036 = vpop.f32.mrf.mxu0
    %v7037 = vadd.f32 %v7008, %v7036
    %7038 = vdwg.mxu0
    %v7040 = vperm.slane %v3926, 0
    %v7041 = vperm.slane %v3926, 1
    %v7042 = vperm.slane %v3926, 2
    %v7043 = vperm.slane %v3926, 3
    %v7048 = vadd.f32 %v6332, %v7040
    %v7049 = vadd.f32 %v6564, %v7041
    %v7050 = vadd.f32 %v6796, %v7042
    %v7051 = vadd.f32 %v7028, %v7043
    %v7052 = vadd.f32 %v6335, %v7040
    %v7053 = vadd.f32 %v6567, %v7041
    %v7054 = vadd.f32 %v6799, %v7042
    %v7055 = vadd.f32 %v7031, %v7043
    %v7056 = vadd.f32 %v6338, %v7040
    %v7057 = vadd.f32 %v6570, %v7041
    %v7058 = vadd.f32 %v6802, %v7042
    %v7059 = vadd.f32 %v7034, %v7043
    %v7060 = vadd.f32 %v6341, %v7040
    %v7061 = vadd.f32 %v6573, %v7041
    %v7062 = vadd.f32 %v6805, %v7042
    %v7063 = vadd.f32 %v7037, %v7043
    %v7064 = vmax.f32 %v7048, 0.0
    %v7065 = vmax.f32 %v7049, 0.0
    %v7066 = vmax.f32 %v7050, 0.0
    %v7067 = vmax.f32 %v7051, 0.0
    %v7068 = vmax.f32 %v7052, 0.0
    %v7069 = vmax.f32 %v7053, 0.0
    %v7070 = vmax.f32 %v7054, 0.0
    %v7071 = vmax.f32 %v7055, 0.0
    %v7072 = vmax.f32 %v7056, 0.0
    %v7073 = vmax.f32 %v7057, 0.0
    %v7074 = vmax.f32 %v7058, 0.0
    %v7075 = vmax.f32 %v7059, 0.0
    %v7076 = vmax.f32 %v7060, 0.0
    %v7077 = vmax.f32 %v7061, 0.0
    %v7078 = vmax.f32 %v7062, 0.0
    %v7079 = vmax.f32 %v7063, 0.0
    %v7080 = vld [vmem:[#allocation13 + $0x10] sm:$0x1]
    %7081 = vmatpush.msra.mxu0 0.0
    %7082 = vmatpush.msra.mxu0 0.0
    %7083 = vmatpush.msra.mxu0 0.0
    %7084 = vmatpush.msra.mxu0 0.0
    %7085 = vmatpush.msra.mxu0 0.0
    %7086 = vmatpush.msra.mxu0 0.0
    %7087 = vmatpush.msra.mxu0 0.0
    %7088 = vmatpush.msra.mxu0 0.0
    %7089 = vmatpush.msra.mxu0 0.0
    %7090 = vmatpush.msra.mxu0 0.0
    %7091 = vmatpush.msra.mxu0 0.0
    %7092 = vmatpush.msra.mxu0 0.0
    %7093 = vmatpush.msra.mxu0 %v7076
    %7094 = vmatpush.msra.mxu0 %v7072
    %7095 = vmatpush.msra.mxu0 %v7068
    %7096 = vmatpush.msra.mxu0 %v7064
    %7097 = vmatmul.f32.gmra.mxu0 %v2131
    %v7098 = vpop.f32.mrf.mxu0
    %v7099 = vadd.f32 0.0, %v7098
    %7100 = vmatmul.f32.gmra.mxu0 %v2134
    %v7101 = vpop.f32.mrf.mxu0
    %v7102 = vadd.f32 0.0, %v7101
    %7103 = vmatmul.f32.gmra.mxu0 %v2137
    %v7104 = vpop.f32.mrf.mxu0
    %v7105 = vadd.f32 0.0, %v7104
    %7106 = vmatmul.f32.gmra.mxu0 %v2140
    %v7107 = vpop.f32.mrf.mxu0
    %v7108 = vadd.f32 0.0, %v7107
    %7109 = vdwg.mxu0
    %7110 = vmatpush.msra.mxu0 0.0
    %7111 = vmatpush.msra.mxu0 0.0
    %7112 = vmatpush.msra.mxu0 0.0
    %7113 = vmatpush.msra.mxu0 0.0
    %7114 = vmatpush.msra.mxu0 0.0
    %7115 = vmatpush.msra.mxu0 0.0
    %7116 = vmatpush.msra.mxu0 0.0
    %7117 = vmatpush.msra.mxu0 0.0
    %7118 = vmatpush.msra.mxu0 0.0
    %7119 = vmatpush.msra.mxu0 0.0
    %7120 = vmatpush.msra.mxu0 0.0
    %7121 = vmatpush.msra.mxu0 0.0
    %7122 = vmatpush.msra.mxu0 %v7077
    %7123 = vmatpush.msra.mxu0 %v7073
    %7124 = vmatpush.msra.mxu0 %v7069
    %7125 = vmatpush.msra.mxu0 %v7065
    %7126 = vmatmul.f32.gmra.mxu0 %v2131
    %v7127 = vpop.f32.mrf.mxu0
    %v7128 = vadd.f32 0.0, %v7127
    %7129 = vmatmul.f32.gmra.mxu0 %v2134
    %v7130 = vpop.f32.mrf.mxu0
    %v7131 = vadd.f32 0.0, %v7130
    %7132 = vmatmul.f32.gmra.mxu0 %v2137
    %v7133 = vpop.f32.mrf.mxu0
    %v7134 = vadd.f32 0.0, %v7133
    %7135 = vmatmul.f32.gmra.mxu0 %v2140
    %v7136 = vpop.f32.mrf.mxu0
    %v7137 = vadd.f32 0.0, %v7136
    %7138 = vdwg.mxu0
    %7139 = vmatpush.msra.mxu0 0.0
    %7140 = vmatpush.msra.mxu0 0.0
    %7141 = vmatpush.msra.mxu0 0.0
    %7142 = vmatpush.msra.mxu0 0.0
    %7143 = vmatpush.msra.mxu0 0.0
    %7144 = vmatpush.msra.mxu0 0.0
    %7145 = vmatpush.msra.mxu0 0.0
    %7146 = vmatpush.msra.mxu0 0.0
    %7147 = vmatpush.msra.mxu0 0.0
    %7148 = vmatpush.msra.mxu0 0.0
    %7149 = vmatpush.msra.mxu0 0.0
    %7150 = vmatpush.msra.mxu0 0.0
    %7151 = vmatpush.msra.mxu0 %v7078
    %7152 = vmatpush.msra.mxu0 %v7074
    %7153 = vmatpush.msra.mxu0 %v7070
    %7154 = vmatpush.msra.mxu0 %v7066
    %7155 = vmatmul.f32.gmra.mxu0 %v2131
    %v7156 = vpop.f32.mrf.mxu0
    %v7157 = vadd.f32 0.0, %v7156
    %7158 = vmatmul.f32.gmra.mxu0 %v2134
    %v7159 = vpop.f32.mrf.mxu0
    %v7160 = vadd.f32 0.0, %v7159
    %7161 = vmatmul.f32.gmra.mxu0 %v2137
    %v7162 = vpop.f32.mrf.mxu0
    %v7163 = vadd.f32 0.0, %v7162
    %7164 = vmatmul.f32.gmra.mxu0 %v2140
    %v7165 = vpop.f32.mrf.mxu0
    %v7166 = vadd.f32 0.0, %v7165
    %7167 = vdwg.mxu0
    %7168 = vmatpush.msra.mxu0 0.0
    %7169 = vmatpush.msra.mxu0 0.0
    %7170 = vmatpush.msra.mxu0 0.0
    %7171 = vmatpush.msra.mxu0 0.0
    %7172 = vmatpush.msra.mxu0 0.0
    %7173 = vmatpush.msra.mxu0 0.0
    %7174 = vmatpush.msra.mxu0 0.0
    %7175 = vmatpush.msra.mxu0 0.0
    %7176 = vmatpush.msra.mxu0 0.0
    %7177 = vmatpush.msra.mxu0 0.0
    %7178 = vmatpush.msra.mxu0 0.0
    %7179 = vmatpush.msra.mxu0 0.0
    %7180 = vmatpush.msra.mxu0 %v7079
    %7181 = vmatpush.msra.mxu0 %v7075
    %7182 = vmatpush.msra.mxu0 %v7071
    %7183 = vmatpush.msra.mxu0 %v7067
    %7184 = vmatmul.f32.gmra.mxu0 %v2131
    %v7185 = vpop.f32.mrf.mxu0
    %v7186 = vadd.f32 0.0, %v7185
    %7187 = vmatmul.f32.gmra.mxu0 %v2134
    %v7188 = vpop.f32.mrf.mxu0
    %v7189 = vadd.f32 0.0, %v7188
    %7190 = vmatmul.f32.gmra.mxu0 %v2137
    %v7191 = vpop.f32.mrf.mxu0
    %v7192 = vadd.f32 0.0, %v7191
    %7193 = vmatmul.f32.gmra.mxu0 %v2140
    %v7194 = vpop.f32.mrf.mxu0
    %v7195 = vadd.f32 0.0, %v7194
    %7196 = vdwg.mxu0
    %v7197 = vld [vmem:[%s7] sm:$0xff]
    %v7198 = vld [vmem:[%s7 + $0x8] sm:$0xff]
    %v7199 = vld [vmem:[%s7 + $0x10] sm:$0xff]
    %v7200 = vld [vmem:[%s7 + $0x18] sm:$0xff]
    %v7201 = vld [vmem:[%s7 + $0x20] sm:$0xff]
    %v7202 = vld [vmem:[%s7 + $0x28] sm:$0xff]
    %v7203 = vld [vmem:[%s7 + $0x30] sm:$0xff]
    %v7204 = vld [vmem:[%s7 + $0x38] sm:$0xff]
    %v7205 = vld [vmem:[%s7 + $0x40] sm:$0xff]
    %v7206 = vld [vmem:[%s7 + $0x48] sm:$0xff]
    %v7207 = vld [vmem:[%s7 + $0x50] sm:$0xff]
    %v7208 = vld [vmem:[%s7 + $0x58] sm:$0xff]
    %v7209 = vld [vmem:[%s7 + $0x60] sm:$0xff]
    %v7210 = vld [vmem:[%s7 + $0x68] sm:$0xff]
    %v7211 = vld [vmem:[%s7 + $0x70] sm:$0xff]
    %v7212 = vld [vmem:[%s7 + $0x78] sm:$0xff]
    %v7213 = vld [vmem:[%s7 + $0x80] sm:$0xff]
    %v7214 = vld [vmem:[%s7 + $0x88] sm:$0xff]
    %v7215 = vld [vmem:[%s7 + $0x90] sm:$0xff]
    %v7216 = vld [vmem:[%s7 + $0x98] sm:$0xff]
    %v7217 = vld [vmem:[%s7 + $0xa0] sm:$0xff]
    %v7218 = vld [vmem:[%s7 + $0xa8] sm:$0xff]
    %v7219 = vld [vmem:[%s7 + $0xb0] sm:$0xff]
    %v7220 = vld [vmem:[%s7 + $0xb8] sm:$0xff]
    %v7221 = vld [vmem:[%s7 + $0xc0] sm:$0xff]
    %v7222 = vld [vmem:[%s7 + $0xc8] sm:$0xff]
    %v7223 = vld [vmem:[%s7 + $0xd0] sm:$0xff]
    %v7224 = vld [vmem:[%s7 + $0xd8] sm:$0xff]
    %v7225 = vld [vmem:[%s7 + $0xe0] sm:$0xff]
    %v7226 = vld [vmem:[%s7 + $0xe8] sm:$0xff]
    %v7227 = vld [vmem:[%s7 + $0xf0] sm:$0xff]
    %v7228 = vld [vmem:[%s7 + $0xf8] sm:$0xff]
    %v7229 = vld [vmem:[%s7 + $0x100] sm:$0xff]
    %v7230 = vld [vmem:[%s7 + $0x108] sm:$0xff]
    %v7231 = vld [vmem:[%s7 + $0x110] sm:$0xff]
    %v7232 = vld [vmem:[%s7 + $0x118] sm:$0xff]
    %v7233 = vld [vmem:[%s7 + $0x120] sm:$0xff]
    %v7234 = vld [vmem:[%s7 + $0x128] sm:$0xff]
    %v7235 = vld [vmem:[%s7 + $0x130] sm:$0xff]
    %v7236 = vld [vmem:[%s7 + $0x138] sm:$0xff]
    %v7237 = vld [vmem:[%s7 + $0x140] sm:$0xff]
    %v7238 = vld [vmem:[%s7 + $0x148] sm:$0xff]
    %v7239 = vld [vmem:[%s7 + $0x150] sm:$0xff]
    %v7240 = vld [vmem:[%s7 + $0x158] sm:$0xff]
    %v7241 = vld [vmem:[%s7 + $0x160] sm:$0xff]
    %v7242 = vld [vmem:[%s7 + $0x168] sm:$0xff]
    %v7243 = vld [vmem:[%s7 + $0x170] sm:$0xff]
    %v7244 = vld [vmem:[%s7 + $0x178] sm:$0xff]
    %v7245 = vld [vmem:[%s7 + $0x180] sm:$0xff]
    %v7246 = vld [vmem:[%s7 + $0x188] sm:$0xff]
    %v7247 = vld [vmem:[%s7 + $0x190] sm:$0xff]
    %v7248 = vld [vmem:[%s7 + $0x198] sm:$0xff]
    %v7249 = vld [vmem:[%s7 + $0x1a0] sm:$0xff]
    %v7250 = vld [vmem:[%s7 + $0x1a8] sm:$0xff]
    %v7251 = vld [vmem:[%s7 + $0x1b0] sm:$0xff]
    %v7252 = vld [vmem:[%s7 + $0x1b8] sm:$0xff]
    %v7253 = vld [vmem:[%s7 + $0x1c0] sm:$0xff]
    %v7254 = vld [vmem:[%s7 + $0x1c8] sm:$0xff]
    %v7255 = vld [vmem:[%s7 + $0x1d0] sm:$0xff]
    %v7256 = vld [vmem:[%s7 + $0x1d8] sm:$0xff]
    %v7257 = vld [vmem:[%s7 + $0x1e0] sm:$0xff]
    %v7258 = vld [vmem:[%s7 + $0x1e8] sm:$0xff]
    %v7259 = vld [vmem:[%s7 + $0x1f0] sm:$0xff]
    %v7260 = vld [vmem:[%s7 + $0x1f8] sm:$0xff]
    %v7261 = vld [vmem:[%s7 + $0x200] sm:$0xff]
    %v7262 = vld [vmem:[%s7 + $0x208] sm:$0xff]
    %v7263 = vld [vmem:[%s7 + $0x210] sm:$0xff]
    %v7264 = vld [vmem:[%s7 + $0x218] sm:$0xff]
    %v7265 = vld [vmem:[%s7 + $0x220] sm:$0xff]
    %v7266 = vld [vmem:[%s7 + $0x228] sm:$0xff]
    %v7267 = vld [vmem:[%s7 + $0x230] sm:$0xff]
    %v7268 = vld [vmem:[%s7 + $0x238] sm:$0xff]
    %v7269 = vld [vmem:[%s7 + $0x240] sm:$0xff]
    %v7270 = vld [vmem:[%s7 + $0x248] sm:$0xff]
    %v7271 = vld [vmem:[%s7 + $0x250] sm:$0xff]
    %v7272 = vld [vmem:[%s7 + $0x258] sm:$0xff]
    %v7273 = vld [vmem:[%s7 + $0x260] sm:$0xff]
    %v7274 = vld [vmem:[%s7 + $0x268] sm:$0xff]
    %v7275 = vld [vmem:[%s7 + $0x270] sm:$0xff]
    %v7276 = vld [vmem:[%s7 + $0x278] sm:$0xff]
    %v7277 = vld [vmem:[%s7 + $0x280] sm:$0xff]
    %v7278 = vld [vmem:[%s7 + $0x288] sm:$0xff]
    %v7279 = vld [vmem:[%s7 + $0x290] sm:$0xff]
    %v7280 = vld [vmem:[%s7 + $0x298] sm:$0xff]
    %v7281 = vld [vmem:[%s7 + $0x2a0] sm:$0xff]
    %v7282 = vld [vmem:[%s7 + $0x2a8] sm:$0xff]
    %v7283 = vld [vmem:[%s7 + $0x2b0] sm:$0xff]
    %v7284 = vld [vmem:[%s7 + $0x2b8] sm:$0xff]
    %v7285 = vld [vmem:[%s7 + $0x2c0] sm:$0xff]
    %v7286 = vld [vmem:[%s7 + $0x2c8] sm:$0xff]
    %v7287 = vld [vmem:[%s7 + $0x2d0] sm:$0xff]
    %v7288 = vld [vmem:[%s7 + $0x2d8] sm:$0xff]
    %v7289 = vld [vmem:[%s7 + $0x2e0] sm:$0xff]
    %v7290 = vld [vmem:[%s7 + $0x2e8] sm:$0xff]
    %v7291 = vld [vmem:[%s7 + $0x2f0] sm:$0xff]
    %v7292 = vld [vmem:[%s7 + $0x2f8] sm:$0xff]
    %v7293 = vld [vmem:[%s7 + $0x300] sm:$0xff]
    %v7294 = vld [vmem:[%s7 + $0x308] sm:$0xff]
    %v7295 = vld [vmem:[%s7 + $0x310] sm:$0xff]
    %v7296 = vld [vmem:[%s7 + $0x318] sm:$0xff]
    %v7297 = vld [vmem:[%s7 + $0x320] sm:$0xff]
    %v7298 = vld [vmem:[%s7 + $0x328] sm:$0xff]
    %v7299 = vld [vmem:[%s7 + $0x330] sm:$0xff]
    %v7300 = vld [vmem:[%s7 + $0x338] sm:$0xff]
    %v7301 = vld [vmem:[%s7 + $0x340] sm:$0xff]
    %v7302 = vld [vmem:[%s7 + $0x348] sm:$0xff]
    %v7303 = vld [vmem:[%s7 + $0x350] sm:$0xff]
    %v7304 = vld [vmem:[%s7 + $0x358] sm:$0xff]
    %v7305 = vld [vmem:[%s7 + $0x360] sm:$0xff]
    %v7306 = vld [vmem:[%s7 + $0x368] sm:$0xff]
    %v7307 = vld [vmem:[%s7 + $0x370] sm:$0xff]
    %v7308 = vld [vmem:[%s7 + $0x378] sm:$0xff]
    %v7309 = vld [vmem:[%s7 + $0x380] sm:$0xff]
    %v7310 = vld [vmem:[%s7 + $0x388] sm:$0xff]
    %v7311 = vld [vmem:[%s7 + $0x390] sm:$0xff]
    %v7312 = vld [vmem:[%s7 + $0x398] sm:$0xff]
    %v7313 = vld [vmem:[%s7 + $0x3a0] sm:$0xff]
    %v7314 = vld [vmem:[%s7 + $0x3a8] sm:$0xff]
    %v7315 = vld [vmem:[%s7 + $0x3b0] sm:$0xff]
    %v7316 = vld [vmem:[%s7 + $0x3b8] sm:$0xff]
    %v7317 = vld [vmem:[%s7 + $0x3c0] sm:$0xff]
    %v7318 = vld [vmem:[%s7 + $0x3c8] sm:$0xff]
    %v7319 = vld [vmem:[%s7 + $0x3d0] sm:$0xff]
    %v7320 = vld [vmem:[%s7 + $0x3d8] sm:$0xff]
    %v7321 = vld [vmem:[%s7 + $0x3e0] sm:$0xff]
    %v7322 = vld [vmem:[%s7 + $0x3e8] sm:$0xff]
    %v7323 = vld [vmem:[%s7 + $0x3f0] sm:$0xff]
    %v7324 = vld [vmem:[%s7 + $0x3f8] sm:$0xff]
    %7325 = vmatpush.msra.mxu0 %v7276
    %7326 = vmatpush.msra.mxu0 %v7275
    %7327 = vmatpush.msra.mxu0 %v7274
    %7328 = vmatpush.msra.mxu0 %v7273
    %7329 = vmatpush.msra.mxu0 %v7272
    %7330 = vmatpush.msra.mxu0 %v7271
    %7331 = vmatpush.msra.mxu0 %v7270
    %7332 = vmatpush.msra.mxu0 %v7269
    %7333 = vmatpush.msra.mxu0 %v7268
    %7334 = vmatpush.msra.mxu0 %v7267
    %7335 = vmatpush.msra.mxu0 %v7266
    %7336 = vmatpush.msra.mxu0 %v7265
    %7337 = vmatpush.msra.mxu0 %v7264
    %7338 = vmatpush.msra.mxu0 %v7263
    %7339 = vmatpush.msra.mxu0 %v7262
    %7340 = vmatpush.msra.mxu0 %v7261
    %7341 = vmatmul.f32.gmra.mxu0 %v7099
    %v7342 = vpop.f32.mrf.mxu0
    %v7343 = vadd.f32 0.0, %v7342
    %7344 = vmatmul.f32.gmra.mxu0 %v7102
    %v7345 = vpop.f32.mrf.mxu0
    %v7346 = vadd.f32 0.0, %v7345
    %7347 = vmatmul.f32.gmra.mxu0 %v7105
    %v7348 = vpop.f32.mrf.mxu0
    %v7349 = vadd.f32 0.0, %v7348
    %7350 = vmatmul.f32.gmra.mxu0 %v7108
    %v7351 = vpop.f32.mrf.mxu0
    %v7352 = vadd.f32 0.0, %v7351
    %7353 = vdwg.mxu0
    %7354 = vmatpush.msra.mxu0 %v7292
    %7355 = vmatpush.msra.mxu0 %v7291
    %7356 = vmatpush.msra.mxu0 %v7290
    %7357 = vmatpush.msra.mxu0 %v7289
    %7358 = vmatpush.msra.mxu0 %v7288
    %7359 = vmatpush.msra.mxu0 %v7287
    %7360 = vmatpush.msra.mxu0 %v7286
    %7361 = vmatpush.msra.mxu0 %v7285
    %7362 = vmatpush.msra.mxu0 %v7284
    %7363 = vmatpush.msra.mxu0 %v7283
    %7364 = vmatpush.msra.mxu0 %v7282
    %7365 = vmatpush.msra.mxu0 %v7281
    %7366 = vmatpush.msra.mxu0 %v7280
    %7367 = vmatpush.msra.mxu0 %v7279
    %7368 = vmatpush.msra.mxu0 %v7278
    %7369 = vmatpush.msra.mxu0 %v7277
    %7370 = vmatmul.f32.gmra.mxu0 %v7128
    %v7371 = vpop.f32.mrf.mxu0
    %v7372 = vadd.f32 %v7343, %v7371
    %7373 = vmatmul.f32.gmra.mxu0 %v7131
    %v7374 = vpop.f32.mrf.mxu0
    %v7375 = vadd.f32 %v7346, %v7374
    %7376 = vmatmul.f32.gmra.mxu0 %v7134
    %v7377 = vpop.f32.mrf.mxu0
    %v7378 = vadd.f32 %v7349, %v7377
    %7379 = vmatmul.f32.gmra.mxu0 %v7137
    %v7380 = vpop.f32.mrf.mxu0
    %v7381 = vadd.f32 %v7352, %v7380
    %7382 = vdwg.mxu0
    %7383 = vmatpush.msra.mxu0 %v7308
    %7384 = vmatpush.msra.mxu0 %v7307
    %7385 = vmatpush.msra.mxu0 %v7306
    %7386 = vmatpush.msra.mxu0 %v7305
    %7387 = vmatpush.msra.mxu0 %v7304
    %7388 = vmatpush.msra.mxu0 %v7303
    %7389 = vmatpush.msra.mxu0 %v7302
    %7390 = vmatpush.msra.mxu0 %v7301
    %7391 = vmatpush.msra.mxu0 %v7300
    %7392 = vmatpush.msra.mxu0 %v7299
    %7393 = vmatpush.msra.mxu0 %v7298
    %7394 = vmatpush.msra.mxu0 %v7297
    %7395 = vmatpush.msra.mxu0 %v7296
    %7396 = vmatpush.msra.mxu0 %v7295
    %7397 = vmatpush.msra.mxu0 %v7294
    %7398 = vmatpush.msra.mxu0 %v7293
    %7399 = vmatmul.f32.gmra.mxu0 %v7157
    %v7400 = vpop.f32.mrf.mxu0
    %v7401 = vadd.f32 %v7372, %v7400
    %7402 = vmatmul.f32.gmra.mxu0 %v7160
    %v7403 = vpop.f32.mrf.mxu0
    %v7404 = vadd.f32 %v7375, %v7403
    %7405 = vmatmul.f32.gmra.mxu0 %v7163
    %v7406 = vpop.f32.mrf.mxu0
    %v7407 = vadd.f32 %v7378, %v7406
    %7408 = vmatmul.f32.gmra.mxu0 %v7166
    %v7409 = vpop.f32.mrf.mxu0
    %v7410 = vadd.f32 %v7381, %v7409
    %7411 = vdwg.mxu0
    %7412 = vmatpush.msra.mxu0 %v7324
    %7413 = vmatpush.msra.mxu0 %v7323
    %7414 = vmatpush.msra.mxu0 %v7322
    %7415 = vmatpush.msra.mxu0 %v7321
    %7416 = vmatpush.msra.mxu0 %v7320
    %7417 = vmatpush.msra.mxu0 %v7319
    %7418 = vmatpush.msra.mxu0 %v7318
    %7419 = vmatpush.msra.mxu0 %v7317
    %7420 = vmatpush.msra.mxu0 %v7316
    %7421 = vmatpush.msra.mxu0 %v7315
    %7422 = vmatpush.msra.mxu0 %v7314
    %7423 = vmatpush.msra.mxu0 %v7313
    %7424 = vmatpush.msra.mxu0 %v7312
    %7425 = vmatpush.msra.mxu0 %v7311
    %7426 = vmatpush.msra.mxu0 %v7310
    %7427 = vmatpush.msra.mxu0 %v7309
    %7428 = vmatmul.f32.gmra.mxu0 %v7186
    %v7429 = vpop.f32.mrf.mxu0
    %v7430 = vadd.f32 %v7401, %v7429
    %7431 = vmatmul.f32.gmra.mxu0 %v7189
    %v7432 = vpop.f32.mrf.mxu0
    %v7433 = vadd.f32 %v7404, %v7432
    %7434 = vmatmul.f32.gmra.mxu0 %v7192
    %v7435 = vpop.f32.mrf.mxu0
    %v7436 = vadd.f32 %v7407, %v7435
    %7437 = vmatmul.f32.gmra.mxu0 %v7195
    %v7438 = vpop.f32.mrf.mxu0
    %v7439 = vadd.f32 %v7410, %v7438
    %7440 = vdwg.mxu0
    %7441 = vmatpush.msra.mxu0 %v7212
    %7442 = vmatpush.msra.mxu0 %v7211
    %7443 = vmatpush.msra.mxu0 %v7210
    %7444 = vmatpush.msra.mxu0 %v7209
    %7445 = vmatpush.msra.mxu0 %v7208
    %7446 = vmatpush.msra.mxu0 %v7207
    %7447 = vmatpush.msra.mxu0 %v7206
    %7448 = vmatpush.msra.mxu0 %v7205
    %7449 = vmatpush.msra.mxu0 %v7204
    %7450 = vmatpush.msra.mxu0 %v7203
    %7451 = vmatpush.msra.mxu0 %v7202
    %7452 = vmatpush.msra.mxu0 %v7201
    %7453 = vmatpush.msra.mxu0 %v7200
    %7454 = vmatpush.msra.mxu0 %v7199
    %7455 = vmatpush.msra.mxu0 %v7198
    %7456 = vmatpush.msra.mxu0 %v7197
    %7457 = vmatmul.f32.gmra.mxu0 %v7064
    %v7458 = vpop.f32.mrf.mxu0
    %v7459 = vadd.f32 %v7430, %v7458
    %7460 = vmatmul.f32.gmra.mxu0 %v7068
    %v7461 = vpop.f32.mrf.mxu0
    %v7462 = vadd.f32 %v7433, %v7461
    %7463 = vmatmul.f32.gmra.mxu0 %v7072
    %v7464 = vpop.f32.mrf.mxu0
    %v7465 = vadd.f32 %v7436, %v7464
    %7466 = vmatmul.f32.gmra.mxu0 %v7076
    %v7467 = vpop.f32.mrf.mxu0
    %v7468 = vadd.f32 %v7439, %v7467
    %7469 = vdwg.mxu0
    %7470 = vmatpush.msra.mxu0 %v7228
    %7471 = vmatpush.msra.mxu0 %v7227
    %7472 = vmatpush.msra.mxu0 %v7226
    %7473 = vmatpush.msra.mxu0 %v7225
    %7474 = vmatpush.msra.mxu0 %v7224
    %7475 = vmatpush.msra.mxu0 %v7223
    %7476 = vmatpush.msra.mxu0 %v7222
    %7477 = vmatpush.msra.mxu0 %v7221
    %7478 = vmatpush.msra.mxu0 %v7220
    %7479 = vmatpush.msra.mxu0 %v7219
    %7480 = vmatpush.msra.mxu0 %v7218
    %7481 = vmatpush.msra.mxu0 %v7217
    %7482 = vmatpush.msra.mxu0 %v7216
    %7483 = vmatpush.msra.mxu0 %v7215
    %7484 = vmatpush.msra.mxu0 %v7214
    %7485 = vmatpush.msra.mxu0 %v7213
    %7486 = vmatmul.f32.gmra.mxu0 %v7065
    %v7487 = vpop.f32.mrf.mxu0
    %v7488 = vadd.f32 %v7459, %v7487
    %7489 = vmatmul.f32.gmra.mxu0 %v7069
    %v7490 = vpop.f32.mrf.mxu0
    %v7491 = vadd.f32 %v7462, %v7490
    %7492 = vmatmul.f32.gmra.mxu0 %v7073
    %v7493 = vpop.f32.mrf.mxu0
    %v7494 = vadd.f32 %v7465, %v7493
    %7495 = vmatmul.f32.gmra.mxu0 %v7077
    %v7496 = vpop.f32.mrf.mxu0
    %v7497 = vadd.f32 %v7468, %v7496
    %7498 = vdwg.mxu0
    %7499 = vmatpush.msra.mxu0 %v7244
    %7500 = vmatpush.msra.mxu0 %v7243
    %7501 = vmatpush.msra.mxu0 %v7242
    %7502 = vmatpush.msra.mxu0 %v7241
    %7503 = vmatpush.msra.mxu0 %v7240
    %7504 = vmatpush.msra.mxu0 %v7239
    %7505 = vmatpush.msra.mxu0 %v7238
    %7506 = vmatpush.msra.mxu0 %v7237
    %7507 = vmatpush.msra.mxu0 %v7236
    %7508 = vmatpush.msra.mxu0 %v7235
    %7509 = vmatpush.msra.mxu0 %v7234
    %7510 = vmatpush.msra.mxu0 %v7233
    %7511 = vmatpush.msra.mxu0 %v7232
    %7512 = vmatpush.msra.mxu0 %v7231
    %7513 = vmatpush.msra.mxu0 %v7230
    %7514 = vmatpush.msra.mxu0 %v7229
    %7515 = vmatmul.f32.gmra.mxu0 %v7066
    %v7516 = vpop.f32.mrf.mxu0
    %v7517 = vadd.f32 %v7488, %v7516
    %7518 = vmatmul.f32.gmra.mxu0 %v7070
    %v7519 = vpop.f32.mrf.mxu0
    %v7520 = vadd.f32 %v7491, %v7519
    %7521 = vmatmul.f32.gmra.mxu0 %v7074
    %v7522 = vpop.f32.mrf.mxu0
    %v7523 = vadd.f32 %v7494, %v7522
    %7524 = vmatmul.f32.gmra.mxu0 %v7078
    %v7525 = vpop.f32.mrf.mxu0
    %v7526 = vadd.f32 %v7497, %v7525
    %7527 = vdwg.mxu0
    %7528 = vmatpush.msra.mxu0 %v7260
    %7529 = vmatpush.msra.mxu0 %v7259
    %7530 = vmatpush.msra.mxu0 %v7258
    %7531 = vmatpush.msra.mxu0 %v7257
    %7532 = vmatpush.msra.mxu0 %v7256
    %7533 = vmatpush.msra.mxu0 %v7255
    %7534 = vmatpush.msra.mxu0 %v7254
    %7535 = vmatpush.msra.mxu0 %v7253
    %7536 = vmatpush.msra.mxu0 %v7252
    %7537 = vmatpush.msra.mxu0 %v7251
    %7538 = vmatpush.msra.mxu0 %v7250
    %7539 = vmatpush.msra.mxu0 %v7249
    %7540 = vmatpush.msra.mxu0 %v7248
    %7541 = vmatpush.msra.mxu0 %v7247
    %7542 = vmatpush.msra.mxu0 %v7246
    %7543 = vmatpush.msra.mxu0 %v7245
    %7544 = vmatmul.f32.gmra.mxu0 %v7067
    %v7545 = vpop.f32.mrf.mxu0
    %v7546 = vadd.f32 %v7517, %v7545
    %7547 = vmatmul.f32.gmra.mxu0 %v7071
    %v7548 = vpop.f32.mrf.mxu0
    %v7549 = vadd.f32 %v7520, %v7548
    %7550 = vmatmul.f32.gmra.mxu0 %v7075
    %v7551 = vpop.f32.mrf.mxu0
    %v7552 = vadd.f32 %v7523, %v7551
    %7553 = vmatmul.f32.gmra.mxu0 %v7079
    %v7554 = vpop.f32.mrf.mxu0
    %v7555 = vadd.f32 %v7526, %v7554
    %7556 = vdwg.mxu0
    %v7558 = vperm.slane %v7080, 0
    %v7560 = vadd.f32 %v7546, %v7558
    %v7561 = vadd.f32 %v7549, %v7558
    %v7562 = vadd.f32 %v7552, %v7558
    %v7563 = vadd.f32 %v7555, %v7558
    %v7564 = vmax.f32 %v7560, 0.0
    %v7565 = vmax.f32 %v7561, 0.0
    %v7566 = vmax.f32 %v7562, 0.0
    %v7567 = vmax.f32 %v7563, 0.0
    %v7568 = vld [vmem:[#allocation12] sm:$0xff]
    %v7569 = vld [vmem:[#allocation12 + $0x8] sm:$0xff]
    %v7570 = vld [vmem:[#allocation12 + $0x10] sm:$0xff]
    %v7571 = vld [vmem:[#allocation12 + $0x18] sm:$0xff]
    %v7572 = vld [vmem:[#allocation12 + $0x20] sm:$0xff]
    %v7573 = vld [vmem:[#allocation12 + $0x28] sm:$0xff]
    %v7574 = vld [vmem:[#allocation12 + $0x30] sm:$0xff]
    %v7575 = vld [vmem:[#allocation12 + $0x38] sm:$0xff]
    %v7576 = vld [vmem:[#allocation12 + $0x40] sm:$0xff]
    %v7577 = vld [vmem:[#allocation12 + $0x48] sm:$0xff]
    %v7578 = vld [vmem:[#allocation12 + $0x50] sm:$0xff]
    %v7579 = vld [vmem:[#allocation12 + $0x58] sm:$0xff]
    %v7581 = vsel %vm2129, %v7564, 0
    %v7584 = vsel %vm2129, %v7565, 0
    %v7587 = vsel %vm2129, %v7566, 0
    %v7590 = vsel %vm2129, %v7567, 0
    %7592 = vmatpush.msra.mxu0 0.0
    %7593 = vmatpush.msra.mxu0 0.0
    %7594 = vmatpush.msra.mxu0 0.0
    %7595 = vmatpush.msra.mxu0 0.0
    %7596 = vmatpush.msra.mxu0 0.0
    %7597 = vmatpush.msra.mxu0 0.0
    %7598 = vmatpush.msra.mxu0 0.0
    %7599 = vmatpush.msra.mxu0 0.0
    %7600 = vmatpush.msra.mxu0 0.0
    %7601 = vmatpush.msra.mxu0 0.0
    %7602 = vmatpush.msra.mxu0 0.0
    %7603 = vmatpush.msra.mxu0 0.0
    %7604 = vmatpush.msra.mxu0 %v7579
    %7605 = vmatpush.msra.mxu0 %v7578
    %7606 = vmatpush.msra.mxu0 %v7577
    %7607 = vmatpush.msra.mxu0 %v7576
    %7608 = vmatmul.f32.gmra.mxu0 %v7581
    %v7609 = vpop.f32.mrf.mxu0
    %v7610 = vadd.f32 0.0, %v7609
    %7611 = vmatmul.f32.gmra.mxu0 %v7584
    %v7612 = vpop.f32.mrf.mxu0
    %v7613 = vadd.f32 0.0, %v7612
    %7614 = vmatmul.f32.gmra.mxu0 %v7587
    %v7615 = vpop.f32.mrf.mxu0
    %v7616 = vadd.f32 0.0, %v7615
    %7617 = vmatmul.f32.gmra.mxu0 %v7590
    %v7618 = vpop.f32.mrf.mxu0
    %v7619 = vadd.f32 0.0, %v7618
    %7620 = vdwg.mxu0
    %v7622 = vsel %vm353, %v2077, 0
    %v7625 = vsel %vm353, %v2080, 0
    %v7628 = vsel %vm353, %v2083, 0
    %v7631 = vsel %vm353, %v2086, 0
    %7633 = vmatpush.msra.mxu0 0.0
    %7634 = vmatpush.msra.mxu0 0.0
    %7635 = vmatpush.msra.mxu0 0.0
    %7636 = vmatpush.msra.mxu0 0.0
    %7637 = vmatpush.msra.mxu0 0.0
    %7638 = vmatpush.msra.mxu0 0.0
    %7639 = vmatpush.msra.mxu0 0.0
    %7640 = vmatpush.msra.mxu0 0.0
    %7641 = vmatpush.msra.mxu0 %v7575
    %7642 = vmatpush.msra.mxu0 %v7574
    %7643 = vmatpush.msra.mxu0 %v7573
    %7644 = vmatpush.msra.mxu0 %v7572
    %7645 = vmatpush.msra.mxu0 %v7571
    %7646 = vmatpush.msra.mxu0 %v7570
    %7647 = vmatpush.msra.mxu0 %v7569
    %7648 = vmatpush.msra.mxu0 %v7568
    %7649 = vmatmul.f32.gmra.mxu0 %v7622
    %v7650 = vpop.f32.mrf.mxu0
    %v7651 = vadd.f32 %v7610, %v7650
    %7652 = vmatmul.f32.gmra.mxu0 %v7625
    %v7653 = vpop.f32.mrf.mxu0
    %v7654 = vadd.f32 %v7613, %v7653
    %7655 = vmatmul.f32.gmra.mxu0 %v7628
    %v7656 = vpop.f32.mrf.mxu0
    %v7657 = vadd.f32 %v7616, %v7656
    %7658 = vmatmul.f32.gmra.mxu0 %v7631
    %v7659 = vpop.f32.mrf.mxu0
    %v7660 = vadd.f32 %v7619, %v7659
    %7661 = vdwg.mxu0
    %v7662 = vld [vmem:[#allocation12 + $0x60] sm:$0xff]
    %v7663 = vld [vmem:[#allocation12 + $0x68] sm:$0xff]
    %v7664 = vld [vmem:[#allocation12 + $0x70] sm:$0xff]
    %v7665 = vld [vmem:[#allocation12 + $0x78] sm:$0xff]
    %v7667 = vsel %vm2129, %v2113, 0
    %v7670 = vsel %vm2129, %v2116, 0
    %v7673 = vsel %vm2129, %v2119, 0
    %v7676 = vsel %vm2129, %v2122, 0
    %7678 = vmatpush.msra.mxu0 0.0
    %7679 = vmatpush.msra.mxu0 0.0
    %7680 = vmatpush.msra.mxu0 0.0
    %7681 = vmatpush.msra.mxu0 0.0
    %7682 = vmatpush.msra.mxu0 0.0
    %7683 = vmatpush.msra.mxu0 0.0
    %7684 = vmatpush.msra.mxu0 0.0
    %7685 = vmatpush.msra.mxu0 0.0
    %7686 = vmatpush.msra.mxu0 0.0
    %7687 = vmatpush.msra.mxu0 0.0
    %7688 = vmatpush.msra.mxu0 0.0
    %7689 = vmatpush.msra.mxu0 0.0
    %7690 = vmatpush.msra.mxu0 %v7665
    %7691 = vmatpush.msra.mxu0 %v7664
    %7692 = vmatpush.msra.mxu0 %v7663
    %7693 = vmatpush.msra.mxu0 %v7662
    %7694 = vmatmul.f32.gmra.mxu0 %v7667
    %v7695 = vpop.f32.mrf.mxu0
    %v7696 = vadd.f32 0.0, %v7695
    %7697 = vmatmul.f32.gmra.mxu0 %v7670
    %v7698 = vpop.f32.mrf.mxu0
    %v7699 = vadd.f32 0.0, %v7698
    %7700 = vmatmul.f32.gmra.mxu0 %v7673
    %v7701 = vpop.f32.mrf.mxu0
    %v7702 = vadd.f32 0.0, %v7701
    %7703 = vmatmul.f32.gmra.mxu0 %v7676
    %v7704 = vpop.f32.mrf.mxu0
    %v7705 = vadd.f32 0.0, %v7704
    %7706 = vdwg.mxu0
    %v7707 = vadd.f32 %v7651, %v7696
    %v7708 = vadd.f32 %v7654, %v7699
    %v7709 = vadd.f32 %v7657, %v7702
    %v7710 = vadd.f32 %v7660, %v7705
    %v7711 = vld [vmem:[#allocation13 + $0x12] sm:$0x1]
    %v7713 = vperm.slane %v7711, 0
    %v7715 = vadd.f32 %v7707, %v7713
    %v7716 = vadd.f32 %v7708, %v7713
    %v7717 = vadd.f32 %v7709, %v7713
    %v7718 = vadd.f32 %v7710, %v7713
    %v7719 = vmax.f32 %v7715, 0.0
    %v7720 = vmax.f32 %v7716, 0.0
    %v7721 = vmax.f32 %v7717, 0.0
    %v7722 = vmax.f32 %v7718, 0.0
    %v7723 = vld [vmem:[%s10] sm:$0xff]
    %v7724 = vld [vmem:[%s10 + $0x8] sm:$0xff]
    %v7725 = vld [vmem:[%s10 + $0x10] sm:$0xff]
    %v7726 = vld [vmem:[%s10 + $0x18] sm:$0xff]
    %v7727 = vld [vmem:[%s10 + $0x20] sm:$0xff]
    %v7728 = vld [vmem:[%s10 + $0x28] sm:$0xff]
    %v7729 = vld [vmem:[%s10 + $0x30] sm:$0xff]
    %v7730 = vld [vmem:[%s10 + $0x38] sm:$0xff]
    %v7731 = vld [vmem:[%s10 + $0x40] sm:$0xff]
    %v7732 = vld [vmem:[%s10 + $0x48] sm:$0xff]
    %v7733 = vld [vmem:[%s10 + $0x50] sm:$0xff]
    %v7734 = vld [vmem:[%s10 + $0x58] sm:$0xff]
    %v7735 = vld [vmem:[%s10 + $0x60] sm:$0xff]
    %v7736 = vld [vmem:[%s10 + $0x68] sm:$0xff]
    %v7737 = vld [vmem:[%s10 + $0x70] sm:$0xff]
    %v7738 = vld [vmem:[%s10 + $0x78] sm:$0xff]
    %v7739 = vld [vmem:[#allocation13 + $0x13] sm:$0x1]
    %v7741 = vperm.slane %v7739, 0
    %7743 = vmatpush.msra.mxu0 %v7738
    %7744 = vmatpush.msra.mxu0 %v7737
    %7745 = vmatpush.msra.mxu0 %v7736
    %7746 = vmatpush.msra.mxu0 %v7735
    %7747 = vmatpush.msra.mxu0 %v7734
    %7748 = vmatpush.msra.mxu0 %v7733
    %7749 = vmatpush.msra.mxu0 %v7732
    %7750 = vmatpush.msra.mxu0 %v7731
    %7751 = vmatpush.msra.mxu0 %v7730
    %7752 = vmatpush.msra.mxu0 %v7729
    %7753 = vmatpush.msra.mxu0 %v7728
    %7754 = vmatpush.msra.mxu0 %v7727
    %7755 = vmatpush.msra.mxu0 %v7726
    %7756 = vmatpush.msra.mxu0 %v7725
    %7757 = vmatpush.msra.mxu0 %v7724
    %7758 = vmatpush.msra.mxu0 %v7723
    %7759 = vmatmul.f32.gmra.mxu0 %v7719
    %v7760 = vpop.f32.mrf.mxu0
    %v7761 = vadd.f32 %v7741, %v7760
    %7762 = vmatmul.f32.gmra.mxu0 %v7720
    %v7763 = vpop.f32.mrf.mxu0
    %v7764 = vadd.f32 %v7741, %v7763
    %7765 = vmatmul.f32.gmra.mxu0 %v7721
    %v7766 = vpop.f32.mrf.mxu0
    %v7767 = vadd.f32 %v7741, %v7766
    %7768 = vmatmul.f32.gmra.mxu0 %v7722
    %v7769 = vpop.f32.mrf.mxu0
    %v7770 = vadd.f32 %v7741, %v7769
    %7771 = vdwg.mxu0
    %v7772 = vmax.f32 %v7761, 0.0
    %v7773 = vmax.f32 %v7764, 0.0
    %v7774 = vmax.f32 %v7767, 0.0
    %v7775 = vmax.f32 %v7770, 0.0
    %v7776 = vld [vmem:[%s11] sm:$0xff]
    %v7777 = vld [vmem:[%s11 + $0x8] sm:$0xff]
    %v7778 = vld [vmem:[%s11 + $0x10] sm:$0xff]
    %v7779 = vld [vmem:[%s11 + $0x18] sm:$0xff]
    %v7780 = vld [vmem:[%s11 + $0x20] sm:$0xff]
    %v7781 = vld [vmem:[%s11 + $0x28] sm:$0xff]
    %v7782 = vld [vmem:[%s11 + $0x30] sm:$0xff]
    %v7783 = vld [vmem:[%s11 + $0x38] sm:$0xff]
    %v7784 = vld [vmem:[#allocation13 + $0x14] sm:$0x1]
    %v7786 = vperm.slane %v7784, 0
    %v7789 = vsel %vm353, %v7772, 0
    %v7792 = vsel %vm353, %v7773, 0
    %v7795 = vsel %vm353, %v7774, 0
    %v7798 = vsel %vm353, %v7775, 0
    %7800 = vmatpush.msra.mxu0 0.0
    %7801 = vmatpush.msra.mxu0 0.0
    %7802 = vmatpush.msra.mxu0 0.0
    %7803 = vmatpush.msra.mxu0 0.0
    %7804 = vmatpush.msra.mxu0 0.0
    %7805 = vmatpush.msra.mxu0 0.0
    %7806 = vmatpush.msra.mxu0 0.0
    %7807 = vmatpush.msra.mxu0 0.0
    %7808 = vmatpush.msra.mxu0 %v7783
    %7809 = vmatpush.msra.mxu0 %v7782
    %7810 = vmatpush.msra.mxu0 %v7781
    %7811 = vmatpush.msra.mxu0 %v7780
    %7812 = vmatpush.msra.mxu0 %v7779
    %7813 = vmatpush.msra.mxu0 %v7778
    %7814 = vmatpush.msra.mxu0 %v7777
    %7815 = vmatpush.msra.mxu0 %v7776
    %7816 = vmatmul.f32.gmra.mxu0 %v7789
    %v7817 = vpop.f32.mrf.mxu0
    %v7818 = vadd.f32 %v7786, %v7817
    %7819 = vmatmul.f32.gmra.mxu0 %v7792
    %v7820 = vpop.f32.mrf.mxu0
    %v7821 = vadd.f32 %v7786, %v7820
    %7822 = vmatmul.f32.gmra.mxu0 %v7795
    %v7823 = vpop.f32.mrf.mxu0
    %v7824 = vadd.f32 %v7786, %v7823
    %7825 = vmatmul.f32.gmra.mxu0 %v7798
    %v7826 = vpop.f32.mrf.mxu0
    %v7827 = vadd.f32 %v7786, %v7826
    %7828 = vdwg.mxu0
    %vm7829 = vcmask 15360
    %7830 = vst.msk [vmem:[%s13] sm:$0xff] %vm7829, %v7818
    %7831 = vst.msk [vmem:[%s13 + $0x8] sm:$0xff] %vm7829, %v7821
    %7832 = vst.msk [vmem:[%s13 + $0x10] sm:$0xff] %vm7829, %v7824
    %7833 = vst.msk [vmem:[%s13 + $0x18] sm:$0xff] %vm7829, %v7827
    // Predicated region
    $region78: #{adaptive_deformation_forward.1} parent=1 // pred_check
      _
    $region79: #{adaptive_deformation_forward.1} parent=1 // pred_check_branch
      %7835 = sbr.rel (0) target = $region81
    $region80: #{adaptive_deformation_forward.1} parent=1 // pred_region
      _
    $region81: #{adaptive_deformation_forward.1} parent=1 // pred_fallthru
      _
    // Predicated region
    $region82: #{adaptive_deformation_forward.1} parent=1 // pred_check
      _
    $region83: #{adaptive_deformation_forward.1} parent=1 // pred_check_branch
      %7837 = sbr.rel (0) target = $region85
    $region84: #{adaptive_deformation_forward.1} parent=1 // pred_region
      _
    $region85: #{adaptive_deformation_forward.1} parent=1 // pred_fallthru
      _
    %7838 = vsyncpa [#allocation6], 1
    %7839 = vsyncpa [#allocation8], 1
    %7840 = vsyncpa [#allocation11], 1
    %7841 = vsyncpa [#allocation14], 1
  %7842 = vsyncmov [#allocation4]
  %s7843 = vpop.sfrf %7842
  %p7844 = scmp.eq.s32.totalorder %s7843, 0
  %p7845 = pneg %p7844
  %7847 = shalt.err (%p7845)
  %s7848 = scalar_lea.sflag [#allocation4], 1
  %7849 = vsyncmov %s7848
  %s7850 = vpop.sfrf %7849
  %p7851 = scmp.eq.s32.totalorder %s7850, 0
  %p7852 = pneg %p7851
  %7854 = shalt.err (%p7852)

</llo_original>
